<compile_context>
chip_gen: v6e
topology: v6e:2x2x1
jax: 0.10.0
libtpu: 0.0.40
codegen_flags: <defaults>
</compile_context>

<pallas_src>
import functools
import math

import jax
import jax.numpy as jnp
from jax.experimental import pallas as pl
from jax.experimental.pallas import tpu as pltpu


def _round_up(n, m):
    return ((n + m - 1) // m) * m


# ----------------------------- Pallas kernel ------------------------------- #

def _mlp_max_kernel(x_ref, w1_ref, b1_ref, w2_ref, b2_ref, w3_ref, b3_ref, o_ref, *,
                    relu_last, single_step):
    """One point tile of [1x1conv + folded BN + ReLU] x3 followed by a max over points.

    x_ref : (1, tp, cin) bf16        w*_ref : bf16 weights (BN scale pre-folded)
    b*_ref: (1, C) f32 biases        o_ref  : (1, 1, 1, C3) f32 (running) max, resident
                                              across the point-tile (reduction) grid axis.
    """
    t = pl.program_id(2)
    cin = x_ref.shape[2]

    x = x_ref[0]                                                     # (tp, cin) bf16

    # Layer 1: K == cin (3) is tiny -> VPU broadcast multiply-adds in f32; keep MXU for 2/3.
    if cin <= 8:
        xf = x.astype(jnp.float32)
        w1 = w1_ref[0].astype(jnp.float32)                           # (cin, c1)
        h = xf[:, 0:1] * w1[0:1, :]
        for k in range(1, cin):
            h = h + xf[:, k:k + 1] * w1[k:k + 1, :]
    else:
        h = jnp.dot(x, w1_ref[0], preferred_element_type=jnp.float32)
    h = jnp.maximum(h + b1_ref[...], 0.0)                            # (tp, c1)

    h = jnp.dot(h.astype(jnp.bfloat16), w2_ref[...],
                preferred_element_type=jnp.float32)                  # (tp, c2)
    h = jnp.maximum(h + b2_ref[...], 0.0)

    h = jnp.dot(h.astype(jnp.bfloat16), w3_ref[...],
                preferred_element_type=jnp.float32)                  # (tp, c3)
    h = h + b3_ref[...]
    if relu_last:
        h = jnp.maximum(h, 0.0)

    tile_max = jnp.max(h, axis=0, keepdims=True)[None, None]         # (1, 1, 1, c3)

    if single_step:
        o_ref[...] = tile_max                                        # no init / no RMW
    else:
        @pl.when(t == 0)
        def _first():
            o_ref[...] = tile_max                                    # direct store, no -inf fill

        @pl.when(t > 0)
        def _rest():
            o_ref[...] = jnp.maximum(o_ref[...], tile_max)


# ------------------------------ wrapper ------------------------------------ #

def fused_mlp_max(xp, layer1, layer2, layer3, *, relu_last, tp, n_split=1):
    """max over points of a 3-layer pointwise MLP, fused in a single pallas_call.

    xp: (B, Np, cin) bf16 with Np % (tp * n_split) == 0.
    layerK = (w, bias).  layer1's weight is (Wb, cin, C1) with Wb in {1, B}
    (Wb == B means a per-batch weight, i.e. the 3x3 input transform folded in);
    layer2/3 weights are (Ck-1, Ck) bf16.  BN scale is pre-folded into the weights;
    biases are (1, Ck) f32.  Returns (B, C3) float32.
    """
    B, n_pts, cin = xp.shape
    w1, b1 = layer1
    w2, b2 = layer2
    w3, b3 = layer3
    wb, _, c1 = w1.shape
    c2 = w2.shape[1]
    c3 = w3.shape[1]
    assert n_pts % (tp * n_split) == 0
    tiles_per_split = n_pts // (tp * n_split)

    w1_map = (lambda s, b, t: (0, 0, 0)) if wb == 1 else (lambda s, b, t: (b, 0, 0))
    const2 = lambda s, b, t: (0, 0)

    out = pl.pallas_call(
        functools.partial(_mlp_max_kernel, relu_last=relu_last,
                          single_step=(tiles_per_split == 1)),
        out_shape=jax.ShapeDtypeStruct((n_split, B, 1, c3), jnp.float32),
        grid=(n_split, B, tiles_per_split),
        in_specs=[
            pl.BlockSpec((1, tp, cin), lambda s, b, t: (b, s * tiles_per_split + t, 0)),
            pl.BlockSpec((1, cin, c1), w1_map),                    # (per-batch) layer-1 weight
            pl.BlockSpec((1, c1), const2),
            pl.BlockSpec((c1, c2), const2),
            pl.BlockSpec((1, c2), const2),
            pl.BlockSpec((c2, c3), const2),
            pl.BlockSpec((1, c3), const2),
        ],
        out_specs=pl.BlockSpec((1, 1, 1, c3), lambda s, b, t: (s, b, 0, 0)),
        compiler_params=pltpu.CompilerParams(
            # point-split and batch axes shard across TensorCores (v7x megacore); the point-tile
            # reduction axis carries the resident max output block -> 'arbitrary' and last.
            dimension_semantics=("parallel", "parallel", "arbitrary"),
            vmem_limit_bytes=32 * 1024 * 1024,
        ),
    )(xp, w1, b1, w2, b2, w3, b3)
    return out.max(axis=0).reshape(B, c3)


# --------------------------- parameter creation ----------------------------- #

def init_params(key, in_features=3, nf=8):
    keys = iter(jax.random.split(key, 16))

    def layer(cin, cout, with_bn=True, dtype=jnp.float32):
        kw, kb, kg, kbe, km, kv = jax.random.split(next(keys), 6)
        w = jax.random.normal(kw, (cin, cout), jnp.float32) / jnp.sqrt(float(cin))
        b = 0.05 * jax.random.normal(kb, (cout,), jnp.float32)
        if with_bn:
            gamma = 1.0 + 0.1 * jax.random.normal(kg, (cout,), jnp.float32)
            beta = 0.1 * jax.random.normal(kbe, (cout,), jnp.float32)
            mean = 0.1 * jax.random.normal(km, (cout,), jnp.float32)
            var = 1.0 + 0.1 * jnp.abs(jax.random.normal(kv, (cout,), jnp.float32))
            s = gamma / jnp.sqrt(var + 1e-5)
            w = w * s[None, :]                       # fold BN(eval) scale into weight columns
            b = b * s + beta - mean * s              # fold conv bias + BN(eval) into bias
        return dict(w=w.astype(dtype), bias=b.reshape(1, cout).astype(jnp.float32))

    return {
        # STN3d conv trunk: 3 -> 64 -> 128 -> 1024  (fused Pallas kernel, bf16 folded weights)
        "stn_c1": layer(3, 64, dtype=jnp.bfloat16),
        "stn_c2": layer(64, 128, dtype=jnp.bfloat16),
        "stn_c3": layer(128, 1024, dtype=jnp.bfloat16),
        # STN3d FC head: 1024 -> 512 -> 256 -> 9     (plain jnp, f32)
        "stn_f1": layer(1024, 512),
        "stn_f2": layer(512, 256),
        "stn_f3": layer(256, 9, with_bn=False),
        # PointNetfeat trunk: in_features -> nf -> 2nf -> 16nf
        "conv1": layer(in_features, nf),             # kept f32: trans gets folded in per batch
        "conv2": layer(nf, nf * 2, dtype=jnp.bfloat16),
        "conv3": layer(nf * 2, nf * 16, dtype=jnp.bfloat16),
    }


# ------------------------------ forward pass -------------------------------- #

def pointnetfeat_forward(x, p, *, tp_target=1024, n_split=None):
    """x: (B, 3, N) float32 (PyTorch NCW).  Returns (global_feat, trans, trans_feat)."""
    B, C, N = x.shape
    assert C == 3, "PointNetfeat's 3x3 input transform requires 3 input channels"

    if n_split is None:
        # v7x has 2 TensorCores/chip: with B == 1 the batch axis can't feed both, so split the
        # point axis into 2 parallel partial-max chunks (no-op on single-TC v5e/v6e).
        n_split = 2 if B == 1 else 1

    xp = jnp.transpose(x, (0, 2, 1)).astype(jnp.bfloat16)        # points-major (B, N, 3), bf16

    # Point-tile selection: prefer a single reduction step per (split, batch) when it fits the
    # tp_target budget; pad N (edge mode -> duplicated points, max unaffected) to tp*tiles.
    tiles_per_split = max(1, math.ceil(N / (tp_target * n_split)))
    tp = _round_up(math.ceil(N / (tiles_per_split * n_split)), 16)
    n_pad = tp * tiles_per_split * n_split
    if n_pad != N:
        xp = jnp.pad(xp, ((0, 0), (0, n_pad - N), (0, 0)), mode="edge")

    # ---- STN3d: fused conv trunk + max over points (single pallas_call) ----
    g = fused_mlp_max(
        xp,
        (p["stn_c1"]["w"][None], p["stn_c1"]["bias"]),
        (p["stn_c2"]["w"], p["stn_c2"]["bias"]),
        (p["stn_c3"]["w"], p["stn_c3"]["bias"]),
        relu_last=True, tp=tp, n_split=n_split)                   # (B, 1024)

    # ---- STN3d FC head: microscopic GEMMs with M == B rows -> plain jnp ----
    h = jnp.maximum(g @ p["stn_f1"]["w"] + p["stn_f1"]["bias"], 0.0)
    h = jnp.maximum(h @ p["stn_f2"]["w"] + p["stn_f2"]["bias"], 0.0)
    h = h @ p["stn_f3"]["w"] + p["stn_f3"]["bias"]                # (B, 9)
    trans = (h + jnp.eye(3, dtype=jnp.float32).reshape(1, 9)).reshape(B, 3, 3)

    # ---- fold the learned 3x3 transform into conv1: (x^T @ trans) @ W1 == x^T @ (trans @ W1)
    w1_eff = jnp.einsum("bij,jk->bik", trans, p["conv1"]["w"]).astype(jnp.bfloat16)  # (B, 3, nf)

    # ---- feature trunk + max over points (single pallas_call) ----
    gfeat = fused_mlp_max(
        xp,
        (w1_eff, p["conv1"]["bias"]),
        (p["conv2"]["w"], p["conv2"]["bias"]),
        (p["conv3"]["w"], p["conv3"]["bias"]),
        relu_last=False, tp=tp, n_split=n_split)                  # (B, 16*nf)

    trans_feat = None   # feature_transform=False; global_feat=True
    return gfeat, trans, trans_feat


# ------------------------- pure-jnp reference (check) ------------------------ #

def _reference_forward(x, p):
    """Pure-jnp reference with the same precision policy (bf16 dot inputs, f32 accumulate)."""
    B, _, N = x.shape
    xp = jnp.transpose(x, (0, 2, 1)).astype(jnp.bfloat16)

    def lin(h, d, relu):
        y = jnp.einsum("...i,io->...o", h.astype(jnp.bfloat16), d["w"].astype(jnp.bfloat16),
                       preferred_element_type=jnp.float32)
        y = y + d["bias"]
        return jnp.maximum(y, 0.0) if relu else y

    h = lin(xp, p["stn_c1"], True)
    h = lin(h, p["stn_c2"], True)
    h = lin(h, p["stn_c3"], True)
    g = jnp.max(h, axis=1)
    g = jnp.maximum(g @ p["stn_f1"]["w"] + p["stn_f1"]["bias"], 0.0)
    g = jnp.maximum(g @ p["stn_f2"]["w"] + p["stn_f2"]["bias"], 0.0)
    g = g @ p["stn_f3"]["w"] + p["stn_f3"]["bias"]
    trans = (g + jnp.eye(3, dtype=jnp.float32).reshape(1, 9)).reshape(B, 3, 3)

    w1_eff = jnp.einsum("bij,jk->bik", trans, p["conv1"]["w"])
    h = jnp.einsum("bni,bio->bno", xp.astype(jnp.bfloat16), w1_eff.astype(jnp.bfloat16),
                   preferred_element_type=jnp.float32)
    h = jnp.maximum(h + p["conv1"]["bias"], 0.0)
    h = lin(h, p["conv2"], True)
    h = lin(h, p["conv3"], False)
    gfeat = jnp.max(h, axis=1)
    return gfeat, trans


# --------------------------------- main -------------------------------------- #

if __name__ == "__main__":
    key = jax.random.PRNGKey(0)
    kx, kp = jax.random.split(key)

    B, N, nf, in_features = 2, 512, 8, 3
    x = jax.random.normal(kx, (B, in_features, N), jnp.float32)
    params = init_params(kp, in_features=in_features, nf=nf)

    # Primary run: tp = full padded N -> single reduction step per batch (grid (1, B, 1)).
    fwd = jax.jit(pointnetfeat_forward)
    gfeat, trans, trans_feat = fwd(x, params)
    jax.block_until_ready((gfeat, trans))

    assert gfeat.shape == (B, nf * 16), gfeat.shape
    assert trans.shape == (B, 3, 3), trans.shape
    assert trans_feat is None

    # Numerical sanity check against a pure-jnp reference with the same precision policy.
    ref_g, ref_t = jax.jit(_reference_forward)(x, params)
    jax.block_until_ready((ref_g, ref_t))
    assert jnp.allclose(trans, ref_t, atol=1e-2, rtol=1e-2)
    assert jnp.allclose(gfeat, ref_g, atol=1e-2, rtol=1e-2)

    # Multi-step reduction path (running max across point tiles) with a small forced tile.
    g2, t2, _ = jax.jit(functools.partial(pointnetfeat_forward, tp_target=128))(x, params)
    jax.block_until_ready((g2, t2))
    assert jnp.allclose(t2, ref_t, atol=1e-2, rtol=1e-2)
    assert jnp.allclose(g2, ref_g, atol=1e-2, rtol=1e-2)

    # B == 1 exercises the 2-way point-split parallel axis (v7x megacore path).
    x1 = x[:1, :, :384]
    g1, t1, _ = jax.jit(pointnetfeat_forward)(x1, params)
    r1g, r1t = jax.jit(_reference_forward)(x1, params)
    jax.block_until_ready((g1, t1, r1g, r1t))
    assert jnp.allclose(t1, r1t, atol=1e-2, rtol=1e-2)
    assert jnp.allclose(g1, r1g, atol=1e-2, rtol=1e-2)

    print("KERNEL_OK")
</pallas_src>

<mosaic_0001>
module attributes {stable_mosaic.version = 11 : i64} {
  func.func @_mlp_max_kernel(%arg0: i32, %arg1: i32, %arg2: i32, %arg3: memref<1x512x3xbf16, #tpu.memory_space<vmem>>, %arg4: memref<1x3x64xbf16, #tpu.memory_space<vmem>>, %arg5: memref<1x64xf32, #tpu.memory_space<vmem>>, %arg6: memref<64x128xbf16, #tpu.memory_space<vmem>>, %arg7: memref<1x128xf32, #tpu.memory_space<vmem>>, %arg8: memref<128x1024xbf16, #tpu.memory_space<vmem>>, %arg9: memref<1x1024xf32, #tpu.memory_space<vmem>>, %arg10: memref<1x1x1x1024xf32, #tpu.memory_space<vmem>>) attributes {dimension_semantics = [#tpu.dimension_semantics<parallel>, #tpu.dimension_semantics<parallel>, #tpu.dimension_semantics<arbitrary>], iteration_bounds = array<i64: 1, 2, 1>, scalar_prefetch = 0 : i64, scratch_operands = 0 : i64, tpu.core_type = #tpu.core_type<tc>, window_params = [{transform_indices = @transform_0, window_bounds = array<i64: 1, 512, 3>}, {pipeline_mode = #tpu.pipeline_mode<synchronous>, transform_indices = @transform_1, window_bounds = array<i64: 1, 3, 64>}, {pipeline_mode = #tpu.pipeline_mode<synchronous>, transform_indices = @transform_2, window_bounds = array<i64: 1, 64>}, {pipeline_mode = #tpu.pipeline_mode<synchronous>, transform_indices = @transform_3, window_bounds = array<i64: 64, 128>}, {pipeline_mode = #tpu.pipeline_mode<synchronous>, transform_indices = @transform_4, window_bounds = array<i64: 1, 128>}, {pipeline_mode = #tpu.pipeline_mode<synchronous>, transform_indices = @transform_5, window_bounds = array<i64: 128, 1024>}, {pipeline_mode = #tpu.pipeline_mode<synchronous>, transform_indices = @transform_6, window_bounds = array<i64: 1, 1024>}, {transform_indices = @transform_7, window_bounds = array<i64: 1, 1, 1, 1024>}]} {
    %c0 = arith.constant 0 : index
    %c0_0 = arith.constant 0 : index
    %c0_1 = arith.constant 0 : index
    %0 = vector.load %arg3[%c0, %c0_0, %c0_1] : memref<1x512x3xbf16, #tpu.memory_space<vmem>>, vector<1x512x3xbf16>
    %1 = vector.shape_cast %0 : vector<1x512x3xbf16> to vector<512x3xbf16>
    %2 = arith.extf %1 : vector<512x3xbf16> to vector<512x3xf32>
    %c0_2 = arith.constant 0 : index
    %c0_3 = arith.constant 0 : index
    %c0_4 = arith.constant 0 : index
    %3 = vector.load %arg4[%c0_2, %c0_3, %c0_4] : memref<1x3x64xbf16, #tpu.memory_space<vmem>>, vector<1x3x64xbf16>
    %4 = vector.shape_cast %3 : vector<1x3x64xbf16> to vector<3x64xbf16>
    %5 = arith.extf %4 : vector<3x64xbf16> to vector<3x64xf32>
    %6 = vector.extract_strided_slice %2 {offsets = [0, 0], sizes = [512, 1], strides = [1, 1]} : vector<512x3xf32> to vector<512x1xf32>
    %7 = vector.extract_strided_slice %5 {offsets = [0, 0], sizes = [1, 64], strides = [1, 1]} : vector<3x64xf32> to vector<1x64xf32>
    %8 = vector.broadcast %6 : vector<512x1xf32> to vector<512x64xf32>
    %9 = vector.broadcast %7 : vector<1x64xf32> to vector<512x64xf32>
    %10 = arith.mulf %8, %9 : vector<512x64xf32>
    %11 = vector.extract_strided_slice %2 {offsets = [0, 1], sizes = [512, 1], strides = [1, 1]} : vector<512x3xf32> to vector<512x1xf32>
    %12 = vector.extract_strided_slice %5 {offsets = [1, 0], sizes = [1, 64], strides = [1, 1]} : vector<3x64xf32> to vector<1x64xf32>
    %13 = vector.broadcast %11 : vector<512x1xf32> to vector<512x64xf32>
    %14 = vector.broadcast %12 : vector<1x64xf32> to vector<512x64xf32>
    %15 = arith.mulf %13, %14 : vector<512x64xf32>
    %16 = arith.addf %10, %15 : vector<512x64xf32>
    %17 = vector.extract_strided_slice %2 {offsets = [0, 2], sizes = [512, 1], strides = [1, 1]} : vector<512x3xf32> to vector<512x1xf32>
    %18 = vector.extract_strided_slice %5 {offsets = [2, 0], sizes = [1, 64], strides = [1, 1]} : vector<3x64xf32> to vector<1x64xf32>
    %19 = vector.broadcast %17 : vector<512x1xf32> to vector<512x64xf32>
    %20 = vector.broadcast %18 : vector<1x64xf32> to vector<512x64xf32>
    %21 = arith.mulf %19, %20 : vector<512x64xf32>
    %22 = arith.addf %16, %21 : vector<512x64xf32>
    %c0_5 = arith.constant 0 : index
    %c0_6 = arith.constant 0 : index
    %23 = vector.load %arg5[%c0_5, %c0_6] : memref<1x64xf32, #tpu.memory_space<vmem>>, vector<1x64xf32>
    %24 = vector.broadcast %23 : vector<1x64xf32> to vector<512x64xf32>
    %25 = arith.addf %22, %24 : vector<512x64xf32>
    %cst = arith.constant 0.000000e+00 : f32
    %26 = vector.broadcast %cst : f32 to vector<512x64xf32>
    %27 = arith.maximumf %25, %26 : vector<512x64xf32>
    %28 = arith.truncf %27 : vector<512x64xf32> to vector<512x64xbf16>
    %c0_7 = arith.constant 0 : index
    %c0_8 = arith.constant 0 : index
    %29 = vector.load %arg6[%c0_7, %c0_8] : memref<64x128xbf16, #tpu.memory_space<vmem>>, vector<64x128xbf16>
    %cst_9 = arith.constant dense<0.000000e+00> : vector<512x128xf32>
    %30 = tpu.matmul %28, %29, %cst_9 {dimension_numbers = #tpu.dot_dimension_numbers<[1], [0], [0], [1], [0, 0, 1, 1], [], []>} : vector<512x64xbf16>, vector<64x128xbf16>, vector<512x128xf32> -> vector<512x128xf32>
    %c0_10 = arith.constant 0 : index
    %c0_11 = arith.constant 0 : index
    %31 = vector.load %arg7[%c0_10, %c0_11] : memref<1x128xf32, #tpu.memory_space<vmem>>, vector<1x128xf32>
    %32 = vector.broadcast %31 : vector<1x128xf32> to vector<512x128xf32>
    %33 = arith.addf %30, %32 : vector<512x128xf32>
    %cst_12 = arith.constant 0.000000e+00 : f32
    %34 = vector.broadcast %cst_12 : f32 to vector<512x128xf32>
    %35 = arith.maximumf %33, %34 : vector<512x128xf32>
    %36 = arith.truncf %35 : vector<512x128xf32> to vector<512x128xbf16>
    %c0_13 = arith.constant 0 : index
    %c0_14 = arith.constant 0 : index
    %37 = vector.load %arg8[%c0_13, %c0_14] : memref<128x1024xbf16, #tpu.memory_space<vmem>>, vector<128x1024xbf16>
    %cst_15 = arith.constant dense<0.000000e+00> : vector<512x1024xf32>
    %38 = tpu.matmul %36, %37, %cst_15 {dimension_numbers = #tpu.dot_dimension_numbers<[1], [0], [0], [1], [0, 0, 1, 1], [], []>} : vector<512x128xbf16>, vector<128x1024xbf16>, vector<512x1024xf32> -> vector<512x1024xf32>
    %c0_16 = arith.constant 0 : index
    %c0_17 = arith.constant 0 : index
    %39 = vector.load %arg9[%c0_16, %c0_17] : memref<1x1024xf32, #tpu.memory_space<vmem>>, vector<1x1024xf32>
    %40 = vector.broadcast %39 : vector<1x1024xf32> to vector<512x1024xf32>
    %41 = arith.addf %38, %40 : vector<512x1024xf32>
    %cst_18 = arith.constant 0.000000e+00 : f32
    %42 = vector.broadcast %cst_18 : f32 to vector<512x1024xf32>
    %43 = arith.maximumf %41, %42 : vector<512x1024xf32>
    %cst_19 = arith.constant dense<0xFF800000> : vector<1024xf32>
    %44 = vector.multi_reduction <maximumf>, %43, %cst_19 [0] : vector<512x1024xf32> to vector<1024xf32>
    %45 = vector.shape_cast %44 : vector<1024xf32> to vector<1x1024xf32>
    %46 = vector.shape_cast %45 : vector<1x1024xf32> to vector<1x1x1x1024xf32>
    %c0_20 = arith.constant 0 : index
    %c0_21 = arith.constant 0 : index
    %c0_22 = arith.constant 0 : index
    %c0_23 = arith.constant 0 : index
    %47 = vector.load %arg10[%c0_20, %c0_21, %c0_22, %c0_23] : memref<1x1x1x1024xf32, #tpu.memory_space<vmem>>, vector<1x1x1x1024xf32>
    tpu.vector_store %arg10[%c0_20, %c0_21, %c0_22, %c0_23], %46 {strides = array<i32>} : memref<1x1x1x1024xf32, #tpu.memory_space<vmem>>, vector<1x1x1x1024xf32>,
    return
  }
  func.func @transform_0(%arg0: i32, %arg1: i32, %arg2: i32) -> (i32, i32, i32) {
    %c1_i32 = arith.constant 1 : i32
    %0 = arith.muli %arg0, %c1_i32 : i32
    %1 = arith.addi %0, %arg2 : i32
    %c0_i32 = arith.constant 0 : i32
    %c0_i32_0 = arith.constant 0 : i32
    return %arg1, %1, %c0_i32 : i32, i32, i32
  }
  func.func @transform_1(%arg0: i32, %arg1: i32, %arg2: i32) -> (i32, i32, i32) {
    %c0_i32 = arith.constant 0 : i32
    %c0_i32_0 = arith.constant 0 : i32
    %c0_i32_1 = arith.constant 0 : i32
    %c0_i32_2 = arith.constant 0 : i32
    return %c0_i32, %c0_i32_0, %c0_i32_1 : i32, i32, i32
  }
  func.func @transform_2(%arg0: i32, %arg1: i32, %arg2: i32) -> (i32, i32) {
    %c0_i32 = arith.constant 0 : i32
    %c0_i32_0 = arith.constant 0 : i32
    %c0_i32_1 = arith.constant 0 : i32
    return %c0_i32, %c0_i32_0 : i32, i32
  }
  func.func @transform_3(%arg0: i32, %arg1: i32, %arg2: i32) -> (i32, i32) {
    %c0_i32 = arith.constant 0 : i32
    %c0_i32_0 = arith.constant 0 : i32
    %c0_i32_1 = arith.constant 0 : i32
    return %c0_i32, %c0_i32_0 : i32, i32
  }
  func.func @transform_4(%arg0: i32, %arg1: i32, %arg2: i32) -> (i32, i32) {
    %c0_i32 = arith.constant 0 : i32
    %c0_i32_0 = arith.constant 0 : i32
    %c0_i32_1 = arith.constant 0 : i32
    return %c0_i32, %c0_i32_0 : i32, i32
  }
  func.func @transform_5(%arg0: i32, %arg1: i32, %arg2: i32) -> (i32, i32) {
    %c0_i32 = arith.constant 0 : i32
    %c0_i32_0 = arith.constant 0 : i32
    %c0_i32_1 = arith.constant 0 : i32
    return %c0_i32, %c0_i32_0 : i32, i32
  }
  func.func @transform_6(%arg0: i32, %arg1: i32, %arg2: i32) -> (i32, i32) {
    %c0_i32 = arith.constant 0 : i32
    %c0_i32_0 = arith.constant 0 : i32
    %c0_i32_1 = arith.constant 0 : i32
    return %c0_i32, %c0_i32_0 : i32, i32
  }
  func.func @transform_7(%arg0: i32, %arg1: i32, %arg2: i32) -> (i32, i32, i32, i32) {
    %c0_i32 = arith.constant 0 : i32
    %c0_i32_0 = arith.constant 0 : i32
    %c0_i32_1 = arith.constant 0 : i32
    return %arg0, %arg1, %c0_i32, %c0_i32_0 : i32, i32, i32, i32
  }
}

module attributes {stable_mosaic.version = 11 : i64} {
  func.func @_mlp_max_kernel(%arg0: i32, %arg1: i32, %arg2: i32, %arg3: memref<1x512x3xbf16, #tpu.memory_space<vmem>>, %arg4: memref<1x3x8xbf16, #tpu.memory_space<vmem>>, %arg5: memref<1x8xf32, #tpu.memory_space<vmem>>, %arg6: memref<8x16xbf16, #tpu.memory_space<vmem>>, %arg7: memref<1x16xf32, #tpu.memory_space<vmem>>, %arg8: memref<16x128xbf16, #tpu.memory_space<vmem>>, %arg9: memref<1x128xf32, #tpu.memory_space<vmem>>, %arg10: memref<1x1x1x128xf32, #tpu.memory_space<vmem>>) attributes {dimension_semantics = [#tpu.dimension_semantics<parallel>, #tpu.dimension_semantics<parallel>, #tpu.dimension_semantics<arbitrary>], iteration_bounds = array<i64: 1, 2, 1>, scalar_prefetch = 0 : i64, scratch_operands = 0 : i64, tpu.core_type = #tpu.core_type<tc>, window_params = [{transform_indices = @transform_0, window_bounds = array<i64: 1, 512, 3>}, {transform_indices = @transform_1, window_bounds = array<i64: 1, 3, 8>}, {pipeline_mode = #tpu.pipeline_mode<synchronous>, transform_indices = @transform_2, window_bounds = array<i64: 1, 8>}, {pipeline_mode = #tpu.pipeline_mode<synchronous>, transform_indices = @transform_3, window_bounds = array<i64: 8, 16>}, {pipeline_mode = #tpu.pipeline_mode<synchronous>, transform_indices = @transform_4, window_bounds = array<i64: 1, 16>}, {pipeline_mode = #tpu.pipeline_mode<synchronous>, transform_indices = @transform_5, window_bounds = array<i64: 16, 128>}, {pipeline_mode = #tpu.pipeline_mode<synchronous>, transform_indices = @transform_6, window_bounds = array<i64: 1, 128>}, {transform_indices = @transform_7, window_bounds = array<i64: 1, 1, 1, 128>}]} {
    %c0 = arith.constant 0 : index
    %c0_0 = arith.constant 0 : index
    %c0_1 = arith.constant 0 : index
    %0 = vector.load %arg3[%c0, %c0_0, %c0_1] : memref<1x512x3xbf16, #tpu.memory_space<vmem>>, vector<1x512x3xbf16>
    %1 = vector.shape_cast %0 : vector<1x512x3xbf16> to vector<512x3xbf16>
    %2 = arith.extf %1 : vector<512x3xbf16> to vector<512x3xf32>
    %c0_2 = arith.constant 0 : index
    %c0_3 = arith.constant 0 : index
    %c0_4 = arith.constant 0 : index
    %3 = vector.load %arg4[%c0_2, %c0_3, %c0_4] : memref<1x3x8xbf16, #tpu.memory_space<vmem>>, vector<1x3x8xbf16>
    %4 = vector.shape_cast %3 : vector<1x3x8xbf16> to vector<3x8xbf16>
    %5 = arith.extf %4 : vector<3x8xbf16> to vector<3x8xf32>
    %6 = vector.extract_strided_slice %2 {offsets = [0, 0], sizes = [512, 1], strides = [1, 1]} : vector<512x3xf32> to vector<512x1xf32>
    %7 = vector.extract_strided_slice %5 {offsets = [0, 0], sizes = [1, 8], strides = [1, 1]} : vector<3x8xf32> to vector<1x8xf32>
    %8 = vector.broadcast %6 : vector<512x1xf32> to vector<512x8xf32>
    %9 = vector.broadcast %7 : vector<1x8xf32> to vector<512x8xf32>
    %10 = arith.mulf %8, %9 : vector<512x8xf32>
    %11 = vector.extract_strided_slice %2 {offsets = [0, 1], sizes = [512, 1], strides = [1, 1]} : vector<512x3xf32> to vector<512x1xf32>
    %12 = vector.extract_strided_slice %5 {offsets = [1, 0], sizes = [1, 8], strides = [1, 1]} : vector<3x8xf32> to vector<1x8xf32>
    %13 = vector.broadcast %11 : vector<512x1xf32> to vector<512x8xf32>
    %14 = vector.broadcast %12 : vector<1x8xf32> to vector<512x8xf32>
    %15 = arith.mulf %13, %14 : vector<512x8xf32>
    %16 = arith.addf %10, %15 : vector<512x8xf32>
    %17 = vector.extract_strided_slice %2 {offsets = [0, 2], sizes = [512, 1], strides = [1, 1]} : vector<512x3xf32> to vector<512x1xf32>
    %18 = vector.extract_strided_slice %5 {offsets = [2, 0], sizes = [1, 8], strides = [1, 1]} : vector<3x8xf32> to vector<1x8xf32>
    %19 = vector.broadcast %17 : vector<512x1xf32> to vector<512x8xf32>
    %20 = vector.broadcast %18 : vector<1x8xf32> to vector<512x8xf32>
    %21 = arith.mulf %19, %20 : vector<512x8xf32>
    %22 = arith.addf %16, %21 : vector<512x8xf32>
    %c0_5 = arith.constant 0 : index
    %c0_6 = arith.constant 0 : index
    %23 = vector.load %arg5[%c0_5, %c0_6] : memref<1x8xf32, #tpu.memory_space<vmem>>, vector<1x8xf32>
    %24 = vector.broadcast %23 : vector<1x8xf32> to vector<512x8xf32>
    %25 = arith.addf %22, %24 : vector<512x8xf32>
    %cst = arith.constant 0.000000e+00 : f32
    %26 = vector.broadcast %cst : f32 to vector<512x8xf32>
    %27 = arith.maximumf %25, %26 : vector<512x8xf32>
    %28 = arith.truncf %27 : vector<512x8xf32> to vector<512x8xbf16>
    %c0_7 = arith.constant 0 : index
    %c0_8 = arith.constant 0 : index
    %29 = vector.load %arg6[%c0_7, %c0_8] : memref<8x16xbf16, #tpu.memory_space<vmem>>, vector<8x16xbf16>
    %cst_9 = arith.constant dense<0.000000e+00> : vector<512x16xf32>
    %30 = tpu.matmul %28, %29, %cst_9 {dimension_numbers = #tpu.dot_dimension_numbers<[1], [0], [0], [1], [0, 0, 1, 1], [], []>} : vector<512x8xbf16>, vector<8x16xbf16>, vector<512x16xf32> -> vector<512x16xf32>
    %c0_10 = arith.constant 0 : index
    %c0_11 = arith.constant 0 : index
    %31 = vector.load %arg7[%c0_10, %c0_11] : memref<1x16xf32, #tpu.memory_space<vmem>>, vector<1x16xf32>
    %32 = vector.broadcast %31 : vector<1x16xf32> to vector<512x16xf32>
    %33 = arith.addf %30, %32 : vector<512x16xf32>
    %cst_12 = arith.constant 0.000000e+00 : f32
    %34 = vector.broadcast %cst_12 : f32 to vector<512x16xf32>
    %35 = arith.maximumf %33, %34 : vector<512x16xf32>
    %36 = arith.truncf %35 : vector<512x16xf32> to vector<512x16xbf16>
    %c0_13 = arith.constant 0 : index
    %c0_14 = arith.constant 0 : index
    %37 = vector.load %arg8[%c0_13, %c0_14] : memref<16x128xbf16, #tpu.memory_space<vmem>>, vector<16x128xbf16>
    %cst_15 = arith.constant dense<0.000000e+00> : vector<512x128xf32>
    %38 = tpu.matmul %36, %37, %cst_15 {dimension_numbers = #tpu.dot_dimension_numbers<[1], [0], [0], [1], [0, 0, 1, 1], [], []>} : vector<512x16xbf16>, vector<16x128xbf16>, vector<512x128xf32> -> vector<512x128xf32>
    %c0_16 = arith.constant 0 : index
    %c0_17 = arith.constant 0 : index
    %39 = vector.load %arg9[%c0_16, %c0_17] : memref<1x128xf32, #tpu.memory_space<vmem>>, vector<1x128xf32>
    %40 = vector.broadcast %39 : vector<1x128xf32> to vector<512x128xf32>
    %41 = arith.addf %38, %40 : vector<512x128xf32>
    %cst_18 = arith.constant dense<0xFF800000> : vector<128xf32>
    %42 = vector.multi_reduction <maximumf>, %41, %cst_18 [0] : vector<512x128xf32> to vector<128xf32>
    %43 = vector.shape_cast %42 : vector<128xf32> to vector<1x128xf32>
    %44 = vector.shape_cast %43 : vector<1x128xf32> to vector<1x1x1x128xf32>
    %c0_19 = arith.constant 0 : index
    %c0_20 = arith.constant 0 : index
    %c0_21 = arith.constant 0 : index
    %c0_22 = arith.constant 0 : index
    %45 = vector.load %arg10[%c0_19, %c0_20, %c0_21, %c0_22] : memref<1x1x1x128xf32, #tpu.memory_space<vmem>>, vector<1x1x1x128xf32>
    tpu.vector_store %arg10[%c0_19, %c0_20, %c0_21, %c0_22], %44 {strides = array<i32>} : memref<1x1x1x128xf32, #tpu.memory_space<vmem>>, vector<1x1x1x128xf32>,
    return
  }
  func.func @transform_0(%arg0: i32, %arg1: i32, %arg2: i32) -> (i32, i32, i32) {
    %c1_i32 = arith.constant 1 : i32
    %0 = arith.muli %arg0, %c1_i32 : i32
    %1 = arith.addi %0, %arg2 : i32
    %c0_i32 = arith.constant 0 : i32
    %c0_i32_0 = arith.constant 0 : i32
    return %arg1, %1, %c0_i32 : i32, i32, i32
  }
  func.func @transform_1(%arg0: i32, %arg1: i32, %arg2: i32) -> (i32, i32, i32) {
    %c0_i32 = arith.constant 0 : i32
    %c0_i32_0 = arith.constant 0 : i32
    %c0_i32_1 = arith.constant 0 : i32
    return %arg1, %c0_i32, %c0_i32_0 : i32, i32, i32
  }
  func.func @transform_2(%arg0: i32, %arg1: i32, %arg2: i32) -> (i32, i32) {
    %c0_i32 = arith.constant 0 : i32
    %c0_i32_0 = arith.constant 0 : i32
    %c0_i32_1 = arith.constant 0 : i32
    return %c0_i32, %c0_i32_0 : i32, i32
  }
  func.func @transform_3(%arg0: i32, %arg1: i32, %arg2: i32) -> (i32, i32) {
    %c0_i32 = arith.constant 0 : i32
    %c0_i32_0 = arith.constant 0 : i32
    %c0_i32_1 = arith.constant 0 : i32
    return %c0_i32, %c0_i32_0 : i32, i32
  }
  func.func @transform_4(%arg0: i32, %arg1: i32, %arg2: i32) -> (i32, i32) {
    %c0_i32 = arith.constant 0 : i32
    %c0_i32_0 = arith.constant 0 : i32
    %c0_i32_1 = arith.constant 0 : i32
    return %c0_i32, %c0_i32_0 : i32, i32
  }
  func.func @transform_5(%arg0: i32, %arg1: i32, %arg2: i32) -> (i32, i32) {
    %c0_i32 = arith.constant 0 : i32
    %c0_i32_0 = arith.constant 0 : i32
    %c0_i32_1 = arith.constant 0 : i32
    return %c0_i32, %c0_i32_0 : i32, i32
  }
  func.func @transform_6(%arg0: i32, %arg1: i32, %arg2: i32) -> (i32, i32) {
    %c0_i32 = arith.constant 0 : i32
    %c0_i32_0 = arith.constant 0 : i32
    %c0_i32_1 = arith.constant 0 : i32
    return %c0_i32, %c0_i32_0 : i32, i32
  }
  func.func @transform_7(%arg0: i32, %arg1: i32, %arg2: i32) -> (i32, i32, i32, i32) {
    %c0_i32 = arith.constant 0 : i32
    %c0_i32_0 = arith.constant 0 : i32
    %c0_i32_1 = arith.constant 0 : i32
    return %arg0, %arg1, %c0_i32, %c0_i32_0 : i32, i32, i32, i32
  }
}

</mosaic_0001>

<llo_original>
// kernel: pointnetfeat_forward.3
$region0: #{pointnetfeat_forward.3}
  #allocation0 [shape = 'u32[]', space=smem, size = 0x4, offset = 0x4, fixed_abs, tag = 'smem constant byte address 0x4 - core index']
  #allocation1 [shape = 'u32[144,128]{1,0:T(1,128)}', space=vmem, size = 0x12000, scoped, tag = 'internal scratch']
  %s0 = inlined_call_operand.vmem [shape: bf16[2,512,3], index: 0, kind: input, shape index: {}]
  %s1 = inlined_call_operand.vmem [shape: bf16[2,3,8], index: 1, kind: input, shape index: {}]
  %s2 = inlined_call_operand.vmem [shape: f32[1,8], index: 2, kind: input, shape index: {}]
  %s3 = inlined_call_operand.vmem [shape: bf16[8,16], index: 3, kind: input, shape index: {}]
  %s4 = inlined_call_operand.vmem [shape: f32[1,16], index: 4, kind: input, shape index: {}]
  %s5 = inlined_call_operand.vmem [shape: bf16[16,128], index: 5, kind: input, shape index: {}]
  %s6 = inlined_call_operand.vmem [shape: f32[1,128], index: 6, kind: input, shape index: {}]
  %s7 = inlined_call_operand.hbm [shape: f32[1,2,1,128], index: 7, kind: output, shape index: {}]
  %s8 = sld [smem:[#allocation0]]
  $region61: #{pointnetfeat_forward.3} parent=0
    _
  %s10 = ssub.s32 1, %s8
  %s11 = scalar_select 0, %s10, %s8
  $region1: #{pointnetfeat_forward.3} parent=0
    #allocation2 [shape = 'u8[1024]{0}', space=vmem, size = 0x400, scoped, tag = 'output window, operand 0']
    #allocation3 [shape = 's32[2]{0}', space=sflag, size = 0x8, scoped, tag = 'scoped memory for pointnetfeat_forward.3']
    %12 = vsyncpa [#allocation3], 0
    %s13 = scalar_lea.sflag [#allocation3], 1
    %14 = vsyncpa %s13, 0
    loop: start=0, step=1, limit=4
    $region2: #{pointnetfeat_forward.3} parent=1 // loop_pre_header
      _
    $region3: #{pointnetfeat_forward.3} parent=1 // loop_header
      %s16 = sphi 0, %s20
      %p17 = scmp.ge.s32.totalorder %s16, 4
      %s23 = sphi 0, %s42
      %s24 = sphi 0, %s38
      %s25 = sphi 0, %s34
      %s26 = sphi 0, %s23
      %s27 = sphi 0, %s24
      %s28 = sphi 0, %s25
      %s29 = sphi 0, %s26
      %s30 = sphi 0, %s27
      %s31 = sphi 0, %s28
      %s49 = sphi 0, %s51
      %s52 = sphi 0, %s49
      %s53 = sphi 0, %s52
      %s69 = sphi 0, %s53
      %s75 = sphi 0, %s77
      %s78 = sphi 0, %s75
      %s79 = sphi 0, %s78
      %s95 = sphi 0, %s79
      %s99 = sphi 0, %s99
      %s101 = sphi 0, %s99
      %s102 = sphi 0, %s101
      %s116 = sphi 0, %s102
      %s120 = sphi 0, %s120
      %s122 = sphi 0, %s120
      %s123 = sphi 0, %s122
      %s137 = sphi 0, %s123
      %s141 = sphi 0, %s141
      %s143 = sphi 0, %s141
      %s144 = sphi 0, %s143
      %s158 = sphi 0, %s144
      %s162 = sphi 0, %s162
      %s164 = sphi 0, %s162
      %s165 = sphi 0, %s164
      %s179 = sphi 0, %s165
      %s183 = sphi 0, %s183
      %s185 = sphi 0, %s183
      %s186 = sphi 0, %s185
      %s200 = sphi 0, %s186
      %s208 = sphi 0, %s210
      %s211 = sphi 0, %s208
      %s212 = sphi 0, %s211
      %s228 = sphi 0, %s212
    $region4: #{pointnetfeat_forward.3} parent=1 // loop_header_branch
      %19 = sbr.rel (%p17) target = $region8
    $region5: #{pointnetfeat_forward.3} parent=1 // loop_body
      %s21 = ssub.s32 %s16, 1
      %s22 = ssub.s32 %s16, 2
      %s32 = sadd.s32 1, %s25
      %p33 = scmp.ge.s32.totalorder %s32, 1
      %s34 = scalar_select %p33, 0, %s32
      %s35 = sadd.s32 1, %s24
      %s36 = scalar_select %p33, %s35, %s24
      %p37 = scmp.ge.s32.totalorder %s36, 2
      %s38 = scalar_select %p37, 0, %s36
      %s39 = sadd.s32 1, %s23
      %s40 = scalar_select %p37, %s39, %s23
      %p41 = scmp.ge.s32.totalorder %s40, 1
      %s42 = scalar_select %p41, 0, %s40
      %s43 = sadd.s32 %s23, %s25
      %s44 = sadd.s32 %s42, %s34
      %s45 = ssub.s32 %s24, %s38
      %s46 = ssub.s32 %s43, %s44
      %s47 = sor.u32 %s45, %s46
      %p48 = scmp.eq.s32.totalorder %s47, 0
      %s50 = sadd.s32 %s49, 1
      %s51 = scalar_select %p48, %s49, %s50
      %p54 = pneg %p48
      %p55 = scmp.eq.s32.totalorder %s16, 1
      %p56 = por %p54, %p55
      %p57 = scmp.ne.s32.totalorder %s49, %s52
      %p58 = scmp.eq.s32.totalorder %s16, 0
      %p59 = por %p57, %p58
      %p60 = scmp.ne.s32.totalorder %s49, %s52
      %p61 = scmp.eq.s32.totalorder %s21, 1
      %p62 = por %p60, %p61
      %p63 = scmp.ne.s32.totalorder %s52, %s53
      %p64 = scmp.eq.s32.totalorder %s21, 0
      %p65 = por %p63, %p64
      %p66 = scmp.ne.s32.totalorder %s52, %s53
      %p67 = scmp.eq.s32.totalorder %s22, 1
      %p68 = por %p66, %p67
      %p70 = scmp.ne.s32.totalorder %s53, %s69
      %p71 = scmp.eq.s32.totalorder %s22, 0
      %p72 = por %p70, %p71
      %s73 = ssub.s32 %s24, %s38
      %p74 = scmp.eq.s32.totalorder %s73, 0
      %s76 = sadd.s32 %s75, 1
      %s77 = scalar_select %p74, %s75, %s76
      %p80 = pneg %p74
      %p81 = scmp.eq.s32.totalorder %s16, 1
      %p82 = por %p80, %p81
      %p83 = scmp.ne.s32.totalorder %s75, %s78
      %p84 = scmp.eq.s32.totalorder %s16, 0
      %p85 = por %p83, %p84
      %p86 = scmp.ne.s32.totalorder %s75, %s78
      %p87 = scmp.eq.s32.totalorder %s21, 1
      %p88 = por %p86, %p87
      %p89 = scmp.ne.s32.totalorder %s78, %s79
      %p90 = scmp.eq.s32.totalorder %s21, 0
      %p91 = por %p89, %p90
      %p92 = scmp.ne.s32.totalorder %s78, %s79
      %p93 = scmp.eq.s32.totalorder %s22, 1
      %p94 = por %p92, %p93
      %p96 = scmp.ne.s32.totalorder %s79, %s95
      %p97 = scmp.eq.s32.totalorder %s22, 0
      %p98 = por %p96, %p97
      %s100 = sadd.s32 %s99, 1
      %p103 = scmp.eq.s32.totalorder %s16, 1
      %p104 = scmp.ne.s32.totalorder %s99, %s101
      %p105 = scmp.eq.s32.totalorder %s16, 0
      %p106 = por %p104, %p105
      %p107 = scmp.ne.s32.totalorder %s99, %s101
      %p108 = scmp.eq.s32.totalorder %s21, 1
      %p109 = por %p107, %p108
      %p110 = scmp.ne.s32.totalorder %s101, %s102
      %p111 = scmp.eq.s32.totalorder %s21, 0
      %p112 = por %p110, %p111
      %p113 = scmp.ne.s32.totalorder %s101, %s102
      %p114 = scmp.eq.s32.totalorder %s22, 1
      %p115 = por %p113, %p114
      %p117 = scmp.ne.s32.totalorder %s102, %s116
      %p118 = scmp.eq.s32.totalorder %s22, 0
      %p119 = por %p117, %p118
      %s121 = sadd.s32 %s120, 1
      %p124 = scmp.eq.s32.totalorder %s16, 1
      %p125 = scmp.ne.s32.totalorder %s120, %s122
      %p126 = scmp.eq.s32.totalorder %s16, 0
      %p127 = por %p125, %p126
      %p128 = scmp.ne.s32.totalorder %s120, %s122
      %p129 = scmp.eq.s32.totalorder %s21, 1
      %p130 = por %p128, %p129
      %p131 = scmp.ne.s32.totalorder %s122, %s123
      %p132 = scmp.eq.s32.totalorder %s21, 0
      %p133 = por %p131, %p132
      %p134 = scmp.ne.s32.totalorder %s122, %s123
      %p135 = scmp.eq.s32.totalorder %s22, 1
      %p136 = por %p134, %p135
      %p138 = scmp.ne.s32.totalorder %s123, %s137
      %p139 = scmp.eq.s32.totalorder %s22, 0
      %p140 = por %p138, %p139
      %s142 = sadd.s32 %s141, 1
      %p145 = scmp.eq.s32.totalorder %s16, 1
      %p146 = scmp.ne.s32.totalorder %s141, %s143
      %p147 = scmp.eq.s32.totalorder %s16, 0
      %p148 = por %p146, %p147
      %p149 = scmp.ne.s32.totalorder %s141, %s143
      %p150 = scmp.eq.s32.totalorder %s21, 1
      %p151 = por %p149, %p150
      %p152 = scmp.ne.s32.totalorder %s143, %s144
      %p153 = scmp.eq.s32.totalorder %s21, 0
      %p154 = por %p152, %p153
      %p155 = scmp.ne.s32.totalorder %s143, %s144
      %p156 = scmp.eq.s32.totalorder %s22, 1
      %p157 = por %p155, %p156
      %p159 = scmp.ne.s32.totalorder %s144, %s158
      %p160 = scmp.eq.s32.totalorder %s22, 0
      %p161 = por %p159, %p160
      %s163 = sadd.s32 %s162, 1
      %p166 = scmp.eq.s32.totalorder %s16, 1
      %p167 = scmp.ne.s32.totalorder %s162, %s164
      %p168 = scmp.eq.s32.totalorder %s16, 0
      %p169 = por %p167, %p168
      %p170 = scmp.ne.s32.totalorder %s162, %s164
      %p171 = scmp.eq.s32.totalorder %s21, 1
      %p172 = por %p170, %p171
      %p173 = scmp.ne.s32.totalorder %s164, %s165
      %p174 = scmp.eq.s32.totalorder %s21, 0
      %p175 = por %p173, %p174
      %p176 = scmp.ne.s32.totalorder %s164, %s165
      %p177 = scmp.eq.s32.totalorder %s22, 1
      %p178 = por %p176, %p177
      %p180 = scmp.ne.s32.totalorder %s165, %s179
      %p181 = scmp.eq.s32.totalorder %s22, 0
      %p182 = por %p180, %p181
      %s184 = sadd.s32 %s183, 1
      %p187 = scmp.eq.s32.totalorder %s16, 1
      %p188 = scmp.ne.s32.totalorder %s183, %s185
      %p189 = scmp.eq.s32.totalorder %s16, 0
      %p190 = por %p188, %p189
      %p191 = scmp.ne.s32.totalorder %s183, %s185
      %p192 = scmp.eq.s32.totalorder %s21, 1
      %p193 = por %p191, %p192
      %p194 = scmp.ne.s32.totalorder %s185, %s186
      %p195 = scmp.eq.s32.totalorder %s21, 0
      %p196 = por %p194, %p195
      %p197 = scmp.ne.s32.totalorder %s185, %s186
      %p198 = scmp.eq.s32.totalorder %s22, 1
      %p199 = por %p197, %p198
      %p201 = scmp.ne.s32.totalorder %s186, %s200
      %p202 = scmp.eq.s32.totalorder %s22, 0
      %p203 = por %p201, %p202
      %s204 = ssub.s32 %s23, %s42
      %s205 = ssub.s32 %s24, %s38
      %s206 = sor.u32 %s204, %s205
      %p207 = scmp.eq.s32.totalorder %s206, 0
      %s209 = sadd.s32 %s208, 1
      %s210 = scalar_select %p207, %s208, %s209
      %p213 = pneg %p207
      %p214 = scmp.eq.s32.totalorder %s16, 1
      %p215 = por %p213, %p214
      %p216 = scmp.ne.s32.totalorder %s208, %s211
      %p217 = scmp.eq.s32.totalorder %s16, 0
      %p218 = por %p216, %p217
      %p219 = scmp.ne.s32.totalorder %s208, %s211
      %p220 = scmp.eq.s32.totalorder %s21, 1
      %p221 = por %p219, %p220
      %p222 = scmp.ne.s32.totalorder %s211, %s212
      %p223 = scmp.eq.s32.totalorder %s21, 0
      %p224 = por %p222, %p223
      %p225 = scmp.ne.s32.totalorder %s211, %s212
      %p226 = scmp.eq.s32.totalorder %s22, 1
      %p227 = por %p225, %p226
      %p229 = scmp.ne.s32.totalorder %s212, %s228
      %p230 = scmp.eq.s32.totalorder %s22, 0
      %p231 = por %p229, %p230
      %p232 = scmp.le.s32.totalorder 1, %s16
      %p233 = scmp.lt.s32.totalorder %s16, 3
      %p234 = pnand %p232, %p233
      %p235 = pneg %p234
      // Predicated region
      $region9: #{pointnetfeat_forward.3} parent=5 // pred_check
        _
      $region10: #{pointnetfeat_forward.3} parent=5 // pred_check_branch
        %237 = sbr.rel (%p234) target = $region12
      $region11: #{pointnetfeat_forward.3} parent=5 // pred_region
        %s238 = ssub.s32 %s16, 1
        // Predicated region
        $region13: #{pointnetfeat_forward.3} parent=11 // pred_check
          %p239 = pneg %p112
        $region14: #{pointnetfeat_forward.3} parent=11 // pred_check_branch
          %241 = sbr.rel (%p239) target = $region16
        $region15: #{pointnetfeat_forward.3} parent=11 // pred_region
          _
        $region16: #{pointnetfeat_forward.3} parent=11 // pred_fallthru
          _
        // Predicated region
        $region17: #{pointnetfeat_forward.3} parent=11 // pred_check
          %p242 = pneg %p133
        $region18: #{pointnetfeat_forward.3} parent=11 // pred_check_branch
          %244 = sbr.rel (%p242) target = $region20
        $region19: #{pointnetfeat_forward.3} parent=11 // pred_region
          _
        $region20: #{pointnetfeat_forward.3} parent=11 // pred_fallthru
          _
        // Predicated region
        $region21: #{pointnetfeat_forward.3} parent=11 // pred_check
          %p245 = pneg %p154
        $region22: #{pointnetfeat_forward.3} parent=11 // pred_check_branch
          %247 = sbr.rel (%p245) target = $region24
        $region23: #{pointnetfeat_forward.3} parent=11 // pred_region
          _
        $region24: #{pointnetfeat_forward.3} parent=11 // pred_fallthru
          _
        // Predicated region
        $region25: #{pointnetfeat_forward.3} parent=11 // pred_check
          %p248 = pneg %p175
        $region26: #{pointnetfeat_forward.3} parent=11 // pred_check_branch
          %250 = sbr.rel (%p248) target = $region28
        $region27: #{pointnetfeat_forward.3} parent=11 // pred_region
          _
        $region28: #{pointnetfeat_forward.3} parent=11 // pred_fallthru
          _
        // Predicated region
        $region29: #{pointnetfeat_forward.3} parent=11 // pred_check
          %p251 = pneg %p196
        $region30: #{pointnetfeat_forward.3} parent=11 // pred_check_branch
          %253 = sbr.rel (%p251) target = $region32
        $region31: #{pointnetfeat_forward.3} parent=11 // pred_region
          _
        $region32: #{pointnetfeat_forward.3} parent=11 // pred_fallthru
          _
      $region12: #{pointnetfeat_forward.3} parent=5 // pred_fallthru
        _
      %p254 = scmp.lt.s32.totalorder %s16, 2
      // Predicated region
      $region33: #{pointnetfeat_forward.3} parent=5 // pred_check
        %p255 = pneg %p254
      $region34: #{pointnetfeat_forward.3} parent=5 // pred_check_branch
        %257 = sbr.rel (%p255) target = $region36
      $region35: #{pointnetfeat_forward.3} parent=5 // pred_region
        // Predicated region
        $region37: #{pointnetfeat_forward.3} parent=35 // pred_check
          %p258 = pneg %p59
        $region38: #{pointnetfeat_forward.3} parent=35 // pred_check_branch
          %260 = sbr.rel (%p258) target = $region40
        $region39: #{pointnetfeat_forward.3} parent=35 // pred_region
          %s261 = sadd.s32 %s23, %s25
          %s262 = smul.u32 64, %s261
          %p263 = scmp.lt.s32.totalorder %s24, 1
          %s264 = scalar_select %p263, %s24, 1
          %p265 = scmp.lt.s32.totalorder %s262, 63
          %s266 = scalar_select %p265, %s262, 63
          %s267 = smul.addr %s264, 64
          %s268 = sadd.s32 %s266, %s267
          %s269 = smul.addr %s268, 4
          %s270 = scalar_lea.vmem %s0, %s269
          %s271 = sadd.s32 %s23, %s25
          %s272 = smul.u32 64, %s271
        $region40: #{pointnetfeat_forward.3} parent=35 // pred_fallthru
          _
        // Predicated region
        $region41: #{pointnetfeat_forward.3} parent=35 // pred_check
          %p273 = pneg %p85
        $region42: #{pointnetfeat_forward.3} parent=35 // pred_check_branch
          %275 = sbr.rel (%p273) target = $region44
        $region43: #{pointnetfeat_forward.3} parent=35 // pred_region
          %p276 = scmp.lt.s32.totalorder %s24, 1
          %s277 = scalar_select %p276, %s24, 1
          %s278 = smul.addr %s277, 2
          %s279 = scalar_lea.vmem %s1, %s278
        $region44: #{pointnetfeat_forward.3} parent=35 // pred_fallthru
          _
      $region36: #{pointnetfeat_forward.3} parent=5 // pred_fallthru
        _
      %p280 = scmp.le.s32.totalorder 1, %s16
      %p281 = scmp.lt.s32.totalorder %s16, 3
      %p282 = pnand %p280, %p281
      %p283 = pneg %p282
      // Predicated region
      $region45: #{pointnetfeat_forward.3} parent=5 // pred_check
        _
      $region46: #{pointnetfeat_forward.3} parent=5 // pred_check_branch
        %285 = sbr.rel (%p282) target = $region48
      $region47: #{pointnetfeat_forward.3} parent=5 // pred_region
        %s286 = ssub.s32 %s16, 1
        %s287 = sadd.s32 %s26, %s28
        %s288 = smul.u32 64, %s287
        %p289 = scmp.lt.s32.totalorder %s27, 1
        %s290 = scalar_select %p289, %s27, 1
        %p291 = scmp.lt.s32.totalorder %s288, 63
        %s292 = scalar_select %p291, %s288, 63
        %s293 = smul.addr %s290, 64
        %s294 = sadd.s32 %s292, %s293
        %s295 = smul.addr %s294, 4
        %s296 = scalar_lea.vmem %s0, %s295
        %p297 = pneg %p65
        %p298 = pneg %p62
        %p299 = scmp.lt.s32.totalorder %s27, 1
        %s300 = scalar_select %p299, %s27, 1
        %s301 = smul.addr %s300, 2
        %s302 = scalar_lea.vmem %s1, %s301
        %p303 = pneg %p91
        %p304 = pneg %p88
        %p305 = pneg %p112
        %p306 = pneg %p109
        %p307 = pneg %p133
        %p308 = pneg %p130
        %p309 = pneg %p154
        %p310 = pneg %p151
        %p311 = pneg %p175
        %p312 = pneg %p172
        %p313 = pneg %p196
        %p314 = pneg %p193
        %p315 = pneg %p224
        %p316 = pneg %p221
        %s317 = sand.u32 %s211, 1
        %s318 = scalar_lea.sflag [#allocation3], %s317
        %s319 = sand.u32 %s211, 1
        %s320 = scalar_lea.vmem [#allocation2], %s319
        %s321 = sadd.s32 %s26, %s28
        %s322 = smul.u32 64, %s321
        %p323 = scmp.lt.s32.totalorder %s27, 1
        %s324 = scalar_select %p323, %s27, 1
        %p325 = scmp.lt.s32.totalorder %s322, 63
        %s326 = scalar_select %p325, %s322, 63
        %s327 = smul.addr %s324, 64
        %s328 = sadd.s32 %s326, %s327
        %s329 = smul.addr %s328, 4
        %s330 = scalar_lea.vmem %s0, %s329
        %s331 = sadd.s32 %s26, %s28
        %s332 = smul.u32 64, %s331
        %p333 = scmp.lt.s32.totalorder %s27, 1
        %s334 = scalar_select %p333, %s27, 1
        %s335 = smul.addr %s334, 2
        %s336 = scalar_lea.vmem %s1, %s335
        %v338 = vld [vmem:[%s330] sm:$0xf]
        %v339 = vld [vmem:[%s330 + $0x4] sm:$0xf]
        %v340 = vld [vmem:[%s330 + $0x8] sm:$0xf]
        %v341 = vld [vmem:[%s330 + $0xc] sm:$0xf]
        %v342 = vld [vmem:[%s330 + $0x10] sm:$0xf]
        %v343 = vld [vmem:[%s330 + $0x14] sm:$0xf]
        %v344 = vld [vmem:[%s330 + $0x18] sm:$0xf]
        %v345 = vld [vmem:[%s330 + $0x1c] sm:$0xf]
        %v346 = vld [vmem:[%s330 + $0x20] sm:$0xf]
        %v347 = vld [vmem:[%s330 + $0x24] sm:$0xf]
        %v348 = vld [vmem:[%s330 + $0x28] sm:$0xf]
        %v349 = vld [vmem:[%s330 + $0x2c] sm:$0xf]
        %v350 = vld [vmem:[%s330 + $0x30] sm:$0xf]
        %v351 = vld [vmem:[%s330 + $0x34] sm:$0xf]
        %v352 = vld [vmem:[%s330 + $0x38] sm:$0xf]
        %v353 = vld [vmem:[%s330 + $0x3c] sm:$0xf]
        %v354 = vld [vmem:[%s330 + $0x40] sm:$0xf]
        %v355 = vld [vmem:[%s330 + $0x44] sm:$0xf]
        %v356 = vld [vmem:[%s330 + $0x48] sm:$0xf]
        %v357 = vld [vmem:[%s330 + $0x4c] sm:$0xf]
        %v358 = vld [vmem:[%s330 + $0x50] sm:$0xf]
        %v359 = vld [vmem:[%s330 + $0x54] sm:$0xf]
        %v360 = vld [vmem:[%s330 + $0x58] sm:$0xf]
        %v361 = vld [vmem:[%s330 + $0x5c] sm:$0xf]
        %v362 = vld [vmem:[%s330 + $0x60] sm:$0xf]
        %v363 = vld [vmem:[%s330 + $0x64] sm:$0xf]
        %v364 = vld [vmem:[%s330 + $0x68] sm:$0xf]
        %v365 = vld [vmem:[%s330 + $0x6c] sm:$0xf]
        %v366 = vld [vmem:[%s330 + $0x70] sm:$0xf]
        %v367 = vld [vmem:[%s330 + $0x74] sm:$0xf]
        %v368 = vld [vmem:[%s330 + $0x78] sm:$0xf]
        %v369 = vld [vmem:[%s330 + $0x7c] sm:$0xf]
        %v370 = vld [vmem:[%s330 + $0x80] sm:$0xf]
        %v371 = vld [vmem:[%s330 + $0x84] sm:$0xf]
        %v372 = vld [vmem:[%s330 + $0x88] sm:$0xf]
        %v373 = vld [vmem:[%s330 + $0x8c] sm:$0xf]
        %v374 = vld [vmem:[%s330 + $0x90] sm:$0xf]
        %v375 = vld [vmem:[%s330 + $0x94] sm:$0xf]
        %v376 = vld [vmem:[%s330 + $0x98] sm:$0xf]
        %v377 = vld [vmem:[%s330 + $0x9c] sm:$0xf]
        %v378 = vld [vmem:[%s330 + $0xa0] sm:$0xf]
        %v379 = vld [vmem:[%s330 + $0xa4] sm:$0xf]
        %v380 = vld [vmem:[%s330 + $0xa8] sm:$0xf]
        %v381 = vld [vmem:[%s330 + $0xac] sm:$0xf]
        %v382 = vld [vmem:[%s330 + $0xb0] sm:$0xf]
        %v383 = vld [vmem:[%s330 + $0xb4] sm:$0xf]
        %v384 = vld [vmem:[%s330 + $0xb8] sm:$0xf]
        %v385 = vld [vmem:[%s330 + $0xbc] sm:$0xf]
        %v386 = vld [vmem:[%s330 + $0xc0] sm:$0xf]
        %v387 = vld [vmem:[%s330 + $0xc4] sm:$0xf]
        %v388 = vld [vmem:[%s330 + $0xc8] sm:$0xf]
        %v389 = vld [vmem:[%s330 + $0xcc] sm:$0xf]
        %v390 = vld [vmem:[%s330 + $0xd0] sm:$0xf]
        %v391 = vld [vmem:[%s330 + $0xd4] sm:$0xf]
        %v392 = vld [vmem:[%s330 + $0xd8] sm:$0xf]
        %v393 = vld [vmem:[%s330 + $0xdc] sm:$0xf]
        %v394 = vld [vmem:[%s330 + $0xe0] sm:$0xf]
        %v395 = vld [vmem:[%s330 + $0xe4] sm:$0xf]
        %v396 = vld [vmem:[%s330 + $0xe8] sm:$0xf]
        %v397 = vld [vmem:[%s330 + $0xec] sm:$0xf]
        %v398 = vld [vmem:[%s330 + $0xf0] sm:$0xf]
        %v399 = vld [vmem:[%s330 + $0xf4] sm:$0xf]
        %v400 = vld [vmem:[%s330 + $0xf8] sm:$0xf]
        %v401 = vld [vmem:[%s330 + $0xfc] sm:$0xf]
        %v402 = vunpack.c.l.bf16 %v338
        %v403 = vunpack.c.l.bf16 %v339
        %v404 = vunpack.c.l.bf16 %v340
        %v405 = vunpack.c.l.bf16 %v341
        %v406 = vunpack.c.l.bf16 %v342
        %v407 = vunpack.c.l.bf16 %v343
        %v408 = vunpack.c.l.bf16 %v344
        %v409 = vunpack.c.l.bf16 %v345
        %v410 = vunpack.c.l.bf16 %v346
        %v411 = vunpack.c.l.bf16 %v347
        %v412 = vunpack.c.l.bf16 %v348
        %v413 = vunpack.c.l.bf16 %v349
        %v414 = vunpack.c.l.bf16 %v350
        %v415 = vunpack.c.l.bf16 %v351
        %v416 = vunpack.c.l.bf16 %v352
        %v417 = vunpack.c.l.bf16 %v353
        %v418 = vunpack.c.l.bf16 %v354
        %v419 = vunpack.c.l.bf16 %v355
        %v420 = vunpack.c.l.bf16 %v356
        %v421 = vunpack.c.l.bf16 %v357
        %v422 = vunpack.c.l.bf16 %v358
        %v423 = vunpack.c.l.bf16 %v359
        %v424 = vunpack.c.l.bf16 %v360
        %v425 = vunpack.c.l.bf16 %v361
        %v426 = vunpack.c.l.bf16 %v362
        %v427 = vunpack.c.l.bf16 %v363
        %v428 = vunpack.c.l.bf16 %v364
        %v429 = vunpack.c.l.bf16 %v365
        %v430 = vunpack.c.l.bf16 %v366
        %v431 = vunpack.c.l.bf16 %v367
        %v432 = vunpack.c.l.bf16 %v368
        %v433 = vunpack.c.l.bf16 %v369
        %v434 = vunpack.c.l.bf16 %v370
        %v435 = vunpack.c.l.bf16 %v371
        %v436 = vunpack.c.l.bf16 %v372
        %v437 = vunpack.c.l.bf16 %v373
        %v438 = vunpack.c.l.bf16 %v374
        %v439 = vunpack.c.l.bf16 %v375
        %v440 = vunpack.c.l.bf16 %v376
        %v441 = vunpack.c.l.bf16 %v377
        %v442 = vunpack.c.l.bf16 %v378
        %v443 = vunpack.c.l.bf16 %v379
        %v444 = vunpack.c.l.bf16 %v380
        %v445 = vunpack.c.l.bf16 %v381
        %v446 = vunpack.c.l.bf16 %v382
        %v447 = vunpack.c.l.bf16 %v383
        %v448 = vunpack.c.l.bf16 %v384
        %v449 = vunpack.c.l.bf16 %v385
        %v450 = vunpack.c.l.bf16 %v386
        %v451 = vunpack.c.l.bf16 %v387
        %v452 = vunpack.c.l.bf16 %v388
        %v453 = vunpack.c.l.bf16 %v389
        %v454 = vunpack.c.l.bf16 %v390
        %v455 = vunpack.c.l.bf16 %v391
        %v456 = vunpack.c.l.bf16 %v392
        %v457 = vunpack.c.l.bf16 %v393
        %v458 = vunpack.c.l.bf16 %v394
        %v459 = vunpack.c.l.bf16 %v395
        %v460 = vunpack.c.l.bf16 %v396
        %v461 = vunpack.c.l.bf16 %v397
        %v462 = vunpack.c.l.bf16 %v398
        %v463 = vunpack.c.l.bf16 %v399
        %v464 = vunpack.c.l.bf16 %v400
        %v465 = vunpack.c.l.bf16 %v401
        %v466 = vld [vmem:[%s336] sm:$0x3]
        %v467 = vunpack.c.l.bf16 %v466
        %469 = vset.pattern.permute.xlu0 0
        %470 = vperm.xlu0 %469, %v402
        %v471 = vpop.permute.xlu0 %470
        %474 = vset.pattern.permute.xlu0 0
        %475 = vperm.xlu0 %474, %v403
        %v476 = vpop.permute.xlu0 %475
        %479 = vset.pattern.permute.xlu0 0
        %480 = vperm.xlu0 %479, %v404
        %v481 = vpop.permute.xlu0 %480
        %484 = vset.pattern.permute.xlu0 0
        %485 = vperm.xlu0 %484, %v405
        %v486 = vpop.permute.xlu0 %485
        %489 = vset.pattern.permute.xlu0 0
        %490 = vperm.xlu0 %489, %v406
        %v491 = vpop.permute.xlu0 %490
        %494 = vset.pattern.permute.xlu0 0
        %495 = vperm.xlu0 %494, %v407
        %v496 = vpop.permute.xlu0 %495
        %499 = vset.pattern.permute.xlu0 0
        %500 = vperm.xlu0 %499, %v408
        %v501 = vpop.permute.xlu0 %500
        %504 = vset.pattern.permute.xlu0 0
        %505 = vperm.xlu0 %504, %v409
        %v506 = vpop.permute.xlu0 %505
        %509 = vset.pattern.permute.xlu0 0
        %510 = vperm.xlu0 %509, %v410
        %v511 = vpop.permute.xlu0 %510
        %514 = vset.pattern.permute.xlu0 0
        %515 = vperm.xlu0 %514, %v411
        %v516 = vpop.permute.xlu0 %515
        %519 = vset.pattern.permute.xlu0 0
        %520 = vperm.xlu0 %519, %v412
        %v521 = vpop.permute.xlu0 %520
        %524 = vset.pattern.permute.xlu0 0
        %525 = vperm.xlu0 %524, %v413
        %v526 = vpop.permute.xlu0 %525
        %529 = vset.pattern.permute.xlu0 0
        %530 = vperm.xlu0 %529, %v414
        %v531 = vpop.permute.xlu0 %530
        %534 = vset.pattern.permute.xlu0 0
        %535 = vperm.xlu0 %534, %v415
        %v536 = vpop.permute.xlu0 %535
        %539 = vset.pattern.permute.xlu0 0
        %540 = vperm.xlu0 %539, %v416
        %v541 = vpop.permute.xlu0 %540
        %544 = vset.pattern.permute.xlu0 0
        %545 = vperm.xlu0 %544, %v417
        %v546 = vpop.permute.xlu0 %545
        %549 = vset.pattern.permute.xlu0 0
        %550 = vperm.xlu0 %549, %v418
        %v551 = vpop.permute.xlu0 %550
        %554 = vset.pattern.permute.xlu0 0
        %555 = vperm.xlu0 %554, %v419
        %v556 = vpop.permute.xlu0 %555
        %559 = vset.pattern.permute.xlu0 0
        %560 = vperm.xlu0 %559, %v420
        %v561 = vpop.permute.xlu0 %560
        %564 = vset.pattern.permute.xlu0 0
        %565 = vperm.xlu0 %564, %v421
        %v566 = vpop.permute.xlu0 %565
        %569 = vset.pattern.permute.xlu0 0
        %570 = vperm.xlu0 %569, %v422
        %v571 = vpop.permute.xlu0 %570
        %574 = vset.pattern.permute.xlu0 0
        %575 = vperm.xlu0 %574, %v423
        %v576 = vpop.permute.xlu0 %575
        %579 = vset.pattern.permute.xlu0 0
        %580 = vperm.xlu0 %579, %v424
        %v581 = vpop.permute.xlu0 %580
        %584 = vset.pattern.permute.xlu0 0
        %585 = vperm.xlu0 %584, %v425
        %v586 = vpop.permute.xlu0 %585
        %589 = vset.pattern.permute.xlu0 0
        %590 = vperm.xlu0 %589, %v426
        %v591 = vpop.permute.xlu0 %590
        %594 = vset.pattern.permute.xlu0 0
        %595 = vperm.xlu0 %594, %v427
        %v596 = vpop.permute.xlu0 %595
        %599 = vset.pattern.permute.xlu0 0
        %600 = vperm.xlu0 %599, %v428
        %v601 = vpop.permute.xlu0 %600
        %604 = vset.pattern.permute.xlu0 0
        %605 = vperm.xlu0 %604, %v429
        %v606 = vpop.permute.xlu0 %605
        %609 = vset.pattern.permute.xlu0 0
        %610 = vperm.xlu0 %609, %v430
        %v611 = vpop.permute.xlu0 %610
        %614 = vset.pattern.permute.xlu0 0
        %615 = vperm.xlu0 %614, %v431
        %v616 = vpop.permute.xlu0 %615
        %619 = vset.pattern.permute.xlu0 0
        %620 = vperm.xlu0 %619, %v432
        %v621 = vpop.permute.xlu0 %620
        %624 = vset.pattern.permute.xlu0 0
        %625 = vperm.xlu0 %624, %v433
        %v626 = vpop.permute.xlu0 %625
        %629 = vset.pattern.permute.xlu0 0
        %630 = vperm.xlu0 %629, %v434
        %v631 = vpop.permute.xlu0 %630
        %634 = vset.pattern.permute.xlu0 0
        %635 = vperm.xlu0 %634, %v435
        %v636 = vpop.permute.xlu0 %635
        %639 = vset.pattern.permute.xlu0 0
        %640 = vperm.xlu0 %639, %v436
        %v641 = vpop.permute.xlu0 %640
        %644 = vset.pattern.permute.xlu0 0
        %645 = vperm.xlu0 %644, %v437
        %v646 = vpop.permute.xlu0 %645
        %649 = vset.pattern.permute.xlu0 0
        %650 = vperm.xlu0 %649, %v438
        %v651 = vpop.permute.xlu0 %650
        %654 = vset.pattern.permute.xlu0 0
        %655 = vperm.xlu0 %654, %v439
        %v656 = vpop.permute.xlu0 %655
        %659 = vset.pattern.permute.xlu0 0
        %660 = vperm.xlu0 %659, %v440
        %v661 = vpop.permute.xlu0 %660
        %664 = vset.pattern.permute.xlu0 0
        %665 = vperm.xlu0 %664, %v441
        %v666 = vpop.permute.xlu0 %665
        %669 = vset.pattern.permute.xlu0 0
        %670 = vperm.xlu0 %669, %v442
        %v671 = vpop.permute.xlu0 %670
        %674 = vset.pattern.permute.xlu0 0
        %675 = vperm.xlu0 %674, %v443
        %v676 = vpop.permute.xlu0 %675
        %679 = vset.pattern.permute.xlu0 0
        %680 = vperm.xlu0 %679, %v444
        %v681 = vpop.permute.xlu0 %680
        %684 = vset.pattern.permute.xlu0 0
        %685 = vperm.xlu0 %684, %v445
        %v686 = vpop.permute.xlu0 %685
        %689 = vset.pattern.permute.xlu0 0
        %690 = vperm.xlu0 %689, %v446
        %v691 = vpop.permute.xlu0 %690
        %694 = vset.pattern.permute.xlu0 0
        %695 = vperm.xlu0 %694, %v447
        %v696 = vpop.permute.xlu0 %695
        %699 = vset.pattern.permute.xlu0 0
        %700 = vperm.xlu0 %699, %v448
        %v701 = vpop.permute.xlu0 %700
        %704 = vset.pattern.permute.xlu0 0
        %705 = vperm.xlu0 %704, %v449
        %v706 = vpop.permute.xlu0 %705
        %709 = vset.pattern.permute.xlu0 0
        %710 = vperm.xlu0 %709, %v450
        %v711 = vpop.permute.xlu0 %710
        %714 = vset.pattern.permute.xlu0 0
        %715 = vperm.xlu0 %714, %v451
        %v716 = vpop.permute.xlu0 %715
        %719 = vset.pattern.permute.xlu0 0
        %720 = vperm.xlu0 %719, %v452
        %v721 = vpop.permute.xlu0 %720
        %724 = vset.pattern.permute.xlu0 0
        %725 = vperm.xlu0 %724, %v453
        %v726 = vpop.permute.xlu0 %725
        %729 = vset.pattern.permute.xlu0 0
        %730 = vperm.xlu0 %729, %v454
        %v731 = vpop.permute.xlu0 %730
        %734 = vset.pattern.permute.xlu0 0
        %735 = vperm.xlu0 %734, %v455
        %v736 = vpop.permute.xlu0 %735
        %739 = vset.pattern.permute.xlu0 0
        %740 = vperm.xlu0 %739, %v456
        %v741 = vpop.permute.xlu0 %740
        %744 = vset.pattern.permute.xlu0 0
        %745 = vperm.xlu0 %744, %v457
        %v746 = vpop.permute.xlu0 %745
        %749 = vset.pattern.permute.xlu0 0
        %750 = vperm.xlu0 %749, %v458
        %v751 = vpop.permute.xlu0 %750
        %754 = vset.pattern.permute.xlu0 0
        %755 = vperm.xlu0 %754, %v459
        %v756 = vpop.permute.xlu0 %755
        %759 = vset.pattern.permute.xlu0 0
        %760 = vperm.xlu0 %759, %v460
        %v761 = vpop.permute.xlu0 %760
        %764 = vset.pattern.permute.xlu0 0
        %765 = vperm.xlu0 %764, %v461
        %v766 = vpop.permute.xlu0 %765
        %769 = vset.pattern.permute.xlu0 0
        %770 = vperm.xlu0 %769, %v462
        %v771 = vpop.permute.xlu0 %770
        %774 = vset.pattern.permute.xlu0 0
        %775 = vperm.xlu0 %774, %v463
        %v776 = vpop.permute.xlu0 %775
        %779 = vset.pattern.permute.xlu0 0
        %780 = vperm.xlu0 %779, %v464
        %v781 = vpop.permute.xlu0 %780
        %784 = vset.pattern.permute.xlu0 0
        %785 = vperm.xlu0 %784, %v465
        %v786 = vpop.permute.xlu0 %785
        %v788 = vlaneseq
        %v789 = vshrl.u32 %v788, 7
        %v790 = vsub.s32 0, %v789
        %v791 = vrot.slane %v467, %v790
        %v792 = vmul.f32 %v471, %v791
        %v793 = vmul.f32 %v476, %v791
        %v794 = vmul.f32 %v481, %v791
        %v795 = vmul.f32 %v486, %v791
        %v796 = vmul.f32 %v491, %v791
        %v797 = vmul.f32 %v496, %v791
        %v798 = vmul.f32 %v501, %v791
        %v799 = vmul.f32 %v506, %v791
        %v800 = vmul.f32 %v511, %v791
        %v801 = vmul.f32 %v516, %v791
        %v802 = vmul.f32 %v521, %v791
        %v803 = vmul.f32 %v526, %v791
        %v804 = vmul.f32 %v531, %v791
        %v805 = vmul.f32 %v536, %v791
        %v806 = vmul.f32 %v541, %v791
        %v807 = vmul.f32 %v546, %v791
        %v808 = vmul.f32 %v551, %v791
        %v809 = vmul.f32 %v556, %v791
        %v810 = vmul.f32 %v561, %v791
        %v811 = vmul.f32 %v566, %v791
        %v812 = vmul.f32 %v571, %v791
        %v813 = vmul.f32 %v576, %v791
        %v814 = vmul.f32 %v581, %v791
        %v815 = vmul.f32 %v586, %v791
        %v816 = vmul.f32 %v591, %v791
        %v817 = vmul.f32 %v596, %v791
        %v818 = vmul.f32 %v601, %v791
        %v819 = vmul.f32 %v606, %v791
        %v820 = vmul.f32 %v611, %v791
        %v821 = vmul.f32 %v616, %v791
        %v822 = vmul.f32 %v621, %v791
        %v823 = vmul.f32 %v626, %v791
        %v824 = vmul.f32 %v631, %v791
        %v825 = vmul.f32 %v636, %v791
        %v826 = vmul.f32 %v641, %v791
        %v827 = vmul.f32 %v646, %v791
        %v828 = vmul.f32 %v651, %v791
        %v829 = vmul.f32 %v656, %v791
        %v830 = vmul.f32 %v661, %v791
        %v831 = vmul.f32 %v666, %v791
        %v832 = vmul.f32 %v671, %v791
        %v833 = vmul.f32 %v676, %v791
        %v834 = vmul.f32 %v681, %v791
        %v835 = vmul.f32 %v686, %v791
        %v836 = vmul.f32 %v691, %v791
        %v837 = vmul.f32 %v696, %v791
        %v838 = vmul.f32 %v701, %v791
        %v839 = vmul.f32 %v706, %v791
        %v840 = vmul.f32 %v711, %v791
        %v841 = vmul.f32 %v716, %v791
        %v842 = vmul.f32 %v721, %v791
        %v843 = vmul.f32 %v726, %v791
        %v844 = vmul.f32 %v731, %v791
        %v845 = vmul.f32 %v736, %v791
        %v846 = vmul.f32 %v741, %v791
        %v847 = vmul.f32 %v746, %v791
        %v848 = vmul.f32 %v751, %v791
        %v849 = vmul.f32 %v756, %v791
        %v850 = vmul.f32 %v761, %v791
        %v851 = vmul.f32 %v766, %v791
        %v852 = vmul.f32 %v771, %v791
        %v853 = vmul.f32 %v776, %v791
        %v854 = vmul.f32 %v781, %v791
        %v855 = vmul.f32 %v786, %v791
        %856 = vset.pattern.permute.xlu0 1
        %857 = vperm.xlu0 %856, %v402
        %v858 = vpop.permute.xlu0 %857
        %860 = vset.pattern.permute.xlu0 1
        %861 = vperm.xlu0 %860, %v403
        %v862 = vpop.permute.xlu0 %861
        %864 = vset.pattern.permute.xlu0 1
        %865 = vperm.xlu0 %864, %v404
        %v866 = vpop.permute.xlu0 %865
        %868 = vset.pattern.permute.xlu0 1
        %869 = vperm.xlu0 %868, %v405
        %v870 = vpop.permute.xlu0 %869
        %872 = vset.pattern.permute.xlu0 1
        %873 = vperm.xlu0 %872, %v406
        %v874 = vpop.permute.xlu0 %873
        %876 = vset.pattern.permute.xlu0 1
        %877 = vperm.xlu0 %876, %v407
        %v878 = vpop.permute.xlu0 %877
        %880 = vset.pattern.permute.xlu0 1
        %881 = vperm.xlu0 %880, %v408
        %v882 = vpop.permute.xlu0 %881
        %884 = vset.pattern.permute.xlu0 1
        %885 = vperm.xlu0 %884, %v409
        %v886 = vpop.permute.xlu0 %885
        %888 = vset.pattern.permute.xlu0 1
        %889 = vperm.xlu0 %888, %v410
        %v890 = vpop.permute.xlu0 %889
        %892 = vset.pattern.permute.xlu0 1
        %893 = vperm.xlu0 %892, %v411
        %v894 = vpop.permute.xlu0 %893
        %896 = vset.pattern.permute.xlu0 1
        %897 = vperm.xlu0 %896, %v412
        %v898 = vpop.permute.xlu0 %897
        %900 = vset.pattern.permute.xlu0 1
        %901 = vperm.xlu0 %900, %v413
        %v902 = vpop.permute.xlu0 %901
        %904 = vset.pattern.permute.xlu0 1
        %905 = vperm.xlu0 %904, %v414
        %v906 = vpop.permute.xlu0 %905
        %908 = vset.pattern.permute.xlu0 1
        %909 = vperm.xlu0 %908, %v415
        %v910 = vpop.permute.xlu0 %909
        %912 = vset.pattern.permute.xlu0 1
        %913 = vperm.xlu0 %912, %v416
        %v914 = vpop.permute.xlu0 %913
        %916 = vset.pattern.permute.xlu0 1
        %917 = vperm.xlu0 %916, %v417
        %v918 = vpop.permute.xlu0 %917
        %920 = vset.pattern.permute.xlu0 1
        %921 = vperm.xlu0 %920, %v418
        %v922 = vpop.permute.xlu0 %921
        %924 = vset.pattern.permute.xlu0 1
        %925 = vperm.xlu0 %924, %v419
        %v926 = vpop.permute.xlu0 %925
        %928 = vset.pattern.permute.xlu0 1
        %929 = vperm.xlu0 %928, %v420
        %v930 = vpop.permute.xlu0 %929
        %932 = vset.pattern.permute.xlu0 1
        %933 = vperm.xlu0 %932, %v421
        %v934 = vpop.permute.xlu0 %933
        %936 = vset.pattern.permute.xlu0 1
        %937 = vperm.xlu0 %936, %v422
        %v938 = vpop.permute.xlu0 %937
        %940 = vset.pattern.permute.xlu0 1
        %941 = vperm.xlu0 %940, %v423
        %v942 = vpop.permute.xlu0 %941
        %944 = vset.pattern.permute.xlu0 1
        %945 = vperm.xlu0 %944, %v424
        %v946 = vpop.permute.xlu0 %945
        %948 = vset.pattern.permute.xlu0 1
        %949 = vperm.xlu0 %948, %v425
        %v950 = vpop.permute.xlu0 %949
        %952 = vset.pattern.permute.xlu0 1
        %953 = vperm.xlu0 %952, %v426
        %v954 = vpop.permute.xlu0 %953
        %956 = vset.pattern.permute.xlu0 1
        %957 = vperm.xlu0 %956, %v427
        %v958 = vpop.permute.xlu0 %957
        %960 = vset.pattern.permute.xlu0 1
        %961 = vperm.xlu0 %960, %v428
        %v962 = vpop.permute.xlu0 %961
        %964 = vset.pattern.permute.xlu0 1
        %965 = vperm.xlu0 %964, %v429
        %v966 = vpop.permute.xlu0 %965
        %968 = vset.pattern.permute.xlu0 1
        %969 = vperm.xlu0 %968, %v430
        %v970 = vpop.permute.xlu0 %969
        %972 = vset.pattern.permute.xlu0 1
        %973 = vperm.xlu0 %972, %v431
        %v974 = vpop.permute.xlu0 %973
        %976 = vset.pattern.permute.xlu0 1
        %977 = vperm.xlu0 %976, %v432
        %v978 = vpop.permute.xlu0 %977
        %980 = vset.pattern.permute.xlu0 1
        %981 = vperm.xlu0 %980, %v433
        %v982 = vpop.permute.xlu0 %981
        %984 = vset.pattern.permute.xlu0 1
        %985 = vperm.xlu0 %984, %v434
        %v986 = vpop.permute.xlu0 %985
        %988 = vset.pattern.permute.xlu0 1
        %989 = vperm.xlu0 %988, %v435
        %v990 = vpop.permute.xlu0 %989
        %992 = vset.pattern.permute.xlu0 1
        %993 = vperm.xlu0 %992, %v436
        %v994 = vpop.permute.xlu0 %993
        %996 = vset.pattern.permute.xlu0 1
        %997 = vperm.xlu0 %996, %v437
        %v998 = vpop.permute.xlu0 %997
        %1000 = vset.pattern.permute.xlu0 1
        %1001 = vperm.xlu0 %1000, %v438
        %v1002 = vpop.permute.xlu0 %1001
        %1004 = vset.pattern.permute.xlu0 1
        %1005 = vperm.xlu0 %1004, %v439
        %v1006 = vpop.permute.xlu0 %1005
        %1008 = vset.pattern.permute.xlu0 1
        %1009 = vperm.xlu0 %1008, %v440
        %v1010 = vpop.permute.xlu0 %1009
        %1012 = vset.pattern.permute.xlu0 1
        %1013 = vperm.xlu0 %1012, %v441
        %v1014 = vpop.permute.xlu0 %1013
        %1016 = vset.pattern.permute.xlu0 1
        %1017 = vperm.xlu0 %1016, %v442
        %v1018 = vpop.permute.xlu0 %1017
        %1020 = vset.pattern.permute.xlu0 1
        %1021 = vperm.xlu0 %1020, %v443
        %v1022 = vpop.permute.xlu0 %1021
        %1024 = vset.pattern.permute.xlu0 1
        %1025 = vperm.xlu0 %1024, %v444
        %v1026 = vpop.permute.xlu0 %1025
        %1028 = vset.pattern.permute.xlu0 1
        %1029 = vperm.xlu0 %1028, %v445
        %v1030 = vpop.permute.xlu0 %1029
        %1032 = vset.pattern.permute.xlu0 1
        %1033 = vperm.xlu0 %1032, %v446
        %v1034 = vpop.permute.xlu0 %1033
        %1036 = vset.pattern.permute.xlu0 1
        %1037 = vperm.xlu0 %1036, %v447
        %v1038 = vpop.permute.xlu0 %1037
        %1040 = vset.pattern.permute.xlu0 1
        %1041 = vperm.xlu0 %1040, %v448
        %v1042 = vpop.permute.xlu0 %1041
        %1044 = vset.pattern.permute.xlu0 1
        %1045 = vperm.xlu0 %1044, %v449
        %v1046 = vpop.permute.xlu0 %1045
        %1048 = vset.pattern.permute.xlu0 1
        %1049 = vperm.xlu0 %1048, %v450
        %v1050 = vpop.permute.xlu0 %1049
        %1052 = vset.pattern.permute.xlu0 1
        %1053 = vperm.xlu0 %1052, %v451
        %v1054 = vpop.permute.xlu0 %1053
        %1056 = vset.pattern.permute.xlu0 1
        %1057 = vperm.xlu0 %1056, %v452
        %v1058 = vpop.permute.xlu0 %1057
        %1060 = vset.pattern.permute.xlu0 1
        %1061 = vperm.xlu0 %1060, %v453
        %v1062 = vpop.permute.xlu0 %1061
        %1064 = vset.pattern.permute.xlu0 1
        %1065 = vperm.xlu0 %1064, %v454
        %v1066 = vpop.permute.xlu0 %1065
        %1068 = vset.pattern.permute.xlu0 1
        %1069 = vperm.xlu0 %1068, %v455
        %v1070 = vpop.permute.xlu0 %1069
        %1072 = vset.pattern.permute.xlu0 1
        %1073 = vperm.xlu0 %1072, %v456
        %v1074 = vpop.permute.xlu0 %1073
        %1076 = vset.pattern.permute.xlu0 1
        %1077 = vperm.xlu0 %1076, %v457
        %v1078 = vpop.permute.xlu0 %1077
        %1080 = vset.pattern.permute.xlu0 1
        %1081 = vperm.xlu0 %1080, %v458
        %v1082 = vpop.permute.xlu0 %1081
        %1084 = vset.pattern.permute.xlu0 1
        %1085 = vperm.xlu0 %1084, %v459
        %v1086 = vpop.permute.xlu0 %1085
        %1088 = vset.pattern.permute.xlu0 1
        %1089 = vperm.xlu0 %1088, %v460
        %v1090 = vpop.permute.xlu0 %1089
        %1092 = vset.pattern.permute.xlu0 1
        %1093 = vperm.xlu0 %1092, %v461
        %v1094 = vpop.permute.xlu0 %1093
        %1096 = vset.pattern.permute.xlu0 1
        %1097 = vperm.xlu0 %1096, %v462
        %v1098 = vpop.permute.xlu0 %1097
        %1100 = vset.pattern.permute.xlu0 1
        %1101 = vperm.xlu0 %1100, %v463
        %v1102 = vpop.permute.xlu0 %1101
        %1104 = vset.pattern.permute.xlu0 1
        %1105 = vperm.xlu0 %1104, %v464
        %v1106 = vpop.permute.xlu0 %1105
        %1108 = vset.pattern.permute.xlu0 1
        %1109 = vperm.xlu0 %1108, %v465
        %v1110 = vpop.permute.xlu0 %1109
        %v1112 = vlaneseq
        %v1113 = vshrl.u32 %v1112, 7
        %v1114 = vsub.s32 1, %v1113
        %v1115 = vrot.slane %v467, %v1114
        %v1116 = vmul.f32 %v858, %v1115
        %v1117 = vmul.f32 %v862, %v1115
        %v1118 = vmul.f32 %v866, %v1115
        %v1119 = vmul.f32 %v870, %v1115
        %v1120 = vmul.f32 %v874, %v1115
        %v1121 = vmul.f32 %v878, %v1115
        %v1122 = vmul.f32 %v882, %v1115
        %v1123 = vmul.f32 %v886, %v1115
        %v1124 = vmul.f32 %v890, %v1115
        %v1125 = vmul.f32 %v894, %v1115
        %v1126 = vmul.f32 %v898, %v1115
        %v1127 = vmul.f32 %v902, %v1115
        %v1128 = vmul.f32 %v906, %v1115
        %v1129 = vmul.f32 %v910, %v1115
        %v1130 = vmul.f32 %v914, %v1115
        %v1131 = vmul.f32 %v918, %v1115
        %v1132 = vmul.f32 %v922, %v1115
        %v1133 = vmul.f32 %v926, %v1115
        %v1134 = vmul.f32 %v930, %v1115
        %v1135 = vmul.f32 %v934, %v1115
        %v1136 = vmul.f32 %v938, %v1115
        %v1137 = vmul.f32 %v942, %v1115
        %v1138 = vmul.f32 %v946, %v1115
        %v1139 = vmul.f32 %v950, %v1115
        %v1140 = vmul.f32 %v954, %v1115
        %v1141 = vmul.f32 %v958, %v1115
        %v1142 = vmul.f32 %v962, %v1115
        %v1143 = vmul.f32 %v966, %v1115
        %v1144 = vmul.f32 %v970, %v1115
        %v1145 = vmul.f32 %v974, %v1115
        %v1146 = vmul.f32 %v978, %v1115
        %v1147 = vmul.f32 %v982, %v1115
        %v1148 = vmul.f32 %v986, %v1115
        %v1149 = vmul.f32 %v990, %v1115
        %v1150 = vmul.f32 %v994, %v1115
        %v1151 = vmul.f32 %v998, %v1115
        %v1152 = vmul.f32 %v1002, %v1115
        %v1153 = vmul.f32 %v1006, %v1115
        %v1154 = vmul.f32 %v1010, %v1115
        %v1155 = vmul.f32 %v1014, %v1115
        %v1156 = vmul.f32 %v1018, %v1115
        %v1157 = vmul.f32 %v1022, %v1115
        %v1158 = vmul.f32 %v1026, %v1115
        %v1159 = vmul.f32 %v1030, %v1115
        %v1160 = vmul.f32 %v1034, %v1115
        %v1161 = vmul.f32 %v1038, %v1115
        %v1162 = vmul.f32 %v1042, %v1115
        %v1163 = vmul.f32 %v1046, %v1115
        %v1164 = vmul.f32 %v1050, %v1115
        %v1165 = vmul.f32 %v1054, %v1115
        %v1166 = vmul.f32 %v1058, %v1115
        %v1167 = vmul.f32 %v1062, %v1115
        %v1168 = vmul.f32 %v1066, %v1115
        %v1169 = vmul.f32 %v1070, %v1115
        %v1170 = vmul.f32 %v1074, %v1115
        %v1171 = vmul.f32 %v1078, %v1115
        %v1172 = vmul.f32 %v1082, %v1115
        %v1173 = vmul.f32 %v1086, %v1115
        %v1174 = vmul.f32 %v1090, %v1115
        %v1175 = vmul.f32 %v1094, %v1115
        %v1176 = vmul.f32 %v1098, %v1115
        %v1177 = vmul.f32 %v1102, %v1115
        %v1178 = vmul.f32 %v1106, %v1115
        %v1179 = vmul.f32 %v1110, %v1115
        %v1180 = vadd.f32 %v792, %v1116
        %v1181 = vadd.f32 %v793, %v1117
        %v1182 = vadd.f32 %v794, %v1118
        %v1183 = vadd.f32 %v795, %v1119
        %v1184 = vadd.f32 %v796, %v1120
        %v1185 = vadd.f32 %v797, %v1121
        %v1186 = vadd.f32 %v798, %v1122
        %v1187 = vadd.f32 %v799, %v1123
        %v1188 = vadd.f32 %v800, %v1124
        %v1189 = vadd.f32 %v801, %v1125
        %v1190 = vadd.f32 %v802, %v1126
        %v1191 = vadd.f32 %v803, %v1127
        %v1192 = vadd.f32 %v804, %v1128
        %v1193 = vadd.f32 %v805, %v1129
        %v1194 = vadd.f32 %v806, %v1130
        %v1195 = vadd.f32 %v807, %v1131
        %v1196 = vadd.f32 %v808, %v1132
        %v1197 = vadd.f32 %v809, %v1133
        %v1198 = vadd.f32 %v810, %v1134
        %v1199 = vadd.f32 %v811, %v1135
        %v1200 = vadd.f32 %v812, %v1136
        %v1201 = vadd.f32 %v813, %v1137
        %v1202 = vadd.f32 %v814, %v1138
        %v1203 = vadd.f32 %v815, %v1139
        %v1204 = vadd.f32 %v816, %v1140
        %v1205 = vadd.f32 %v817, %v1141
        %v1206 = vadd.f32 %v818, %v1142
        %v1207 = vadd.f32 %v819, %v1143
        %v1208 = vadd.f32 %v820, %v1144
        %v1209 = vadd.f32 %v821, %v1145
        %v1210 = vadd.f32 %v822, %v1146
        %v1211 = vadd.f32 %v823, %v1147
        %v1212 = vadd.f32 %v824, %v1148
        %v1213 = vadd.f32 %v825, %v1149
        %v1214 = vadd.f32 %v826, %v1150
        %v1215 = vadd.f32 %v827, %v1151
        %v1216 = vadd.f32 %v828, %v1152
        %v1217 = vadd.f32 %v829, %v1153
        %v1218 = vadd.f32 %v830, %v1154
        %v1219 = vadd.f32 %v831, %v1155
        %v1220 = vadd.f32 %v832, %v1156
        %v1221 = vadd.f32 %v833, %v1157
        %v1222 = vadd.f32 %v834, %v1158
        %v1223 = vadd.f32 %v835, %v1159
        %v1224 = vadd.f32 %v836, %v1160
        %v1225 = vadd.f32 %v837, %v1161
        %v1226 = vadd.f32 %v838, %v1162
        %v1227 = vadd.f32 %v839, %v1163
        %v1228 = vadd.f32 %v840, %v1164
        %v1229 = vadd.f32 %v841, %v1165
        %v1230 = vadd.f32 %v842, %v1166
        %v1231 = vadd.f32 %v843, %v1167
        %v1232 = vadd.f32 %v844, %v1168
        %v1233 = vadd.f32 %v845, %v1169
        %v1234 = vadd.f32 %v846, %v1170
        %v1235 = vadd.f32 %v847, %v1171
        %v1236 = vadd.f32 %v848, %v1172
        %v1237 = vadd.f32 %v849, %v1173
        %v1238 = vadd.f32 %v850, %v1174
        %v1239 = vadd.f32 %v851, %v1175
        %v1240 = vadd.f32 %v852, %v1176
        %v1241 = vadd.f32 %v853, %v1177
        %v1242 = vadd.f32 %v854, %v1178
        %v1243 = vadd.f32 %v855, %v1179
        %1244 = vset.pattern.permute.xlu0 2
        %1245 = vperm.xlu0 %1244, %v402
        %v1246 = vpop.permute.xlu0 %1245
        %1248 = vset.pattern.permute.xlu0 2
        %1249 = vperm.xlu0 %1248, %v403
        %v1250 = vpop.permute.xlu0 %1249
        %1252 = vset.pattern.permute.xlu0 2
        %1253 = vperm.xlu0 %1252, %v404
        %v1254 = vpop.permute.xlu0 %1253
        %1256 = vset.pattern.permute.xlu0 2
        %1257 = vperm.xlu0 %1256, %v405
        %v1258 = vpop.permute.xlu0 %1257
        %1260 = vset.pattern.permute.xlu0 2
        %1261 = vperm.xlu0 %1260, %v406
        %v1262 = vpop.permute.xlu0 %1261
        %1264 = vset.pattern.permute.xlu0 2
        %1265 = vperm.xlu0 %1264, %v407
        %v1266 = vpop.permute.xlu0 %1265
        %1268 = vset.pattern.permute.xlu0 2
        %1269 = vperm.xlu0 %1268, %v408
        %v1270 = vpop.permute.xlu0 %1269
        %1272 = vset.pattern.permute.xlu0 2
        %1273 = vperm.xlu0 %1272, %v409
        %v1274 = vpop.permute.xlu0 %1273
        %1276 = vset.pattern.permute.xlu0 2
        %1277 = vperm.xlu0 %1276, %v410
        %v1278 = vpop.permute.xlu0 %1277
        %1280 = vset.pattern.permute.xlu0 2
        %1281 = vperm.xlu0 %1280, %v411
        %v1282 = vpop.permute.xlu0 %1281
        %1284 = vset.pattern.permute.xlu0 2
        %1285 = vperm.xlu0 %1284, %v412
        %v1286 = vpop.permute.xlu0 %1285
        %1288 = vset.pattern.permute.xlu0 2
        %1289 = vperm.xlu0 %1288, %v413
        %v1290 = vpop.permute.xlu0 %1289
        %1292 = vset.pattern.permute.xlu0 2
        %1293 = vperm.xlu0 %1292, %v414
        %v1294 = vpop.permute.xlu0 %1293
        %1296 = vset.pattern.permute.xlu0 2
        %1297 = vperm.xlu0 %1296, %v415
        %v1298 = vpop.permute.xlu0 %1297
        %1300 = vset.pattern.permute.xlu0 2
        %1301 = vperm.xlu0 %1300, %v416
        %v1302 = vpop.permute.xlu0 %1301
        %1304 = vset.pattern.permute.xlu0 2
        %1305 = vperm.xlu0 %1304, %v417
        %v1306 = vpop.permute.xlu0 %1305
        %1308 = vset.pattern.permute.xlu0 2
        %1309 = vperm.xlu0 %1308, %v418
        %v1310 = vpop.permute.xlu0 %1309
        %1312 = vset.pattern.permute.xlu0 2
        %1313 = vperm.xlu0 %1312, %v419
        %v1314 = vpop.permute.xlu0 %1313
        %1316 = vset.pattern.permute.xlu0 2
        %1317 = vperm.xlu0 %1316, %v420
        %v1318 = vpop.permute.xlu0 %1317
        %1320 = vset.pattern.permute.xlu0 2
        %1321 = vperm.xlu0 %1320, %v421
        %v1322 = vpop.permute.xlu0 %1321
        %1324 = vset.pattern.permute.xlu0 2
        %1325 = vperm.xlu0 %1324, %v422
        %v1326 = vpop.permute.xlu0 %1325
        %1328 = vset.pattern.permute.xlu0 2
        %1329 = vperm.xlu0 %1328, %v423
        %v1330 = vpop.permute.xlu0 %1329
        %1332 = vset.pattern.permute.xlu0 2
        %1333 = vperm.xlu0 %1332, %v424
        %v1334 = vpop.permute.xlu0 %1333
        %1336 = vset.pattern.permute.xlu0 2
        %1337 = vperm.xlu0 %1336, %v425
        %v1338 = vpop.permute.xlu0 %1337
        %1340 = vset.pattern.permute.xlu0 2
        %1341 = vperm.xlu0 %1340, %v426
        %v1342 = vpop.permute.xlu0 %1341
        %1344 = vset.pattern.permute.xlu0 2
        %1345 = vperm.xlu0 %1344, %v427
        %v1346 = vpop.permute.xlu0 %1345
        %1348 = vset.pattern.permute.xlu0 2
        %1349 = vperm.xlu0 %1348, %v428
        %v1350 = vpop.permute.xlu0 %1349
        %1352 = vset.pattern.permute.xlu0 2
        %1353 = vperm.xlu0 %1352, %v429
        %v1354 = vpop.permute.xlu0 %1353
        %1356 = vset.pattern.permute.xlu0 2
        %1357 = vperm.xlu0 %1356, %v430
        %v1358 = vpop.permute.xlu0 %1357
        %1360 = vset.pattern.permute.xlu0 2
        %1361 = vperm.xlu0 %1360, %v431
        %v1362 = vpop.permute.xlu0 %1361
        %1364 = vset.pattern.permute.xlu0 2
        %1365 = vperm.xlu0 %1364, %v432
        %v1366 = vpop.permute.xlu0 %1365
        %1368 = vset.pattern.permute.xlu0 2
        %1369 = vperm.xlu0 %1368, %v433
        %v1370 = vpop.permute.xlu0 %1369
        %1372 = vset.pattern.permute.xlu0 2
        %1373 = vperm.xlu0 %1372, %v434
        %v1374 = vpop.permute.xlu0 %1373
        %1376 = vset.pattern.permute.xlu0 2
        %1377 = vperm.xlu0 %1376, %v435
        %v1378 = vpop.permute.xlu0 %1377
        %1380 = vset.pattern.permute.xlu0 2
        %1381 = vperm.xlu0 %1380, %v436
        %v1382 = vpop.permute.xlu0 %1381
        %1384 = vset.pattern.permute.xlu0 2
        %1385 = vperm.xlu0 %1384, %v437
        %v1386 = vpop.permute.xlu0 %1385
        %1388 = vset.pattern.permute.xlu0 2
        %1389 = vperm.xlu0 %1388, %v438
        %v1390 = vpop.permute.xlu0 %1389
        %1392 = vset.pattern.permute.xlu0 2
        %1393 = vperm.xlu0 %1392, %v439
        %v1394 = vpop.permute.xlu0 %1393
        %1396 = vset.pattern.permute.xlu0 2
        %1397 = vperm.xlu0 %1396, %v440
        %v1398 = vpop.permute.xlu0 %1397
        %1400 = vset.pattern.permute.xlu0 2
        %1401 = vperm.xlu0 %1400, %v441
        %v1402 = vpop.permute.xlu0 %1401
        %1404 = vset.pattern.permute.xlu0 2
        %1405 = vperm.xlu0 %1404, %v442
        %v1406 = vpop.permute.xlu0 %1405
        %1408 = vset.pattern.permute.xlu0 2
        %1409 = vperm.xlu0 %1408, %v443
        %v1410 = vpop.permute.xlu0 %1409
        %1412 = vset.pattern.permute.xlu0 2
        %1413 = vperm.xlu0 %1412, %v444
        %v1414 = vpop.permute.xlu0 %1413
        %1416 = vset.pattern.permute.xlu0 2
        %1417 = vperm.xlu0 %1416, %v445
        %v1418 = vpop.permute.xlu0 %1417
        %1420 = vset.pattern.permute.xlu0 2
        %1421 = vperm.xlu0 %1420, %v446
        %v1422 = vpop.permute.xlu0 %1421
        %1424 = vset.pattern.permute.xlu0 2
        %1425 = vperm.xlu0 %1424, %v447
        %v1426 = vpop.permute.xlu0 %1425
        %1428 = vset.pattern.permute.xlu0 2
        %1429 = vperm.xlu0 %1428, %v448
        %v1430 = vpop.permute.xlu0 %1429
        %1432 = vset.pattern.permute.xlu0 2
        %1433 = vperm.xlu0 %1432, %v449
        %v1434 = vpop.permute.xlu0 %1433
        %1436 = vset.pattern.permute.xlu0 2
        %1437 = vperm.xlu0 %1436, %v450
        %v1438 = vpop.permute.xlu0 %1437
        %1440 = vset.pattern.permute.xlu0 2
        %1441 = vperm.xlu0 %1440, %v451
        %v1442 = vpop.permute.xlu0 %1441
        %1444 = vset.pattern.permute.xlu0 2
        %1445 = vperm.xlu0 %1444, %v452
        %v1446 = vpop.permute.xlu0 %1445
        %1448 = vset.pattern.permute.xlu0 2
        %1449 = vperm.xlu0 %1448, %v453
        %v1450 = vpop.permute.xlu0 %1449
        %1452 = vset.pattern.permute.xlu0 2
        %1453 = vperm.xlu0 %1452, %v454
        %v1454 = vpop.permute.xlu0 %1453
        %1456 = vset.pattern.permute.xlu0 2
        %1457 = vperm.xlu0 %1456, %v455
        %v1458 = vpop.permute.xlu0 %1457
        %1460 = vset.pattern.permute.xlu0 2
        %1461 = vperm.xlu0 %1460, %v456
        %v1462 = vpop.permute.xlu0 %1461
        %1464 = vset.pattern.permute.xlu0 2
        %1465 = vperm.xlu0 %1464, %v457
        %v1466 = vpop.permute.xlu0 %1465
        %1468 = vset.pattern.permute.xlu0 2
        %1469 = vperm.xlu0 %1468, %v458
        %v1470 = vpop.permute.xlu0 %1469
        %1472 = vset.pattern.permute.xlu0 2
        %1473 = vperm.xlu0 %1472, %v459
        %v1474 = vpop.permute.xlu0 %1473
        %1476 = vset.pattern.permute.xlu0 2
        %1477 = vperm.xlu0 %1476, %v460
        %v1478 = vpop.permute.xlu0 %1477
        %1480 = vset.pattern.permute.xlu0 2
        %1481 = vperm.xlu0 %1480, %v461
        %v1482 = vpop.permute.xlu0 %1481
        %1484 = vset.pattern.permute.xlu0 2
        %1485 = vperm.xlu0 %1484, %v462
        %v1486 = vpop.permute.xlu0 %1485
        %1488 = vset.pattern.permute.xlu0 2
        %1489 = vperm.xlu0 %1488, %v463
        %v1490 = vpop.permute.xlu0 %1489
        %1492 = vset.pattern.permute.xlu0 2
        %1493 = vperm.xlu0 %1492, %v464
        %v1494 = vpop.permute.xlu0 %1493
        %1496 = vset.pattern.permute.xlu0 2
        %1497 = vperm.xlu0 %1496, %v465
        %v1498 = vpop.permute.xlu0 %1497
        %v1500 = vlaneseq
        %v1501 = vshrl.u32 %v1500, 7
        %v1502 = vsub.s32 2, %v1501
        %v1503 = vrot.slane %v467, %v1502
        %v1504 = vmul.f32 %v1246, %v1503
        %v1505 = vmul.f32 %v1250, %v1503
        %v1506 = vmul.f32 %v1254, %v1503
        %v1507 = vmul.f32 %v1258, %v1503
        %v1508 = vmul.f32 %v1262, %v1503
        %v1509 = vmul.f32 %v1266, %v1503
        %v1510 = vmul.f32 %v1270, %v1503
        %v1511 = vmul.f32 %v1274, %v1503
        %v1512 = vmul.f32 %v1278, %v1503
        %v1513 = vmul.f32 %v1282, %v1503
        %v1514 = vmul.f32 %v1286, %v1503
        %v1515 = vmul.f32 %v1290, %v1503
        %v1516 = vmul.f32 %v1294, %v1503
        %v1517 = vmul.f32 %v1298, %v1503
        %v1518 = vmul.f32 %v1302, %v1503
        %v1519 = vmul.f32 %v1306, %v1503
        %v1520 = vmul.f32 %v1310, %v1503
        %v1521 = vmul.f32 %v1314, %v1503
        %v1522 = vmul.f32 %v1318, %v1503
        %v1523 = vmul.f32 %v1322, %v1503
        %v1524 = vmul.f32 %v1326, %v1503
        %v1525 = vmul.f32 %v1330, %v1503
        %v1526 = vmul.f32 %v1334, %v1503
        %v1527 = vmul.f32 %v1338, %v1503
        %v1528 = vmul.f32 %v1342, %v1503
        %v1529 = vmul.f32 %v1346, %v1503
        %v1530 = vmul.f32 %v1350, %v1503
        %v1531 = vmul.f32 %v1354, %v1503
        %v1532 = vmul.f32 %v1358, %v1503
        %v1533 = vmul.f32 %v1362, %v1503
        %v1534 = vmul.f32 %v1366, %v1503
        %v1535 = vmul.f32 %v1370, %v1503
        %v1536 = vmul.f32 %v1374, %v1503
        %v1537 = vmul.f32 %v1378, %v1503
        %v1538 = vmul.f32 %v1382, %v1503
        %v1539 = vmul.f32 %v1386, %v1503
        %v1540 = vmul.f32 %v1390, %v1503
        %v1541 = vmul.f32 %v1394, %v1503
        %v1542 = vmul.f32 %v1398, %v1503
        %v1543 = vmul.f32 %v1402, %v1503
        %v1544 = vmul.f32 %v1406, %v1503
        %v1545 = vmul.f32 %v1410, %v1503
        %v1546 = vmul.f32 %v1414, %v1503
        %v1547 = vmul.f32 %v1418, %v1503
        %v1548 = vmul.f32 %v1422, %v1503
        %v1549 = vmul.f32 %v1426, %v1503
        %v1550 = vmul.f32 %v1430, %v1503
        %v1551 = vmul.f32 %v1434, %v1503
        %v1552 = vmul.f32 %v1438, %v1503
        %v1553 = vmul.f32 %v1442, %v1503
        %v1554 = vmul.f32 %v1446, %v1503
        %v1555 = vmul.f32 %v1450, %v1503
        %v1556 = vmul.f32 %v1454, %v1503
        %v1557 = vmul.f32 %v1458, %v1503
        %v1558 = vmul.f32 %v1462, %v1503
        %v1559 = vmul.f32 %v1466, %v1503
        %v1560 = vmul.f32 %v1470, %v1503
        %v1561 = vmul.f32 %v1474, %v1503
        %v1562 = vmul.f32 %v1478, %v1503
        %v1563 = vmul.f32 %v1482, %v1503
        %v1564 = vmul.f32 %v1486, %v1503
        %v1565 = vmul.f32 %v1490, %v1503
        %v1566 = vmul.f32 %v1494, %v1503
        %v1567 = vmul.f32 %v1498, %v1503
        %v1568 = vadd.f32 %v1180, %v1504
        %v1569 = vadd.f32 %v1181, %v1505
        %v1570 = vadd.f32 %v1182, %v1506
        %v1571 = vadd.f32 %v1183, %v1507
        %v1572 = vadd.f32 %v1184, %v1508
        %v1573 = vadd.f32 %v1185, %v1509
        %v1574 = vadd.f32 %v1186, %v1510
        %v1575 = vadd.f32 %v1187, %v1511
        %v1576 = vadd.f32 %v1188, %v1512
        %v1577 = vadd.f32 %v1189, %v1513
        %v1578 = vadd.f32 %v1190, %v1514
        %v1579 = vadd.f32 %v1191, %v1515
        %v1580 = vadd.f32 %v1192, %v1516
        %v1581 = vadd.f32 %v1193, %v1517
        %v1582 = vadd.f32 %v1194, %v1518
        %v1583 = vadd.f32 %v1195, %v1519
        %v1584 = vadd.f32 %v1196, %v1520
        %v1585 = vadd.f32 %v1197, %v1521
        %v1586 = vadd.f32 %v1198, %v1522
        %v1587 = vadd.f32 %v1199, %v1523
        %v1588 = vadd.f32 %v1200, %v1524
        %v1589 = vadd.f32 %v1201, %v1525
        %v1590 = vadd.f32 %v1202, %v1526
        %v1591 = vadd.f32 %v1203, %v1527
        %v1592 = vadd.f32 %v1204, %v1528
        %v1593 = vadd.f32 %v1205, %v1529
        %v1594 = vadd.f32 %v1206, %v1530
        %v1595 = vadd.f32 %v1207, %v1531
        %v1596 = vadd.f32 %v1208, %v1532
        %v1597 = vadd.f32 %v1209, %v1533
        %v1598 = vadd.f32 %v1210, %v1534
        %v1599 = vadd.f32 %v1211, %v1535
        %v1600 = vadd.f32 %v1212, %v1536
        %v1601 = vadd.f32 %v1213, %v1537
        %v1602 = vadd.f32 %v1214, %v1538
        %v1603 = vadd.f32 %v1215, %v1539
        %v1604 = vadd.f32 %v1216, %v1540
        %v1605 = vadd.f32 %v1217, %v1541
        %v1606 = vadd.f32 %v1218, %v1542
        %v1607 = vadd.f32 %v1219, %v1543
        %v1608 = vadd.f32 %v1220, %v1544
        %v1609 = vadd.f32 %v1221, %v1545
        %v1610 = vadd.f32 %v1222, %v1546
        %v1611 = vadd.f32 %v1223, %v1547
        %v1612 = vadd.f32 %v1224, %v1548
        %v1613 = vadd.f32 %v1225, %v1549
        %v1614 = vadd.f32 %v1226, %v1550
        %v1615 = vadd.f32 %v1227, %v1551
        %v1616 = vadd.f32 %v1228, %v1552
        %v1617 = vadd.f32 %v1229, %v1553
        %v1618 = vadd.f32 %v1230, %v1554
        %v1619 = vadd.f32 %v1231, %v1555
        %v1620 = vadd.f32 %v1232, %v1556
        %v1621 = vadd.f32 %v1233, %v1557
        %v1622 = vadd.f32 %v1234, %v1558
        %v1623 = vadd.f32 %v1235, %v1559
        %v1624 = vadd.f32 %v1236, %v1560
        %v1625 = vadd.f32 %v1237, %v1561
        %v1626 = vadd.f32 %v1238, %v1562
        %v1627 = vadd.f32 %v1239, %v1563
        %v1628 = vadd.f32 %v1240, %v1564
        %v1629 = vadd.f32 %v1241, %v1565
        %v1630 = vadd.f32 %v1242, %v1566
        %v1631 = vadd.f32 %v1243, %v1567
        %v1632 = vld [vmem:[%s2] sm:$0x1]
        %v1634 = vlaneseq
        %v1635 = vshrl.u32 %v1634, 7
        %v1636 = vsub.s32 0, %v1635
        %v1637 = vrot.slane %v1632, %v1636
        %v1639 = vadd.f32 %v1568, %v1637
        %v1640 = vadd.f32 %v1569, %v1637
        %v1641 = vadd.f32 %v1570, %v1637
        %v1642 = vadd.f32 %v1571, %v1637
        %v1643 = vadd.f32 %v1572, %v1637
        %v1644 = vadd.f32 %v1573, %v1637
        %v1645 = vadd.f32 %v1574, %v1637
        %v1646 = vadd.f32 %v1575, %v1637
        %v1647 = vadd.f32 %v1576, %v1637
        %v1648 = vadd.f32 %v1577, %v1637
        %v1649 = vadd.f32 %v1578, %v1637
        %v1650 = vadd.f32 %v1579, %v1637
        %v1651 = vadd.f32 %v1580, %v1637
        %v1652 = vadd.f32 %v1581, %v1637
        %v1653 = vadd.f32 %v1582, %v1637
        %v1654 = vadd.f32 %v1583, %v1637
        %v1655 = vadd.f32 %v1584, %v1637
        %v1656 = vadd.f32 %v1585, %v1637
        %v1657 = vadd.f32 %v1586, %v1637
        %v1658 = vadd.f32 %v1587, %v1637
        %v1659 = vadd.f32 %v1588, %v1637
        %v1660 = vadd.f32 %v1589, %v1637
        %v1661 = vadd.f32 %v1590, %v1637
        %v1662 = vadd.f32 %v1591, %v1637
        %v1663 = vadd.f32 %v1592, %v1637
        %v1664 = vadd.f32 %v1593, %v1637
        %v1665 = vadd.f32 %v1594, %v1637
        %v1666 = vadd.f32 %v1595, %v1637
        %v1667 = vadd.f32 %v1596, %v1637
        %v1668 = vadd.f32 %v1597, %v1637
        %v1669 = vadd.f32 %v1598, %v1637
        %v1670 = vadd.f32 %v1599, %v1637
        %v1671 = vadd.f32 %v1600, %v1637
        %v1672 = vadd.f32 %v1601, %v1637
        %v1673 = vadd.f32 %v1602, %v1637
        %v1674 = vadd.f32 %v1603, %v1637
        %v1675 = vadd.f32 %v1604, %v1637
        %v1676 = vadd.f32 %v1605, %v1637
        %v1677 = vadd.f32 %v1606, %v1637
        %v1678 = vadd.f32 %v1607, %v1637
        %v1679 = vadd.f32 %v1608, %v1637
        %v1680 = vadd.f32 %v1609, %v1637
        %v1681 = vadd.f32 %v1610, %v1637
        %v1682 = vadd.f32 %v1611, %v1637
        %v1683 = vadd.f32 %v1612, %v1637
        %v1684 = vadd.f32 %v1613, %v1637
        %v1685 = vadd.f32 %v1614, %v1637
        %v1686 = vadd.f32 %v1615, %v1637
        %v1687 = vadd.f32 %v1616, %v1637
        %v1688 = vadd.f32 %v1617, %v1637
        %v1689 = vadd.f32 %v1618, %v1637
        %v1690 = vadd.f32 %v1619, %v1637
        %v1691 = vadd.f32 %v1620, %v1637
        %v1692 = vadd.f32 %v1621, %v1637
        %v1693 = vadd.f32 %v1622, %v1637
        %v1694 = vadd.f32 %v1623, %v1637
        %v1695 = vadd.f32 %v1624, %v1637
        %v1696 = vadd.f32 %v1625, %v1637
        %v1697 = vadd.f32 %v1626, %v1637
        %v1698 = vadd.f32 %v1627, %v1637
        %v1699 = vadd.f32 %v1628, %v1637
        %v1700 = vadd.f32 %v1629, %v1637
        %v1701 = vadd.f32 %v1630, %v1637
        %v1702 = vadd.f32 %v1631, %v1637
        %v1703 = vmax.f32 %v1639, 0.0
        %v1704 = vmax.f32 %v1640, 0.0
        %v1705 = vmax.f32 %v1641, 0.0
        %v1706 = vmax.f32 %v1642, 0.0
        %v1707 = vmax.f32 %v1643, 0.0
        %v1708 = vmax.f32 %v1644, 0.0
        %v1709 = vmax.f32 %v1645, 0.0
        %v1710 = vmax.f32 %v1646, 0.0
        %v1711 = vmax.f32 %v1647, 0.0
        %v1712 = vmax.f32 %v1648, 0.0
        %v1713 = vmax.f32 %v1649, 0.0
        %v1714 = vmax.f32 %v1650, 0.0
        %v1715 = vmax.f32 %v1651, 0.0
        %v1716 = vmax.f32 %v1652, 0.0
        %v1717 = vmax.f32 %v1653, 0.0
        %v1718 = vmax.f32 %v1654, 0.0
        %v1719 = vmax.f32 %v1655, 0.0
        %v1720 = vmax.f32 %v1656, 0.0
        %v1721 = vmax.f32 %v1657, 0.0
        %v1722 = vmax.f32 %v1658, 0.0
        %v1723 = vmax.f32 %v1659, 0.0
        %v1724 = vmax.f32 %v1660, 0.0
        %v1725 = vmax.f32 %v1661, 0.0
        %v1726 = vmax.f32 %v1662, 0.0
        %v1727 = vmax.f32 %v1663, 0.0
        %v1728 = vmax.f32 %v1664, 0.0
        %v1729 = vmax.f32 %v1665, 0.0
        %v1730 = vmax.f32 %v1666, 0.0
        %v1731 = vmax.f32 %v1667, 0.0
        %v1732 = vmax.f32 %v1668, 0.0
        %v1733 = vmax.f32 %v1669, 0.0
        %v1734 = vmax.f32 %v1670, 0.0
        %v1735 = vmax.f32 %v1671, 0.0
        %v1736 = vmax.f32 %v1672, 0.0
        %v1737 = vmax.f32 %v1673, 0.0
        %v1738 = vmax.f32 %v1674, 0.0
        %v1739 = vmax.f32 %v1675, 0.0
        %v1740 = vmax.f32 %v1676, 0.0
        %v1741 = vmax.f32 %v1677, 0.0
        %v1742 = vmax.f32 %v1678, 0.0
        %v1743 = vmax.f32 %v1679, 0.0
        %v1744 = vmax.f32 %v1680, 0.0
        %v1745 = vmax.f32 %v1681, 0.0
        %v1746 = vmax.f32 %v1682, 0.0
        %v1747 = vmax.f32 %v1683, 0.0
        %v1748 = vmax.f32 %v1684, 0.0
        %v1749 = vmax.f32 %v1685, 0.0
        %v1750 = vmax.f32 %v1686, 0.0
        %v1751 = vmax.f32 %v1687, 0.0
        %v1752 = vmax.f32 %v1688, 0.0
        %v1753 = vmax.f32 %v1689, 0.0
        %v1754 = vmax.f32 %v1690, 0.0
        %v1755 = vmax.f32 %v1691, 0.0
        %v1756 = vmax.f32 %v1692, 0.0
        %v1757 = vmax.f32 %v1693, 0.0
        %v1758 = vmax.f32 %v1694, 0.0
        %v1759 = vmax.f32 %v1695, 0.0
        %v1760 = vmax.f32 %v1696, 0.0
        %v1761 = vmax.f32 %v1697, 0.0
        %v1762 = vmax.f32 %v1698, 0.0
        %v1763 = vmax.f32 %v1699, 0.0
        %v1764 = vmax.f32 %v1700, 0.0
        %v1765 = vmax.f32 %v1701, 0.0
        %v1766 = vmax.f32 %v1702, 0.0
        %v1767 = vpack.c.bf16 %v1704, %v1703
        %v1768 = vpack.c.bf16 %v1706, %v1705
        %v1769 = vpack.c.bf16 %v1708, %v1707
        %v1770 = vpack.c.bf16 %v1710, %v1709
        %v1771 = vpack.c.bf16 %v1712, %v1711
        %v1772 = vpack.c.bf16 %v1714, %v1713
        %v1773 = vpack.c.bf16 %v1716, %v1715
        %v1774 = vpack.c.bf16 %v1718, %v1717
        %v1775 = vpack.c.bf16 %v1720, %v1719
        %v1776 = vpack.c.bf16 %v1722, %v1721
        %v1777 = vpack.c.bf16 %v1724, %v1723
        %v1778 = vpack.c.bf16 %v1726, %v1725
        %v1779 = vpack.c.bf16 %v1728, %v1727
        %v1780 = vpack.c.bf16 %v1730, %v1729
        %v1781 = vpack.c.bf16 %v1732, %v1731
        %v1782 = vpack.c.bf16 %v1734, %v1733
        %v1783 = vpack.c.bf16 %v1736, %v1735
        %v1784 = vpack.c.bf16 %v1738, %v1737
        %v1785 = vpack.c.bf16 %v1740, %v1739
        %v1786 = vpack.c.bf16 %v1742, %v1741
        %v1787 = vpack.c.bf16 %v1744, %v1743
        %v1788 = vpack.c.bf16 %v1746, %v1745
        %v1789 = vpack.c.bf16 %v1748, %v1747
        %v1790 = vpack.c.bf16 %v1750, %v1749
        %v1791 = vpack.c.bf16 %v1752, %v1751
        %v1792 = vpack.c.bf16 %v1754, %v1753
        %v1793 = vpack.c.bf16 %v1756, %v1755
        %v1794 = vpack.c.bf16 %v1758, %v1757
        %v1795 = vpack.c.bf16 %v1760, %v1759
        %v1796 = vpack.c.bf16 %v1762, %v1761
        %v1797 = vpack.c.bf16 %v1764, %v1763
        %v1798 = vpack.c.bf16 %v1766, %v1765
        %v1799 = vld [vmem:[%s3] sm:$0xf]
        %v1800 = vld [vmem:[%s4] sm:$0x1]
        %v1802 = vlaneseq
        %v1803 = vshrl.u32 %v1802, 7
        %v1804 = vsub.s32 0, %v1803
        %v1805 = vrot.slane %v1800, %v1804
        %vm1807 = vcmask 64512
        %v1809 = vsel %vm1807, %v1767, 0
        %v1812 = vsel %vm1807, %v1768, 0
        %v1815 = vsel %vm1807, %v1769, 0
        %v1818 = vsel %vm1807, %v1770, 0
        %v1821 = vsel %vm1807, %v1771, 0
        %v1824 = vsel %vm1807, %v1772, 0
        %v1827 = vsel %vm1807, %v1773, 0
        %v1830 = vsel %vm1807, %v1774, 0
        %v1833 = vsel %vm1807, %v1775, 0
        %v1836 = vsel %vm1807, %v1776, 0
        %v1839 = vsel %vm1807, %v1777, 0
        %v1842 = vsel %vm1807, %v1778, 0
        %v1845 = vsel %vm1807, %v1779, 0
        %v1848 = vsel %vm1807, %v1780, 0
        %v1851 = vsel %vm1807, %v1781, 0
        %v1854 = vsel %vm1807, %v1782, 0
        %v1857 = vsel %vm1807, %v1783, 0
        %v1860 = vsel %vm1807, %v1784, 0
        %v1863 = vsel %vm1807, %v1785, 0
        %v1866 = vsel %vm1807, %v1786, 0
        %v1869 = vsel %vm1807, %v1787, 0
        %v1872 = vsel %vm1807, %v1788, 0
        %v1875 = vsel %vm1807, %v1789, 0
        %v1878 = vsel %vm1807, %v1790, 0
        %v1881 = vsel %vm1807, %v1791, 0
        %v1884 = vsel %vm1807, %v1792, 0
        %v1887 = vsel %vm1807, %v1793, 0
        %v1890 = vsel %vm1807, %v1794, 0
        %v1893 = vsel %vm1807, %v1795, 0
        %v1896 = vsel %vm1807, %v1796, 0
        %v1899 = vsel %vm1807, %v1797, 0
        %v1902 = vsel %vm1807, %v1798, 0
        %vm1904 = vcmask 1043456
        %v1906 = vsel %vm1904, %v1799, 0
        %1908 = vmatprep.subr.bf16.mxu0 0
        %1909 = vmatpush1.bf16.msra.mxu0 0
        %1910 = vmatprep.subr.bf16.mxu0 0
        %1911 = vmatpush1.bf16.msra.mxu0 0
        %1912 = vmatprep.subr.bf16.mxu0 0
        %1913 = vmatpush1.bf16.msra.mxu0 0
        %1914 = vmatprep.subr.bf16.mxu0 0
        %1915 = vmatpush1.bf16.msra.mxu0 0
        %1916 = vmatprep.subr.bf16.mxu0 0
        %1917 = vmatpush1.bf16.msra.mxu0 0
        %1918 = vmatprep.subr.bf16.mxu0 0
        %1919 = vmatpush1.bf16.msra.mxu0 0
        %1920 = vmatprep.subr.bf16.mxu0 0
        %1921 = vmatpush1.bf16.msra.mxu0 0
        %1922 = vmatprep.subr.bf16.mxu0 0
        %1923 = vmatpush1.bf16.msra.mxu0 %v1906
        %1924 = vmatprep.subr.bf16.mxu0 0
        %1925 = vmatpush2.bf16.msra.mxu0 0
        %1926 = vmatprep.subr.bf16.mxu0 0
        %1927 = vmatpush2.bf16.msra.mxu0 0
        %1928 = vmatprep.subr.bf16.mxu0 0
        %1929 = vmatpush2.bf16.msra.mxu0 0
        %1930 = vmatprep.subr.bf16.mxu0 0
        %1931 = vmatpush2.bf16.msra.mxu0 0
        %1932 = vmatprep.subr.bf16.mxu0 0
        %1933 = vmatpush2.bf16.msra.mxu0 0
        %1934 = vmatprep.subr.bf16.mxu0 0
        %1935 = vmatpush2.bf16.msra.mxu0 0
        %1936 = vmatprep.subr.bf16.mxu0 0
        %1937 = vmatpush2.bf16.msra.mxu0 0
        %1938 = vmatprep.subr.bf16.mxu0 0
        %1939 = vmatpush2.bf16.msra.mxu0 0
        %1940 = vmatprep.mubr.bf16.mxu0 0
        %1941 = vmatmul.mubr.bf16.gmra.mxu0 %v1809
        %v1942 = vpop.f32.mrf.mxu0
        %v1943 = vadd.f32 %v1805, %v1942
        %v1944 = vpop.f32.mrf.mxu0
        %v1945 = vpop.f32.mrf.mxu0
        %v1946 = vadd.f32 %v1805, %v1945
        %v1947 = vpop.f32.mrf.mxu0
        %1948 = vmatprep.mubr.bf16.mxu0 0
        %1949 = vmatmul.mubr.bf16.gmra.mxu0 %v1812
        %v1950 = vpop.f32.mrf.mxu0
        %v1951 = vadd.f32 %v1805, %v1950
        %v1952 = vpop.f32.mrf.mxu0
        %v1953 = vpop.f32.mrf.mxu0
        %v1954 = vadd.f32 %v1805, %v1953
        %v1955 = vpop.f32.mrf.mxu0
        %1956 = vmatprep.mubr.bf16.mxu0 0
        %1957 = vmatmul.mubr.bf16.gmra.mxu0 %v1815
        %v1958 = vpop.f32.mrf.mxu0
        %v1959 = vadd.f32 %v1805, %v1958
        %v1960 = vpop.f32.mrf.mxu0
        %v1961 = vpop.f32.mrf.mxu0
        %v1962 = vadd.f32 %v1805, %v1961
        %v1963 = vpop.f32.mrf.mxu0
        %1964 = vmatprep.mubr.bf16.mxu0 0
        %1965 = vmatmul.mubr.bf16.gmra.mxu0 %v1818
        %v1966 = vpop.f32.mrf.mxu0
        %v1967 = vadd.f32 %v1805, %v1966
        %v1968 = vpop.f32.mrf.mxu0
        %v1969 = vpop.f32.mrf.mxu0
        %v1970 = vadd.f32 %v1805, %v1969
        %v1971 = vpop.f32.mrf.mxu0
        %1972 = vmatprep.mubr.bf16.mxu0 0
        %1973 = vmatmul.mubr.bf16.gmra.mxu0 %v1821
        %v1974 = vpop.f32.mrf.mxu0
        %v1975 = vadd.f32 %v1805, %v1974
        %v1976 = vpop.f32.mrf.mxu0
        %v1977 = vpop.f32.mrf.mxu0
        %v1978 = vadd.f32 %v1805, %v1977
        %v1979 = vpop.f32.mrf.mxu0
        %1980 = vmatprep.mubr.bf16.mxu0 0
        %1981 = vmatmul.mubr.bf16.gmra.mxu0 %v1824
        %v1982 = vpop.f32.mrf.mxu0
        %v1983 = vadd.f32 %v1805, %v1982
        %v1984 = vpop.f32.mrf.mxu0
        %v1985 = vpop.f32.mrf.mxu0
        %v1986 = vadd.f32 %v1805, %v1985
        %v1987 = vpop.f32.mrf.mxu0
        %1988 = vmatprep.mubr.bf16.mxu0 0
        %1989 = vmatmul.mubr.bf16.gmra.mxu0 %v1827
        %v1990 = vpop.f32.mrf.mxu0
        %v1991 = vadd.f32 %v1805, %v1990
        %v1992 = vpop.f32.mrf.mxu0
        %v1993 = vpop.f32.mrf.mxu0
        %v1994 = vadd.f32 %v1805, %v1993
        %v1995 = vpop.f32.mrf.mxu0
        %1996 = vmatprep.mubr.bf16.mxu0 0
        %1997 = vmatmul.mubr.bf16.gmra.mxu0 %v1830
        %v1998 = vpop.f32.mrf.mxu0
        %v1999 = vadd.f32 %v1805, %v1998
        %v2000 = vpop.f32.mrf.mxu0
        %v2001 = vpop.f32.mrf.mxu0
        %v2002 = vadd.f32 %v1805, %v2001
        %v2003 = vpop.f32.mrf.mxu0
        %2004 = vmatprep.mubr.bf16.mxu0 0
        %2005 = vmatmul.mubr.bf16.gmra.mxu0 %v1833
        %v2006 = vpop.f32.mrf.mxu0
        %v2007 = vadd.f32 %v1805, %v2006
        %v2008 = vpop.f32.mrf.mxu0
        %v2009 = vpop.f32.mrf.mxu0
        %v2010 = vadd.f32 %v1805, %v2009
        %v2011 = vpop.f32.mrf.mxu0
        %2012 = vmatprep.mubr.bf16.mxu0 0
        %2013 = vmatmul.mubr.bf16.gmra.mxu0 %v1836
        %v2014 = vpop.f32.mrf.mxu0
        %v2015 = vadd.f32 %v1805, %v2014
        %v2016 = vpop.f32.mrf.mxu0
        %v2017 = vpop.f32.mrf.mxu0
        %v2018 = vadd.f32 %v1805, %v2017
        %v2019 = vpop.f32.mrf.mxu0
        %2020 = vmatprep.mubr.bf16.mxu0 0
        %2021 = vmatmul.mubr.bf16.gmra.mxu0 %v1839
        %v2022 = vpop.f32.mrf.mxu0
        %v2023 = vadd.f32 %v1805, %v2022
        %v2024 = vpop.f32.mrf.mxu0
        %v2025 = vpop.f32.mrf.mxu0
        %v2026 = vadd.f32 %v1805, %v2025
        %v2027 = vpop.f32.mrf.mxu0
        %2028 = vmatprep.mubr.bf16.mxu0 0
        %2029 = vmatmul.mubr.bf16.gmra.mxu0 %v1842
        %v2030 = vpop.f32.mrf.mxu0
        %v2031 = vadd.f32 %v1805, %v2030
        %v2032 = vpop.f32.mrf.mxu0
        %v2033 = vpop.f32.mrf.mxu0
        %v2034 = vadd.f32 %v1805, %v2033
        %v2035 = vpop.f32.mrf.mxu0
        %2036 = vmatprep.mubr.bf16.mxu0 0
        %2037 = vmatmul.mubr.bf16.gmra.mxu0 %v1845
        %v2038 = vpop.f32.mrf.mxu0
        %v2039 = vadd.f32 %v1805, %v2038
        %v2040 = vpop.f32.mrf.mxu0
        %v2041 = vpop.f32.mrf.mxu0
        %v2042 = vadd.f32 %v1805, %v2041
        %v2043 = vpop.f32.mrf.mxu0
        %2044 = vmatprep.mubr.bf16.mxu0 0
        %2045 = vmatmul.mubr.bf16.gmra.mxu0 %v1848
        %v2046 = vpop.f32.mrf.mxu0
        %v2047 = vadd.f32 %v1805, %v2046
        %v2048 = vpop.f32.mrf.mxu0
        %v2049 = vpop.f32.mrf.mxu0
        %v2050 = vadd.f32 %v1805, %v2049
        %v2051 = vpop.f32.mrf.mxu0
        %2052 = vmatprep.mubr.bf16.mxu0 0
        %2053 = vmatmul.mubr.bf16.gmra.mxu0 %v1851
        %v2054 = vpop.f32.mrf.mxu0
        %v2055 = vadd.f32 %v1805, %v2054
        %v2056 = vpop.f32.mrf.mxu0
        %v2057 = vpop.f32.mrf.mxu0
        %v2058 = vadd.f32 %v1805, %v2057
        %v2059 = vpop.f32.mrf.mxu0
        %2060 = vmatprep.mubr.bf16.mxu0 0
        %2061 = vmatmul.mubr.bf16.gmra.mxu0 %v1854
        %v2062 = vpop.f32.mrf.mxu0
        %v2063 = vadd.f32 %v1805, %v2062
        %v2064 = vpop.f32.mrf.mxu0
        %v2065 = vpop.f32.mrf.mxu0
        %v2066 = vadd.f32 %v1805, %v2065
        %v2067 = vpop.f32.mrf.mxu0
        %2068 = vmatprep.mubr.bf16.mxu0 0
        %2069 = vmatmul.mubr.bf16.gmra.mxu0 %v1857
        %v2070 = vpop.f32.mrf.mxu0
        %v2071 = vadd.f32 %v1805, %v2070
        %v2072 = vpop.f32.mrf.mxu0
        %v2073 = vpop.f32.mrf.mxu0
        %v2074 = vadd.f32 %v1805, %v2073
        %v2075 = vpop.f32.mrf.mxu0
        %2076 = vmatprep.mubr.bf16.mxu0 0
        %2077 = vmatmul.mubr.bf16.gmra.mxu0 %v1860
        %v2078 = vpop.f32.mrf.mxu0
        %v2079 = vadd.f32 %v1805, %v2078
        %v2080 = vpop.f32.mrf.mxu0
        %v2081 = vpop.f32.mrf.mxu0
        %v2082 = vadd.f32 %v1805, %v2081
        %v2083 = vpop.f32.mrf.mxu0
        %2084 = vmatprep.mubr.bf16.mxu0 0
        %2085 = vmatmul.mubr.bf16.gmra.mxu0 %v1863
        %v2086 = vpop.f32.mrf.mxu0
        %v2087 = vadd.f32 %v1805, %v2086
        %v2088 = vpop.f32.mrf.mxu0
        %v2089 = vpop.f32.mrf.mxu0
        %v2090 = vadd.f32 %v1805, %v2089
        %v2091 = vpop.f32.mrf.mxu0
        %2092 = vmatprep.mubr.bf16.mxu0 0
        %2093 = vmatmul.mubr.bf16.gmra.mxu0 %v1866
        %v2094 = vpop.f32.mrf.mxu0
        %v2095 = vadd.f32 %v1805, %v2094
        %v2096 = vpop.f32.mrf.mxu0
        %v2097 = vpop.f32.mrf.mxu0
        %v2098 = vadd.f32 %v1805, %v2097
        %v2099 = vpop.f32.mrf.mxu0
        %2100 = vmatprep.mubr.bf16.mxu0 0
        %2101 = vmatmul.mubr.bf16.gmra.mxu0 %v1869
        %v2102 = vpop.f32.mrf.mxu0
        %v2103 = vadd.f32 %v1805, %v2102
        %v2104 = vpop.f32.mrf.mxu0
        %v2105 = vpop.f32.mrf.mxu0
        %v2106 = vadd.f32 %v1805, %v2105
        %v2107 = vpop.f32.mrf.mxu0
        %2108 = vmatprep.mubr.bf16.mxu0 0
        %2109 = vmatmul.mubr.bf16.gmra.mxu0 %v1872
        %v2110 = vpop.f32.mrf.mxu0
        %v2111 = vadd.f32 %v1805, %v2110
        %v2112 = vpop.f32.mrf.mxu0
        %v2113 = vpop.f32.mrf.mxu0
        %v2114 = vadd.f32 %v1805, %v2113
        %v2115 = vpop.f32.mrf.mxu0
        %2116 = vmatprep.mubr.bf16.mxu0 0
        %2117 = vmatmul.mubr.bf16.gmra.mxu0 %v1875
        %v2118 = vpop.f32.mrf.mxu0
        %v2119 = vadd.f32 %v1805, %v2118
        %v2120 = vpop.f32.mrf.mxu0
        %v2121 = vpop.f32.mrf.mxu0
        %v2122 = vadd.f32 %v1805, %v2121
        %v2123 = vpop.f32.mrf.mxu0
        %2124 = vmatprep.mubr.bf16.mxu0 0
        %2125 = vmatmul.mubr.bf16.gmra.mxu0 %v1878
        %v2126 = vpop.f32.mrf.mxu0
        %v2127 = vadd.f32 %v1805, %v2126
        %v2128 = vpop.f32.mrf.mxu0
        %v2129 = vpop.f32.mrf.mxu0
        %v2130 = vadd.f32 %v1805, %v2129
        %v2131 = vpop.f32.mrf.mxu0
        %2132 = vmatprep.mubr.bf16.mxu0 0
        %2133 = vmatmul.mubr.bf16.gmra.mxu0 %v1881
        %v2134 = vpop.f32.mrf.mxu0
        %v2135 = vadd.f32 %v1805, %v2134
        %v2136 = vpop.f32.mrf.mxu0
        %v2137 = vpop.f32.mrf.mxu0
        %v2138 = vadd.f32 %v1805, %v2137
        %v2139 = vpop.f32.mrf.mxu0
        %2140 = vmatprep.mubr.bf16.mxu0 0
        %2141 = vmatmul.mubr.bf16.gmra.mxu0 %v1884
        %v2142 = vpop.f32.mrf.mxu0
        %v2143 = vadd.f32 %v1805, %v2142
        %v2144 = vpop.f32.mrf.mxu0
        %v2145 = vpop.f32.mrf.mxu0
        %v2146 = vadd.f32 %v1805, %v2145
        %v2147 = vpop.f32.mrf.mxu0
        %2148 = vmatprep.mubr.bf16.mxu0 0
        %2149 = vmatmul.mubr.bf16.gmra.mxu0 %v1887
        %v2150 = vpop.f32.mrf.mxu0
        %v2151 = vadd.f32 %v1805, %v2150
        %v2152 = vpop.f32.mrf.mxu0
        %v2153 = vpop.f32.mrf.mxu0
        %v2154 = vadd.f32 %v1805, %v2153
        %v2155 = vpop.f32.mrf.mxu0
        %2156 = vmatprep.mubr.bf16.mxu0 0
        %2157 = vmatmul.mubr.bf16.gmra.mxu0 %v1890
        %v2158 = vpop.f32.mrf.mxu0
        %v2159 = vadd.f32 %v1805, %v2158
        %v2160 = vpop.f32.mrf.mxu0
        %v2161 = vpop.f32.mrf.mxu0
        %v2162 = vadd.f32 %v1805, %v2161
        %v2163 = vpop.f32.mrf.mxu0
        %2164 = vmatprep.mubr.bf16.mxu0 0
        %2165 = vmatmul.mubr.bf16.gmra.mxu0 %v1893
        %v2166 = vpop.f32.mrf.mxu0
        %v2167 = vadd.f32 %v1805, %v2166
        %v2168 = vpop.f32.mrf.mxu0
        %v2169 = vpop.f32.mrf.mxu0
        %v2170 = vadd.f32 %v1805, %v2169
        %v2171 = vpop.f32.mrf.mxu0
        %2172 = vmatprep.mubr.bf16.mxu0 0
        %2173 = vmatmul.mubr.bf16.gmra.mxu0 %v1896
        %v2174 = vpop.f32.mrf.mxu0
        %v2175 = vadd.f32 %v1805, %v2174
        %v2176 = vpop.f32.mrf.mxu0
        %v2177 = vpop.f32.mrf.mxu0
        %v2178 = vadd.f32 %v1805, %v2177
        %v2179 = vpop.f32.mrf.mxu0
        %2180 = vmatprep.mubr.bf16.mxu0 0
        %2181 = vmatmul.mubr.bf16.gmra.mxu0 %v1899
        %v2182 = vpop.f32.mrf.mxu0
        %v2183 = vadd.f32 %v1805, %v2182
        %v2184 = vpop.f32.mrf.mxu0
        %v2185 = vpop.f32.mrf.mxu0
        %v2186 = vadd.f32 %v1805, %v2185
        %v2187 = vpop.f32.mrf.mxu0
        %2188 = vmatprep.mubr.bf16.mxu0 0
        %2189 = vmatmul.mubr.bf16.gmra.mxu0 %v1902
        %v2190 = vpop.f32.mrf.mxu0
        %v2191 = vadd.f32 %v1805, %v2190
        %v2192 = vpop.f32.mrf.mxu0
        %v2193 = vpop.f32.mrf.mxu0
        %v2194 = vadd.f32 %v1805, %v2193
        %v2195 = vpop.f32.mrf.mxu0
        %2196 = vdwg.mxu0
        %v2197 = vmax.f32 %v1943, 0.0
        %v2198 = vmax.f32 %v1946, 0.0
        %v2199 = vmax.f32 %v1951, 0.0
        %v2200 = vmax.f32 %v1954, 0.0
        %v2201 = vmax.f32 %v1959, 0.0
        %v2202 = vmax.f32 %v1962, 0.0
        %v2203 = vmax.f32 %v1967, 0.0
        %v2204 = vmax.f32 %v1970, 0.0
        %v2205 = vmax.f32 %v1975, 0.0
        %v2206 = vmax.f32 %v1978, 0.0
        %v2207 = vmax.f32 %v1983, 0.0
        %v2208 = vmax.f32 %v1986, 0.0
        %v2209 = vmax.f32 %v1991, 0.0
        %v2210 = vmax.f32 %v1994, 0.0
        %v2211 = vmax.f32 %v1999, 0.0
        %v2212 = vmax.f32 %v2002, 0.0
        %v2213 = vmax.f32 %v2007, 0.0
        %v2214 = vmax.f32 %v2010, 0.0
        %v2215 = vmax.f32 %v2015, 0.0
        %v2216 = vmax.f32 %v2018, 0.0
        %v2217 = vmax.f32 %v2023, 0.0
        %v2218 = vmax.f32 %v2026, 0.0
        %v2219 = vmax.f32 %v2031, 0.0
        %v2220 = vmax.f32 %v2034, 0.0
        %v2221 = vmax.f32 %v2039, 0.0
        %v2222 = vmax.f32 %v2042, 0.0
        %v2223 = vmax.f32 %v2047, 0.0
        %v2224 = vmax.f32 %v2050, 0.0
        %v2225 = vmax.f32 %v2055, 0.0
        %v2226 = vmax.f32 %v2058, 0.0
        %v2227 = vmax.f32 %v2063, 0.0
        %v2228 = vmax.f32 %v2066, 0.0
        %v2229 = vmax.f32 %v2071, 0.0
        %v2230 = vmax.f32 %v2074, 0.0
        %v2231 = vmax.f32 %v2079, 0.0
        %v2232 = vmax.f32 %v2082, 0.0
        %v2233 = vmax.f32 %v2087, 0.0
        %v2234 = vmax.f32 %v2090, 0.0
        %v2235 = vmax.f32 %v2095, 0.0
        %v2236 = vmax.f32 %v2098, 0.0
        %v2237 = vmax.f32 %v2103, 0.0
        %v2238 = vmax.f32 %v2106, 0.0
        %v2239 = vmax.f32 %v2111, 0.0
        %v2240 = vmax.f32 %v2114, 0.0
        %v2241 = vmax.f32 %v2119, 0.0
        %v2242 = vmax.f32 %v2122, 0.0
        %v2243 = vmax.f32 %v2127, 0.0
        %v2244 = vmax.f32 %v2130, 0.0
        %v2245 = vmax.f32 %v2135, 0.0
        %v2246 = vmax.f32 %v2138, 0.0
        %v2247 = vmax.f32 %v2143, 0.0
        %v2248 = vmax.f32 %v2146, 0.0
        %v2249 = vmax.f32 %v2151, 0.0
        %v2250 = vmax.f32 %v2154, 0.0
        %v2251 = vmax.f32 %v2159, 0.0
        %v2252 = vmax.f32 %v2162, 0.0
        %v2253 = vmax.f32 %v2167, 0.0
        %v2254 = vmax.f32 %v2170, 0.0
        %v2255 = vmax.f32 %v2175, 0.0
        %v2256 = vmax.f32 %v2178, 0.0
        %v2257 = vmax.f32 %v2183, 0.0
        %v2258 = vmax.f32 %v2186, 0.0
        %v2259 = vmax.f32 %v2191, 0.0
        %v2260 = vmax.f32 %v2194, 0.0
        %v2261 = vpack.c.bf16 %v2198, %v2197
        %v2262 = vpack.c.bf16 %v2200, %v2199
        %v2263 = vpack.c.bf16 %v2202, %v2201
        %v2264 = vpack.c.bf16 %v2204, %v2203
        %v2265 = vpack.c.bf16 %v2206, %v2205
        %v2266 = vpack.c.bf16 %v2208, %v2207
        %v2267 = vpack.c.bf16 %v2210, %v2209
        %v2268 = vpack.c.bf16 %v2212, %v2211
        %v2269 = vpack.c.bf16 %v2214, %v2213
        %v2270 = vpack.c.bf16 %v2216, %v2215
        %v2271 = vpack.c.bf16 %v2218, %v2217
        %v2272 = vpack.c.bf16 %v2220, %v2219
        %v2273 = vpack.c.bf16 %v2222, %v2221
        %v2274 = vpack.c.bf16 %v2224, %v2223
        %v2275 = vpack.c.bf16 %v2226, %v2225
        %v2276 = vpack.c.bf16 %v2228, %v2227
        %v2277 = vpack.c.bf16 %v2230, %v2229
        %v2278 = vpack.c.bf16 %v2232, %v2231
        %v2279 = vpack.c.bf16 %v2234, %v2233
        %v2280 = vpack.c.bf16 %v2236, %v2235
        %v2281 = vpack.c.bf16 %v2238, %v2237
        %v2282 = vpack.c.bf16 %v2240, %v2239
        %v2283 = vpack.c.bf16 %v2242, %v2241
        %v2284 = vpack.c.bf16 %v2244, %v2243
        %v2285 = vpack.c.bf16 %v2246, %v2245
        %v2286 = vpack.c.bf16 %v2248, %v2247
        %v2287 = vpack.c.bf16 %v2250, %v2249
        %v2288 = vpack.c.bf16 %v2252, %v2251
        %v2289 = vpack.c.bf16 %v2254, %v2253
        %v2290 = vpack.c.bf16 %v2256, %v2255
        %v2291 = vpack.c.bf16 %v2258, %v2257
        %v2292 = vpack.c.bf16 %v2260, %v2259
        %v2293 = vld [vmem:[%s5] sm:$0xf]
        %v2294 = vld [vmem:[%s5 + $0x4] sm:$0xf]
        %v2295 = vld [vmem:[%s6] sm:$0x1]
        %v2297 = vlaneseq
        %v2298 = vshrl.u32 %v2297, 7
        %v2299 = vsub.s32 0, %v2298
        %v2300 = vrot.slane %v2295, %v2299
        %v2304 = vunpack.c.l.b16 %v2293
        %v2305 = vunpack.c.l.b16 %v2294
        %v2306 = vpack.c.b16 %v2305, %v2304
        %vm2308 = vcmask 130048
        %v2310 = vsel %vm2308, %v2261, 0
        %v2313 = vsel %vm2308, %v2262, 0
        %v2316 = vsel %vm2308, %v2263, 0
        %v2319 = vsel %vm2308, %v2264, 0
        %v2322 = vsel %vm2308, %v2265, 0
        %v2325 = vsel %vm2308, %v2266, 0
        %v2328 = vsel %vm2308, %v2267, 0
        %v2331 = vsel %vm2308, %v2268, 0
        %v2334 = vsel %vm2308, %v2269, 0
        %v2337 = vsel %vm2308, %v2270, 0
        %v2340 = vsel %vm2308, %v2271, 0
        %v2343 = vsel %vm2308, %v2272, 0
        %v2346 = vsel %vm2308, %v2273, 0
        %v2349 = vsel %vm2308, %v2274, 0
        %v2352 = vsel %vm2308, %v2275, 0
        %v2355 = vsel %vm2308, %v2276, 0
        %v2358 = vsel %vm2308, %v2277, 0
        %v2361 = vsel %vm2308, %v2278, 0
        %v2364 = vsel %vm2308, %v2279, 0
        %v2367 = vsel %vm2308, %v2280, 0
        %v2370 = vsel %vm2308, %v2281, 0
        %v2373 = vsel %vm2308, %v2282, 0
        %v2376 = vsel %vm2308, %v2283, 0
        %v2379 = vsel %vm2308, %v2284, 0
        %v2382 = vsel %vm2308, %v2285, 0
        %v2385 = vsel %vm2308, %v2286, 0
        %v2388 = vsel %vm2308, %v2287, 0
        %v2391 = vsel %vm2308, %v2288, 0
        %v2394 = vsel %vm2308, %v2289, 0
        %v2397 = vsel %vm2308, %v2290, 0
        %v2400 = vsel %vm2308, %v2291, 0
        %v2403 = vsel %vm2308, %v2292, 0
        %2405 = vmatprep.subr.bf16.mxu0 0
        %2406 = vmatpush1.bf16.msra.mxu0 0
        %2407 = vmatprep.subr.bf16.mxu0 0
        %2408 = vmatpush1.bf16.msra.mxu0 0
        %2409 = vmatprep.subr.bf16.mxu0 0
        %2410 = vmatpush1.bf16.msra.mxu0 0
        %2411 = vmatprep.subr.bf16.mxu0 0
        %2412 = vmatpush1.bf16.msra.mxu0 0
        %2413 = vmatprep.subr.bf16.mxu0 0
        %2414 = vmatpush1.bf16.msra.mxu0 0
        %2415 = vmatprep.subr.bf16.mxu0 0
        %2416 = vmatpush1.bf16.msra.mxu0 0
        %2417 = vmatprep.subr.bf16.mxu0 0
        %2418 = vmatpush1.bf16.msra.mxu0 0
        %2419 = vmatprep.subr.bf16.mxu0 0
        %2420 = vmatpush1.bf16.msra.mxu0 %v2306
        %2421 = vmatprep.subr.bf16.mxu0 0
        %2422 = vmatpush2.bf16.msra.mxu0 0
        %2423 = vmatprep.subr.bf16.mxu0 0
        %2424 = vmatpush2.bf16.msra.mxu0 0
        %2425 = vmatprep.subr.bf16.mxu0 0
        %2426 = vmatpush2.bf16.msra.mxu0 0
        %2427 = vmatprep.subr.bf16.mxu0 0
        %2428 = vmatpush2.bf16.msra.mxu0 0
        %2429 = vmatprep.subr.bf16.mxu0 0
        %2430 = vmatpush2.bf16.msra.mxu0 0
        %2431 = vmatprep.subr.bf16.mxu0 0
        %2432 = vmatpush2.bf16.msra.mxu0 0
        %2433 = vmatprep.subr.bf16.mxu0 0
        %2434 = vmatpush2.bf16.msra.mxu0 0
        %2435 = vmatprep.subr.bf16.mxu0 0
        %2436 = vmatpush2.bf16.msra.mxu0 0
        %2437 = vmatprep.mubr.bf16.mxu0 0
        %2438 = vmatmul.mubr.bf16.gmra.mxu0 %v2310
        %v2439 = vpop.f32.mrf.mxu0
        %v2440 = vadd.f32 %v2300, %v2439
        %v2441 = vpop.f32.mrf.mxu0
        %v2442 = vpop.f32.mrf.mxu0
        %v2443 = vadd.f32 %v2300, %v2442
        %v2444 = vpop.f32.mrf.mxu0
        %2445 = vmatprep.mubr.bf16.mxu0 0
        %2446 = vmatmul.mubr.bf16.gmra.mxu0 %v2313
        %v2447 = vpop.f32.mrf.mxu0
        %v2448 = vadd.f32 %v2300, %v2447
        %v2449 = vpop.f32.mrf.mxu0
        %v2450 = vpop.f32.mrf.mxu0
        %v2451 = vadd.f32 %v2300, %v2450
        %v2452 = vpop.f32.mrf.mxu0
        %2453 = vmatprep.mubr.bf16.mxu0 0
        %2454 = vmatmul.mubr.bf16.gmra.mxu0 %v2316
        %v2455 = vpop.f32.mrf.mxu0
        %v2456 = vadd.f32 %v2300, %v2455
        %v2457 = vpop.f32.mrf.mxu0
        %v2458 = vpop.f32.mrf.mxu0
        %v2459 = vadd.f32 %v2300, %v2458
        %v2460 = vpop.f32.mrf.mxu0
        %2461 = vmatprep.mubr.bf16.mxu0 0
        %2462 = vmatmul.mubr.bf16.gmra.mxu0 %v2319
        %v2463 = vpop.f32.mrf.mxu0
        %v2464 = vadd.f32 %v2300, %v2463
        %v2465 = vpop.f32.mrf.mxu0
        %v2466 = vpop.f32.mrf.mxu0
        %v2467 = vadd.f32 %v2300, %v2466
        %v2468 = vpop.f32.mrf.mxu0
        %2469 = vmatprep.mubr.bf16.mxu0 0
        %2470 = vmatmul.mubr.bf16.gmra.mxu0 %v2322
        %v2471 = vpop.f32.mrf.mxu0
        %v2472 = vadd.f32 %v2300, %v2471
        %v2473 = vpop.f32.mrf.mxu0
        %v2474 = vpop.f32.mrf.mxu0
        %v2475 = vadd.f32 %v2300, %v2474
        %v2476 = vpop.f32.mrf.mxu0
        %2477 = vmatprep.mubr.bf16.mxu0 0
        %2478 = vmatmul.mubr.bf16.gmra.mxu0 %v2325
        %v2479 = vpop.f32.mrf.mxu0
        %v2480 = vadd.f32 %v2300, %v2479
        %v2481 = vpop.f32.mrf.mxu0
        %v2482 = vpop.f32.mrf.mxu0
        %v2483 = vadd.f32 %v2300, %v2482
        %v2484 = vpop.f32.mrf.mxu0
        %2485 = vmatprep.mubr.bf16.mxu0 0
        %2486 = vmatmul.mubr.bf16.gmra.mxu0 %v2328
        %v2487 = vpop.f32.mrf.mxu0
        %v2488 = vadd.f32 %v2300, %v2487
        %v2489 = vpop.f32.mrf.mxu0
        %v2490 = vpop.f32.mrf.mxu0
        %v2491 = vadd.f32 %v2300, %v2490
        %v2492 = vpop.f32.mrf.mxu0
        %2493 = vmatprep.mubr.bf16.mxu0 0
        %2494 = vmatmul.mubr.bf16.gmra.mxu0 %v2331
        %v2495 = vpop.f32.mrf.mxu0
        %v2496 = vadd.f32 %v2300, %v2495
        %v2497 = vpop.f32.mrf.mxu0
        %v2498 = vpop.f32.mrf.mxu0
        %v2499 = vadd.f32 %v2300, %v2498
        %v2500 = vpop.f32.mrf.mxu0
        %2501 = vmatprep.mubr.bf16.mxu0 0
        %2502 = vmatmul.mubr.bf16.gmra.mxu0 %v2334
        %v2503 = vpop.f32.mrf.mxu0
        %v2504 = vadd.f32 %v2300, %v2503
        %v2505 = vpop.f32.mrf.mxu0
        %v2506 = vpop.f32.mrf.mxu0
        %v2507 = vadd.f32 %v2300, %v2506
        %v2508 = vpop.f32.mrf.mxu0
        %2509 = vmatprep.mubr.bf16.mxu0 0
        %2510 = vmatmul.mubr.bf16.gmra.mxu0 %v2337
        %v2511 = vpop.f32.mrf.mxu0
        %v2512 = vadd.f32 %v2300, %v2511
        %v2513 = vpop.f32.mrf.mxu0
        %v2514 = vpop.f32.mrf.mxu0
        %v2515 = vadd.f32 %v2300, %v2514
        %v2516 = vpop.f32.mrf.mxu0
        %2517 = vmatprep.mubr.bf16.mxu0 0
        %2518 = vmatmul.mubr.bf16.gmra.mxu0 %v2340
        %v2519 = vpop.f32.mrf.mxu0
        %v2520 = vadd.f32 %v2300, %v2519
        %v2521 = vpop.f32.mrf.mxu0
        %v2522 = vpop.f32.mrf.mxu0
        %v2523 = vadd.f32 %v2300, %v2522
        %v2524 = vpop.f32.mrf.mxu0
        %2525 = vmatprep.mubr.bf16.mxu0 0
        %2526 = vmatmul.mubr.bf16.gmra.mxu0 %v2343
        %v2527 = vpop.f32.mrf.mxu0
        %v2528 = vadd.f32 %v2300, %v2527
        %v2529 = vpop.f32.mrf.mxu0
        %v2530 = vpop.f32.mrf.mxu0
        %v2531 = vadd.f32 %v2300, %v2530
        %v2532 = vpop.f32.mrf.mxu0
        %2533 = vmatprep.mubr.bf16.mxu0 0
        %2534 = vmatmul.mubr.bf16.gmra.mxu0 %v2346
        %v2535 = vpop.f32.mrf.mxu0
        %v2536 = vadd.f32 %v2300, %v2535
        %v2537 = vpop.f32.mrf.mxu0
        %v2538 = vpop.f32.mrf.mxu0
        %v2539 = vadd.f32 %v2300, %v2538
        %v2540 = vpop.f32.mrf.mxu0
        %2541 = vmatprep.mubr.bf16.mxu0 0
        %2542 = vmatmul.mubr.bf16.gmra.mxu0 %v2349
        %v2543 = vpop.f32.mrf.mxu0
        %v2544 = vadd.f32 %v2300, %v2543
        %v2545 = vpop.f32.mrf.mxu0
        %v2546 = vpop.f32.mrf.mxu0
        %v2547 = vadd.f32 %v2300, %v2546
        %v2548 = vpop.f32.mrf.mxu0
        %2549 = vmatprep.mubr.bf16.mxu0 0
        %2550 = vmatmul.mubr.bf16.gmra.mxu0 %v2352
        %v2551 = vpop.f32.mrf.mxu0
        %v2552 = vadd.f32 %v2300, %v2551
        %v2553 = vpop.f32.mrf.mxu0
        %v2554 = vpop.f32.mrf.mxu0
        %v2555 = vadd.f32 %v2300, %v2554
        %v2556 = vpop.f32.mrf.mxu0
        %2557 = vmatprep.mubr.bf16.mxu0 0
        %2558 = vmatmul.mubr.bf16.gmra.mxu0 %v2355
        %v2559 = vpop.f32.mrf.mxu0
        %v2560 = vadd.f32 %v2300, %v2559
        %v2561 = vpop.f32.mrf.mxu0
        %v2562 = vpop.f32.mrf.mxu0
        %v2563 = vadd.f32 %v2300, %v2562
        %v2564 = vpop.f32.mrf.mxu0
        %2565 = vmatprep.mubr.bf16.mxu0 0
        %2566 = vmatmul.mubr.bf16.gmra.mxu0 %v2358
        %v2567 = vpop.f32.mrf.mxu0
        %v2568 = vadd.f32 %v2300, %v2567
        %v2569 = vpop.f32.mrf.mxu0
        %v2570 = vpop.f32.mrf.mxu0
        %v2571 = vadd.f32 %v2300, %v2570
        %v2572 = vpop.f32.mrf.mxu0
        %2573 = vmatprep.mubr.bf16.mxu0 0
        %2574 = vmatmul.mubr.bf16.gmra.mxu0 %v2361
        %v2575 = vpop.f32.mrf.mxu0
        %v2576 = vadd.f32 %v2300, %v2575
        %v2577 = vpop.f32.mrf.mxu0
        %v2578 = vpop.f32.mrf.mxu0
        %v2579 = vadd.f32 %v2300, %v2578
        %v2580 = vpop.f32.mrf.mxu0
        %2581 = vmatprep.mubr.bf16.mxu0 0
        %2582 = vmatmul.mubr.bf16.gmra.mxu0 %v2364
        %v2583 = vpop.f32.mrf.mxu0
        %v2584 = vadd.f32 %v2300, %v2583
        %v2585 = vpop.f32.mrf.mxu0
        %v2586 = vpop.f32.mrf.mxu0
        %v2587 = vadd.f32 %v2300, %v2586
        %v2588 = vpop.f32.mrf.mxu0
        %2589 = vmatprep.mubr.bf16.mxu0 0
        %2590 = vmatmul.mubr.bf16.gmra.mxu0 %v2367
        %v2591 = vpop.f32.mrf.mxu0
        %v2592 = vadd.f32 %v2300, %v2591
        %v2593 = vpop.f32.mrf.mxu0
        %v2594 = vpop.f32.mrf.mxu0
        %v2595 = vadd.f32 %v2300, %v2594
        %v2596 = vpop.f32.mrf.mxu0
        %2597 = vmatprep.mubr.bf16.mxu0 0
        %2598 = vmatmul.mubr.bf16.gmra.mxu0 %v2370
        %v2599 = vpop.f32.mrf.mxu0
        %v2600 = vadd.f32 %v2300, %v2599
        %v2601 = vpop.f32.mrf.mxu0
        %v2602 = vpop.f32.mrf.mxu0
        %v2603 = vadd.f32 %v2300, %v2602
        %v2604 = vpop.f32.mrf.mxu0
        %2605 = vmatprep.mubr.bf16.mxu0 0
        %2606 = vmatmul.mubr.bf16.gmra.mxu0 %v2373
        %v2607 = vpop.f32.mrf.mxu0
        %v2608 = vadd.f32 %v2300, %v2607
        %v2609 = vpop.f32.mrf.mxu0
        %v2610 = vpop.f32.mrf.mxu0
        %v2611 = vadd.f32 %v2300, %v2610
        %v2612 = vpop.f32.mrf.mxu0
        %2613 = vmatprep.mubr.bf16.mxu0 0
        %2614 = vmatmul.mubr.bf16.gmra.mxu0 %v2376
        %v2615 = vpop.f32.mrf.mxu0
        %v2616 = vadd.f32 %v2300, %v2615
        %v2617 = vpop.f32.mrf.mxu0
        %v2618 = vpop.f32.mrf.mxu0
        %v2619 = vadd.f32 %v2300, %v2618
        %v2620 = vpop.f32.mrf.mxu0
        %2621 = vmatprep.mubr.bf16.mxu0 0
        %2622 = vmatmul.mubr.bf16.gmra.mxu0 %v2379
        %v2623 = vpop.f32.mrf.mxu0
        %v2624 = vadd.f32 %v2300, %v2623
        %v2625 = vpop.f32.mrf.mxu0
        %v2626 = vpop.f32.mrf.mxu0
        %v2627 = vadd.f32 %v2300, %v2626
        %v2628 = vpop.f32.mrf.mxu0
        %2629 = vmatprep.mubr.bf16.mxu0 0
        %2630 = vmatmul.mubr.bf16.gmra.mxu0 %v2382
        %v2631 = vpop.f32.mrf.mxu0
        %v2632 = vadd.f32 %v2300, %v2631
        %v2633 = vpop.f32.mrf.mxu0
        %v2634 = vpop.f32.mrf.mxu0
        %v2635 = vadd.f32 %v2300, %v2634
        %v2636 = vpop.f32.mrf.mxu0
        %2637 = vmatprep.mubr.bf16.mxu0 0
        %2638 = vmatmul.mubr.bf16.gmra.mxu0 %v2385
        %v2639 = vpop.f32.mrf.mxu0
        %v2640 = vadd.f32 %v2300, %v2639
        %v2641 = vpop.f32.mrf.mxu0
        %v2642 = vpop.f32.mrf.mxu0
        %v2643 = vadd.f32 %v2300, %v2642
        %v2644 = vpop.f32.mrf.mxu0
        %2645 = vmatprep.mubr.bf16.mxu0 0
        %2646 = vmatmul.mubr.bf16.gmra.mxu0 %v2388
        %v2647 = vpop.f32.mrf.mxu0
        %v2648 = vadd.f32 %v2300, %v2647
        %v2649 = vpop.f32.mrf.mxu0
        %v2650 = vpop.f32.mrf.mxu0
        %v2651 = vadd.f32 %v2300, %v2650
        %v2652 = vpop.f32.mrf.mxu0
        %2653 = vmatprep.mubr.bf16.mxu0 0
        %2654 = vmatmul.mubr.bf16.gmra.mxu0 %v2391
        %v2655 = vpop.f32.mrf.mxu0
        %v2656 = vadd.f32 %v2300, %v2655
        %v2657 = vpop.f32.mrf.mxu0
        %v2658 = vpop.f32.mrf.mxu0
        %v2659 = vadd.f32 %v2300, %v2658
        %v2660 = vpop.f32.mrf.mxu0
        %2661 = vmatprep.mubr.bf16.mxu0 0
        %2662 = vmatmul.mubr.bf16.gmra.mxu0 %v2394
        %v2663 = vpop.f32.mrf.mxu0
        %v2664 = vadd.f32 %v2300, %v2663
        %v2665 = vpop.f32.mrf.mxu0
        %v2666 = vpop.f32.mrf.mxu0
        %v2667 = vadd.f32 %v2300, %v2666
        %v2668 = vpop.f32.mrf.mxu0
        %2669 = vmatprep.mubr.bf16.mxu0 0
        %2670 = vmatmul.mubr.bf16.gmra.mxu0 %v2397
        %v2671 = vpop.f32.mrf.mxu0
        %v2672 = vadd.f32 %v2300, %v2671
        %v2673 = vpop.f32.mrf.mxu0
        %v2674 = vpop.f32.mrf.mxu0
        %v2675 = vadd.f32 %v2300, %v2674
        %v2676 = vpop.f32.mrf.mxu0
        %2677 = vmatprep.mubr.bf16.mxu0 0
        %2678 = vmatmul.mubr.bf16.gmra.mxu0 %v2400
        %v2679 = vpop.f32.mrf.mxu0
        %v2680 = vadd.f32 %v2300, %v2679
        %v2681 = vpop.f32.mrf.mxu0
        %v2682 = vpop.f32.mrf.mxu0
        %v2683 = vadd.f32 %v2300, %v2682
        %v2684 = vpop.f32.mrf.mxu0
        %2685 = vmatprep.mubr.bf16.mxu0 0
        %2686 = vmatmul.mubr.bf16.gmra.mxu0 %v2403
        %v2687 = vpop.f32.mrf.mxu0
        %v2688 = vadd.f32 %v2300, %v2687
        %v2689 = vpop.f32.mrf.mxu0
        %v2690 = vpop.f32.mrf.mxu0
        %v2691 = vadd.f32 %v2300, %v2690
        %v2692 = vpop.f32.mrf.mxu0
        %2693 = vdwg.mxu0
        %v2694 = vmax.f32 %v2440, %v2456
        %v2695 = vmax.f32 %v2443, %v2459
        %v2696 = vmax.f32 %v2448, %v2464
        %v2697 = vmax.f32 %v2451, %v2467
        %v2698 = vmax.f32 %v2694, %v2472
        %v2699 = vmax.f32 %v2695, %v2475
        %v2700 = vmax.f32 %v2696, %v2480
        %v2701 = vmax.f32 %v2697, %v2483
        %v2702 = vmax.f32 %v2698, %v2488
        %v2703 = vmax.f32 %v2699, %v2491
        %v2704 = vmax.f32 %v2700, %v2496
        %v2705 = vmax.f32 %v2701, %v2499
        %v2706 = vmax.f32 %v2702, %v2504
        %v2707 = vmax.f32 %v2703, %v2507
        %v2708 = vmax.f32 %v2704, %v2512
        %v2709 = vmax.f32 %v2705, %v2515
        %v2710 = vmax.f32 %v2706, %v2520
        %v2711 = vmax.f32 %v2707, %v2523
        %v2712 = vmax.f32 %v2708, %v2528
        %v2713 = vmax.f32 %v2709, %v2531
        %v2714 = vmax.f32 %v2710, %v2536
        %v2715 = vmax.f32 %v2711, %v2539
        %v2716 = vmax.f32 %v2712, %v2544
        %v2717 = vmax.f32 %v2713, %v2547
        %v2718 = vmax.f32 %v2714, %v2552
        %v2719 = vmax.f32 %v2715, %v2555
        %v2720 = vmax.f32 %v2716, %v2560
        %v2721 = vmax.f32 %v2717, %v2563
        %v2722 = vmax.f32 %v2718, %v2568
        %v2723 = vmax.f32 %v2719, %v2571
        %v2724 = vmax.f32 %v2720, %v2576
        %v2725 = vmax.f32 %v2721, %v2579
        %v2726 = vmax.f32 %v2722, %v2584
        %v2727 = vmax.f32 %v2723, %v2587
        %v2728 = vmax.f32 %v2724, %v2592
        %v2729 = vmax.f32 %v2725, %v2595
        %v2730 = vmax.f32 %v2726, %v2600
        %v2731 = vmax.f32 %v2727, %v2603
        %v2732 = vmax.f32 %v2728, %v2608
        %v2733 = vmax.f32 %v2729, %v2611
        %v2734 = vmax.f32 %v2730, %v2616
        %v2735 = vmax.f32 %v2731, %v2619
        %v2736 = vmax.f32 %v2732, %v2624
        %v2737 = vmax.f32 %v2733, %v2627
        %v2738 = vmax.f32 %v2734, %v2632
        %v2739 = vmax.f32 %v2735, %v2635
        %v2740 = vmax.f32 %v2736, %v2640
        %v2741 = vmax.f32 %v2737, %v2643
        %v2742 = vmax.f32 %v2738, %v2648
        %v2743 = vmax.f32 %v2739, %v2651
        %v2744 = vmax.f32 %v2740, %v2656
        %v2745 = vmax.f32 %v2741, %v2659
        %v2746 = vmax.f32 %v2742, %v2664
        %v2747 = vmax.f32 %v2743, %v2667
        %v2748 = vmax.f32 %v2744, %v2672
        %v2749 = vmax.f32 %v2745, %v2675
        %v2750 = vmax.f32 %v2746, %v2680
        %v2751 = vmax.f32 %v2747, %v2683
        %v2752 = vmax.f32 %v2748, %v2688
        %v2753 = vmax.f32 %v2749, %v2691
        %v2754 = vmax.f32 %v2750, %v2751
        %v2755 = vmax.f32 %v2752, %v2753
        %v2756 = vmax.f32 %v2754, %v2755
        %v2757 = vrot.slane %v2756, 4
        %v2758 = vmax.f32 %v2756, %v2757
        %v2759 = vrot.slane %v2758, 2
        %v2760 = vmax.f32 %v2758, %v2759
        %v2761 = vrot.slane %v2760, 1
        %v2762 = vmax.f32 %v2760, %v2761
        %2763 = vst [vmem:[%s320] sm:$0x1] %v2762
        %s2764 = sand.u32 %s211, 1
        %s2765 = scalar_lea.sflag [#allocation3], %s2764
        %s2766 = sand.u32 %s211, 1
        %s2767 = scalar_lea.vmem [#allocation2], %s2766
        // Predicated region
        $region49: #{pointnetfeat_forward.3} parent=47 // pred_check
          %p2768 = pneg %p221
        $region50: #{pointnetfeat_forward.3} parent=47 // pred_check_branch
          %2770 = sbr.rel (%p2768) target = $region52
        $region51: #{pointnetfeat_forward.3} parent=47 // pred_region
          %s2772 = ssub.s32 16, 16
          %2773 = vsyncadd %s2765, %s2772
          %s2774 = smul.addr %s26, 2
          %s2775 = sadd.s32 %s27, %s2774
          %s2776 = smul.addr %s2775, 16
          %s2777 = scalar_lea.hbm %s7, %s2776
          %s2779 = sshll.u32 %s2767, 4
          %s2780 = int_to_ptr.vmem [resolvable:$true] %s2779
          %2782 = dma.vmem_to_hbm [thread:$0]  %s2780, 16, %s2777, %s2765
        $region52: #{pointnetfeat_forward.3} parent=47 // pred_fallthru
          _
      $region48: #{pointnetfeat_forward.3} parent=5 // pred_fallthru
        _
      %p2783 = scmp.le.s32.totalorder 2, %s16
      // Predicated region
      $region53: #{pointnetfeat_forward.3} parent=5 // pred_check
        %p2784 = pneg %p2783
      $region54: #{pointnetfeat_forward.3} parent=5 // pred_check_branch
        %2786 = sbr.rel (%p2784) target = $region56
      $region55: #{pointnetfeat_forward.3} parent=5 // pred_region
        %s2787 = ssub.s32 %s16, 2
        // Predicated region
        $region57: #{pointnetfeat_forward.3} parent=55 // pred_check
          %p2788 = pneg %p227
        $region58: #{pointnetfeat_forward.3} parent=55 // pred_check_branch
          %2790 = sbr.rel (%p2788) target = $region60
        $region59: #{pointnetfeat_forward.3} parent=55 // pred_region
          %s2791 = sand.u32 %s212, 1
          %s2792 = scalar_lea.sflag [#allocation3], %s2791
          %s2793 = sand.u32 %s212, 1
          %s2794 = scalar_lea.vmem [#allocation2], %s2793
          %2795 = dma.done %s2792, 16
        $region60: #{pointnetfeat_forward.3} parent=55 // pred_fallthru
          _
      $region56: #{pointnetfeat_forward.3} parent=5 // pred_fallthru
        _
    $region6: #{pointnetfeat_forward.3} parent=1 // loop_footer
      %s20 = sadd.s32 1, %s16
    $region7: #{pointnetfeat_forward.3} parent=1 // loop_footer_branch
      %15 = sbr.rel target = $region3
    $region8: #{pointnetfeat_forward.3} parent=1 // loop_exit
      _
    %2796 = vsyncpa [#allocation3], 1
    %s2797 = scalar_lea.sflag [#allocation3], 1
    %2798 = vsyncpa %s2797, 1

// kernel: pointnetfeat_forward.2
$region0: #{pointnetfeat_forward.2}
  #allocation0 [shape = 'u32[]', space=smem, size = 0x4, offset = 0x4, fixed_abs, tag = 'smem constant byte address 0x4 - core index']
  #allocation1 [shape = 'u32[144,128]{1,0:T(1,128)}', space=vmem, size = 0x12000, scoped, tag = 'internal scratch']
  %s0 = inlined_call_operand.vmem [shape: bf16[2,512,3], index: 0, kind: input, shape index: {}]
  %s1 = inlined_call_operand.hbm [shape: bf16[1,3,64], index: 1, kind: input, shape index: {}]
  %s2 = inlined_call_operand.hbm [shape: f32[1,64], index: 2, kind: input, shape index: {}]
  %s3 = inlined_call_operand.hbm [shape: bf16[64,128], index: 3, kind: input, shape index: {}]
  %s4 = inlined_call_operand.hbm [shape: f32[1,128], index: 4, kind: input, shape index: {}]
  %s5 = inlined_call_operand.hbm [shape: bf16[128,1024], index: 5, kind: input, shape index: {}]
  %s6 = inlined_call_operand.hbm [shape: f32[1,1024], index: 6, kind: input, shape index: {}]
  %s7 = inlined_call_operand.vmem [shape: f32[1,2,1,1024], index: 7, kind: output, shape index: {}]
  %s8 = sld [smem:[#allocation0]]
  $region85: #{pointnetfeat_forward.2} parent=0
    _
  %s10 = ssub.s32 1, %s8
  %s11 = scalar_select 0, %s10, %s8
  $region1: #{pointnetfeat_forward.2} parent=0
    #allocation2 [shape = 'u8[1024]{0}', space=vmem, size = 0x400, scoped, tag = 'input window, operand 1, single buffered']
    #allocation3 [shape = 's32[2]{0}', space=sflag, size = 0x8, scoped, tag = 'scoped memory for pointnetfeat_forward.2']
    #allocation4 [shape = 'u8[512]{0}', space=vmem, size = 0x400, scoped, tag = 'input window, operand 2, single buffered']
    #allocation5 [shape = 's32[1]{0}', space=sflag, size = 0x4, scoped, tag = 'scoped memory for pointnetfeat_forward.2']
    #allocation6 [shape = 'u8[16384]{0}', space=vmem, size = 0x4000, scoped, tag = 'input window, operand 3, single buffered']
    #allocation7 [shape = 'u8[512]{0}', space=vmem, size = 0x400, scoped, tag = 'input window, operand 4, single buffered']
    #allocation8 [shape = 's32[1]{0}', space=sflag, size = 0x4, scoped, tag = 'scoped memory for pointnetfeat_forward.2']
    #allocation9 [shape = 'u8[262144]{0}', space=vmem, size = 0x40000, scoped, tag = 'input window, operand 5, single buffered']
    #allocation10 [shape = 'u8[4096]{0}', space=vmem, size = 0x1000, scoped, tag = 'input window, operand 6, single buffered']
    #allocation11 [shape = 's32[1]{0}', space=sflag, size = 0x4, scoped, tag = 'scoped memory for pointnetfeat_forward.2']
    %12 = vsyncpa [#allocation3], 0
    %13 = vsyncpa [#allocation5], 0
    %14 = vsyncpa [#allocation8], 0
    %15 = vsyncpa [#allocation11], 0
    loop: start=0, step=1, limit=4
    $region2: #{pointnetfeat_forward.2} parent=1 // loop_pre_header
      _
    $region3: #{pointnetfeat_forward.2} parent=1 // loop_header
      %s17 = sphi 0, %s21
      %p18 = scmp.ge.s32.totalorder %s17, 4
      %s24 = sphi 0, %s43
      %s25 = sphi 0, %s39
      %s26 = sphi 0, %s35
      %s27 = sphi 0, %s24
      %s28 = sphi 0, %s25
      %s29 = sphi 0, %s26
      %s30 = sphi 0, %s27
      %s31 = sphi 0, %s28
      %s32 = sphi 0, %s29
      %s50 = sphi 0, %s52
      %s53 = sphi 0, %s50
      %s54 = sphi 0, %s53
      %s70 = sphi 0, %s54
      %s74 = sphi 0, %s74
      %s76 = sphi 0, %s74
      %s77 = sphi 0, %s76
      %s91 = sphi 0, %s77
      %s95 = sphi 0, %s95
      %s97 = sphi 0, %s95
      %s98 = sphi 0, %s97
      %s112 = sphi 0, %s98
      %s116 = sphi 0, %s116
      %s118 = sphi 0, %s116
      %s119 = sphi 0, %s118
      %s133 = sphi 0, %s119
      %s137 = sphi 0, %s137
      %s139 = sphi 0, %s137
      %s140 = sphi 0, %s139
      %s154 = sphi 0, %s140
      %s158 = sphi 0, %s158
      %s160 = sphi 0, %s158
      %s161 = sphi 0, %s160
      %s175 = sphi 0, %s161
      %s179 = sphi 0, %s179
      %s181 = sphi 0, %s179
      %s182 = sphi 0, %s181
      %s196 = sphi 0, %s182
      %s204 = sphi 0, %s206
      %s207 = sphi 0, %s204
      %s208 = sphi 0, %s207
      %s224 = sphi 0, %s208
    $region4: #{pointnetfeat_forward.2} parent=1 // loop_header_branch
      %20 = sbr.rel (%p18) target = $region8
    $region5: #{pointnetfeat_forward.2} parent=1 // loop_body
      %s22 = ssub.s32 %s17, 1
      %s23 = ssub.s32 %s17, 2
      %s33 = sadd.s32 1, %s26
      %p34 = scmp.ge.s32.totalorder %s33, 1
      %s35 = scalar_select %p34, 0, %s33
      %s36 = sadd.s32 1, %s25
      %s37 = scalar_select %p34, %s36, %s25
      %p38 = scmp.ge.s32.totalorder %s37, 2
      %s39 = scalar_select %p38, 0, %s37
      %s40 = sadd.s32 1, %s24
      %s41 = scalar_select %p38, %s40, %s24
      %p42 = scmp.ge.s32.totalorder %s41, 1
      %s43 = scalar_select %p42, 0, %s41
      %s44 = sadd.s32 %s24, %s26
      %s45 = sadd.s32 %s43, %s35
      %s46 = ssub.s32 %s25, %s39
      %s47 = ssub.s32 %s44, %s45
      %s48 = sor.u32 %s46, %s47
      %p49 = scmp.eq.s32.totalorder %s48, 0
      %s51 = sadd.s32 %s50, 1
      %s52 = scalar_select %p49, %s50, %s51
      %p55 = pneg %p49
      %p56 = scmp.eq.s32.totalorder %s17, 1
      %p57 = por %p55, %p56
      %p58 = scmp.ne.s32.totalorder %s50, %s53
      %p59 = scmp.eq.s32.totalorder %s17, 0
      %p60 = por %p58, %p59
      %p61 = scmp.ne.s32.totalorder %s50, %s53
      %p62 = scmp.eq.s32.totalorder %s22, 1
      %p63 = por %p61, %p62
      %p64 = scmp.ne.s32.totalorder %s53, %s54
      %p65 = scmp.eq.s32.totalorder %s22, 0
      %p66 = por %p64, %p65
      %p67 = scmp.ne.s32.totalorder %s53, %s54
      %p68 = scmp.eq.s32.totalorder %s23, 1
      %p69 = por %p67, %p68
      %p71 = scmp.ne.s32.totalorder %s54, %s70
      %p72 = scmp.eq.s32.totalorder %s23, 0
      %p73 = por %p71, %p72
      %s75 = sadd.s32 %s74, 1
      %p78 = scmp.eq.s32.totalorder %s17, 1
      %p79 = scmp.ne.s32.totalorder %s74, %s76
      %p80 = scmp.eq.s32.totalorder %s17, 0
      %p81 = por %p79, %p80
      %p82 = scmp.ne.s32.totalorder %s74, %s76
      %p83 = scmp.eq.s32.totalorder %s22, 1
      %p84 = por %p82, %p83
      %p85 = scmp.ne.s32.totalorder %s76, %s77
      %p86 = scmp.eq.s32.totalorder %s22, 0
      %p87 = por %p85, %p86
      %p88 = scmp.ne.s32.totalorder %s76, %s77
      %p89 = scmp.eq.s32.totalorder %s23, 1
      %p90 = por %p88, %p89
      %p92 = scmp.ne.s32.totalorder %s77, %s91
      %p93 = scmp.eq.s32.totalorder %s23, 0
      %p94 = por %p92, %p93
      %s96 = sadd.s32 %s95, 1
      %p99 = scmp.eq.s32.totalorder %s17, 1
      %p100 = scmp.ne.s32.totalorder %s95, %s97
      %p101 = scmp.eq.s32.totalorder %s17, 0
      %p102 = por %p100, %p101
      %p103 = scmp.ne.s32.totalorder %s95, %s97
      %p104 = scmp.eq.s32.totalorder %s22, 1
      %p105 = por %p103, %p104
      %p106 = scmp.ne.s32.totalorder %s97, %s98
      %p107 = scmp.eq.s32.totalorder %s22, 0
      %p108 = por %p106, %p107
      %p109 = scmp.ne.s32.totalorder %s97, %s98
      %p110 = scmp.eq.s32.totalorder %s23, 1
      %p111 = por %p109, %p110
      %p113 = scmp.ne.s32.totalorder %s98, %s112
      %p114 = scmp.eq.s32.totalorder %s23, 0
      %p115 = por %p113, %p114
      %s117 = sadd.s32 %s116, 1
      %p120 = scmp.eq.s32.totalorder %s17, 1
      %p121 = scmp.ne.s32.totalorder %s116, %s118
      %p122 = scmp.eq.s32.totalorder %s17, 0
      %p123 = por %p121, %p122
      %p124 = scmp.ne.s32.totalorder %s116, %s118
      %p125 = scmp.eq.s32.totalorder %s22, 1
      %p126 = por %p124, %p125
      %p127 = scmp.ne.s32.totalorder %s118, %s119
      %p128 = scmp.eq.s32.totalorder %s22, 0
      %p129 = por %p127, %p128
      %p130 = scmp.ne.s32.totalorder %s118, %s119
      %p131 = scmp.eq.s32.totalorder %s23, 1
      %p132 = por %p130, %p131
      %p134 = scmp.ne.s32.totalorder %s119, %s133
      %p135 = scmp.eq.s32.totalorder %s23, 0
      %p136 = por %p134, %p135
      %s138 = sadd.s32 %s137, 1
      %p141 = scmp.eq.s32.totalorder %s17, 1
      %p142 = scmp.ne.s32.totalorder %s137, %s139
      %p143 = scmp.eq.s32.totalorder %s17, 0
      %p144 = por %p142, %p143
      %p145 = scmp.ne.s32.totalorder %s137, %s139
      %p146 = scmp.eq.s32.totalorder %s22, 1
      %p147 = por %p145, %p146
      %p148 = scmp.ne.s32.totalorder %s139, %s140
      %p149 = scmp.eq.s32.totalorder %s22, 0
      %p150 = por %p148, %p149
      %p151 = scmp.ne.s32.totalorder %s139, %s140
      %p152 = scmp.eq.s32.totalorder %s23, 1
      %p153 = por %p151, %p152
      %p155 = scmp.ne.s32.totalorder %s140, %s154
      %p156 = scmp.eq.s32.totalorder %s23, 0
      %p157 = por %p155, %p156
      %s159 = sadd.s32 %s158, 1
      %p162 = scmp.eq.s32.totalorder %s17, 1
      %p163 = scmp.ne.s32.totalorder %s158, %s160
      %p164 = scmp.eq.s32.totalorder %s17, 0
      %p165 = por %p163, %p164
      %p166 = scmp.ne.s32.totalorder %s158, %s160
      %p167 = scmp.eq.s32.totalorder %s22, 1
      %p168 = por %p166, %p167
      %p169 = scmp.ne.s32.totalorder %s160, %s161
      %p170 = scmp.eq.s32.totalorder %s22, 0
      %p171 = por %p169, %p170
      %p172 = scmp.ne.s32.totalorder %s160, %s161
      %p173 = scmp.eq.s32.totalorder %s23, 1
      %p174 = por %p172, %p173
      %p176 = scmp.ne.s32.totalorder %s161, %s175
      %p177 = scmp.eq.s32.totalorder %s23, 0
      %p178 = por %p176, %p177
      %s180 = sadd.s32 %s179, 1
      %p183 = scmp.eq.s32.totalorder %s17, 1
      %p184 = scmp.ne.s32.totalorder %s179, %s181
      %p185 = scmp.eq.s32.totalorder %s17, 0
      %p186 = por %p184, %p185
      %p187 = scmp.ne.s32.totalorder %s179, %s181
      %p188 = scmp.eq.s32.totalorder %s22, 1
      %p189 = por %p187, %p188
      %p190 = scmp.ne.s32.totalorder %s181, %s182
      %p191 = scmp.eq.s32.totalorder %s22, 0
      %p192 = por %p190, %p191
      %p193 = scmp.ne.s32.totalorder %s181, %s182
      %p194 = scmp.eq.s32.totalorder %s23, 1
      %p195 = por %p193, %p194
      %p197 = scmp.ne.s32.totalorder %s182, %s196
      %p198 = scmp.eq.s32.totalorder %s23, 0
      %p199 = por %p197, %p198
      %s200 = ssub.s32 %s24, %s43
      %s201 = ssub.s32 %s25, %s39
      %s202 = sor.u32 %s200, %s201
      %p203 = scmp.eq.s32.totalorder %s202, 0
      %s205 = sadd.s32 %s204, 1
      %s206 = scalar_select %p203, %s204, %s205
      %p209 = pneg %p203
      %p210 = scmp.eq.s32.totalorder %s17, 1
      %p211 = por %p209, %p210
      %p212 = scmp.ne.s32.totalorder %s204, %s207
      %p213 = scmp.eq.s32.totalorder %s17, 0
      %p214 = por %p212, %p213
      %p215 = scmp.ne.s32.totalorder %s204, %s207
      %p216 = scmp.eq.s32.totalorder %s22, 1
      %p217 = por %p215, %p216
      %p218 = scmp.ne.s32.totalorder %s207, %s208
      %p219 = scmp.eq.s32.totalorder %s22, 0
      %p220 = por %p218, %p219
      %p221 = scmp.ne.s32.totalorder %s207, %s208
      %p222 = scmp.eq.s32.totalorder %s23, 1
      %p223 = por %p221, %p222
      %p225 = scmp.ne.s32.totalorder %s208, %s224
      %p226 = scmp.eq.s32.totalorder %s23, 0
      %p227 = por %p225, %p226
      %p228 = scmp.le.s32.totalorder 1, %s17
      %p229 = scmp.lt.s32.totalorder %s17, 3
      %p230 = pnand %p228, %p229
      %p231 = pneg %p230
      // Predicated region
      $region9: #{pointnetfeat_forward.2} parent=5 // pred_check
        _
      $region10: #{pointnetfeat_forward.2} parent=5 // pred_check_branch
        %233 = sbr.rel (%p230) target = $region12
      $region11: #{pointnetfeat_forward.2} parent=5 // pred_region
        %s234 = ssub.s32 %s17, 1
        // Predicated region
        $region13: #{pointnetfeat_forward.2} parent=11 // pred_check
          %p235 = pneg %p87
        $region14: #{pointnetfeat_forward.2} parent=11 // pred_check_branch
          %237 = sbr.rel (%p235) target = $region16
        $region15: #{pointnetfeat_forward.2} parent=11 // pred_region
          %s239 = ssub.s32 32, 32
          %240 = vsyncadd [#allocation3], %s239
          %s242 = sshll.u32 [#allocation2], 4
          %s243 = int_to_ptr.vmem [resolvable:$true] %s242
          %245 = dma.hbm_to_vmem [thread:$0]  %s1, 32, %s243, [#allocation3]
        $region16: #{pointnetfeat_forward.2} parent=11 // pred_fallthru
          _
        // Predicated region
        $region17: #{pointnetfeat_forward.2} parent=11 // pred_check
          %p246 = pneg %p108
        $region18: #{pointnetfeat_forward.2} parent=11 // pred_check_branch
          %248 = sbr.rel (%p246) target = $region20
        $region19: #{pointnetfeat_forward.2} parent=11 // pred_region
          %s250 = ssub.s32 16, 16
          %251 = vsyncadd [#allocation5], %s250
          %s253 = sshll.u32 [#allocation4], 4
          %s254 = int_to_ptr.vmem [resolvable:$true] %s253
          %256 = dma.hbm_to_vmem [thread:$0]  %s2, 16, %s254, [#allocation5]
        $region20: #{pointnetfeat_forward.2} parent=11 // pred_fallthru
          _
        // Predicated region
        $region21: #{pointnetfeat_forward.2} parent=11 // pred_check
          %p257 = pneg %p129
        $region22: #{pointnetfeat_forward.2} parent=11 // pred_check_branch
          %259 = sbr.rel (%p257) target = $region24
        $region23: #{pointnetfeat_forward.2} parent=11 // pred_region
          %s261 = ssub.s32 512, 512
          %262 = vsyncadd [#allocation5], %s261
          %s263 = sshll.u32 [#allocation6], 4
          %s264 = int_to_ptr.vmem [resolvable:$true] %s263
          %269 = dma.hbm_to_vmem [thread:$0]  %s3, 512, %s264, [#allocation5], 64, 64, 4
        $region24: #{pointnetfeat_forward.2} parent=11 // pred_fallthru
          _
        // Predicated region
        $region25: #{pointnetfeat_forward.2} parent=11 // pred_check
          %p270 = pneg %p150
        $region26: #{pointnetfeat_forward.2} parent=11 // pred_check_branch
          %272 = sbr.rel (%p270) target = $region28
        $region27: #{pointnetfeat_forward.2} parent=11 // pred_region
          %s274 = ssub.s32 16, 16
          %275 = vsyncadd [#allocation8], %s274
          %s277 = sshll.u32 [#allocation7], 4
          %s278 = int_to_ptr.vmem [resolvable:$true] %s277
          %280 = dma.hbm_to_vmem [thread:$0]  %s4, 16, %s278, [#allocation8]
        $region28: #{pointnetfeat_forward.2} parent=11 // pred_fallthru
          _
        // Predicated region
        $region29: #{pointnetfeat_forward.2} parent=11 // pred_check
          %p281 = pneg %p171
        $region30: #{pointnetfeat_forward.2} parent=11 // pred_check_branch
          %283 = sbr.rel (%p281) target = $region32
        $region31: #{pointnetfeat_forward.2} parent=11 // pred_region
          %s285 = ssub.s32 8192, 8192
          %286 = vsyncadd [#allocation8], %s285
          %s287 = sshll.u32 [#allocation9], 4
          %s288 = int_to_ptr.vmem [resolvable:$true] %s287
          %293 = dma.hbm_to_vmem [thread:$0]  %s5, 8192, %s288, [#allocation8], 512, 512, 32
        $region32: #{pointnetfeat_forward.2} parent=11 // pred_fallthru
          _
        // Predicated region
        $region33: #{pointnetfeat_forward.2} parent=11 // pred_check
          %p294 = pneg %p192
        $region34: #{pointnetfeat_forward.2} parent=11 // pred_check_branch
          %296 = sbr.rel (%p294) target = $region36
        $region35: #{pointnetfeat_forward.2} parent=11 // pred_region
          %s298 = ssub.s32 128, 128
          %299 = vsyncadd [#allocation11], %s298
          %s301 = sshll.u32 [#allocation10], 4
          %s302 = int_to_ptr.vmem [resolvable:$true] %s301
          %304 = dma.hbm_to_vmem [thread:$0]  %s6, 128, %s302, [#allocation11]
        $region36: #{pointnetfeat_forward.2} parent=11 // pred_fallthru
          _
      $region12: #{pointnetfeat_forward.2} parent=5 // pred_fallthru
        _
      %p305 = scmp.lt.s32.totalorder %s17, 2
      // Predicated region
      $region37: #{pointnetfeat_forward.2} parent=5 // pred_check
        %p306 = pneg %p305
      $region38: #{pointnetfeat_forward.2} parent=5 // pred_check_branch
        %308 = sbr.rel (%p306) target = $region40
      $region39: #{pointnetfeat_forward.2} parent=5 // pred_region
        // Predicated region
        $region41: #{pointnetfeat_forward.2} parent=39 // pred_check
          %p309 = pneg %p60
        $region42: #{pointnetfeat_forward.2} parent=39 // pred_check_branch
          %311 = sbr.rel (%p309) target = $region44
        $region43: #{pointnetfeat_forward.2} parent=39 // pred_region
          %s312 = sadd.s32 %s24, %s26
          %s313 = smul.u32 64, %s312
          %p314 = scmp.lt.s32.totalorder %s25, 1
          %s315 = scalar_select %p314, %s25, 1
          %p316 = scmp.lt.s32.totalorder %s313, 63
          %s317 = scalar_select %p316, %s313, 63
          %s318 = smul.addr %s315, 64
          %s319 = sadd.s32 %s317, %s318
          %s320 = smul.addr %s319, 4
          %s321 = scalar_lea.vmem %s0, %s320
          %s322 = sadd.s32 %s24, %s26
          %s323 = smul.u32 64, %s322
        $region44: #{pointnetfeat_forward.2} parent=39 // pred_fallthru
          _
      $region40: #{pointnetfeat_forward.2} parent=5 // pred_fallthru
        _
      %p324 = scmp.le.s32.totalorder 1, %s17
      %p325 = scmp.lt.s32.totalorder %s17, 3
      %p326 = pnand %p324, %p325
      %p327 = pneg %p326
      // Predicated region
      $region45: #{pointnetfeat_forward.2} parent=5 // pred_check
        _
      $region46: #{pointnetfeat_forward.2} parent=5 // pred_check_branch
        %329 = sbr.rel (%p326) target = $region48
      $region47: #{pointnetfeat_forward.2} parent=5 // pred_region
        %s330 = ssub.s32 %s17, 1
        // Predicated region
        $region49: #{pointnetfeat_forward.2} parent=47 // pred_check
          %p331 = pneg %p87
        $region50: #{pointnetfeat_forward.2} parent=47 // pred_check_branch
          %333 = sbr.rel (%p331) target = $region52
        $region51: #{pointnetfeat_forward.2} parent=47 // pred_region
          %334 = dma.done [#allocation3], 32
        $region52: #{pointnetfeat_forward.2} parent=47 // pred_fallthru
          _
        // Predicated region
        $region53: #{pointnetfeat_forward.2} parent=47 // pred_check
          %p335 = pneg %p108
        $region54: #{pointnetfeat_forward.2} parent=47 // pred_check_branch
          %337 = sbr.rel (%p335) target = $region56
        $region55: #{pointnetfeat_forward.2} parent=47 // pred_region
          %338 = dma.done [#allocation5], 16
        $region56: #{pointnetfeat_forward.2} parent=47 // pred_fallthru
          _
        // Predicated region
        $region57: #{pointnetfeat_forward.2} parent=47 // pred_check
          %p339 = pneg %p129
        $region58: #{pointnetfeat_forward.2} parent=47 // pred_check_branch
          %341 = sbr.rel (%p339) target = $region60
        $region59: #{pointnetfeat_forward.2} parent=47 // pred_region
          %342 = dma.done [#allocation5], 512
        $region60: #{pointnetfeat_forward.2} parent=47 // pred_fallthru
          _
        // Predicated region
        $region61: #{pointnetfeat_forward.2} parent=47 // pred_check
          %p343 = pneg %p150
        $region62: #{pointnetfeat_forward.2} parent=47 // pred_check_branch
          %345 = sbr.rel (%p343) target = $region64
        $region63: #{pointnetfeat_forward.2} parent=47 // pred_region
          %346 = dma.done [#allocation8], 16
        $region64: #{pointnetfeat_forward.2} parent=47 // pred_fallthru
          _
        // Predicated region
        $region65: #{pointnetfeat_forward.2} parent=47 // pred_check
          %p347 = pneg %p171
        $region66: #{pointnetfeat_forward.2} parent=47 // pred_check_branch
          %349 = sbr.rel (%p347) target = $region68
        $region67: #{pointnetfeat_forward.2} parent=47 // pred_region
          %350 = dma.done [#allocation8], 8192
        $region68: #{pointnetfeat_forward.2} parent=47 // pred_fallthru
          _
        // Predicated region
        $region69: #{pointnetfeat_forward.2} parent=47 // pred_check
          %p351 = pneg %p192
        $region70: #{pointnetfeat_forward.2} parent=47 // pred_check_branch
          %353 = sbr.rel (%p351) target = $region72
        $region71: #{pointnetfeat_forward.2} parent=47 // pred_region
          %354 = dma.done [#allocation11], 128
        $region72: #{pointnetfeat_forward.2} parent=47 // pred_fallthru
          _
        %s355 = sadd.s32 %s27, %s29
        %s356 = smul.u32 64, %s355
        %p357 = scmp.lt.s32.totalorder %s28, 1
        %s358 = scalar_select %p357, %s28, 1
        %p359 = scmp.lt.s32.totalorder %s356, 63
        %s360 = scalar_select %p359, %s356, 63
        %s361 = smul.addr %s358, 64
        %s362 = sadd.s32 %s360, %s361
        %s363 = smul.addr %s362, 4
        %s364 = scalar_lea.vmem %s0, %s363
        %p365 = pneg %p66
        %p366 = pneg %p63
        %p367 = pneg %p87
        %p368 = pneg %p84
        %p369 = pneg %p108
        %p370 = pneg %p105
        %p371 = pneg %p129
        %p372 = pneg %p126
        %p373 = pneg %p150
        %p374 = pneg %p147
        %p375 = pneg %p171
        %p376 = pneg %p168
        %p377 = pneg %p192
        %p378 = pneg %p189
        %p379 = pneg %p220
        %p380 = pneg %p217
        %p381 = scmp.lt.s32.totalorder %s27, 0
        %s382 = scalar_select %p381, %s27, 0
        %p383 = scmp.lt.s32.totalorder %s28, 1
        %s384 = scalar_select %p383, %s28, 1
        %s385 = smul.addr %s384, 8
        %s386 = smul.addr %s382, 16
        %s387 = sadd.s32 %s385, %s386
        %s388 = scalar_lea.vmem %s7, %s387
        %s389 = sadd.s32 %s27, %s29
        %s390 = smul.u32 64, %s389
        %p391 = scmp.lt.s32.totalorder %s28, 1
        %s392 = scalar_select %p391, %s28, 1
        %p393 = scmp.lt.s32.totalorder %s390, 63
        %s394 = scalar_select %p393, %s390, 63
        %s395 = smul.addr %s392, 64
        %s396 = sadd.s32 %s394, %s395
        %s397 = smul.addr %s396, 4
        %s398 = scalar_lea.vmem %s0, %s397
        %s399 = sadd.s32 %s27, %s29
        %s400 = smul.u32 64, %s399
        %p401 = scmp.lt.s32.totalorder %s27, 0
        %s402 = scalar_select %p401, %s27, 0
        %p403 = scmp.lt.s32.totalorder %s28, 1
        %s404 = scalar_select %p403, %s28, 1
        %s405 = smul.addr %s404, 8
        %s406 = smul.addr %s402, 16
        %s407 = sadd.s32 %s405, %s406
        %s408 = scalar_lea.vmem %s7, %s407
        %v410 = vld [vmem:[%s398] sm:$0xf]
        %v411 = vld [vmem:[%s398 + $0x4] sm:$0xf]
        %v412 = vld [vmem:[%s398 + $0x8] sm:$0xf]
        %v413 = vld [vmem:[%s398 + $0xc] sm:$0xf]
        %v414 = vld [vmem:[%s398 + $0x10] sm:$0xf]
        %v415 = vld [vmem:[%s398 + $0x14] sm:$0xf]
        %v416 = vld [vmem:[%s398 + $0x18] sm:$0xf]
        %v417 = vld [vmem:[%s398 + $0x1c] sm:$0xf]
        %v418 = vld [vmem:[%s398 + $0x20] sm:$0xf]
        %v419 = vld [vmem:[%s398 + $0x24] sm:$0xf]
        %v420 = vld [vmem:[%s398 + $0x28] sm:$0xf]
        %v421 = vld [vmem:[%s398 + $0x2c] sm:$0xf]
        %v422 = vld [vmem:[%s398 + $0x30] sm:$0xf]
        %v423 = vld [vmem:[%s398 + $0x34] sm:$0xf]
        %v424 = vld [vmem:[%s398 + $0x38] sm:$0xf]
        %v425 = vld [vmem:[%s398 + $0x3c] sm:$0xf]
        %v426 = vld [vmem:[%s398 + $0x40] sm:$0xf]
        %v427 = vld [vmem:[%s398 + $0x44] sm:$0xf]
        %v428 = vld [vmem:[%s398 + $0x48] sm:$0xf]
        %v429 = vld [vmem:[%s398 + $0x4c] sm:$0xf]
        %v430 = vld [vmem:[%s398 + $0x50] sm:$0xf]
        %v431 = vld [vmem:[%s398 + $0x54] sm:$0xf]
        %v432 = vld [vmem:[%s398 + $0x58] sm:$0xf]
        %v433 = vld [vmem:[%s398 + $0x5c] sm:$0xf]
        %v434 = vld [vmem:[%s398 + $0x60] sm:$0xf]
        %v435 = vld [vmem:[%s398 + $0x64] sm:$0xf]
        %v436 = vld [vmem:[%s398 + $0x68] sm:$0xf]
        %v437 = vld [vmem:[%s398 + $0x6c] sm:$0xf]
        %v438 = vld [vmem:[%s398 + $0x70] sm:$0xf]
        %v439 = vld [vmem:[%s398 + $0x74] sm:$0xf]
        %v440 = vld [vmem:[%s398 + $0x78] sm:$0xf]
        %v441 = vld [vmem:[%s398 + $0x7c] sm:$0xf]
        %v442 = vld [vmem:[%s398 + $0x80] sm:$0xf]
        %v443 = vld [vmem:[%s398 + $0x84] sm:$0xf]
        %v444 = vld [vmem:[%s398 + $0x88] sm:$0xf]
        %v445 = vld [vmem:[%s398 + $0x8c] sm:$0xf]
        %v446 = vld [vmem:[%s398 + $0x90] sm:$0xf]
        %v447 = vld [vmem:[%s398 + $0x94] sm:$0xf]
        %v448 = vld [vmem:[%s398 + $0x98] sm:$0xf]
        %v449 = vld [vmem:[%s398 + $0x9c] sm:$0xf]
        %v450 = vld [vmem:[%s398 + $0xa0] sm:$0xf]
        %v451 = vld [vmem:[%s398 + $0xa4] sm:$0xf]
        %v452 = vld [vmem:[%s398 + $0xa8] sm:$0xf]
        %v453 = vld [vmem:[%s398 + $0xac] sm:$0xf]
        %v454 = vld [vmem:[%s398 + $0xb0] sm:$0xf]
        %v455 = vld [vmem:[%s398 + $0xb4] sm:$0xf]
        %v456 = vld [vmem:[%s398 + $0xb8] sm:$0xf]
        %v457 = vld [vmem:[%s398 + $0xbc] sm:$0xf]
        %v458 = vld [vmem:[%s398 + $0xc0] sm:$0xf]
        %v459 = vld [vmem:[%s398 + $0xc4] sm:$0xf]
        %v460 = vld [vmem:[%s398 + $0xc8] sm:$0xf]
        %v461 = vld [vmem:[%s398 + $0xcc] sm:$0xf]
        %v462 = vld [vmem:[%s398 + $0xd0] sm:$0xf]
        %v463 = vld [vmem:[%s398 + $0xd4] sm:$0xf]
        %v464 = vld [vmem:[%s398 + $0xd8] sm:$0xf]
        %v465 = vld [vmem:[%s398 + $0xdc] sm:$0xf]
        %v466 = vld [vmem:[%s398 + $0xe0] sm:$0xf]
        %v467 = vld [vmem:[%s398 + $0xe4] sm:$0xf]
        %v468 = vld [vmem:[%s398 + $0xe8] sm:$0xf]
        %v469 = vld [vmem:[%s398 + $0xec] sm:$0xf]
        %v470 = vld [vmem:[%s398 + $0xf0] sm:$0xf]
        %v471 = vld [vmem:[%s398 + $0xf4] sm:$0xf]
        %v472 = vld [vmem:[%s398 + $0xf8] sm:$0xf]
        %v473 = vld [vmem:[%s398 + $0xfc] sm:$0xf]
        %v474 = vunpack.c.l.bf16 %v410
        %v475 = vunpack.c.l.bf16 %v411
        %v476 = vunpack.c.l.bf16 %v412
        %v477 = vunpack.c.l.bf16 %v413
        %v478 = vunpack.c.l.bf16 %v414
        %v479 = vunpack.c.l.bf16 %v415
        %v480 = vunpack.c.l.bf16 %v416
        %v481 = vunpack.c.l.bf16 %v417
        %v482 = vunpack.c.l.bf16 %v418
        %v483 = vunpack.c.l.bf16 %v419
        %v484 = vunpack.c.l.bf16 %v420
        %v485 = vunpack.c.l.bf16 %v421
        %v486 = vunpack.c.l.bf16 %v422
        %v487 = vunpack.c.l.bf16 %v423
        %v488 = vunpack.c.l.bf16 %v424
        %v489 = vunpack.c.l.bf16 %v425
        %v490 = vunpack.c.l.bf16 %v426
        %v491 = vunpack.c.l.bf16 %v427
        %v492 = vunpack.c.l.bf16 %v428
        %v493 = vunpack.c.l.bf16 %v429
        %v494 = vunpack.c.l.bf16 %v430
        %v495 = vunpack.c.l.bf16 %v431
        %v496 = vunpack.c.l.bf16 %v432
        %v497 = vunpack.c.l.bf16 %v433
        %v498 = vunpack.c.l.bf16 %v434
        %v499 = vunpack.c.l.bf16 %v435
        %v500 = vunpack.c.l.bf16 %v436
        %v501 = vunpack.c.l.bf16 %v437
        %v502 = vunpack.c.l.bf16 %v438
        %v503 = vunpack.c.l.bf16 %v439
        %v504 = vunpack.c.l.bf16 %v440
        %v505 = vunpack.c.l.bf16 %v441
        %v506 = vunpack.c.l.bf16 %v442
        %v507 = vunpack.c.l.bf16 %v443
        %v508 = vunpack.c.l.bf16 %v444
        %v509 = vunpack.c.l.bf16 %v445
        %v510 = vunpack.c.l.bf16 %v446
        %v511 = vunpack.c.l.bf16 %v447
        %v512 = vunpack.c.l.bf16 %v448
        %v513 = vunpack.c.l.bf16 %v449
        %v514 = vunpack.c.l.bf16 %v450
        %v515 = vunpack.c.l.bf16 %v451
        %v516 = vunpack.c.l.bf16 %v452
        %v517 = vunpack.c.l.bf16 %v453
        %v518 = vunpack.c.l.bf16 %v454
        %v519 = vunpack.c.l.bf16 %v455
        %v520 = vunpack.c.l.bf16 %v456
        %v521 = vunpack.c.l.bf16 %v457
        %v522 = vunpack.c.l.bf16 %v458
        %v523 = vunpack.c.l.bf16 %v459
        %v524 = vunpack.c.l.bf16 %v460
        %v525 = vunpack.c.l.bf16 %v461
        %v526 = vunpack.c.l.bf16 %v462
        %v527 = vunpack.c.l.bf16 %v463
        %v528 = vunpack.c.l.bf16 %v464
        %v529 = vunpack.c.l.bf16 %v465
        %v530 = vunpack.c.l.bf16 %v466
        %v531 = vunpack.c.l.bf16 %v467
        %v532 = vunpack.c.l.bf16 %v468
        %v533 = vunpack.c.l.bf16 %v469
        %v534 = vunpack.c.l.bf16 %v470
        %v535 = vunpack.c.l.bf16 %v471
        %v536 = vunpack.c.l.bf16 %v472
        %v537 = vunpack.c.l.bf16 %v473
        %v538 = vld [vmem:[#allocation2] sm:$0x3]
        %v539 = vunpack.c.l.bf16 %v538
        %541 = vset.pattern.permute.xlu0 0
        %542 = vperm.xlu0 %541, %v474
        %v543 = vpop.permute.xlu0 %542
        %546 = vset.pattern.permute.xlu0 0
        %547 = vperm.xlu0 %546, %v475
        %v548 = vpop.permute.xlu0 %547
        %551 = vset.pattern.permute.xlu0 0
        %552 = vperm.xlu0 %551, %v476
        %v553 = vpop.permute.xlu0 %552
        %556 = vset.pattern.permute.xlu0 0
        %557 = vperm.xlu0 %556, %v477
        %v558 = vpop.permute.xlu0 %557
        %561 = vset.pattern.permute.xlu0 0
        %562 = vperm.xlu0 %561, %v478
        %v563 = vpop.permute.xlu0 %562
        %566 = vset.pattern.permute.xlu0 0
        %567 = vperm.xlu0 %566, %v479
        %v568 = vpop.permute.xlu0 %567
        %571 = vset.pattern.permute.xlu0 0
        %572 = vperm.xlu0 %571, %v480
        %v573 = vpop.permute.xlu0 %572
        %576 = vset.pattern.permute.xlu0 0
        %577 = vperm.xlu0 %576, %v481
        %v578 = vpop.permute.xlu0 %577
        %581 = vset.pattern.permute.xlu0 0
        %582 = vperm.xlu0 %581, %v482
        %v583 = vpop.permute.xlu0 %582
        %586 = vset.pattern.permute.xlu0 0
        %587 = vperm.xlu0 %586, %v483
        %v588 = vpop.permute.xlu0 %587
        %591 = vset.pattern.permute.xlu0 0
        %592 = vperm.xlu0 %591, %v484
        %v593 = vpop.permute.xlu0 %592
        %596 = vset.pattern.permute.xlu0 0
        %597 = vperm.xlu0 %596, %v485
        %v598 = vpop.permute.xlu0 %597
        %601 = vset.pattern.permute.xlu0 0
        %602 = vperm.xlu0 %601, %v486
        %v603 = vpop.permute.xlu0 %602
        %606 = vset.pattern.permute.xlu0 0
        %607 = vperm.xlu0 %606, %v487
        %v608 = vpop.permute.xlu0 %607
        %611 = vset.pattern.permute.xlu0 0
        %612 = vperm.xlu0 %611, %v488
        %v613 = vpop.permute.xlu0 %612
        %616 = vset.pattern.permute.xlu0 0
        %617 = vperm.xlu0 %616, %v489
        %v618 = vpop.permute.xlu0 %617
        %621 = vset.pattern.permute.xlu0 0
        %622 = vperm.xlu0 %621, %v490
        %v623 = vpop.permute.xlu0 %622
        %626 = vset.pattern.permute.xlu0 0
        %627 = vperm.xlu0 %626, %v491
        %v628 = vpop.permute.xlu0 %627
        %631 = vset.pattern.permute.xlu0 0
        %632 = vperm.xlu0 %631, %v492
        %v633 = vpop.permute.xlu0 %632
        %636 = vset.pattern.permute.xlu0 0
        %637 = vperm.xlu0 %636, %v493
        %v638 = vpop.permute.xlu0 %637
        %641 = vset.pattern.permute.xlu0 0
        %642 = vperm.xlu0 %641, %v494
        %v643 = vpop.permute.xlu0 %642
        %646 = vset.pattern.permute.xlu0 0
        %647 = vperm.xlu0 %646, %v495
        %v648 = vpop.permute.xlu0 %647
        %651 = vset.pattern.permute.xlu0 0
        %652 = vperm.xlu0 %651, %v496
        %v653 = vpop.permute.xlu0 %652
        %656 = vset.pattern.permute.xlu0 0
        %657 = vperm.xlu0 %656, %v497
        %v658 = vpop.permute.xlu0 %657
        %661 = vset.pattern.permute.xlu0 0
        %662 = vperm.xlu0 %661, %v498
        %v663 = vpop.permute.xlu0 %662
        %666 = vset.pattern.permute.xlu0 0
        %667 = vperm.xlu0 %666, %v499
        %v668 = vpop.permute.xlu0 %667
        %671 = vset.pattern.permute.xlu0 0
        %672 = vperm.xlu0 %671, %v500
        %v673 = vpop.permute.xlu0 %672
        %676 = vset.pattern.permute.xlu0 0
        %677 = vperm.xlu0 %676, %v501
        %v678 = vpop.permute.xlu0 %677
        %681 = vset.pattern.permute.xlu0 0
        %682 = vperm.xlu0 %681, %v502
        %v683 = vpop.permute.xlu0 %682
        %686 = vset.pattern.permute.xlu0 0
        %687 = vperm.xlu0 %686, %v503
        %v688 = vpop.permute.xlu0 %687
        %691 = vset.pattern.permute.xlu0 0
        %692 = vperm.xlu0 %691, %v504
        %v693 = vpop.permute.xlu0 %692
        %696 = vset.pattern.permute.xlu0 0
        %697 = vperm.xlu0 %696, %v505
        %v698 = vpop.permute.xlu0 %697
        %701 = vset.pattern.permute.xlu0 0
        %702 = vperm.xlu0 %701, %v506
        %v703 = vpop.permute.xlu0 %702
        %706 = vset.pattern.permute.xlu0 0
        %707 = vperm.xlu0 %706, %v507
        %v708 = vpop.permute.xlu0 %707
        %711 = vset.pattern.permute.xlu0 0
        %712 = vperm.xlu0 %711, %v508
        %v713 = vpop.permute.xlu0 %712
        %716 = vset.pattern.permute.xlu0 0
        %717 = vperm.xlu0 %716, %v509
        %v718 = vpop.permute.xlu0 %717
        %721 = vset.pattern.permute.xlu0 0
        %722 = vperm.xlu0 %721, %v510
        %v723 = vpop.permute.xlu0 %722
        %726 = vset.pattern.permute.xlu0 0
        %727 = vperm.xlu0 %726, %v511
        %v728 = vpop.permute.xlu0 %727
        %731 = vset.pattern.permute.xlu0 0
        %732 = vperm.xlu0 %731, %v512
        %v733 = vpop.permute.xlu0 %732
        %736 = vset.pattern.permute.xlu0 0
        %737 = vperm.xlu0 %736, %v513
        %v738 = vpop.permute.xlu0 %737
        %741 = vset.pattern.permute.xlu0 0
        %742 = vperm.xlu0 %741, %v514
        %v743 = vpop.permute.xlu0 %742
        %746 = vset.pattern.permute.xlu0 0
        %747 = vperm.xlu0 %746, %v515
        %v748 = vpop.permute.xlu0 %747
        %751 = vset.pattern.permute.xlu0 0
        %752 = vperm.xlu0 %751, %v516
        %v753 = vpop.permute.xlu0 %752
        %756 = vset.pattern.permute.xlu0 0
        %757 = vperm.xlu0 %756, %v517
        %v758 = vpop.permute.xlu0 %757
        %761 = vset.pattern.permute.xlu0 0
        %762 = vperm.xlu0 %761, %v518
        %v763 = vpop.permute.xlu0 %762
        %766 = vset.pattern.permute.xlu0 0
        %767 = vperm.xlu0 %766, %v519
        %v768 = vpop.permute.xlu0 %767
        %771 = vset.pattern.permute.xlu0 0
        %772 = vperm.xlu0 %771, %v520
        %v773 = vpop.permute.xlu0 %772
        %776 = vset.pattern.permute.xlu0 0
        %777 = vperm.xlu0 %776, %v521
        %v778 = vpop.permute.xlu0 %777
        %781 = vset.pattern.permute.xlu0 0
        %782 = vperm.xlu0 %781, %v522
        %v783 = vpop.permute.xlu0 %782
        %786 = vset.pattern.permute.xlu0 0
        %787 = vperm.xlu0 %786, %v523
        %v788 = vpop.permute.xlu0 %787
        %791 = vset.pattern.permute.xlu0 0
        %792 = vperm.xlu0 %791, %v524
        %v793 = vpop.permute.xlu0 %792
        %796 = vset.pattern.permute.xlu0 0
        %797 = vperm.xlu0 %796, %v525
        %v798 = vpop.permute.xlu0 %797
        %801 = vset.pattern.permute.xlu0 0
        %802 = vperm.xlu0 %801, %v526
        %v803 = vpop.permute.xlu0 %802
        %806 = vset.pattern.permute.xlu0 0
        %807 = vperm.xlu0 %806, %v527
        %v808 = vpop.permute.xlu0 %807
        %811 = vset.pattern.permute.xlu0 0
        %812 = vperm.xlu0 %811, %v528
        %v813 = vpop.permute.xlu0 %812
        %816 = vset.pattern.permute.xlu0 0
        %817 = vperm.xlu0 %816, %v529
        %v818 = vpop.permute.xlu0 %817
        %821 = vset.pattern.permute.xlu0 0
        %822 = vperm.xlu0 %821, %v530
        %v823 = vpop.permute.xlu0 %822
        %826 = vset.pattern.permute.xlu0 0
        %827 = vperm.xlu0 %826, %v531
        %v828 = vpop.permute.xlu0 %827
        %831 = vset.pattern.permute.xlu0 0
        %832 = vperm.xlu0 %831, %v532
        %v833 = vpop.permute.xlu0 %832
        %836 = vset.pattern.permute.xlu0 0
        %837 = vperm.xlu0 %836, %v533
        %v838 = vpop.permute.xlu0 %837
        %841 = vset.pattern.permute.xlu0 0
        %842 = vperm.xlu0 %841, %v534
        %v843 = vpop.permute.xlu0 %842
        %846 = vset.pattern.permute.xlu0 0
        %847 = vperm.xlu0 %846, %v535
        %v848 = vpop.permute.xlu0 %847
        %851 = vset.pattern.permute.xlu0 0
        %852 = vperm.xlu0 %851, %v536
        %v853 = vpop.permute.xlu0 %852
        %856 = vset.pattern.permute.xlu0 0
        %857 = vperm.xlu0 %856, %v537
        %v858 = vpop.permute.xlu0 %857
        %v860 = vlaneseq
        %v861 = vshrl.u32 %v860, 7
        %v862 = vsub.s32 0, %v861
        %v863 = vrot.slane %v539, %v862
        %v864 = vmul.f32 %v543, %v863
        %v865 = vmul.f32 %v548, %v863
        %v866 = vmul.f32 %v553, %v863
        %v867 = vmul.f32 %v558, %v863
        %v868 = vmul.f32 %v563, %v863
        %v869 = vmul.f32 %v568, %v863
        %v870 = vmul.f32 %v573, %v863
        %v871 = vmul.f32 %v578, %v863
        %v872 = vmul.f32 %v583, %v863
        %v873 = vmul.f32 %v588, %v863
        %v874 = vmul.f32 %v593, %v863
        %v875 = vmul.f32 %v598, %v863
        %v876 = vmul.f32 %v603, %v863
        %v877 = vmul.f32 %v608, %v863
        %v878 = vmul.f32 %v613, %v863
        %v879 = vmul.f32 %v618, %v863
        %v880 = vmul.f32 %v623, %v863
        %v881 = vmul.f32 %v628, %v863
        %v882 = vmul.f32 %v633, %v863
        %v883 = vmul.f32 %v638, %v863
        %v884 = vmul.f32 %v643, %v863
        %v885 = vmul.f32 %v648, %v863
        %v886 = vmul.f32 %v653, %v863
        %v887 = vmul.f32 %v658, %v863
        %v888 = vmul.f32 %v663, %v863
        %v889 = vmul.f32 %v668, %v863
        %v890 = vmul.f32 %v673, %v863
        %v891 = vmul.f32 %v678, %v863
        %v892 = vmul.f32 %v683, %v863
        %v893 = vmul.f32 %v688, %v863
        %v894 = vmul.f32 %v693, %v863
        %v895 = vmul.f32 %v698, %v863
        %v896 = vmul.f32 %v703, %v863
        %v897 = vmul.f32 %v708, %v863
        %v898 = vmul.f32 %v713, %v863
        %v899 = vmul.f32 %v718, %v863
        %v900 = vmul.f32 %v723, %v863
        %v901 = vmul.f32 %v728, %v863
        %v902 = vmul.f32 %v733, %v863
        %v903 = vmul.f32 %v738, %v863
        %v904 = vmul.f32 %v743, %v863
        %v905 = vmul.f32 %v748, %v863
        %v906 = vmul.f32 %v753, %v863
        %v907 = vmul.f32 %v758, %v863
        %v908 = vmul.f32 %v763, %v863
        %v909 = vmul.f32 %v768, %v863
        %v910 = vmul.f32 %v773, %v863
        %v911 = vmul.f32 %v778, %v863
        %v912 = vmul.f32 %v783, %v863
        %v913 = vmul.f32 %v788, %v863
        %v914 = vmul.f32 %v793, %v863
        %v915 = vmul.f32 %v798, %v863
        %v916 = vmul.f32 %v803, %v863
        %v917 = vmul.f32 %v808, %v863
        %v918 = vmul.f32 %v813, %v863
        %v919 = vmul.f32 %v818, %v863
        %v920 = vmul.f32 %v823, %v863
        %v921 = vmul.f32 %v828, %v863
        %v922 = vmul.f32 %v833, %v863
        %v923 = vmul.f32 %v838, %v863
        %v924 = vmul.f32 %v843, %v863
        %v925 = vmul.f32 %v848, %v863
        %v926 = vmul.f32 %v853, %v863
        %v927 = vmul.f32 %v858, %v863
        %928 = vset.pattern.permute.xlu0 1
        %929 = vperm.xlu0 %928, %v474
        %v930 = vpop.permute.xlu0 %929
        %932 = vset.pattern.permute.xlu0 1
        %933 = vperm.xlu0 %932, %v475
        %v934 = vpop.permute.xlu0 %933
        %936 = vset.pattern.permute.xlu0 1
        %937 = vperm.xlu0 %936, %v476
        %v938 = vpop.permute.xlu0 %937
        %940 = vset.pattern.permute.xlu0 1
        %941 = vperm.xlu0 %940, %v477
        %v942 = vpop.permute.xlu0 %941
        %944 = vset.pattern.permute.xlu0 1
        %945 = vperm.xlu0 %944, %v478
        %v946 = vpop.permute.xlu0 %945
        %948 = vset.pattern.permute.xlu0 1
        %949 = vperm.xlu0 %948, %v479
        %v950 = vpop.permute.xlu0 %949
        %952 = vset.pattern.permute.xlu0 1
        %953 = vperm.xlu0 %952, %v480
        %v954 = vpop.permute.xlu0 %953
        %956 = vset.pattern.permute.xlu0 1
        %957 = vperm.xlu0 %956, %v481
        %v958 = vpop.permute.xlu0 %957
        %960 = vset.pattern.permute.xlu0 1
        %961 = vperm.xlu0 %960, %v482
        %v962 = vpop.permute.xlu0 %961
        %964 = vset.pattern.permute.xlu0 1
        %965 = vperm.xlu0 %964, %v483
        %v966 = vpop.permute.xlu0 %965
        %968 = vset.pattern.permute.xlu0 1
        %969 = vperm.xlu0 %968, %v484
        %v970 = vpop.permute.xlu0 %969
        %972 = vset.pattern.permute.xlu0 1
        %973 = vperm.xlu0 %972, %v485
        %v974 = vpop.permute.xlu0 %973
        %976 = vset.pattern.permute.xlu0 1
        %977 = vperm.xlu0 %976, %v486
        %v978 = vpop.permute.xlu0 %977
        %980 = vset.pattern.permute.xlu0 1
        %981 = vperm.xlu0 %980, %v487
        %v982 = vpop.permute.xlu0 %981
        %984 = vset.pattern.permute.xlu0 1
        %985 = vperm.xlu0 %984, %v488
        %v986 = vpop.permute.xlu0 %985
        %988 = vset.pattern.permute.xlu0 1
        %989 = vperm.xlu0 %988, %v489
        %v990 = vpop.permute.xlu0 %989
        %992 = vset.pattern.permute.xlu0 1
        %993 = vperm.xlu0 %992, %v490
        %v994 = vpop.permute.xlu0 %993
        %996 = vset.pattern.permute.xlu0 1
        %997 = vperm.xlu0 %996, %v491
        %v998 = vpop.permute.xlu0 %997
        %1000 = vset.pattern.permute.xlu0 1
        %1001 = vperm.xlu0 %1000, %v492
        %v1002 = vpop.permute.xlu0 %1001
        %1004 = vset.pattern.permute.xlu0 1
        %1005 = vperm.xlu0 %1004, %v493
        %v1006 = vpop.permute.xlu0 %1005
        %1008 = vset.pattern.permute.xlu0 1
        %1009 = vperm.xlu0 %1008, %v494
        %v1010 = vpop.permute.xlu0 %1009
        %1012 = vset.pattern.permute.xlu0 1
        %1013 = vperm.xlu0 %1012, %v495
        %v1014 = vpop.permute.xlu0 %1013
        %1016 = vset.pattern.permute.xlu0 1
        %1017 = vperm.xlu0 %1016, %v496
        %v1018 = vpop.permute.xlu0 %1017
        %1020 = vset.pattern.permute.xlu0 1
        %1021 = vperm.xlu0 %1020, %v497
        %v1022 = vpop.permute.xlu0 %1021
        %1024 = vset.pattern.permute.xlu0 1
        %1025 = vperm.xlu0 %1024, %v498
        %v1026 = vpop.permute.xlu0 %1025
        %1028 = vset.pattern.permute.xlu0 1
        %1029 = vperm.xlu0 %1028, %v499
        %v1030 = vpop.permute.xlu0 %1029
        %1032 = vset.pattern.permute.xlu0 1
        %1033 = vperm.xlu0 %1032, %v500
        %v1034 = vpop.permute.xlu0 %1033
        %1036 = vset.pattern.permute.xlu0 1
        %1037 = vperm.xlu0 %1036, %v501
        %v1038 = vpop.permute.xlu0 %1037
        %1040 = vset.pattern.permute.xlu0 1
        %1041 = vperm.xlu0 %1040, %v502
        %v1042 = vpop.permute.xlu0 %1041
        %1044 = vset.pattern.permute.xlu0 1
        %1045 = vperm.xlu0 %1044, %v503
        %v1046 = vpop.permute.xlu0 %1045
        %1048 = vset.pattern.permute.xlu0 1
        %1049 = vperm.xlu0 %1048, %v504
        %v1050 = vpop.permute.xlu0 %1049
        %1052 = vset.pattern.permute.xlu0 1
        %1053 = vperm.xlu0 %1052, %v505
        %v1054 = vpop.permute.xlu0 %1053
        %1056 = vset.pattern.permute.xlu0 1
        %1057 = vperm.xlu0 %1056, %v506
        %v1058 = vpop.permute.xlu0 %1057
        %1060 = vset.pattern.permute.xlu0 1
        %1061 = vperm.xlu0 %1060, %v507
        %v1062 = vpop.permute.xlu0 %1061
        %1064 = vset.pattern.permute.xlu0 1
        %1065 = vperm.xlu0 %1064, %v508
        %v1066 = vpop.permute.xlu0 %1065
        %1068 = vset.pattern.permute.xlu0 1
        %1069 = vperm.xlu0 %1068, %v509
        %v1070 = vpop.permute.xlu0 %1069
        %1072 = vset.pattern.permute.xlu0 1
        %1073 = vperm.xlu0 %1072, %v510
        %v1074 = vpop.permute.xlu0 %1073
        %1076 = vset.pattern.permute.xlu0 1
        %1077 = vperm.xlu0 %1076, %v511
        %v1078 = vpop.permute.xlu0 %1077
        %1080 = vset.pattern.permute.xlu0 1
        %1081 = vperm.xlu0 %1080, %v512
        %v1082 = vpop.permute.xlu0 %1081
        %1084 = vset.pattern.permute.xlu0 1
        %1085 = vperm.xlu0 %1084, %v513
        %v1086 = vpop.permute.xlu0 %1085
        %1088 = vset.pattern.permute.xlu0 1
        %1089 = vperm.xlu0 %1088, %v514
        %v1090 = vpop.permute.xlu0 %1089
        %1092 = vset.pattern.permute.xlu0 1
        %1093 = vperm.xlu0 %1092, %v515
        %v1094 = vpop.permute.xlu0 %1093
        %1096 = vset.pattern.permute.xlu0 1
        %1097 = vperm.xlu0 %1096, %v516
        %v1098 = vpop.permute.xlu0 %1097
        %1100 = vset.pattern.permute.xlu0 1
        %1101 = vperm.xlu0 %1100, %v517
        %v1102 = vpop.permute.xlu0 %1101
        %1104 = vset.pattern.permute.xlu0 1
        %1105 = vperm.xlu0 %1104, %v518
        %v1106 = vpop.permute.xlu0 %1105
        %1108 = vset.pattern.permute.xlu0 1
        %1109 = vperm.xlu0 %1108, %v519
        %v1110 = vpop.permute.xlu0 %1109
        %1112 = vset.pattern.permute.xlu0 1
        %1113 = vperm.xlu0 %1112, %v520
        %v1114 = vpop.permute.xlu0 %1113
        %1116 = vset.pattern.permute.xlu0 1
        %1117 = vperm.xlu0 %1116, %v521
        %v1118 = vpop.permute.xlu0 %1117
        %1120 = vset.pattern.permute.xlu0 1
        %1121 = vperm.xlu0 %1120, %v522
        %v1122 = vpop.permute.xlu0 %1121
        %1124 = vset.pattern.permute.xlu0 1
        %1125 = vperm.xlu0 %1124, %v523
        %v1126 = vpop.permute.xlu0 %1125
        %1128 = vset.pattern.permute.xlu0 1
        %1129 = vperm.xlu0 %1128, %v524
        %v1130 = vpop.permute.xlu0 %1129
        %1132 = vset.pattern.permute.xlu0 1
        %1133 = vperm.xlu0 %1132, %v525
        %v1134 = vpop.permute.xlu0 %1133
        %1136 = vset.pattern.permute.xlu0 1
        %1137 = vperm.xlu0 %1136, %v526
        %v1138 = vpop.permute.xlu0 %1137
        %1140 = vset.pattern.permute.xlu0 1
        %1141 = vperm.xlu0 %1140, %v527
        %v1142 = vpop.permute.xlu0 %1141
        %1144 = vset.pattern.permute.xlu0 1
        %1145 = vperm.xlu0 %1144, %v528
        %v1146 = vpop.permute.xlu0 %1145
        %1148 = vset.pattern.permute.xlu0 1
        %1149 = vperm.xlu0 %1148, %v529
        %v1150 = vpop.permute.xlu0 %1149
        %1152 = vset.pattern.permute.xlu0 1
        %1153 = vperm.xlu0 %1152, %v530
        %v1154 = vpop.permute.xlu0 %1153
        %1156 = vset.pattern.permute.xlu0 1
        %1157 = vperm.xlu0 %1156, %v531
        %v1158 = vpop.permute.xlu0 %1157
        %1160 = vset.pattern.permute.xlu0 1
        %1161 = vperm.xlu0 %1160, %v532
        %v1162 = vpop.permute.xlu0 %1161
        %1164 = vset.pattern.permute.xlu0 1
        %1165 = vperm.xlu0 %1164, %v533
        %v1166 = vpop.permute.xlu0 %1165
        %1168 = vset.pattern.permute.xlu0 1
        %1169 = vperm.xlu0 %1168, %v534
        %v1170 = vpop.permute.xlu0 %1169
        %1172 = vset.pattern.permute.xlu0 1
        %1173 = vperm.xlu0 %1172, %v535
        %v1174 = vpop.permute.xlu0 %1173
        %1176 = vset.pattern.permute.xlu0 1
        %1177 = vperm.xlu0 %1176, %v536
        %v1178 = vpop.permute.xlu0 %1177
        %1180 = vset.pattern.permute.xlu0 1
        %1181 = vperm.xlu0 %1180, %v537
        %v1182 = vpop.permute.xlu0 %1181
        %v1184 = vlaneseq
        %v1185 = vshrl.u32 %v1184, 7
        %v1186 = vsub.s32 1, %v1185
        %v1187 = vrot.slane %v539, %v1186
        %v1188 = vmul.f32 %v930, %v1187
        %v1189 = vmul.f32 %v934, %v1187
        %v1190 = vmul.f32 %v938, %v1187
        %v1191 = vmul.f32 %v942, %v1187
        %v1192 = vmul.f32 %v946, %v1187
        %v1193 = vmul.f32 %v950, %v1187
        %v1194 = vmul.f32 %v954, %v1187
        %v1195 = vmul.f32 %v958, %v1187
        %v1196 = vmul.f32 %v962, %v1187
        %v1197 = vmul.f32 %v966, %v1187
        %v1198 = vmul.f32 %v970, %v1187
        %v1199 = vmul.f32 %v974, %v1187
        %v1200 = vmul.f32 %v978, %v1187
        %v1201 = vmul.f32 %v982, %v1187
        %v1202 = vmul.f32 %v986, %v1187
        %v1203 = vmul.f32 %v990, %v1187
        %v1204 = vmul.f32 %v994, %v1187
        %v1205 = vmul.f32 %v998, %v1187
        %v1206 = vmul.f32 %v1002, %v1187
        %v1207 = vmul.f32 %v1006, %v1187
        %v1208 = vmul.f32 %v1010, %v1187
        %v1209 = vmul.f32 %v1014, %v1187
        %v1210 = vmul.f32 %v1018, %v1187
        %v1211 = vmul.f32 %v1022, %v1187
        %v1212 = vmul.f32 %v1026, %v1187
        %v1213 = vmul.f32 %v1030, %v1187
        %v1214 = vmul.f32 %v1034, %v1187
        %v1215 = vmul.f32 %v1038, %v1187
        %v1216 = vmul.f32 %v1042, %v1187
        %v1217 = vmul.f32 %v1046, %v1187
        %v1218 = vmul.f32 %v1050, %v1187
        %v1219 = vmul.f32 %v1054, %v1187
        %v1220 = vmul.f32 %v1058, %v1187
        %v1221 = vmul.f32 %v1062, %v1187
        %v1222 = vmul.f32 %v1066, %v1187
        %v1223 = vmul.f32 %v1070, %v1187
        %v1224 = vmul.f32 %v1074, %v1187
        %v1225 = vmul.f32 %v1078, %v1187
        %v1226 = vmul.f32 %v1082, %v1187
        %v1227 = vmul.f32 %v1086, %v1187
        %v1228 = vmul.f32 %v1090, %v1187
        %v1229 = vmul.f32 %v1094, %v1187
        %v1230 = vmul.f32 %v1098, %v1187
        %v1231 = vmul.f32 %v1102, %v1187
        %v1232 = vmul.f32 %v1106, %v1187
        %v1233 = vmul.f32 %v1110, %v1187
        %v1234 = vmul.f32 %v1114, %v1187
        %v1235 = vmul.f32 %v1118, %v1187
        %v1236 = vmul.f32 %v1122, %v1187
        %v1237 = vmul.f32 %v1126, %v1187
        %v1238 = vmul.f32 %v1130, %v1187
        %v1239 = vmul.f32 %v1134, %v1187
        %v1240 = vmul.f32 %v1138, %v1187
        %v1241 = vmul.f32 %v1142, %v1187
        %v1242 = vmul.f32 %v1146, %v1187
        %v1243 = vmul.f32 %v1150, %v1187
        %v1244 = vmul.f32 %v1154, %v1187
        %v1245 = vmul.f32 %v1158, %v1187
        %v1246 = vmul.f32 %v1162, %v1187
        %v1247 = vmul.f32 %v1166, %v1187
        %v1248 = vmul.f32 %v1170, %v1187
        %v1249 = vmul.f32 %v1174, %v1187
        %v1250 = vmul.f32 %v1178, %v1187
        %v1251 = vmul.f32 %v1182, %v1187
        %v1252 = vadd.f32 %v864, %v1188
        %v1253 = vadd.f32 %v865, %v1189
        %v1254 = vadd.f32 %v866, %v1190
        %v1255 = vadd.f32 %v867, %v1191
        %v1256 = vadd.f32 %v868, %v1192
        %v1257 = vadd.f32 %v869, %v1193
        %v1258 = vadd.f32 %v870, %v1194
        %v1259 = vadd.f32 %v871, %v1195
        %v1260 = vadd.f32 %v872, %v1196
        %v1261 = vadd.f32 %v873, %v1197
        %v1262 = vadd.f32 %v874, %v1198
        %v1263 = vadd.f32 %v875, %v1199
        %v1264 = vadd.f32 %v876, %v1200
        %v1265 = vadd.f32 %v877, %v1201
        %v1266 = vadd.f32 %v878, %v1202
        %v1267 = vadd.f32 %v879, %v1203
        %v1268 = vadd.f32 %v880, %v1204
        %v1269 = vadd.f32 %v881, %v1205
        %v1270 = vadd.f32 %v882, %v1206
        %v1271 = vadd.f32 %v883, %v1207
        %v1272 = vadd.f32 %v884, %v1208
        %v1273 = vadd.f32 %v885, %v1209
        %v1274 = vadd.f32 %v886, %v1210
        %v1275 = vadd.f32 %v887, %v1211
        %v1276 = vadd.f32 %v888, %v1212
        %v1277 = vadd.f32 %v889, %v1213
        %v1278 = vadd.f32 %v890, %v1214
        %v1279 = vadd.f32 %v891, %v1215
        %v1280 = vadd.f32 %v892, %v1216
        %v1281 = vadd.f32 %v893, %v1217
        %v1282 = vadd.f32 %v894, %v1218
        %v1283 = vadd.f32 %v895, %v1219
        %v1284 = vadd.f32 %v896, %v1220
        %v1285 = vadd.f32 %v897, %v1221
        %v1286 = vadd.f32 %v898, %v1222
        %v1287 = vadd.f32 %v899, %v1223
        %v1288 = vadd.f32 %v900, %v1224
        %v1289 = vadd.f32 %v901, %v1225
        %v1290 = vadd.f32 %v902, %v1226
        %v1291 = vadd.f32 %v903, %v1227
        %v1292 = vadd.f32 %v904, %v1228
        %v1293 = vadd.f32 %v905, %v1229
        %v1294 = vadd.f32 %v906, %v1230
        %v1295 = vadd.f32 %v907, %v1231
        %v1296 = vadd.f32 %v908, %v1232
        %v1297 = vadd.f32 %v909, %v1233
        %v1298 = vadd.f32 %v910, %v1234
        %v1299 = vadd.f32 %v911, %v1235
        %v1300 = vadd.f32 %v912, %v1236
        %v1301 = vadd.f32 %v913, %v1237
        %v1302 = vadd.f32 %v914, %v1238
        %v1303 = vadd.f32 %v915, %v1239
        %v1304 = vadd.f32 %v916, %v1240
        %v1305 = vadd.f32 %v917, %v1241
        %v1306 = vadd.f32 %v918, %v1242
        %v1307 = vadd.f32 %v919, %v1243
        %v1308 = vadd.f32 %v920, %v1244
        %v1309 = vadd.f32 %v921, %v1245
        %v1310 = vadd.f32 %v922, %v1246
        %v1311 = vadd.f32 %v923, %v1247
        %v1312 = vadd.f32 %v924, %v1248
        %v1313 = vadd.f32 %v925, %v1249
        %v1314 = vadd.f32 %v926, %v1250
        %v1315 = vadd.f32 %v927, %v1251
        %1316 = vset.pattern.permute.xlu0 2
        %1317 = vperm.xlu0 %1316, %v474
        %v1318 = vpop.permute.xlu0 %1317
        %1320 = vset.pattern.permute.xlu0 2
        %1321 = vperm.xlu0 %1320, %v475
        %v1322 = vpop.permute.xlu0 %1321
        %1324 = vset.pattern.permute.xlu0 2
        %1325 = vperm.xlu0 %1324, %v476
        %v1326 = vpop.permute.xlu0 %1325
        %1328 = vset.pattern.permute.xlu0 2
        %1329 = vperm.xlu0 %1328, %v477
        %v1330 = vpop.permute.xlu0 %1329
        %1332 = vset.pattern.permute.xlu0 2
        %1333 = vperm.xlu0 %1332, %v478
        %v1334 = vpop.permute.xlu0 %1333
        %1336 = vset.pattern.permute.xlu0 2
        %1337 = vperm.xlu0 %1336, %v479
        %v1338 = vpop.permute.xlu0 %1337
        %1340 = vset.pattern.permute.xlu0 2
        %1341 = vperm.xlu0 %1340, %v480
        %v1342 = vpop.permute.xlu0 %1341
        %1344 = vset.pattern.permute.xlu0 2
        %1345 = vperm.xlu0 %1344, %v481
        %v1346 = vpop.permute.xlu0 %1345
        %1348 = vset.pattern.permute.xlu0 2
        %1349 = vperm.xlu0 %1348, %v482
        %v1350 = vpop.permute.xlu0 %1349
        %1352 = vset.pattern.permute.xlu0 2
        %1353 = vperm.xlu0 %1352, %v483
        %v1354 = vpop.permute.xlu0 %1353
        %1356 = vset.pattern.permute.xlu0 2
        %1357 = vperm.xlu0 %1356, %v484
        %v1358 = vpop.permute.xlu0 %1357
        %1360 = vset.pattern.permute.xlu0 2
        %1361 = vperm.xlu0 %1360, %v485
        %v1362 = vpop.permute.xlu0 %1361
        %1364 = vset.pattern.permute.xlu0 2
        %1365 = vperm.xlu0 %1364, %v486
        %v1366 = vpop.permute.xlu0 %1365
        %1368 = vset.pattern.permute.xlu0 2
        %1369 = vperm.xlu0 %1368, %v487
        %v1370 = vpop.permute.xlu0 %1369
        %1372 = vset.pattern.permute.xlu0 2
        %1373 = vperm.xlu0 %1372, %v488
        %v1374 = vpop.permute.xlu0 %1373
        %1376 = vset.pattern.permute.xlu0 2
        %1377 = vperm.xlu0 %1376, %v489
        %v1378 = vpop.permute.xlu0 %1377
        %1380 = vset.pattern.permute.xlu0 2
        %1381 = vperm.xlu0 %1380, %v490
        %v1382 = vpop.permute.xlu0 %1381
        %1384 = vset.pattern.permute.xlu0 2
        %1385 = vperm.xlu0 %1384, %v491
        %v1386 = vpop.permute.xlu0 %1385
        %1388 = vset.pattern.permute.xlu0 2
        %1389 = vperm.xlu0 %1388, %v492
        %v1390 = vpop.permute.xlu0 %1389
        %1392 = vset.pattern.permute.xlu0 2
        %1393 = vperm.xlu0 %1392, %v493
        %v1394 = vpop.permute.xlu0 %1393
        %1396 = vset.pattern.permute.xlu0 2
        %1397 = vperm.xlu0 %1396, %v494
        %v1398 = vpop.permute.xlu0 %1397
        %1400 = vset.pattern.permute.xlu0 2
        %1401 = vperm.xlu0 %1400, %v495
        %v1402 = vpop.permute.xlu0 %1401
        %1404 = vset.pattern.permute.xlu0 2
        %1405 = vperm.xlu0 %1404, %v496
        %v1406 = vpop.permute.xlu0 %1405
        %1408 = vset.pattern.permute.xlu0 2
        %1409 = vperm.xlu0 %1408, %v497
        %v1410 = vpop.permute.xlu0 %1409
        %1412 = vset.pattern.permute.xlu0 2
        %1413 = vperm.xlu0 %1412, %v498
        %v1414 = vpop.permute.xlu0 %1413
        %1416 = vset.pattern.permute.xlu0 2
        %1417 = vperm.xlu0 %1416, %v499
        %v1418 = vpop.permute.xlu0 %1417
        %1420 = vset.pattern.permute.xlu0 2
        %1421 = vperm.xlu0 %1420, %v500
        %v1422 = vpop.permute.xlu0 %1421
        %1424 = vset.pattern.permute.xlu0 2
        %1425 = vperm.xlu0 %1424, %v501
        %v1426 = vpop.permute.xlu0 %1425
        %1428 = vset.pattern.permute.xlu0 2
        %1429 = vperm.xlu0 %1428, %v502
        %v1430 = vpop.permute.xlu0 %1429
        %1432 = vset.pattern.permute.xlu0 2
        %1433 = vperm.xlu0 %1432, %v503
        %v1434 = vpop.permute.xlu0 %1433
        %1436 = vset.pattern.permute.xlu0 2
        %1437 = vperm.xlu0 %1436, %v504
        %v1438 = vpop.permute.xlu0 %1437
        %1440 = vset.pattern.permute.xlu0 2
        %1441 = vperm.xlu0 %1440, %v505
        %v1442 = vpop.permute.xlu0 %1441
        %1444 = vset.pattern.permute.xlu0 2
        %1445 = vperm.xlu0 %1444, %v506
        %v1446 = vpop.permute.xlu0 %1445
        %1448 = vset.pattern.permute.xlu0 2
        %1449 = vperm.xlu0 %1448, %v507
        %v1450 = vpop.permute.xlu0 %1449
        %1452 = vset.pattern.permute.xlu0 2
        %1453 = vperm.xlu0 %1452, %v508
        %v1454 = vpop.permute.xlu0 %1453
        %1456 = vset.pattern.permute.xlu0 2
        %1457 = vperm.xlu0 %1456, %v509
        %v1458 = vpop.permute.xlu0 %1457
        %1460 = vset.pattern.permute.xlu0 2
        %1461 = vperm.xlu0 %1460, %v510
        %v1462 = vpop.permute.xlu0 %1461
        %1464 = vset.pattern.permute.xlu0 2
        %1465 = vperm.xlu0 %1464, %v511
        %v1466 = vpop.permute.xlu0 %1465
        %1468 = vset.pattern.permute.xlu0 2
        %1469 = vperm.xlu0 %1468, %v512
        %v1470 = vpop.permute.xlu0 %1469
        %1472 = vset.pattern.permute.xlu0 2
        %1473 = vperm.xlu0 %1472, %v513
        %v1474 = vpop.permute.xlu0 %1473
        %1476 = vset.pattern.permute.xlu0 2
        %1477 = vperm.xlu0 %1476, %v514
        %v1478 = vpop.permute.xlu0 %1477
        %1480 = vset.pattern.permute.xlu0 2
        %1481 = vperm.xlu0 %1480, %v515
        %v1482 = vpop.permute.xlu0 %1481
        %1484 = vset.pattern.permute.xlu0 2
        %1485 = vperm.xlu0 %1484, %v516
        %v1486 = vpop.permute.xlu0 %1485
        %1488 = vset.pattern.permute.xlu0 2
        %1489 = vperm.xlu0 %1488, %v517
        %v1490 = vpop.permute.xlu0 %1489
        %1492 = vset.pattern.permute.xlu0 2
        %1493 = vperm.xlu0 %1492, %v518
        %v1494 = vpop.permute.xlu0 %1493
        %1496 = vset.pattern.permute.xlu0 2
        %1497 = vperm.xlu0 %1496, %v519
        %v1498 = vpop.permute.xlu0 %1497
        %1500 = vset.pattern.permute.xlu0 2
        %1501 = vperm.xlu0 %1500, %v520
        %v1502 = vpop.permute.xlu0 %1501
        %1504 = vset.pattern.permute.xlu0 2
        %1505 = vperm.xlu0 %1504, %v521
        %v1506 = vpop.permute.xlu0 %1505
        %1508 = vset.pattern.permute.xlu0 2
        %1509 = vperm.xlu0 %1508, %v522
        %v1510 = vpop.permute.xlu0 %1509
        %1512 = vset.pattern.permute.xlu0 2
        %1513 = vperm.xlu0 %1512, %v523
        %v1514 = vpop.permute.xlu0 %1513
        %1516 = vset.pattern.permute.xlu0 2
        %1517 = vperm.xlu0 %1516, %v524
        %v1518 = vpop.permute.xlu0 %1517
        %1520 = vset.pattern.permute.xlu0 2
        %1521 = vperm.xlu0 %1520, %v525
        %v1522 = vpop.permute.xlu0 %1521
        %1524 = vset.pattern.permute.xlu0 2
        %1525 = vperm.xlu0 %1524, %v526
        %v1526 = vpop.permute.xlu0 %1525
        %1528 = vset.pattern.permute.xlu0 2
        %1529 = vperm.xlu0 %1528, %v527
        %v1530 = vpop.permute.xlu0 %1529
        %1532 = vset.pattern.permute.xlu0 2
        %1533 = vperm.xlu0 %1532, %v528
        %v1534 = vpop.permute.xlu0 %1533
        %1536 = vset.pattern.permute.xlu0 2
        %1537 = vperm.xlu0 %1536, %v529
        %v1538 = vpop.permute.xlu0 %1537
        %1540 = vset.pattern.permute.xlu0 2
        %1541 = vperm.xlu0 %1540, %v530
        %v1542 = vpop.permute.xlu0 %1541
        %1544 = vset.pattern.permute.xlu0 2
        %1545 = vperm.xlu0 %1544, %v531
        %v1546 = vpop.permute.xlu0 %1545
        %1548 = vset.pattern.permute.xlu0 2
        %1549 = vperm.xlu0 %1548, %v532
        %v1550 = vpop.permute.xlu0 %1549
        %1552 = vset.pattern.permute.xlu0 2
        %1553 = vperm.xlu0 %1552, %v533
        %v1554 = vpop.permute.xlu0 %1553
        %1556 = vset.pattern.permute.xlu0 2
        %1557 = vperm.xlu0 %1556, %v534
        %v1558 = vpop.permute.xlu0 %1557
        %1560 = vset.pattern.permute.xlu0 2
        %1561 = vperm.xlu0 %1560, %v535
        %v1562 = vpop.permute.xlu0 %1561
        %1564 = vset.pattern.permute.xlu0 2
        %1565 = vperm.xlu0 %1564, %v536
        %v1566 = vpop.permute.xlu0 %1565
        %1568 = vset.pattern.permute.xlu0 2
        %1569 = vperm.xlu0 %1568, %v537
        %v1570 = vpop.permute.xlu0 %1569
        %v1572 = vlaneseq
        %v1573 = vshrl.u32 %v1572, 7
        %v1574 = vsub.s32 2, %v1573
        %v1575 = vrot.slane %v539, %v1574
        %v1576 = vmul.f32 %v1318, %v1575
        %v1577 = vmul.f32 %v1322, %v1575
        %v1578 = vmul.f32 %v1326, %v1575
        %v1579 = vmul.f32 %v1330, %v1575
        %v1580 = vmul.f32 %v1334, %v1575
        %v1581 = vmul.f32 %v1338, %v1575
        %v1582 = vmul.f32 %v1342, %v1575
        %v1583 = vmul.f32 %v1346, %v1575
        %v1584 = vmul.f32 %v1350, %v1575
        %v1585 = vmul.f32 %v1354, %v1575
        %v1586 = vmul.f32 %v1358, %v1575
        %v1587 = vmul.f32 %v1362, %v1575
        %v1588 = vmul.f32 %v1366, %v1575
        %v1589 = vmul.f32 %v1370, %v1575
        %v1590 = vmul.f32 %v1374, %v1575
        %v1591 = vmul.f32 %v1378, %v1575
        %v1592 = vmul.f32 %v1382, %v1575
        %v1593 = vmul.f32 %v1386, %v1575
        %v1594 = vmul.f32 %v1390, %v1575
        %v1595 = vmul.f32 %v1394, %v1575
        %v1596 = vmul.f32 %v1398, %v1575
        %v1597 = vmul.f32 %v1402, %v1575
        %v1598 = vmul.f32 %v1406, %v1575
        %v1599 = vmul.f32 %v1410, %v1575
        %v1600 = vmul.f32 %v1414, %v1575
        %v1601 = vmul.f32 %v1418, %v1575
        %v1602 = vmul.f32 %v1422, %v1575
        %v1603 = vmul.f32 %v1426, %v1575
        %v1604 = vmul.f32 %v1430, %v1575
        %v1605 = vmul.f32 %v1434, %v1575
        %v1606 = vmul.f32 %v1438, %v1575
        %v1607 = vmul.f32 %v1442, %v1575
        %v1608 = vmul.f32 %v1446, %v1575
        %v1609 = vmul.f32 %v1450, %v1575
        %v1610 = vmul.f32 %v1454, %v1575
        %v1611 = vmul.f32 %v1458, %v1575
        %v1612 = vmul.f32 %v1462, %v1575
        %v1613 = vmul.f32 %v1466, %v1575
        %v1614 = vmul.f32 %v1470, %v1575
        %v1615 = vmul.f32 %v1474, %v1575
        %v1616 = vmul.f32 %v1478, %v1575
        %v1617 = vmul.f32 %v1482, %v1575
        %v1618 = vmul.f32 %v1486, %v1575
        %v1619 = vmul.f32 %v1490, %v1575
        %v1620 = vmul.f32 %v1494, %v1575
        %v1621 = vmul.f32 %v1498, %v1575
        %v1622 = vmul.f32 %v1502, %v1575
        %v1623 = vmul.f32 %v1506, %v1575
        %v1624 = vmul.f32 %v1510, %v1575
        %v1625 = vmul.f32 %v1514, %v1575
        %v1626 = vmul.f32 %v1518, %v1575
        %v1627 = vmul.f32 %v1522, %v1575
        %v1628 = vmul.f32 %v1526, %v1575
        %v1629 = vmul.f32 %v1530, %v1575
        %v1630 = vmul.f32 %v1534, %v1575
        %v1631 = vmul.f32 %v1538, %v1575
        %v1632 = vmul.f32 %v1542, %v1575
        %v1633 = vmul.f32 %v1546, %v1575
        %v1634 = vmul.f32 %v1550, %v1575
        %v1635 = vmul.f32 %v1554, %v1575
        %v1636 = vmul.f32 %v1558, %v1575
        %v1637 = vmul.f32 %v1562, %v1575
        %v1638 = vmul.f32 %v1566, %v1575
        %v1639 = vmul.f32 %v1570, %v1575
        %v1640 = vadd.f32 %v1252, %v1576
        %v1641 = vadd.f32 %v1253, %v1577
        %v1642 = vadd.f32 %v1254, %v1578
        %v1643 = vadd.f32 %v1255, %v1579
        %v1644 = vadd.f32 %v1256, %v1580
        %v1645 = vadd.f32 %v1257, %v1581
        %v1646 = vadd.f32 %v1258, %v1582
        %v1647 = vadd.f32 %v1259, %v1583
        %v1648 = vadd.f32 %v1260, %v1584
        %v1649 = vadd.f32 %v1261, %v1585
        %v1650 = vadd.f32 %v1262, %v1586
        %v1651 = vadd.f32 %v1263, %v1587
        %v1652 = vadd.f32 %v1264, %v1588
        %v1653 = vadd.f32 %v1265, %v1589
        %v1654 = vadd.f32 %v1266, %v1590
        %v1655 = vadd.f32 %v1267, %v1591
        %v1656 = vadd.f32 %v1268, %v1592
        %v1657 = vadd.f32 %v1269, %v1593
        %v1658 = vadd.f32 %v1270, %v1594
        %v1659 = vadd.f32 %v1271, %v1595
        %v1660 = vadd.f32 %v1272, %v1596
        %v1661 = vadd.f32 %v1273, %v1597
        %v1662 = vadd.f32 %v1274, %v1598
        %v1663 = vadd.f32 %v1275, %v1599
        %v1664 = vadd.f32 %v1276, %v1600
        %v1665 = vadd.f32 %v1277, %v1601
        %v1666 = vadd.f32 %v1278, %v1602
        %v1667 = vadd.f32 %v1279, %v1603
        %v1668 = vadd.f32 %v1280, %v1604
        %v1669 = vadd.f32 %v1281, %v1605
        %v1670 = vadd.f32 %v1282, %v1606
        %v1671 = vadd.f32 %v1283, %v1607
        %v1672 = vadd.f32 %v1284, %v1608
        %v1673 = vadd.f32 %v1285, %v1609
        %v1674 = vadd.f32 %v1286, %v1610
        %v1675 = vadd.f32 %v1287, %v1611
        %v1676 = vadd.f32 %v1288, %v1612
        %v1677 = vadd.f32 %v1289, %v1613
        %v1678 = vadd.f32 %v1290, %v1614
        %v1679 = vadd.f32 %v1291, %v1615
        %v1680 = vadd.f32 %v1292, %v1616
        %v1681 = vadd.f32 %v1293, %v1617
        %v1682 = vadd.f32 %v1294, %v1618
        %v1683 = vadd.f32 %v1295, %v1619
        %v1684 = vadd.f32 %v1296, %v1620
        %v1685 = vadd.f32 %v1297, %v1621
        %v1686 = vadd.f32 %v1298, %v1622
        %v1687 = vadd.f32 %v1299, %v1623
        %v1688 = vadd.f32 %v1300, %v1624
        %v1689 = vadd.f32 %v1301, %v1625
        %v1690 = vadd.f32 %v1302, %v1626
        %v1691 = vadd.f32 %v1303, %v1627
        %v1692 = vadd.f32 %v1304, %v1628
        %v1693 = vadd.f32 %v1305, %v1629
        %v1694 = vadd.f32 %v1306, %v1630
        %v1695 = vadd.f32 %v1307, %v1631
        %v1696 = vadd.f32 %v1308, %v1632
        %v1697 = vadd.f32 %v1309, %v1633
        %v1698 = vadd.f32 %v1310, %v1634
        %v1699 = vadd.f32 %v1311, %v1635
        %v1700 = vadd.f32 %v1312, %v1636
        %v1701 = vadd.f32 %v1313, %v1637
        %v1702 = vadd.f32 %v1314, %v1638
        %v1703 = vadd.f32 %v1315, %v1639
        %v1704 = vld [vmem:[#allocation4] sm:$0x1]
        %v1706 = vlaneseq
        %v1707 = vshrl.u32 %v1706, 7
        %v1708 = vsub.s32 0, %v1707
        %v1709 = vrot.slane %v1704, %v1708
        %v1711 = vadd.f32 %v1640, %v1709
        %v1712 = vadd.f32 %v1641, %v1709
        %v1713 = vadd.f32 %v1642, %v1709
        %v1714 = vadd.f32 %v1643, %v1709
        %v1715 = vadd.f32 %v1644, %v1709
        %v1716 = vadd.f32 %v1645, %v1709
        %v1717 = vadd.f32 %v1646, %v1709
        %v1718 = vadd.f32 %v1647, %v1709
        %v1719 = vadd.f32 %v1648, %v1709
        %v1720 = vadd.f32 %v1649, %v1709
        %v1721 = vadd.f32 %v1650, %v1709
        %v1722 = vadd.f32 %v1651, %v1709
        %v1723 = vadd.f32 %v1652, %v1709
        %v1724 = vadd.f32 %v1653, %v1709
        %v1725 = vadd.f32 %v1654, %v1709
        %v1726 = vadd.f32 %v1655, %v1709
        %v1727 = vadd.f32 %v1656, %v1709
        %v1728 = vadd.f32 %v1657, %v1709
        %v1729 = vadd.f32 %v1658, %v1709
        %v1730 = vadd.f32 %v1659, %v1709
        %v1731 = vadd.f32 %v1660, %v1709
        %v1732 = vadd.f32 %v1661, %v1709
        %v1733 = vadd.f32 %v1662, %v1709
        %v1734 = vadd.f32 %v1663, %v1709
        %v1735 = vadd.f32 %v1664, %v1709
        %v1736 = vadd.f32 %v1665, %v1709
        %v1737 = vadd.f32 %v1666, %v1709
        %v1738 = vadd.f32 %v1667, %v1709
        %v1739 = vadd.f32 %v1668, %v1709
        %v1740 = vadd.f32 %v1669, %v1709
        %v1741 = vadd.f32 %v1670, %v1709
        %v1742 = vadd.f32 %v1671, %v1709
        %v1743 = vadd.f32 %v1672, %v1709
        %v1744 = vadd.f32 %v1673, %v1709
        %v1745 = vadd.f32 %v1674, %v1709
        %v1746 = vadd.f32 %v1675, %v1709
        %v1747 = vadd.f32 %v1676, %v1709
        %v1748 = vadd.f32 %v1677, %v1709
        %v1749 = vadd.f32 %v1678, %v1709
        %v1750 = vadd.f32 %v1679, %v1709
        %v1751 = vadd.f32 %v1680, %v1709
        %v1752 = vadd.f32 %v1681, %v1709
        %v1753 = vadd.f32 %v1682, %v1709
        %v1754 = vadd.f32 %v1683, %v1709
        %v1755 = vadd.f32 %v1684, %v1709
        %v1756 = vadd.f32 %v1685, %v1709
        %v1757 = vadd.f32 %v1686, %v1709
        %v1758 = vadd.f32 %v1687, %v1709
        %v1759 = vadd.f32 %v1688, %v1709
        %v1760 = vadd.f32 %v1689, %v1709
        %v1761 = vadd.f32 %v1690, %v1709
        %v1762 = vadd.f32 %v1691, %v1709
        %v1763 = vadd.f32 %v1692, %v1709
        %v1764 = vadd.f32 %v1693, %v1709
        %v1765 = vadd.f32 %v1694, %v1709
        %v1766 = vadd.f32 %v1695, %v1709
        %v1767 = vadd.f32 %v1696, %v1709
        %v1768 = vadd.f32 %v1697, %v1709
        %v1769 = vadd.f32 %v1698, %v1709
        %v1770 = vadd.f32 %v1699, %v1709
        %v1771 = vadd.f32 %v1700, %v1709
        %v1772 = vadd.f32 %v1701, %v1709
        %v1773 = vadd.f32 %v1702, %v1709
        %v1774 = vadd.f32 %v1703, %v1709
        %v1775 = vmax.f32 %v1711, 0.0
        %v1776 = vmax.f32 %v1712, 0.0
        %v1777 = vmax.f32 %v1713, 0.0
        %v1778 = vmax.f32 %v1714, 0.0
        %v1779 = vmax.f32 %v1715, 0.0
        %v1780 = vmax.f32 %v1716, 0.0
        %v1781 = vmax.f32 %v1717, 0.0
        %v1782 = vmax.f32 %v1718, 0.0
        %v1783 = vmax.f32 %v1719, 0.0
        %v1784 = vmax.f32 %v1720, 0.0
        %v1785 = vmax.f32 %v1721, 0.0
        %v1786 = vmax.f32 %v1722, 0.0
        %v1787 = vmax.f32 %v1723, 0.0
        %v1788 = vmax.f32 %v1724, 0.0
        %v1789 = vmax.f32 %v1725, 0.0
        %v1790 = vmax.f32 %v1726, 0.0
        %v1791 = vmax.f32 %v1727, 0.0
        %v1792 = vmax.f32 %v1728, 0.0
        %v1793 = vmax.f32 %v1729, 0.0
        %v1794 = vmax.f32 %v1730, 0.0
        %v1795 = vmax.f32 %v1731, 0.0
        %v1796 = vmax.f32 %v1732, 0.0
        %v1797 = vmax.f32 %v1733, 0.0
        %v1798 = vmax.f32 %v1734, 0.0
        %v1799 = vmax.f32 %v1735, 0.0
        %v1800 = vmax.f32 %v1736, 0.0
        %v1801 = vmax.f32 %v1737, 0.0
        %v1802 = vmax.f32 %v1738, 0.0
        %v1803 = vmax.f32 %v1739, 0.0
        %v1804 = vmax.f32 %v1740, 0.0
        %v1805 = vmax.f32 %v1741, 0.0
        %v1806 = vmax.f32 %v1742, 0.0
        %v1807 = vmax.f32 %v1743, 0.0
        %v1808 = vmax.f32 %v1744, 0.0
        %v1809 = vmax.f32 %v1745, 0.0
        %v1810 = vmax.f32 %v1746, 0.0
        %v1811 = vmax.f32 %v1747, 0.0
        %v1812 = vmax.f32 %v1748, 0.0
        %v1813 = vmax.f32 %v1749, 0.0
        %v1814 = vmax.f32 %v1750, 0.0
        %v1815 = vmax.f32 %v1751, 0.0
        %v1816 = vmax.f32 %v1752, 0.0
        %v1817 = vmax.f32 %v1753, 0.0
        %v1818 = vmax.f32 %v1754, 0.0
        %v1819 = vmax.f32 %v1755, 0.0
        %v1820 = vmax.f32 %v1756, 0.0
        %v1821 = vmax.f32 %v1757, 0.0
        %v1822 = vmax.f32 %v1758, 0.0
        %v1823 = vmax.f32 %v1759, 0.0
        %v1824 = vmax.f32 %v1760, 0.0
        %v1825 = vmax.f32 %v1761, 0.0
        %v1826 = vmax.f32 %v1762, 0.0
        %v1827 = vmax.f32 %v1763, 0.0
        %v1828 = vmax.f32 %v1764, 0.0
        %v1829 = vmax.f32 %v1765, 0.0
        %v1830 = vmax.f32 %v1766, 0.0
        %v1831 = vmax.f32 %v1767, 0.0
        %v1832 = vmax.f32 %v1768, 0.0
        %v1833 = vmax.f32 %v1769, 0.0
        %v1834 = vmax.f32 %v1770, 0.0
        %v1835 = vmax.f32 %v1771, 0.0
        %v1836 = vmax.f32 %v1772, 0.0
        %v1837 = vmax.f32 %v1773, 0.0
        %v1838 = vmax.f32 %v1774, 0.0
        %v1839 = vpack.c.bf16 %v1776, %v1775
        %v1840 = vpack.c.bf16 %v1778, %v1777
        %v1841 = vpack.c.bf16 %v1780, %v1779
        %v1842 = vpack.c.bf16 %v1782, %v1781
        %v1843 = vpack.c.bf16 %v1784, %v1783
        %v1844 = vpack.c.bf16 %v1786, %v1785
        %v1845 = vpack.c.bf16 %v1788, %v1787
        %v1846 = vpack.c.bf16 %v1790, %v1789
        %v1847 = vpack.c.bf16 %v1792, %v1791
        %v1848 = vpack.c.bf16 %v1794, %v1793
        %v1849 = vpack.c.bf16 %v1796, %v1795
        %v1850 = vpack.c.bf16 %v1798, %v1797
        %v1851 = vpack.c.bf16 %v1800, %v1799
        %v1852 = vpack.c.bf16 %v1802, %v1801
        %v1853 = vpack.c.bf16 %v1804, %v1803
        %v1854 = vpack.c.bf16 %v1806, %v1805
        %v1855 = vpack.c.bf16 %v1808, %v1807
        %v1856 = vpack.c.bf16 %v1810, %v1809
        %v1857 = vpack.c.bf16 %v1812, %v1811
        %v1858 = vpack.c.bf16 %v1814, %v1813
        %v1859 = vpack.c.bf16 %v1816, %v1815
        %v1860 = vpack.c.bf16 %v1818, %v1817
        %v1861 = vpack.c.bf16 %v1820, %v1819
        %v1862 = vpack.c.bf16 %v1822, %v1821
        %v1863 = vpack.c.bf16 %v1824, %v1823
        %v1864 = vpack.c.bf16 %v1826, %v1825
        %v1865 = vpack.c.bf16 %v1828, %v1827
        %v1866 = vpack.c.bf16 %v1830, %v1829
        %v1867 = vpack.c.bf16 %v1832, %v1831
        %v1868 = vpack.c.bf16 %v1834, %v1833
        %v1869 = vpack.c.bf16 %v1836, %v1835
        %v1870 = vpack.c.bf16 %v1838, %v1837
        %v1871 = vld [vmem:[#allocation6] sm:$0xf]
        %v1872 = vld [vmem:[#allocation6 + $0x4] sm:$0xf]
        %v1873 = vld [vmem:[#allocation6 + $0x8] sm:$0xf]
        %v1874 = vld [vmem:[#allocation6 + $0xc] sm:$0xf]
        %v1875 = vld [vmem:[#allocation6 + $0x10] sm:$0xf]
        %v1876 = vld [vmem:[#allocation6 + $0x14] sm:$0xf]
        %v1877 = vld [vmem:[#allocation6 + $0x18] sm:$0xf]
        %v1878 = vld [vmem:[#allocation6 + $0x1c] sm:$0xf]
        %v1879 = vld [vmem:[#allocation7] sm:$0x1]
        %v1881 = vlaneseq
        %v1882 = vshrl.u32 %v1881, 7
        %v1883 = vsub.s32 0, %v1882
        %v1884 = vrot.slane %v1879, %v1883
        %v1894 = vunpack.c.l.b16 %v1871
        %v1895 = vunpack.c.l.b16 %v1872
        %v1896 = vunpack.c.l.b16 %v1873
        %v1897 = vunpack.c.l.b16 %v1874
        %v1898 = vunpack.c.l.b16 %v1875
        %v1899 = vunpack.c.l.b16 %v1876
        %v1900 = vunpack.c.l.b16 %v1877
        %v1901 = vunpack.c.l.b16 %v1878
        %v1902 = vpack.c.b16 %v1895, %v1894
        %v1903 = vpack.c.b16 %v1897, %v1896
        %v1904 = vpack.c.b16 %v1899, %v1898
        %v1905 = vpack.c.b16 %v1901, %v1900
        %vm1910 = vcmask 523264
        %v1912 = vsel %vm1910, %v1839, 0
        %v1915 = vsel %vm1910, %v1840, 0
        %v1918 = vsel %vm1910, %v1841, 0
        %v1921 = vsel %vm1910, %v1842, 0
        %v1924 = vsel %vm1910, %v1843, 0
        %v1927 = vsel %vm1910, %v1844, 0
        %v1930 = vsel %vm1910, %v1845, 0
        %v1933 = vsel %vm1910, %v1846, 0
        %v1936 = vsel %vm1910, %v1847, 0
        %v1939 = vsel %vm1910, %v1848, 0
        %v1942 = vsel %vm1910, %v1849, 0
        %v1945 = vsel %vm1910, %v1850, 0
        %v1948 = vsel %vm1910, %v1851, 0
        %v1951 = vsel %vm1910, %v1852, 0
        %v1954 = vsel %vm1910, %v1853, 0
        %v1957 = vsel %vm1910, %v1854, 0
        %v1960 = vsel %vm1910, %v1855, 0
        %v1963 = vsel %vm1910, %v1856, 0
        %v1966 = vsel %vm1910, %v1857, 0
        %v1969 = vsel %vm1910, %v1858, 0
        %v1972 = vsel %vm1910, %v1859, 0
        %v1975 = vsel %vm1910, %v1860, 0
        %v1978 = vsel %vm1910, %v1861, 0
        %v1981 = vsel %vm1910, %v1862, 0
        %v1984 = vsel %vm1910, %v1863, 0
        %v1987 = vsel %vm1910, %v1864, 0
        %v1990 = vsel %vm1910, %v1865, 0
        %v1993 = vsel %vm1910, %v1866, 0
        %v1996 = vsel %vm1910, %v1867, 0
        %v1999 = vsel %vm1910, %v1868, 0
        %v2002 = vsel %vm1910, %v1869, 0
        %v2005 = vsel %vm1910, %v1870, 0
        %2007 = vmatprep.subr.bf16.mxu0 0
        %2008 = vmatpush1.bf16.msra.mxu0 0
        %2009 = vmatprep.subr.bf16.mxu0 0
        %2010 = vmatpush1.bf16.msra.mxu0 0
        %2011 = vmatprep.subr.bf16.mxu0 0
        %2012 = vmatpush1.bf16.msra.mxu0 0
        %2013 = vmatprep.subr.bf16.mxu0 0
        %2014 = vmatpush1.bf16.msra.mxu0 0
        %2015 = vmatprep.subr.bf16.mxu0 0
        %2016 = vmatpush1.bf16.msra.mxu0 %v1905
        %2017 = vmatprep.subr.bf16.mxu0 0
        %2018 = vmatpush1.bf16.msra.mxu0 %v1904
        %2019 = vmatprep.subr.bf16.mxu0 0
        %2020 = vmatpush1.bf16.msra.mxu0 %v1903
        %2021 = vmatprep.subr.bf16.mxu0 0
        %2022 = vmatpush1.bf16.msra.mxu0 %v1902
        %2023 = vmatprep.subr.bf16.mxu0 0
        %2024 = vmatpush2.bf16.msra.mxu0 0
        %2025 = vmatprep.subr.bf16.mxu0 0
        %2026 = vmatpush2.bf16.msra.mxu0 0
        %2027 = vmatprep.subr.bf16.mxu0 0
        %2028 = vmatpush2.bf16.msra.mxu0 0
        %2029 = vmatprep.subr.bf16.mxu0 0
        %2030 = vmatpush2.bf16.msra.mxu0 0
        %2031 = vmatprep.subr.bf16.mxu0 0
        %2032 = vmatpush2.bf16.msra.mxu0 0
        %2033 = vmatprep.subr.bf16.mxu0 0
        %2034 = vmatpush2.bf16.msra.mxu0 0
        %2035 = vmatprep.subr.bf16.mxu0 0
        %2036 = vmatpush2.bf16.msra.mxu0 0
        %2037 = vmatprep.subr.bf16.mxu0 0
        %2038 = vmatpush2.bf16.msra.mxu0 0
        %2039 = vmatprep.mubr.bf16.mxu0 0
        %2040 = vmatmul.mubr.bf16.gmra.mxu0 %v1912
        %v2041 = vpop.f32.mrf.mxu0
        %v2042 = vadd.f32 %v1884, %v2041
        %v2043 = vpop.f32.mrf.mxu0
        %v2044 = vpop.f32.mrf.mxu0
        %v2045 = vadd.f32 %v1884, %v2044
        %v2046 = vpop.f32.mrf.mxu0
        %2047 = vmatprep.mubr.bf16.mxu0 0
        %2048 = vmatmul.mubr.bf16.gmra.mxu0 %v1915
        %v2049 = vpop.f32.mrf.mxu0
        %v2050 = vadd.f32 %v1884, %v2049
        %v2051 = vpop.f32.mrf.mxu0
        %v2052 = vpop.f32.mrf.mxu0
        %v2053 = vadd.f32 %v1884, %v2052
        %v2054 = vpop.f32.mrf.mxu0
        %2055 = vmatprep.mubr.bf16.mxu0 0
        %2056 = vmatmul.mubr.bf16.gmra.mxu0 %v1918
        %v2057 = vpop.f32.mrf.mxu0
        %v2058 = vadd.f32 %v1884, %v2057
        %v2059 = vpop.f32.mrf.mxu0
        %v2060 = vpop.f32.mrf.mxu0
        %v2061 = vadd.f32 %v1884, %v2060
        %v2062 = vpop.f32.mrf.mxu0
        %2063 = vmatprep.mubr.bf16.mxu0 0
        %2064 = vmatmul.mubr.bf16.gmra.mxu0 %v1921
        %v2065 = vpop.f32.mrf.mxu0
        %v2066 = vadd.f32 %v1884, %v2065
        %v2067 = vpop.f32.mrf.mxu0
        %v2068 = vpop.f32.mrf.mxu0
        %v2069 = vadd.f32 %v1884, %v2068
        %v2070 = vpop.f32.mrf.mxu0
        %2071 = vmatprep.mubr.bf16.mxu0 0
        %2072 = vmatmul.mubr.bf16.gmra.mxu0 %v1924
        %v2073 = vpop.f32.mrf.mxu0
        %v2074 = vadd.f32 %v1884, %v2073
        %v2075 = vpop.f32.mrf.mxu0
        %v2076 = vpop.f32.mrf.mxu0
        %v2077 = vadd.f32 %v1884, %v2076
        %v2078 = vpop.f32.mrf.mxu0
        %2079 = vmatprep.mubr.bf16.mxu0 0
        %2080 = vmatmul.mubr.bf16.gmra.mxu0 %v1927
        %v2081 = vpop.f32.mrf.mxu0
        %v2082 = vadd.f32 %v1884, %v2081
        %v2083 = vpop.f32.mrf.mxu0
        %v2084 = vpop.f32.mrf.mxu0
        %v2085 = vadd.f32 %v1884, %v2084
        %v2086 = vpop.f32.mrf.mxu0
        %2087 = vmatprep.mubr.bf16.mxu0 0
        %2088 = vmatmul.mubr.bf16.gmra.mxu0 %v1930
        %v2089 = vpop.f32.mrf.mxu0
        %v2090 = vadd.f32 %v1884, %v2089
        %v2091 = vpop.f32.mrf.mxu0
        %v2092 = vpop.f32.mrf.mxu0
        %v2093 = vadd.f32 %v1884, %v2092
        %v2094 = vpop.f32.mrf.mxu0
        %2095 = vmatprep.mubr.bf16.mxu0 0
        %2096 = vmatmul.mubr.bf16.gmra.mxu0 %v1933
        %v2097 = vpop.f32.mrf.mxu0
        %v2098 = vadd.f32 %v1884, %v2097
        %v2099 = vpop.f32.mrf.mxu0
        %v2100 = vpop.f32.mrf.mxu0
        %v2101 = vadd.f32 %v1884, %v2100
        %v2102 = vpop.f32.mrf.mxu0
        %2103 = vmatprep.mubr.bf16.mxu0 0
        %2104 = vmatmul.mubr.bf16.gmra.mxu0 %v1936
        %v2105 = vpop.f32.mrf.mxu0
        %v2106 = vadd.f32 %v1884, %v2105
        %v2107 = vpop.f32.mrf.mxu0
        %v2108 = vpop.f32.mrf.mxu0
        %v2109 = vadd.f32 %v1884, %v2108
        %v2110 = vpop.f32.mrf.mxu0
        %2111 = vmatprep.mubr.bf16.mxu0 0
        %2112 = vmatmul.mubr.bf16.gmra.mxu0 %v1939
        %v2113 = vpop.f32.mrf.mxu0
        %v2114 = vadd.f32 %v1884, %v2113
        %v2115 = vpop.f32.mrf.mxu0
        %v2116 = vpop.f32.mrf.mxu0
        %v2117 = vadd.f32 %v1884, %v2116
        %v2118 = vpop.f32.mrf.mxu0
        %2119 = vmatprep.mubr.bf16.mxu0 0
        %2120 = vmatmul.mubr.bf16.gmra.mxu0 %v1942
        %v2121 = vpop.f32.mrf.mxu0
        %v2122 = vadd.f32 %v1884, %v2121
        %v2123 = vpop.f32.mrf.mxu0
        %v2124 = vpop.f32.mrf.mxu0
        %v2125 = vadd.f32 %v1884, %v2124
        %v2126 = vpop.f32.mrf.mxu0
        %2127 = vmatprep.mubr.bf16.mxu0 0
        %2128 = vmatmul.mubr.bf16.gmra.mxu0 %v1945
        %v2129 = vpop.f32.mrf.mxu0
        %v2130 = vadd.f32 %v1884, %v2129
        %v2131 = vpop.f32.mrf.mxu0
        %v2132 = vpop.f32.mrf.mxu0
        %v2133 = vadd.f32 %v1884, %v2132
        %v2134 = vpop.f32.mrf.mxu0
        %2135 = vmatprep.mubr.bf16.mxu0 0
        %2136 = vmatmul.mubr.bf16.gmra.mxu0 %v1948
        %v2137 = vpop.f32.mrf.mxu0
        %v2138 = vadd.f32 %v1884, %v2137
        %v2139 = vpop.f32.mrf.mxu0
        %v2140 = vpop.f32.mrf.mxu0
        %v2141 = vadd.f32 %v1884, %v2140
        %v2142 = vpop.f32.mrf.mxu0
        %2143 = vmatprep.mubr.bf16.mxu0 0
        %2144 = vmatmul.mubr.bf16.gmra.mxu0 %v1951
        %v2145 = vpop.f32.mrf.mxu0
        %v2146 = vadd.f32 %v1884, %v2145
        %v2147 = vpop.f32.mrf.mxu0
        %v2148 = vpop.f32.mrf.mxu0
        %v2149 = vadd.f32 %v1884, %v2148
        %v2150 = vpop.f32.mrf.mxu0
        %2151 = vmatprep.mubr.bf16.mxu0 0
        %2152 = vmatmul.mubr.bf16.gmra.mxu0 %v1954
        %v2153 = vpop.f32.mrf.mxu0
        %v2154 = vadd.f32 %v1884, %v2153
        %v2155 = vpop.f32.mrf.mxu0
        %v2156 = vpop.f32.mrf.mxu0
        %v2157 = vadd.f32 %v1884, %v2156
        %v2158 = vpop.f32.mrf.mxu0
        %2159 = vmatprep.mubr.bf16.mxu0 0
        %2160 = vmatmul.mubr.bf16.gmra.mxu0 %v1957
        %v2161 = vpop.f32.mrf.mxu0
        %v2162 = vadd.f32 %v1884, %v2161
        %v2163 = vpop.f32.mrf.mxu0
        %v2164 = vpop.f32.mrf.mxu0
        %v2165 = vadd.f32 %v1884, %v2164
        %v2166 = vpop.f32.mrf.mxu0
        %2167 = vmatprep.mubr.bf16.mxu0 0
        %2168 = vmatmul.mubr.bf16.gmra.mxu0 %v1960
        %v2169 = vpop.f32.mrf.mxu0
        %v2170 = vadd.f32 %v1884, %v2169
        %v2171 = vpop.f32.mrf.mxu0
        %v2172 = vpop.f32.mrf.mxu0
        %v2173 = vadd.f32 %v1884, %v2172
        %v2174 = vpop.f32.mrf.mxu0
        %2175 = vmatprep.mubr.bf16.mxu0 0
        %2176 = vmatmul.mubr.bf16.gmra.mxu0 %v1963
        %v2177 = vpop.f32.mrf.mxu0
        %v2178 = vadd.f32 %v1884, %v2177
        %v2179 = vpop.f32.mrf.mxu0
        %v2180 = vpop.f32.mrf.mxu0
        %v2181 = vadd.f32 %v1884, %v2180
        %v2182 = vpop.f32.mrf.mxu0
        %2183 = vmatprep.mubr.bf16.mxu0 0
        %2184 = vmatmul.mubr.bf16.gmra.mxu0 %v1966
        %v2185 = vpop.f32.mrf.mxu0
        %v2186 = vadd.f32 %v1884, %v2185
        %v2187 = vpop.f32.mrf.mxu0
        %v2188 = vpop.f32.mrf.mxu0
        %v2189 = vadd.f32 %v1884, %v2188
        %v2190 = vpop.f32.mrf.mxu0
        %2191 = vmatprep.mubr.bf16.mxu0 0
        %2192 = vmatmul.mubr.bf16.gmra.mxu0 %v1969
        %v2193 = vpop.f32.mrf.mxu0
        %v2194 = vadd.f32 %v1884, %v2193
        %v2195 = vpop.f32.mrf.mxu0
        %v2196 = vpop.f32.mrf.mxu0
        %v2197 = vadd.f32 %v1884, %v2196
        %v2198 = vpop.f32.mrf.mxu0
        %2199 = vmatprep.mubr.bf16.mxu0 0
        %2200 = vmatmul.mubr.bf16.gmra.mxu0 %v1972
        %v2201 = vpop.f32.mrf.mxu0
        %v2202 = vadd.f32 %v1884, %v2201
        %v2203 = vpop.f32.mrf.mxu0
        %v2204 = vpop.f32.mrf.mxu0
        %v2205 = vadd.f32 %v1884, %v2204
        %v2206 = vpop.f32.mrf.mxu0
        %2207 = vmatprep.mubr.bf16.mxu0 0
        %2208 = vmatmul.mubr.bf16.gmra.mxu0 %v1975
        %v2209 = vpop.f32.mrf.mxu0
        %v2210 = vadd.f32 %v1884, %v2209
        %v2211 = vpop.f32.mrf.mxu0
        %v2212 = vpop.f32.mrf.mxu0
        %v2213 = vadd.f32 %v1884, %v2212
        %v2214 = vpop.f32.mrf.mxu0
        %2215 = vmatprep.mubr.bf16.mxu0 0
        %2216 = vmatmul.mubr.bf16.gmra.mxu0 %v1978
        %v2217 = vpop.f32.mrf.mxu0
        %v2218 = vadd.f32 %v1884, %v2217
        %v2219 = vpop.f32.mrf.mxu0
        %v2220 = vpop.f32.mrf.mxu0
        %v2221 = vadd.f32 %v1884, %v2220
        %v2222 = vpop.f32.mrf.mxu0
        %2223 = vmatprep.mubr.bf16.mxu0 0
        %2224 = vmatmul.mubr.bf16.gmra.mxu0 %v1981
        %v2225 = vpop.f32.mrf.mxu0
        %v2226 = vadd.f32 %v1884, %v2225
        %v2227 = vpop.f32.mrf.mxu0
        %v2228 = vpop.f32.mrf.mxu0
        %v2229 = vadd.f32 %v1884, %v2228
        %v2230 = vpop.f32.mrf.mxu0
        %2231 = vmatprep.mubr.bf16.mxu0 0
        %2232 = vmatmul.mubr.bf16.gmra.mxu0 %v1984
        %v2233 = vpop.f32.mrf.mxu0
        %v2234 = vadd.f32 %v1884, %v2233
        %v2235 = vpop.f32.mrf.mxu0
        %v2236 = vpop.f32.mrf.mxu0
        %v2237 = vadd.f32 %v1884, %v2236
        %v2238 = vpop.f32.mrf.mxu0
        %2239 = vmatprep.mubr.bf16.mxu0 0
        %2240 = vmatmul.mubr.bf16.gmra.mxu0 %v1987
        %v2241 = vpop.f32.mrf.mxu0
        %v2242 = vadd.f32 %v1884, %v2241
        %v2243 = vpop.f32.mrf.mxu0
        %v2244 = vpop.f32.mrf.mxu0
        %v2245 = vadd.f32 %v1884, %v2244
        %v2246 = vpop.f32.mrf.mxu0
        %2247 = vmatprep.mubr.bf16.mxu0 0
        %2248 = vmatmul.mubr.bf16.gmra.mxu0 %v1990
        %v2249 = vpop.f32.mrf.mxu0
        %v2250 = vadd.f32 %v1884, %v2249
        %v2251 = vpop.f32.mrf.mxu0
        %v2252 = vpop.f32.mrf.mxu0
        %v2253 = vadd.f32 %v1884, %v2252
        %v2254 = vpop.f32.mrf.mxu0
        %2255 = vmatprep.mubr.bf16.mxu0 0
        %2256 = vmatmul.mubr.bf16.gmra.mxu0 %v1993
        %v2257 = vpop.f32.mrf.mxu0
        %v2258 = vadd.f32 %v1884, %v2257
        %v2259 = vpop.f32.mrf.mxu0
        %v2260 = vpop.f32.mrf.mxu0
        %v2261 = vadd.f32 %v1884, %v2260
        %v2262 = vpop.f32.mrf.mxu0
        %2263 = vmatprep.mubr.bf16.mxu0 0
        %2264 = vmatmul.mubr.bf16.gmra.mxu0 %v1996
        %v2265 = vpop.f32.mrf.mxu0
        %v2266 = vadd.f32 %v1884, %v2265
        %v2267 = vpop.f32.mrf.mxu0
        %v2268 = vpop.f32.mrf.mxu0
        %v2269 = vadd.f32 %v1884, %v2268
        %v2270 = vpop.f32.mrf.mxu0
        %2271 = vmatprep.mubr.bf16.mxu0 0
        %2272 = vmatmul.mubr.bf16.gmra.mxu0 %v1999
        %v2273 = vpop.f32.mrf.mxu0
        %v2274 = vadd.f32 %v1884, %v2273
        %v2275 = vpop.f32.mrf.mxu0
        %v2276 = vpop.f32.mrf.mxu0
        %v2277 = vadd.f32 %v1884, %v2276
        %v2278 = vpop.f32.mrf.mxu0
        %2279 = vmatprep.mubr.bf16.mxu0 0
        %2280 = vmatmul.mubr.bf16.gmra.mxu0 %v2002
        %v2281 = vpop.f32.mrf.mxu0
        %v2282 = vadd.f32 %v1884, %v2281
        %v2283 = vpop.f32.mrf.mxu0
        %v2284 = vpop.f32.mrf.mxu0
        %v2285 = vadd.f32 %v1884, %v2284
        %v2286 = vpop.f32.mrf.mxu0
        %2287 = vmatprep.mubr.bf16.mxu0 0
        %2288 = vmatmul.mubr.bf16.gmra.mxu0 %v2005
        %v2289 = vpop.f32.mrf.mxu0
        %v2290 = vadd.f32 %v1884, %v2289
        %v2291 = vpop.f32.mrf.mxu0
        %v2292 = vpop.f32.mrf.mxu0
        %v2293 = vadd.f32 %v1884, %v2292
        %v2294 = vpop.f32.mrf.mxu0
        %2295 = vdwg.mxu0
        %v2296 = vmax.f32 %v2042, 0.0
        %v2297 = vmax.f32 %v2045, 0.0
        %v2298 = vmax.f32 %v2050, 0.0
        %v2299 = vmax.f32 %v2053, 0.0
        %v2300 = vmax.f32 %v2058, 0.0
        %v2301 = vmax.f32 %v2061, 0.0
        %v2302 = vmax.f32 %v2066, 0.0
        %v2303 = vmax.f32 %v2069, 0.0
        %v2304 = vmax.f32 %v2074, 0.0
        %v2305 = vmax.f32 %v2077, 0.0
        %v2306 = vmax.f32 %v2082, 0.0
        %v2307 = vmax.f32 %v2085, 0.0
        %v2308 = vmax.f32 %v2090, 0.0
        %v2309 = vmax.f32 %v2093, 0.0
        %v2310 = vmax.f32 %v2098, 0.0
        %v2311 = vmax.f32 %v2101, 0.0
        %v2312 = vmax.f32 %v2106, 0.0
        %v2313 = vmax.f32 %v2109, 0.0
        %v2314 = vmax.f32 %v2114, 0.0
        %v2315 = vmax.f32 %v2117, 0.0
        %v2316 = vmax.f32 %v2122, 0.0
        %v2317 = vmax.f32 %v2125, 0.0
        %v2318 = vmax.f32 %v2130, 0.0
        %v2319 = vmax.f32 %v2133, 0.0
        %v2320 = vmax.f32 %v2138, 0.0
        %v2321 = vmax.f32 %v2141, 0.0
        %v2322 = vmax.f32 %v2146, 0.0
        %v2323 = vmax.f32 %v2149, 0.0
        %v2324 = vmax.f32 %v2154, 0.0
        %v2325 = vmax.f32 %v2157, 0.0
        %v2326 = vmax.f32 %v2162, 0.0
        %v2327 = vmax.f32 %v2165, 0.0
        %v2328 = vmax.f32 %v2170, 0.0
        %v2329 = vmax.f32 %v2173, 0.0
        %v2330 = vmax.f32 %v2178, 0.0
        %v2331 = vmax.f32 %v2181, 0.0
        %v2332 = vmax.f32 %v2186, 0.0
        %v2333 = vmax.f32 %v2189, 0.0
        %v2334 = vmax.f32 %v2194, 0.0
        %v2335 = vmax.f32 %v2197, 0.0
        %v2336 = vmax.f32 %v2202, 0.0
        %v2337 = vmax.f32 %v2205, 0.0
        %v2338 = vmax.f32 %v2210, 0.0
        %v2339 = vmax.f32 %v2213, 0.0
        %v2340 = vmax.f32 %v2218, 0.0
        %v2341 = vmax.f32 %v2221, 0.0
        %v2342 = vmax.f32 %v2226, 0.0
        %v2343 = vmax.f32 %v2229, 0.0
        %v2344 = vmax.f32 %v2234, 0.0
        %v2345 = vmax.f32 %v2237, 0.0
        %v2346 = vmax.f32 %v2242, 0.0
        %v2347 = vmax.f32 %v2245, 0.0
        %v2348 = vmax.f32 %v2250, 0.0
        %v2349 = vmax.f32 %v2253, 0.0
        %v2350 = vmax.f32 %v2258, 0.0
        %v2351 = vmax.f32 %v2261, 0.0
        %v2352 = vmax.f32 %v2266, 0.0
        %v2353 = vmax.f32 %v2269, 0.0
        %v2354 = vmax.f32 %v2274, 0.0
        %v2355 = vmax.f32 %v2277, 0.0
        %v2356 = vmax.f32 %v2282, 0.0
        %v2357 = vmax.f32 %v2285, 0.0
        %v2358 = vmax.f32 %v2290, 0.0
        %v2359 = vmax.f32 %v2293, 0.0
        %v2360 = vpack.c.bf16 %v2297, %v2296
        %v2361 = vpack.c.bf16 %v2299, %v2298
        %v2362 = vpack.c.bf16 %v2301, %v2300
        %v2363 = vpack.c.bf16 %v2303, %v2302
        %v2364 = vpack.c.bf16 %v2305, %v2304
        %v2365 = vpack.c.bf16 %v2307, %v2306
        %v2366 = vpack.c.bf16 %v2309, %v2308
        %v2367 = vpack.c.bf16 %v2311, %v2310
        %v2368 = vpack.c.bf16 %v2313, %v2312
        %v2369 = vpack.c.bf16 %v2315, %v2314
        %v2370 = vpack.c.bf16 %v2317, %v2316
        %v2371 = vpack.c.bf16 %v2319, %v2318
        %v2372 = vpack.c.bf16 %v2321, %v2320
        %v2373 = vpack.c.bf16 %v2323, %v2322
        %v2374 = vpack.c.bf16 %v2325, %v2324
        %v2375 = vpack.c.bf16 %v2327, %v2326
        %v2376 = vpack.c.bf16 %v2329, %v2328
        %v2377 = vpack.c.bf16 %v2331, %v2330
        %v2378 = vpack.c.bf16 %v2333, %v2332
        %v2379 = vpack.c.bf16 %v2335, %v2334
        %v2380 = vpack.c.bf16 %v2337, %v2336
        %v2381 = vpack.c.bf16 %v2339, %v2338
        %v2382 = vpack.c.bf16 %v2341, %v2340
        %v2383 = vpack.c.bf16 %v2343, %v2342
        %v2384 = vpack.c.bf16 %v2345, %v2344
        %v2385 = vpack.c.bf16 %v2347, %v2346
        %v2386 = vpack.c.bf16 %v2349, %v2348
        %v2387 = vpack.c.bf16 %v2351, %v2350
        %v2388 = vpack.c.bf16 %v2353, %v2352
        %v2389 = vpack.c.bf16 %v2355, %v2354
        %v2390 = vpack.c.bf16 %v2357, %v2356
        %v2391 = vpack.c.bf16 %v2359, %v2358
        %v2392 = vld [vmem:[#allocation9] sm:$0xff]
        %v2393 = vld [vmem:[#allocation9 + $0x8] sm:$0xff]
        %v2394 = vld [vmem:[#allocation9 + $0x10] sm:$0xff]
        %v2395 = vld [vmem:[#allocation9 + $0x18] sm:$0xff]
        %v2396 = vld [vmem:[#allocation9 + $0x20] sm:$0xff]
        %v2397 = vld [vmem:[#allocation9 + $0x28] sm:$0xff]
        %v2398 = vld [vmem:[#allocation9 + $0x30] sm:$0xff]
        %v2399 = vld [vmem:[#allocation9 + $0x38] sm:$0xff]
        %v2400 = vld [vmem:[#allocation9 + $0x40] sm:$0xff]
        %v2401 = vld [vmem:[#allocation9 + $0x48] sm:$0xff]
        %v2402 = vld [vmem:[#allocation9 + $0x50] sm:$0xff]
        %v2403 = vld [vmem:[#allocation9 + $0x58] sm:$0xff]
        %v2404 = vld [vmem:[#allocation9 + $0x60] sm:$0xff]
        %v2405 = vld [vmem:[#allocation9 + $0x68] sm:$0xff]
        %v2406 = vld [vmem:[#allocation9 + $0x70] sm:$0xff]
        %v2407 = vld [vmem:[#allocation9 + $0x78] sm:$0xff]
        %v2408 = vld [vmem:[#allocation9 + $0x80] sm:$0xff]
        %v2409 = vld [vmem:[#allocation9 + $0x88] sm:$0xff]
        %v2410 = vld [vmem:[#allocation9 + $0x90] sm:$0xff]
        %v2411 = vld [vmem:[#allocation9 + $0x98] sm:$0xff]
        %v2412 = vld [vmem:[#allocation9 + $0xa0] sm:$0xff]
        %v2413 = vld [vmem:[#allocation9 + $0xa8] sm:$0xff]
        %v2414 = vld [vmem:[#allocation9 + $0xb0] sm:$0xff]
        %v2415 = vld [vmem:[#allocation9 + $0xb8] sm:$0xff]
        %v2416 = vld [vmem:[#allocation9 + $0xc0] sm:$0xff]
        %v2417 = vld [vmem:[#allocation9 + $0xc8] sm:$0xff]
        %v2418 = vld [vmem:[#allocation9 + $0xd0] sm:$0xff]
        %v2419 = vld [vmem:[#allocation9 + $0xd8] sm:$0xff]
        %v2420 = vld [vmem:[#allocation9 + $0xe0] sm:$0xff]
        %v2421 = vld [vmem:[#allocation9 + $0xe8] sm:$0xff]
        %v2422 = vld [vmem:[#allocation9 + $0xf0] sm:$0xff]
        %v2423 = vld [vmem:[#allocation9 + $0xf8] sm:$0xff]
        %v2424 = vld [vmem:[#allocation9 + $0x100] sm:$0xff]
        %v2425 = vld [vmem:[#allocation9 + $0x108] sm:$0xff]
        %v2426 = vld [vmem:[#allocation9 + $0x110] sm:$0xff]
        %v2427 = vld [vmem:[#allocation9 + $0x118] sm:$0xff]
        %v2428 = vld [vmem:[#allocation9 + $0x120] sm:$0xff]
        %v2429 = vld [vmem:[#allocation9 + $0x128] sm:$0xff]
        %v2430 = vld [vmem:[#allocation9 + $0x130] sm:$0xff]
        %v2431 = vld [vmem:[#allocation9 + $0x138] sm:$0xff]
        %v2432 = vld [vmem:[#allocation9 + $0x140] sm:$0xff]
        %v2433 = vld [vmem:[#allocation9 + $0x148] sm:$0xff]
        %v2434 = vld [vmem:[#allocation9 + $0x150] sm:$0xff]
        %v2435 = vld [vmem:[#allocation9 + $0x158] sm:$0xff]
        %v2436 = vld [vmem:[#allocation9 + $0x160] sm:$0xff]
        %v2437 = vld [vmem:[#allocation9 + $0x168] sm:$0xff]
        %v2438 = vld [vmem:[#allocation9 + $0x170] sm:$0xff]
        %v2439 = vld [vmem:[#allocation9 + $0x178] sm:$0xff]
        %v2440 = vld [vmem:[#allocation9 + $0x180] sm:$0xff]
        %v2441 = vld [vmem:[#allocation9 + $0x188] sm:$0xff]
        %v2442 = vld [vmem:[#allocation9 + $0x190] sm:$0xff]
        %v2443 = vld [vmem:[#allocation9 + $0x198] sm:$0xff]
        %v2444 = vld [vmem:[#allocation9 + $0x1a0] sm:$0xff]
        %v2445 = vld [vmem:[#allocation9 + $0x1a8] sm:$0xff]
        %v2446 = vld [vmem:[#allocation9 + $0x1b0] sm:$0xff]
        %v2447 = vld [vmem:[#allocation9 + $0x1b8] sm:$0xff]
        %v2448 = vld [vmem:[#allocation9 + $0x1c0] sm:$0xff]
        %v2449 = vld [vmem:[#allocation9 + $0x1c8] sm:$0xff]
        %v2450 = vld [vmem:[#allocation9 + $0x1d0] sm:$0xff]
        %v2451 = vld [vmem:[#allocation9 + $0x1d8] sm:$0xff]
        %v2452 = vld [vmem:[#allocation9 + $0x1e0] sm:$0xff]
        %v2453 = vld [vmem:[#allocation9 + $0x1e8] sm:$0xff]
        %v2454 = vld [vmem:[#allocation9 + $0x1f0] sm:$0xff]
        %v2455 = vld [vmem:[#allocation9 + $0x1f8] sm:$0xff]
        %v2456 = vld [vmem:[#allocation10] sm:$0xff]
        %v2458 = vlaneseq
        %v2459 = vshrl.u32 %v2458, 7
        %v2460 = vsub.s32 0, %v2459
        %v2461 = vrot.slane %v2456, %v2460
        %v2462 = vlaneseq
        %v2463 = vshrl.u32 %v2462, 7
        %v2464 = vsub.s32 1, %v2463
        %v2465 = vrot.slane %v2456, %v2464
        %v2466 = vlaneseq
        %v2467 = vshrl.u32 %v2466, 7
        %v2468 = vsub.s32 2, %v2467
        %v2469 = vrot.slane %v2456, %v2468
        %v2470 = vlaneseq
        %v2471 = vshrl.u32 %v2470, 7
        %v2472 = vsub.s32 3, %v2471
        %v2473 = vrot.slane %v2456, %v2472
        %v2474 = vlaneseq
        %v2475 = vshrl.u32 %v2474, 7
        %v2476 = vsub.s32 4, %v2475
        %v2477 = vrot.slane %v2456, %v2476
        %v2478 = vlaneseq
        %v2479 = vshrl.u32 %v2478, 7
        %v2480 = vsub.s32 5, %v2479
        %v2481 = vrot.slane %v2456, %v2480
        %v2482 = vlaneseq
        %v2483 = vshrl.u32 %v2482, 7
        %v2484 = vsub.s32 6, %v2483
        %v2485 = vrot.slane %v2456, %v2484
        %v2486 = vlaneseq
        %v2487 = vshrl.u32 %v2486, 7
        %v2488 = vsub.s32 7, %v2487
        %v2489 = vrot.slane %v2456, %v2488
        %v2562 = vunpack.c.l.b16 %v2392
        %v2563 = vunpack.c.h.b16 %v2392
        %v2564 = vunpack.c.l.b16 %v2393
        %v2565 = vunpack.c.h.b16 %v2393
        %v2566 = vunpack.c.l.b16 %v2394
        %v2567 = vunpack.c.h.b16 %v2394
        %v2568 = vunpack.c.l.b16 %v2395
        %v2569 = vunpack.c.h.b16 %v2395
        %v2570 = vunpack.c.l.b16 %v2396
        %v2571 = vunpack.c.h.b16 %v2396
        %v2572 = vunpack.c.l.b16 %v2397
        %v2573 = vunpack.c.h.b16 %v2397
        %v2574 = vunpack.c.l.b16 %v2398
        %v2575 = vunpack.c.h.b16 %v2398
        %v2576 = vunpack.c.l.b16 %v2399
        %v2577 = vunpack.c.h.b16 %v2399
        %v2578 = vunpack.c.l.b16 %v2400
        %v2579 = vunpack.c.h.b16 %v2400
        %v2580 = vunpack.c.l.b16 %v2401
        %v2581 = vunpack.c.h.b16 %v2401
        %v2582 = vunpack.c.l.b16 %v2402
        %v2583 = vunpack.c.h.b16 %v2402
        %v2584 = vunpack.c.l.b16 %v2403
        %v2585 = vunpack.c.h.b16 %v2403
        %v2586 = vunpack.c.l.b16 %v2404
        %v2587 = vunpack.c.h.b16 %v2404
        %v2588 = vunpack.c.l.b16 %v2405
        %v2589 = vunpack.c.h.b16 %v2405
        %v2590 = vunpack.c.l.b16 %v2406
        %v2591 = vunpack.c.h.b16 %v2406
        %v2592 = vunpack.c.l.b16 %v2407
        %v2593 = vunpack.c.h.b16 %v2407
        %v2594 = vunpack.c.l.b16 %v2408
        %v2595 = vunpack.c.h.b16 %v2408
        %v2596 = vunpack.c.l.b16 %v2409
        %v2597 = vunpack.c.h.b16 %v2409
        %v2598 = vunpack.c.l.b16 %v2410
        %v2599 = vunpack.c.h.b16 %v2410
        %v2600 = vunpack.c.l.b16 %v2411
        %v2601 = vunpack.c.h.b16 %v2411
        %v2602 = vunpack.c.l.b16 %v2412
        %v2603 = vunpack.c.h.b16 %v2412
        %v2604 = vunpack.c.l.b16 %v2413
        %v2605 = vunpack.c.h.b16 %v2413
        %v2606 = vunpack.c.l.b16 %v2414
        %v2607 = vunpack.c.h.b16 %v2414
        %v2608 = vunpack.c.l.b16 %v2415
        %v2609 = vunpack.c.h.b16 %v2415
        %v2610 = vunpack.c.l.b16 %v2416
        %v2611 = vunpack.c.h.b16 %v2416
        %v2612 = vunpack.c.l.b16 %v2417
        %v2613 = vunpack.c.h.b16 %v2417
        %v2614 = vunpack.c.l.b16 %v2418
        %v2615 = vunpack.c.h.b16 %v2418
        %v2616 = vunpack.c.l.b16 %v2419
        %v2617 = vunpack.c.h.b16 %v2419
        %v2618 = vunpack.c.l.b16 %v2420
        %v2619 = vunpack.c.h.b16 %v2420
        %v2620 = vunpack.c.l.b16 %v2421
        %v2621 = vunpack.c.h.b16 %v2421
        %v2622 = vunpack.c.l.b16 %v2422
        %v2623 = vunpack.c.h.b16 %v2422
        %v2624 = vunpack.c.l.b16 %v2423
        %v2625 = vunpack.c.h.b16 %v2423
        %v2626 = vunpack.c.l.b16 %v2424
        %v2627 = vunpack.c.h.b16 %v2424
        %v2628 = vunpack.c.l.b16 %v2425
        %v2629 = vunpack.c.h.b16 %v2425
        %v2630 = vunpack.c.l.b16 %v2426
        %v2631 = vunpack.c.h.b16 %v2426
        %v2632 = vunpack.c.l.b16 %v2427
        %v2633 = vunpack.c.h.b16 %v2427
        %v2634 = vunpack.c.l.b16 %v2428
        %v2635 = vunpack.c.h.b16 %v2428
        %v2636 = vunpack.c.l.b16 %v2429
        %v2637 = vunpack.c.h.b16 %v2429
        %v2638 = vunpack.c.l.b16 %v2430
        %v2639 = vunpack.c.h.b16 %v2430
        %v2640 = vunpack.c.l.b16 %v2431
        %v2641 = vunpack.c.h.b16 %v2431
        %v2642 = vunpack.c.l.b16 %v2432
        %v2643 = vunpack.c.h.b16 %v2432
        %v2644 = vunpack.c.l.b16 %v2433
        %v2645 = vunpack.c.h.b16 %v2433
        %v2646 = vunpack.c.l.b16 %v2434
        %v2647 = vunpack.c.h.b16 %v2434
        %v2648 = vunpack.c.l.b16 %v2435
        %v2649 = vunpack.c.h.b16 %v2435
        %v2650 = vunpack.c.l.b16 %v2436
        %v2651 = vunpack.c.h.b16 %v2436
        %v2652 = vunpack.c.l.b16 %v2437
        %v2653 = vunpack.c.h.b16 %v2437
        %v2654 = vunpack.c.l.b16 %v2438
        %v2655 = vunpack.c.h.b16 %v2438
        %v2656 = vunpack.c.l.b16 %v2439
        %v2657 = vunpack.c.h.b16 %v2439
        %v2658 = vunpack.c.l.b16 %v2440
        %v2659 = vunpack.c.h.b16 %v2440
        %v2660 = vunpack.c.l.b16 %v2441
        %v2661 = vunpack.c.h.b16 %v2441
        %v2662 = vunpack.c.l.b16 %v2442
        %v2663 = vunpack.c.h.b16 %v2442
        %v2664 = vunpack.c.l.b16 %v2443
        %v2665 = vunpack.c.h.b16 %v2443
        %v2666 = vunpack.c.l.b16 %v2444
        %v2667 = vunpack.c.h.b16 %v2444
        %v2668 = vunpack.c.l.b16 %v2445
        %v2669 = vunpack.c.h.b16 %v2445
        %v2670 = vunpack.c.l.b16 %v2446
        %v2671 = vunpack.c.h.b16 %v2446
        %v2672 = vunpack.c.l.b16 %v2447
        %v2673 = vunpack.c.h.b16 %v2447
        %v2674 = vunpack.c.l.b16 %v2448
        %v2675 = vunpack.c.h.b16 %v2448
        %v2676 = vunpack.c.l.b16 %v2449
        %v2677 = vunpack.c.h.b16 %v2449
        %v2678 = vunpack.c.l.b16 %v2450
        %v2679 = vunpack.c.h.b16 %v2450
        %v2680 = vunpack.c.l.b16 %v2451
        %v2681 = vunpack.c.h.b16 %v2451
        %v2682 = vunpack.c.l.b16 %v2452
        %v2683 = vunpack.c.h.b16 %v2452
        %v2684 = vunpack.c.l.b16 %v2453
        %v2685 = vunpack.c.h.b16 %v2453
        %v2686 = vunpack.c.l.b16 %v2454
        %v2687 = vunpack.c.h.b16 %v2454
        %v2688 = vunpack.c.l.b16 %v2455
        %v2689 = vunpack.c.h.b16 %v2455
        %v2690 = vpack.c.b16 %v2570, %v2562
        %v2691 = vpack.c.b16 %v2571, %v2563
        %v2692 = vpack.c.b16 %v2572, %v2564
        %v2693 = vpack.c.b16 %v2573, %v2565
        %v2694 = vpack.c.b16 %v2574, %v2566
        %v2695 = vpack.c.b16 %v2575, %v2567
        %v2696 = vpack.c.b16 %v2576, %v2568
        %v2697 = vpack.c.b16 %v2577, %v2569
        %v2698 = vpack.c.b16 %v2586, %v2578
        %v2699 = vpack.c.b16 %v2587, %v2579
        %v2700 = vpack.c.b16 %v2588, %v2580
        %v2701 = vpack.c.b16 %v2589, %v2581
        %v2702 = vpack.c.b16 %v2590, %v2582
        %v2703 = vpack.c.b16 %v2591, %v2583
        %v2704 = vpack.c.b16 %v2592, %v2584
        %v2705 = vpack.c.b16 %v2593, %v2585
        %v2706 = vpack.c.b16 %v2602, %v2594
        %v2707 = vpack.c.b16 %v2603, %v2595
        %v2708 = vpack.c.b16 %v2604, %v2596
        %v2709 = vpack.c.b16 %v2605, %v2597
        %v2710 = vpack.c.b16 %v2606, %v2598
        %v2711 = vpack.c.b16 %v2607, %v2599
        %v2712 = vpack.c.b16 %v2608, %v2600
        %v2713 = vpack.c.b16 %v2609, %v2601
        %v2714 = vpack.c.b16 %v2618, %v2610
        %v2715 = vpack.c.b16 %v2619, %v2611
        %v2716 = vpack.c.b16 %v2620, %v2612
        %v2717 = vpack.c.b16 %v2621, %v2613
        %v2718 = vpack.c.b16 %v2622, %v2614
        %v2719 = vpack.c.b16 %v2623, %v2615
        %v2720 = vpack.c.b16 %v2624, %v2616
        %v2721 = vpack.c.b16 %v2625, %v2617
        %v2722 = vpack.c.b16 %v2634, %v2626
        %v2723 = vpack.c.b16 %v2635, %v2627
        %v2724 = vpack.c.b16 %v2636, %v2628
        %v2725 = vpack.c.b16 %v2637, %v2629
        %v2726 = vpack.c.b16 %v2638, %v2630
        %v2727 = vpack.c.b16 %v2639, %v2631
        %v2728 = vpack.c.b16 %v2640, %v2632
        %v2729 = vpack.c.b16 %v2641, %v2633
        %v2730 = vpack.c.b16 %v2650, %v2642
        %v2731 = vpack.c.b16 %v2651, %v2643
        %v2732 = vpack.c.b16 %v2652, %v2644
        %v2733 = vpack.c.b16 %v2653, %v2645
        %v2734 = vpack.c.b16 %v2654, %v2646
        %v2735 = vpack.c.b16 %v2655, %v2647
        %v2736 = vpack.c.b16 %v2656, %v2648
        %v2737 = vpack.c.b16 %v2657, %v2649
        %v2738 = vpack.c.b16 %v2666, %v2658
        %v2739 = vpack.c.b16 %v2667, %v2659
        %v2740 = vpack.c.b16 %v2668, %v2660
        %v2741 = vpack.c.b16 %v2669, %v2661
        %v2742 = vpack.c.b16 %v2670, %v2662
        %v2743 = vpack.c.b16 %v2671, %v2663
        %v2744 = vpack.c.b16 %v2672, %v2664
        %v2745 = vpack.c.b16 %v2673, %v2665
        %v2746 = vpack.c.b16 %v2682, %v2674
        %v2747 = vpack.c.b16 %v2683, %v2675
        %v2748 = vpack.c.b16 %v2684, %v2676
        %v2749 = vpack.c.b16 %v2685, %v2677
        %v2750 = vpack.c.b16 %v2686, %v2678
        %v2751 = vpack.c.b16 %v2687, %v2679
        %v2752 = vpack.c.b16 %v2688, %v2680
        %v2753 = vpack.c.b16 %v2689, %v2681
        %2818 = vmatprep.subr.bf16.mxu0 %v2747
        %2819 = vmatpush1.bf16.msra.mxu0 %v2746
        %2820 = vmatprep.subr.bf16.mxu0 %v2739
        %2821 = vmatpush1.bf16.msra.mxu0 %v2738
        %2822 = vmatprep.subr.bf16.mxu0 %v2731
        %2823 = vmatpush1.bf16.msra.mxu0 %v2730
        %2824 = vmatprep.subr.bf16.mxu0 %v2723
        %2825 = vmatpush1.bf16.msra.mxu0 %v2722
        %2826 = vmatprep.subr.bf16.mxu0 %v2715
        %2827 = vmatpush1.bf16.msra.mxu0 %v2714
        %2828 = vmatprep.subr.bf16.mxu0 %v2707
        %2829 = vmatpush1.bf16.msra.mxu0 %v2706
        %2830 = vmatprep.subr.bf16.mxu0 %v2699
        %2831 = vmatpush1.bf16.msra.mxu0 %v2698
        %2832 = vmatprep.subr.bf16.mxu0 %v2691
        %2833 = vmatpush1.bf16.msra.mxu0 %v2690
        %2834 = vmatprep.subr.bf16.mxu0 0
        %2835 = vmatpush2.bf16.msra.mxu0 0
        %2836 = vmatprep.subr.bf16.mxu0 0
        %2837 = vmatpush2.bf16.msra.mxu0 0
        %2838 = vmatprep.subr.bf16.mxu0 0
        %2839 = vmatpush2.bf16.msra.mxu0 0
        %2840 = vmatprep.subr.bf16.mxu0 0
        %2841 = vmatpush2.bf16.msra.mxu0 0
        %2842 = vmatprep.subr.bf16.mxu0 0
        %2843 = vmatpush2.bf16.msra.mxu0 0
        %2844 = vmatprep.subr.bf16.mxu0 0
        %2845 = vmatpush2.bf16.msra.mxu0 0
        %2846 = vmatprep.subr.bf16.mxu0 0
        %2847 = vmatpush2.bf16.msra.mxu0 0
        %2848 = vmatprep.subr.bf16.mxu0 0
        %2849 = vmatpush2.bf16.msra.mxu0 0
        %2850 = vmatprep.mubr.bf16.mxu0 0
        %2851 = vmatmul.mubr.bf16.gmra.mxu0 %v2360
        %v2852 = vpop.f32.mrf.mxu0
        %v2853 = vadd.f32 %v2461, %v2852
        %v2854 = vpop.f32.mrf.mxu0
        %v2855 = vadd.f32 %v2465, %v2854
        %v2856 = vpop.f32.mrf.mxu0
        %v2857 = vadd.f32 %v2461, %v2856
        %v2858 = vpop.f32.mrf.mxu0
        %v2859 = vadd.f32 %v2465, %v2858
        %2860 = vmatprep.mubr.bf16.mxu0 0
        %2861 = vmatmul.mubr.bf16.gmra.mxu0 %v2361
        %v2862 = vpop.f32.mrf.mxu0
        %v2863 = vadd.f32 %v2461, %v2862
        %v2864 = vpop.f32.mrf.mxu0
        %v2865 = vadd.f32 %v2465, %v2864
        %v2866 = vpop.f32.mrf.mxu0
        %v2867 = vadd.f32 %v2461, %v2866
        %v2868 = vpop.f32.mrf.mxu0
        %v2869 = vadd.f32 %v2465, %v2868
        %2870 = vmatprep.mubr.bf16.mxu0 0
        %2871 = vmatmul.mubr.bf16.gmra.mxu0 %v2362
        %v2872 = vpop.f32.mrf.mxu0
        %v2873 = vadd.f32 %v2461, %v2872
        %v2874 = vpop.f32.mrf.mxu0
        %v2875 = vadd.f32 %v2465, %v2874
        %v2876 = vpop.f32.mrf.mxu0
        %v2877 = vadd.f32 %v2461, %v2876
        %v2878 = vpop.f32.mrf.mxu0
        %v2879 = vadd.f32 %v2465, %v2878
        %2880 = vmatprep.mubr.bf16.mxu0 0
        %2881 = vmatmul.mubr.bf16.gmra.mxu0 %v2363
        %v2882 = vpop.f32.mrf.mxu0
        %v2883 = vadd.f32 %v2461, %v2882
        %v2884 = vpop.f32.mrf.mxu0
        %v2885 = vadd.f32 %v2465, %v2884
        %v2886 = vpop.f32.mrf.mxu0
        %v2887 = vadd.f32 %v2461, %v2886
        %v2888 = vpop.f32.mrf.mxu0
        %v2889 = vadd.f32 %v2465, %v2888
        %2890 = vmatprep.mubr.bf16.mxu0 0
        %2891 = vmatmul.mubr.bf16.gmra.mxu0 %v2364
        %v2892 = vpop.f32.mrf.mxu0
        %v2893 = vadd.f32 %v2461, %v2892
        %v2894 = vpop.f32.mrf.mxu0
        %v2895 = vadd.f32 %v2465, %v2894
        %v2896 = vpop.f32.mrf.mxu0
        %v2897 = vadd.f32 %v2461, %v2896
        %v2898 = vpop.f32.mrf.mxu0
        %v2899 = vadd.f32 %v2465, %v2898
        %2900 = vmatprep.mubr.bf16.mxu0 0
        %2901 = vmatmul.mubr.bf16.gmra.mxu0 %v2365
        %v2902 = vpop.f32.mrf.mxu0
        %v2903 = vadd.f32 %v2461, %v2902
        %v2904 = vpop.f32.mrf.mxu0
        %v2905 = vadd.f32 %v2465, %v2904
        %v2906 = vpop.f32.mrf.mxu0
        %v2907 = vadd.f32 %v2461, %v2906
        %v2908 = vpop.f32.mrf.mxu0
        %v2909 = vadd.f32 %v2465, %v2908
        %2910 = vmatprep.mubr.bf16.mxu0 0
        %2911 = vmatmul.mubr.bf16.gmra.mxu0 %v2366
        %v2912 = vpop.f32.mrf.mxu0
        %v2913 = vadd.f32 %v2461, %v2912
        %v2914 = vpop.f32.mrf.mxu0
        %v2915 = vadd.f32 %v2465, %v2914
        %v2916 = vpop.f32.mrf.mxu0
        %v2917 = vadd.f32 %v2461, %v2916
        %v2918 = vpop.f32.mrf.mxu0
        %v2919 = vadd.f32 %v2465, %v2918
        %2920 = vmatprep.mubr.bf16.mxu0 0
        %2921 = vmatmul.mubr.bf16.gmra.mxu0 %v2367
        %v2922 = vpop.f32.mrf.mxu0
        %v2923 = vadd.f32 %v2461, %v2922
        %v2924 = vpop.f32.mrf.mxu0
        %v2925 = vadd.f32 %v2465, %v2924
        %v2926 = vpop.f32.mrf.mxu0
        %v2927 = vadd.f32 %v2461, %v2926
        %v2928 = vpop.f32.mrf.mxu0
        %v2929 = vadd.f32 %v2465, %v2928
        %2930 = vmatprep.mubr.bf16.mxu0 0
        %2931 = vmatmul.mubr.bf16.gmra.mxu0 %v2368
        %v2932 = vpop.f32.mrf.mxu0
        %v2933 = vadd.f32 %v2461, %v2932
        %v2934 = vpop.f32.mrf.mxu0
        %v2935 = vadd.f32 %v2465, %v2934
        %v2936 = vpop.f32.mrf.mxu0
        %v2937 = vadd.f32 %v2461, %v2936
        %v2938 = vpop.f32.mrf.mxu0
        %v2939 = vadd.f32 %v2465, %v2938
        %2940 = vmatprep.mubr.bf16.mxu0 0
        %2941 = vmatmul.mubr.bf16.gmra.mxu0 %v2369
        %v2942 = vpop.f32.mrf.mxu0
        %v2943 = vadd.f32 %v2461, %v2942
        %v2944 = vpop.f32.mrf.mxu0
        %v2945 = vadd.f32 %v2465, %v2944
        %v2946 = vpop.f32.mrf.mxu0
        %v2947 = vadd.f32 %v2461, %v2946
        %v2948 = vpop.f32.mrf.mxu0
        %v2949 = vadd.f32 %v2465, %v2948
        %2950 = vmatprep.mubr.bf16.mxu0 0
        %2951 = vmatmul.mubr.bf16.gmra.mxu0 %v2370
        %v2952 = vpop.f32.mrf.mxu0
        %v2953 = vadd.f32 %v2461, %v2952
        %v2954 = vpop.f32.mrf.mxu0
        %v2955 = vadd.f32 %v2465, %v2954
        %v2956 = vpop.f32.mrf.mxu0
        %v2957 = vadd.f32 %v2461, %v2956
        %v2958 = vpop.f32.mrf.mxu0
        %v2959 = vadd.f32 %v2465, %v2958
        %2960 = vmatprep.mubr.bf16.mxu0 0
        %2961 = vmatmul.mubr.bf16.gmra.mxu0 %v2371
        %v2962 = vpop.f32.mrf.mxu0
        %v2963 = vadd.f32 %v2461, %v2962
        %v2964 = vpop.f32.mrf.mxu0
        %v2965 = vadd.f32 %v2465, %v2964
        %v2966 = vpop.f32.mrf.mxu0
        %v2967 = vadd.f32 %v2461, %v2966
        %v2968 = vpop.f32.mrf.mxu0
        %v2969 = vadd.f32 %v2465, %v2968
        %2970 = vmatprep.mubr.bf16.mxu0 0
        %2971 = vmatmul.mubr.bf16.gmra.mxu0 %v2372
        %v2972 = vpop.f32.mrf.mxu0
        %v2973 = vadd.f32 %v2461, %v2972
        %v2974 = vpop.f32.mrf.mxu0
        %v2975 = vadd.f32 %v2465, %v2974
        %v2976 = vpop.f32.mrf.mxu0
        %v2977 = vadd.f32 %v2461, %v2976
        %v2978 = vpop.f32.mrf.mxu0
        %v2979 = vadd.f32 %v2465, %v2978
        %2980 = vmatprep.mubr.bf16.mxu0 0
        %2981 = vmatmul.mubr.bf16.gmra.mxu0 %v2373
        %v2982 = vpop.f32.mrf.mxu0
        %v2983 = vadd.f32 %v2461, %v2982
        %v2984 = vpop.f32.mrf.mxu0
        %v2985 = vadd.f32 %v2465, %v2984
        %v2986 = vpop.f32.mrf.mxu0
        %v2987 = vadd.f32 %v2461, %v2986
        %v2988 = vpop.f32.mrf.mxu0
        %v2989 = vadd.f32 %v2465, %v2988
        %2990 = vmatprep.mubr.bf16.mxu0 0
        %2991 = vmatmul.mubr.bf16.gmra.mxu0 %v2374
        %v2992 = vpop.f32.mrf.mxu0
        %v2993 = vadd.f32 %v2461, %v2992
        %v2994 = vpop.f32.mrf.mxu0
        %v2995 = vadd.f32 %v2465, %v2994
        %v2996 = vpop.f32.mrf.mxu0
        %v2997 = vadd.f32 %v2461, %v2996
        %v2998 = vpop.f32.mrf.mxu0
        %v2999 = vadd.f32 %v2465, %v2998
        %3000 = vmatprep.mubr.bf16.mxu0 0
        %3001 = vmatmul.mubr.bf16.gmra.mxu0 %v2375
        %v3002 = vpop.f32.mrf.mxu0
        %v3003 = vadd.f32 %v2461, %v3002
        %v3004 = vpop.f32.mrf.mxu0
        %v3005 = vadd.f32 %v2465, %v3004
        %v3006 = vpop.f32.mrf.mxu0
        %v3007 = vadd.f32 %v2461, %v3006
        %v3008 = vpop.f32.mrf.mxu0
        %v3009 = vadd.f32 %v2465, %v3008
        %3010 = vmatprep.mubr.bf16.mxu0 0
        %3011 = vmatmul.mubr.bf16.gmra.mxu0 %v2376
        %v3012 = vpop.f32.mrf.mxu0
        %v3013 = vadd.f32 %v2461, %v3012
        %v3014 = vpop.f32.mrf.mxu0
        %v3015 = vadd.f32 %v2465, %v3014
        %v3016 = vpop.f32.mrf.mxu0
        %v3017 = vadd.f32 %v2461, %v3016
        %v3018 = vpop.f32.mrf.mxu0
        %v3019 = vadd.f32 %v2465, %v3018
        %3020 = vmatprep.mubr.bf16.mxu0 0
        %3021 = vmatmul.mubr.bf16.gmra.mxu0 %v2377
        %v3022 = vpop.f32.mrf.mxu0
        %v3023 = vadd.f32 %v2461, %v3022
        %v3024 = vpop.f32.mrf.mxu0
        %v3025 = vadd.f32 %v2465, %v3024
        %v3026 = vpop.f32.mrf.mxu0
        %v3027 = vadd.f32 %v2461, %v3026
        %v3028 = vpop.f32.mrf.mxu0
        %v3029 = vadd.f32 %v2465, %v3028
        %3030 = vmatprep.mubr.bf16.mxu0 0
        %3031 = vmatmul.mubr.bf16.gmra.mxu0 %v2378
        %v3032 = vpop.f32.mrf.mxu0
        %v3033 = vadd.f32 %v2461, %v3032
        %v3034 = vpop.f32.mrf.mxu0
        %v3035 = vadd.f32 %v2465, %v3034
        %v3036 = vpop.f32.mrf.mxu0
        %v3037 = vadd.f32 %v2461, %v3036
        %v3038 = vpop.f32.mrf.mxu0
        %v3039 = vadd.f32 %v2465, %v3038
        %3040 = vmatprep.mubr.bf16.mxu0 0
        %3041 = vmatmul.mubr.bf16.gmra.mxu0 %v2379
        %v3042 = vpop.f32.mrf.mxu0
        %v3043 = vadd.f32 %v2461, %v3042
        %v3044 = vpop.f32.mrf.mxu0
        %v3045 = vadd.f32 %v2465, %v3044
        %v3046 = vpop.f32.mrf.mxu0
        %v3047 = vadd.f32 %v2461, %v3046
        %v3048 = vpop.f32.mrf.mxu0
        %v3049 = vadd.f32 %v2465, %v3048
        %3050 = vmatprep.mubr.bf16.mxu0 0
        %3051 = vmatmul.mubr.bf16.gmra.mxu0 %v2380
        %v3052 = vpop.f32.mrf.mxu0
        %v3053 = vadd.f32 %v2461, %v3052
        %v3054 = vpop.f32.mrf.mxu0
        %v3055 = vadd.f32 %v2465, %v3054
        %v3056 = vpop.f32.mrf.mxu0
        %v3057 = vadd.f32 %v2461, %v3056
        %v3058 = vpop.f32.mrf.mxu0
        %v3059 = vadd.f32 %v2465, %v3058
        %3060 = vmatprep.mubr.bf16.mxu0 0
        %3061 = vmatmul.mubr.bf16.gmra.mxu0 %v2381
        %v3062 = vpop.f32.mrf.mxu0
        %v3063 = vadd.f32 %v2461, %v3062
        %v3064 = vpop.f32.mrf.mxu0
        %v3065 = vadd.f32 %v2465, %v3064
        %v3066 = vpop.f32.mrf.mxu0
        %v3067 = vadd.f32 %v2461, %v3066
        %v3068 = vpop.f32.mrf.mxu0
        %v3069 = vadd.f32 %v2465, %v3068
        %3070 = vmatprep.mubr.bf16.mxu0 0
        %3071 = vmatmul.mubr.bf16.gmra.mxu0 %v2382
        %v3072 = vpop.f32.mrf.mxu0
        %v3073 = vadd.f32 %v2461, %v3072
        %v3074 = vpop.f32.mrf.mxu0
        %v3075 = vadd.f32 %v2465, %v3074
        %v3076 = vpop.f32.mrf.mxu0
        %v3077 = vadd.f32 %v2461, %v3076
        %v3078 = vpop.f32.mrf.mxu0
        %v3079 = vadd.f32 %v2465, %v3078
        %3080 = vmatprep.mubr.bf16.mxu0 0
        %3081 = vmatmul.mubr.bf16.gmra.mxu0 %v2383
        %v3082 = vpop.f32.mrf.mxu0
        %v3083 = vadd.f32 %v2461, %v3082
        %v3084 = vpop.f32.mrf.mxu0
        %v3085 = vadd.f32 %v2465, %v3084
        %v3086 = vpop.f32.mrf.mxu0
        %v3087 = vadd.f32 %v2461, %v3086
        %v3088 = vpop.f32.mrf.mxu0
        %v3089 = vadd.f32 %v2465, %v3088
        %3090 = vmatprep.mubr.bf16.mxu0 0
        %3091 = vmatmul.mubr.bf16.gmra.mxu0 %v2384
        %v3092 = vpop.f32.mrf.mxu0
        %v3093 = vadd.f32 %v2461, %v3092
        %v3094 = vpop.f32.mrf.mxu0
        %v3095 = vadd.f32 %v2465, %v3094
        %v3096 = vpop.f32.mrf.mxu0
        %v3097 = vadd.f32 %v2461, %v3096
        %v3098 = vpop.f32.mrf.mxu0
        %v3099 = vadd.f32 %v2465, %v3098
        %3100 = vmatprep.mubr.bf16.mxu0 0
        %3101 = vmatmul.mubr.bf16.gmra.mxu0 %v2385
        %v3102 = vpop.f32.mrf.mxu0
        %v3103 = vadd.f32 %v2461, %v3102
        %v3104 = vpop.f32.mrf.mxu0
        %v3105 = vadd.f32 %v2465, %v3104
        %v3106 = vpop.f32.mrf.mxu0
        %v3107 = vadd.f32 %v2461, %v3106
        %v3108 = vpop.f32.mrf.mxu0
        %v3109 = vadd.f32 %v2465, %v3108
        %3110 = vmatprep.mubr.bf16.mxu0 0
        %3111 = vmatmul.mubr.bf16.gmra.mxu0 %v2386
        %v3112 = vpop.f32.mrf.mxu0
        %v3113 = vadd.f32 %v2461, %v3112
        %v3114 = vpop.f32.mrf.mxu0
        %v3115 = vadd.f32 %v2465, %v3114
        %v3116 = vpop.f32.mrf.mxu0
        %v3117 = vadd.f32 %v2461, %v3116
        %v3118 = vpop.f32.mrf.mxu0
        %v3119 = vadd.f32 %v2465, %v3118
        %3120 = vmatprep.mubr.bf16.mxu0 0
        %3121 = vmatmul.mubr.bf16.gmra.mxu0 %v2387
        %v3122 = vpop.f32.mrf.mxu0
        %v3123 = vadd.f32 %v2461, %v3122
        %v3124 = vpop.f32.mrf.mxu0
        %v3125 = vadd.f32 %v2465, %v3124
        %v3126 = vpop.f32.mrf.mxu0
        %v3127 = vadd.f32 %v2461, %v3126
        %v3128 = vpop.f32.mrf.mxu0
        %v3129 = vadd.f32 %v2465, %v3128
        %3130 = vmatprep.mubr.bf16.mxu0 0
        %3131 = vmatmul.mubr.bf16.gmra.mxu0 %v2388
        %v3132 = vpop.f32.mrf.mxu0
        %v3133 = vadd.f32 %v2461, %v3132
        %v3134 = vpop.f32.mrf.mxu0
        %v3135 = vadd.f32 %v2465, %v3134
        %v3136 = vpop.f32.mrf.mxu0
        %v3137 = vadd.f32 %v2461, %v3136
        %v3138 = vpop.f32.mrf.mxu0
        %v3139 = vadd.f32 %v2465, %v3138
        %3140 = vmatprep.mubr.bf16.mxu0 0
        %3141 = vmatmul.mubr.bf16.gmra.mxu0 %v2389
        %v3142 = vpop.f32.mrf.mxu0
        %v3143 = vadd.f32 %v2461, %v3142
        %v3144 = vpop.f32.mrf.mxu0
        %v3145 = vadd.f32 %v2465, %v3144
        %v3146 = vpop.f32.mrf.mxu0
        %v3147 = vadd.f32 %v2461, %v3146
        %v3148 = vpop.f32.mrf.mxu0
        %v3149 = vadd.f32 %v2465, %v3148
        %3150 = vmatprep.mubr.bf16.mxu0 0
        %3151 = vmatmul.mubr.bf16.gmra.mxu0 %v2390
        %v3152 = vpop.f32.mrf.mxu0
        %v3153 = vadd.f32 %v2461, %v3152
        %v3154 = vpop.f32.mrf.mxu0
        %v3155 = vadd.f32 %v2465, %v3154
        %v3156 = vpop.f32.mrf.mxu0
        %v3157 = vadd.f32 %v2461, %v3156
        %v3158 = vpop.f32.mrf.mxu0
        %v3159 = vadd.f32 %v2465, %v3158
        %3160 = vmatprep.mubr.bf16.mxu0 0
        %3161 = vmatmul.mubr.bf16.gmra.mxu0 %v2391
        %v3162 = vpop.f32.mrf.mxu0
        %v3163 = vadd.f32 %v2461, %v3162
        %v3164 = vpop.f32.mrf.mxu0
        %v3165 = vadd.f32 %v2465, %v3164
        %v3166 = vpop.f32.mrf.mxu0
        %v3167 = vadd.f32 %v2461, %v3166
        %v3168 = vpop.f32.mrf.mxu0
        %v3169 = vadd.f32 %v2465, %v3168
        %3170 = vdwg.mxu0
        %3171 = vmatprep.subr.bf16.mxu0 %v2749
        %3172 = vmatpush1.bf16.msra.mxu0 %v2748
        %3173 = vmatprep.subr.bf16.mxu0 %v2741
        %3174 = vmatpush1.bf16.msra.mxu0 %v2740
        %3175 = vmatprep.subr.bf16.mxu0 %v2733
        %3176 = vmatpush1.bf16.msra.mxu0 %v2732
        %3177 = vmatprep.subr.bf16.mxu0 %v2725
        %3178 = vmatpush1.bf16.msra.mxu0 %v2724
        %3179 = vmatprep.subr.bf16.mxu0 %v2717
        %3180 = vmatpush1.bf16.msra.mxu0 %v2716
        %3181 = vmatprep.subr.bf16.mxu0 %v2709
        %3182 = vmatpush1.bf16.msra.mxu0 %v2708
        %3183 = vmatprep.subr.bf16.mxu0 %v2701
        %3184 = vmatpush1.bf16.msra.mxu0 %v2700
        %3185 = vmatprep.subr.bf16.mxu0 %v2693
        %3186 = vmatpush1.bf16.msra.mxu0 %v2692
        %3187 = vmatprep.subr.bf16.mxu0 0
        %3188 = vmatpush2.bf16.msra.mxu0 0
        %3189 = vmatprep.subr.bf16.mxu0 0
        %3190 = vmatpush2.bf16.msra.mxu0 0
        %3191 = vmatprep.subr.bf16.mxu0 0
        %3192 = vmatpush2.bf16.msra.mxu0 0
        %3193 = vmatprep.subr.bf16.mxu0 0
        %3194 = vmatpush2.bf16.msra.mxu0 0
        %3195 = vmatprep.subr.bf16.mxu0 0
        %3196 = vmatpush2.bf16.msra.mxu0 0
        %3197 = vmatprep.subr.bf16.mxu0 0
        %3198 = vmatpush2.bf16.msra.mxu0 0
        %3199 = vmatprep.subr.bf16.mxu0 0
        %3200 = vmatpush2.bf16.msra.mxu0 0
        %3201 = vmatprep.subr.bf16.mxu0 0
        %3202 = vmatpush2.bf16.msra.mxu0 0
        %3203 = vmatprep.mubr.bf16.mxu0 0
        %3204 = vmatmul.mubr.bf16.gmra.mxu0 %v2360
        %v3205 = vpop.f32.mrf.mxu0
        %v3206 = vadd.f32 %v2469, %v3205
        %v3207 = vpop.f32.mrf.mxu0
        %v3208 = vadd.f32 %v2473, %v3207
        %v3209 = vpop.f32.mrf.mxu0
        %v3210 = vadd.f32 %v2469, %v3209
        %v3211 = vpop.f32.mrf.mxu0
        %v3212 = vadd.f32 %v2473, %v3211
        %3213 = vmatprep.mubr.bf16.mxu0 0
        %3214 = vmatmul.mubr.bf16.gmra.mxu0 %v2361
        %v3215 = vpop.f32.mrf.mxu0
        %v3216 = vadd.f32 %v2469, %v3215
        %v3217 = vpop.f32.mrf.mxu0
        %v3218 = vadd.f32 %v2473, %v3217
        %v3219 = vpop.f32.mrf.mxu0
        %v3220 = vadd.f32 %v2469, %v3219
        %v3221 = vpop.f32.mrf.mxu0
        %v3222 = vadd.f32 %v2473, %v3221
        %3223 = vmatprep.mubr.bf16.mxu0 0
        %3224 = vmatmul.mubr.bf16.gmra.mxu0 %v2362
        %v3225 = vpop.f32.mrf.mxu0
        %v3226 = vadd.f32 %v2469, %v3225
        %v3227 = vpop.f32.mrf.mxu0
        %v3228 = vadd.f32 %v2473, %v3227
        %v3229 = vpop.f32.mrf.mxu0
        %v3230 = vadd.f32 %v2469, %v3229
        %v3231 = vpop.f32.mrf.mxu0
        %v3232 = vadd.f32 %v2473, %v3231
        %3233 = vmatprep.mubr.bf16.mxu0 0
        %3234 = vmatmul.mubr.bf16.gmra.mxu0 %v2363
        %v3235 = vpop.f32.mrf.mxu0
        %v3236 = vadd.f32 %v2469, %v3235
        %v3237 = vpop.f32.mrf.mxu0
        %v3238 = vadd.f32 %v2473, %v3237
        %v3239 = vpop.f32.mrf.mxu0
        %v3240 = vadd.f32 %v2469, %v3239
        %v3241 = vpop.f32.mrf.mxu0
        %v3242 = vadd.f32 %v2473, %v3241
        %3243 = vmatprep.mubr.bf16.mxu0 0
        %3244 = vmatmul.mubr.bf16.gmra.mxu0 %v2364
        %v3245 = vpop.f32.mrf.mxu0
        %v3246 = vadd.f32 %v2469, %v3245
        %v3247 = vpop.f32.mrf.mxu0
        %v3248 = vadd.f32 %v2473, %v3247
        %v3249 = vpop.f32.mrf.mxu0
        %v3250 = vadd.f32 %v2469, %v3249
        %v3251 = vpop.f32.mrf.mxu0
        %v3252 = vadd.f32 %v2473, %v3251
        %3253 = vmatprep.mubr.bf16.mxu0 0
        %3254 = vmatmul.mubr.bf16.gmra.mxu0 %v2365
        %v3255 = vpop.f32.mrf.mxu0
        %v3256 = vadd.f32 %v2469, %v3255
        %v3257 = vpop.f32.mrf.mxu0
        %v3258 = vadd.f32 %v2473, %v3257
        %v3259 = vpop.f32.mrf.mxu0
        %v3260 = vadd.f32 %v2469, %v3259
        %v3261 = vpop.f32.mrf.mxu0
        %v3262 = vadd.f32 %v2473, %v3261
        %3263 = vmatprep.mubr.bf16.mxu0 0
        %3264 = vmatmul.mubr.bf16.gmra.mxu0 %v2366
        %v3265 = vpop.f32.mrf.mxu0
        %v3266 = vadd.f32 %v2469, %v3265
        %v3267 = vpop.f32.mrf.mxu0
        %v3268 = vadd.f32 %v2473, %v3267
        %v3269 = vpop.f32.mrf.mxu0
        %v3270 = vadd.f32 %v2469, %v3269
        %v3271 = vpop.f32.mrf.mxu0
        %v3272 = vadd.f32 %v2473, %v3271
        %3273 = vmatprep.mubr.bf16.mxu0 0
        %3274 = vmatmul.mubr.bf16.gmra.mxu0 %v2367
        %v3275 = vpop.f32.mrf.mxu0
        %v3276 = vadd.f32 %v2469, %v3275
        %v3277 = vpop.f32.mrf.mxu0
        %v3278 = vadd.f32 %v2473, %v3277
        %v3279 = vpop.f32.mrf.mxu0
        %v3280 = vadd.f32 %v2469, %v3279
        %v3281 = vpop.f32.mrf.mxu0
        %v3282 = vadd.f32 %v2473, %v3281
        %3283 = vmatprep.mubr.bf16.mxu0 0
        %3284 = vmatmul.mubr.bf16.gmra.mxu0 %v2368
        %v3285 = vpop.f32.mrf.mxu0
        %v3286 = vadd.f32 %v2469, %v3285
        %v3287 = vpop.f32.mrf.mxu0
        %v3288 = vadd.f32 %v2473, %v3287
        %v3289 = vpop.f32.mrf.mxu0
        %v3290 = vadd.f32 %v2469, %v3289
        %v3291 = vpop.f32.mrf.mxu0
        %v3292 = vadd.f32 %v2473, %v3291
        %3293 = vmatprep.mubr.bf16.mxu0 0
        %3294 = vmatmul.mubr.bf16.gmra.mxu0 %v2369
        %v3295 = vpop.f32.mrf.mxu0
        %v3296 = vadd.f32 %v2469, %v3295
        %v3297 = vpop.f32.mrf.mxu0
        %v3298 = vadd.f32 %v2473, %v3297
        %v3299 = vpop.f32.mrf.mxu0
        %v3300 = vadd.f32 %v2469, %v3299
        %v3301 = vpop.f32.mrf.mxu0
        %v3302 = vadd.f32 %v2473, %v3301
        %3303 = vmatprep.mubr.bf16.mxu0 0
        %3304 = vmatmul.mubr.bf16.gmra.mxu0 %v2370
        %v3305 = vpop.f32.mrf.mxu0
        %v3306 = vadd.f32 %v2469, %v3305
        %v3307 = vpop.f32.mrf.mxu0
        %v3308 = vadd.f32 %v2473, %v3307
        %v3309 = vpop.f32.mrf.mxu0
        %v3310 = vadd.f32 %v2469, %v3309
        %v3311 = vpop.f32.mrf.mxu0
        %v3312 = vadd.f32 %v2473, %v3311
        %3313 = vmatprep.mubr.bf16.mxu0 0
        %3314 = vmatmul.mubr.bf16.gmra.mxu0 %v2371
        %v3315 = vpop.f32.mrf.mxu0
        %v3316 = vadd.f32 %v2469, %v3315
        %v3317 = vpop.f32.mrf.mxu0
        %v3318 = vadd.f32 %v2473, %v3317
        %v3319 = vpop.f32.mrf.mxu0
        %v3320 = vadd.f32 %v2469, %v3319
        %v3321 = vpop.f32.mrf.mxu0
        %v3322 = vadd.f32 %v2473, %v3321
        %3323 = vmatprep.mubr.bf16.mxu0 0
        %3324 = vmatmul.mubr.bf16.gmra.mxu0 %v2372
        %v3325 = vpop.f32.mrf.mxu0
        %v3326 = vadd.f32 %v2469, %v3325
        %v3327 = vpop.f32.mrf.mxu0
        %v3328 = vadd.f32 %v2473, %v3327
        %v3329 = vpop.f32.mrf.mxu0
        %v3330 = vadd.f32 %v2469, %v3329
        %v3331 = vpop.f32.mrf.mxu0
        %v3332 = vadd.f32 %v2473, %v3331
        %3333 = vmatprep.mubr.bf16.mxu0 0
        %3334 = vmatmul.mubr.bf16.gmra.mxu0 %v2373
        %v3335 = vpop.f32.mrf.mxu0
        %v3336 = vadd.f32 %v2469, %v3335
        %v3337 = vpop.f32.mrf.mxu0
        %v3338 = vadd.f32 %v2473, %v3337
        %v3339 = vpop.f32.mrf.mxu0
        %v3340 = vadd.f32 %v2469, %v3339
        %v3341 = vpop.f32.mrf.mxu0
        %v3342 = vadd.f32 %v2473, %v3341
        %3343 = vmatprep.mubr.bf16.mxu0 0
        %3344 = vmatmul.mubr.bf16.gmra.mxu0 %v2374
        %v3345 = vpop.f32.mrf.mxu0
        %v3346 = vadd.f32 %v2469, %v3345
        %v3347 = vpop.f32.mrf.mxu0
        %v3348 = vadd.f32 %v2473, %v3347
        %v3349 = vpop.f32.mrf.mxu0
        %v3350 = vadd.f32 %v2469, %v3349
        %v3351 = vpop.f32.mrf.mxu0
        %v3352 = vadd.f32 %v2473, %v3351
        %3353 = vmatprep.mubr.bf16.mxu0 0
        %3354 = vmatmul.mubr.bf16.gmra.mxu0 %v2375
        %v3355 = vpop.f32.mrf.mxu0
        %v3356 = vadd.f32 %v2469, %v3355
        %v3357 = vpop.f32.mrf.mxu0
        %v3358 = vadd.f32 %v2473, %v3357
        %v3359 = vpop.f32.mrf.mxu0
        %v3360 = vadd.f32 %v2469, %v3359
        %v3361 = vpop.f32.mrf.mxu0
        %v3362 = vadd.f32 %v2473, %v3361
        %3363 = vmatprep.mubr.bf16.mxu0 0
        %3364 = vmatmul.mubr.bf16.gmra.mxu0 %v2376
        %v3365 = vpop.f32.mrf.mxu0
        %v3366 = vadd.f32 %v2469, %v3365
        %v3367 = vpop.f32.mrf.mxu0
        %v3368 = vadd.f32 %v2473, %v3367
        %v3369 = vpop.f32.mrf.mxu0
        %v3370 = vadd.f32 %v2469, %v3369
        %v3371 = vpop.f32.mrf.mxu0
        %v3372 = vadd.f32 %v2473, %v3371
        %3373 = vmatprep.mubr.bf16.mxu0 0
        %3374 = vmatmul.mubr.bf16.gmra.mxu0 %v2377
        %v3375 = vpop.f32.mrf.mxu0
        %v3376 = vadd.f32 %v2469, %v3375
        %v3377 = vpop.f32.mrf.mxu0
        %v3378 = vadd.f32 %v2473, %v3377
        %v3379 = vpop.f32.mrf.mxu0
        %v3380 = vadd.f32 %v2469, %v3379
        %v3381 = vpop.f32.mrf.mxu0
        %v3382 = vadd.f32 %v2473, %v3381
        %3383 = vmatprep.mubr.bf16.mxu0 0
        %3384 = vmatmul.mubr.bf16.gmra.mxu0 %v2378
        %v3385 = vpop.f32.mrf.mxu0
        %v3386 = vadd.f32 %v2469, %v3385
        %v3387 = vpop.f32.mrf.mxu0
        %v3388 = vadd.f32 %v2473, %v3387
        %v3389 = vpop.f32.mrf.mxu0
        %v3390 = vadd.f32 %v2469, %v3389
        %v3391 = vpop.f32.mrf.mxu0
        %v3392 = vadd.f32 %v2473, %v3391
        %3393 = vmatprep.mubr.bf16.mxu0 0
        %3394 = vmatmul.mubr.bf16.gmra.mxu0 %v2379
        %v3395 = vpop.f32.mrf.mxu0
        %v3396 = vadd.f32 %v2469, %v3395
        %v3397 = vpop.f32.mrf.mxu0
        %v3398 = vadd.f32 %v2473, %v3397
        %v3399 = vpop.f32.mrf.mxu0
        %v3400 = vadd.f32 %v2469, %v3399
        %v3401 = vpop.f32.mrf.mxu0
        %v3402 = vadd.f32 %v2473, %v3401
        %3403 = vmatprep.mubr.bf16.mxu0 0
        %3404 = vmatmul.mubr.bf16.gmra.mxu0 %v2380
        %v3405 = vpop.f32.mrf.mxu0
        %v3406 = vadd.f32 %v2469, %v3405
        %v3407 = vpop.f32.mrf.mxu0
        %v3408 = vadd.f32 %v2473, %v3407
        %v3409 = vpop.f32.mrf.mxu0
        %v3410 = vadd.f32 %v2469, %v3409
        %v3411 = vpop.f32.mrf.mxu0
        %v3412 = vadd.f32 %v2473, %v3411
        %3413 = vmatprep.mubr.bf16.mxu0 0
        %3414 = vmatmul.mubr.bf16.gmra.mxu0 %v2381
        %v3415 = vpop.f32.mrf.mxu0
        %v3416 = vadd.f32 %v2469, %v3415
        %v3417 = vpop.f32.mrf.mxu0
        %v3418 = vadd.f32 %v2473, %v3417
        %v3419 = vpop.f32.mrf.mxu0
        %v3420 = vadd.f32 %v2469, %v3419
        %v3421 = vpop.f32.mrf.mxu0
        %v3422 = vadd.f32 %v2473, %v3421
        %3423 = vmatprep.mubr.bf16.mxu0 0
        %3424 = vmatmul.mubr.bf16.gmra.mxu0 %v2382
        %v3425 = vpop.f32.mrf.mxu0
        %v3426 = vadd.f32 %v2469, %v3425
        %v3427 = vpop.f32.mrf.mxu0
        %v3428 = vadd.f32 %v2473, %v3427
        %v3429 = vpop.f32.mrf.mxu0
        %v3430 = vadd.f32 %v2469, %v3429
        %v3431 = vpop.f32.mrf.mxu0
        %v3432 = vadd.f32 %v2473, %v3431
        %3433 = vmatprep.mubr.bf16.mxu0 0
        %3434 = vmatmul.mubr.bf16.gmra.mxu0 %v2383
        %v3435 = vpop.f32.mrf.mxu0
        %v3436 = vadd.f32 %v2469, %v3435
        %v3437 = vpop.f32.mrf.mxu0
        %v3438 = vadd.f32 %v2473, %v3437
        %v3439 = vpop.f32.mrf.mxu0
        %v3440 = vadd.f32 %v2469, %v3439
        %v3441 = vpop.f32.mrf.mxu0
        %v3442 = vadd.f32 %v2473, %v3441
        %3443 = vmatprep.mubr.bf16.mxu0 0
        %3444 = vmatmul.mubr.bf16.gmra.mxu0 %v2384
        %v3445 = vpop.f32.mrf.mxu0
        %v3446 = vadd.f32 %v2469, %v3445
        %v3447 = vpop.f32.mrf.mxu0
        %v3448 = vadd.f32 %v2473, %v3447
        %v3449 = vpop.f32.mrf.mxu0
        %v3450 = vadd.f32 %v2469, %v3449
        %v3451 = vpop.f32.mrf.mxu0
        %v3452 = vadd.f32 %v2473, %v3451
        %3453 = vmatprep.mubr.bf16.mxu0 0
        %3454 = vmatmul.mubr.bf16.gmra.mxu0 %v2385
        %v3455 = vpop.f32.mrf.mxu0
        %v3456 = vadd.f32 %v2469, %v3455
        %v3457 = vpop.f32.mrf.mxu0
        %v3458 = vadd.f32 %v2473, %v3457
        %v3459 = vpop.f32.mrf.mxu0
        %v3460 = vadd.f32 %v2469, %v3459
        %v3461 = vpop.f32.mrf.mxu0
        %v3462 = vadd.f32 %v2473, %v3461
        %3463 = vmatprep.mubr.bf16.mxu0 0
        %3464 = vmatmul.mubr.bf16.gmra.mxu0 %v2386
        %v3465 = vpop.f32.mrf.mxu0
        %v3466 = vadd.f32 %v2469, %v3465
        %v3467 = vpop.f32.mrf.mxu0
        %v3468 = vadd.f32 %v2473, %v3467
        %v3469 = vpop.f32.mrf.mxu0
        %v3470 = vadd.f32 %v2469, %v3469
        %v3471 = vpop.f32.mrf.mxu0
        %v3472 = vadd.f32 %v2473, %v3471
        %3473 = vmatprep.mubr.bf16.mxu0 0
        %3474 = vmatmul.mubr.bf16.gmra.mxu0 %v2387
        %v3475 = vpop.f32.mrf.mxu0
        %v3476 = vadd.f32 %v2469, %v3475
        %v3477 = vpop.f32.mrf.mxu0
        %v3478 = vadd.f32 %v2473, %v3477
        %v3479 = vpop.f32.mrf.mxu0
        %v3480 = vadd.f32 %v2469, %v3479
        %v3481 = vpop.f32.mrf.mxu0
        %v3482 = vadd.f32 %v2473, %v3481
        %3483 = vmatprep.mubr.bf16.mxu0 0
        %3484 = vmatmul.mubr.bf16.gmra.mxu0 %v2388
        %v3485 = vpop.f32.mrf.mxu0
        %v3486 = vadd.f32 %v2469, %v3485
        %v3487 = vpop.f32.mrf.mxu0
        %v3488 = vadd.f32 %v2473, %v3487
        %v3489 = vpop.f32.mrf.mxu0
        %v3490 = vadd.f32 %v2469, %v3489
        %v3491 = vpop.f32.mrf.mxu0
        %v3492 = vadd.f32 %v2473, %v3491
        %3493 = vmatprep.mubr.bf16.mxu0 0
        %3494 = vmatmul.mubr.bf16.gmra.mxu0 %v2389
        %v3495 = vpop.f32.mrf.mxu0
        %v3496 = vadd.f32 %v2469, %v3495
        %v3497 = vpop.f32.mrf.mxu0
        %v3498 = vadd.f32 %v2473, %v3497
        %v3499 = vpop.f32.mrf.mxu0
        %v3500 = vadd.f32 %v2469, %v3499
        %v3501 = vpop.f32.mrf.mxu0
        %v3502 = vadd.f32 %v2473, %v3501
        %3503 = vmatprep.mubr.bf16.mxu0 0
        %3504 = vmatmul.mubr.bf16.gmra.mxu0 %v2390
        %v3505 = vpop.f32.mrf.mxu0
        %v3506 = vadd.f32 %v2469, %v3505
        %v3507 = vpop.f32.mrf.mxu0
        %v3508 = vadd.f32 %v2473, %v3507
        %v3509 = vpop.f32.mrf.mxu0
        %v3510 = vadd.f32 %v2469, %v3509
        %v3511 = vpop.f32.mrf.mxu0
        %v3512 = vadd.f32 %v2473, %v3511
        %3513 = vmatprep.mubr.bf16.mxu0 0
        %3514 = vmatmul.mubr.bf16.gmra.mxu0 %v2391
        %v3515 = vpop.f32.mrf.mxu0
        %v3516 = vadd.f32 %v2469, %v3515
        %v3517 = vpop.f32.mrf.mxu0
        %v3518 = vadd.f32 %v2473, %v3517
        %v3519 = vpop.f32.mrf.mxu0
        %v3520 = vadd.f32 %v2469, %v3519
        %v3521 = vpop.f32.mrf.mxu0
        %v3522 = vadd.f32 %v2473, %v3521
        %3523 = vdwg.mxu0
        %3524 = vmatprep.subr.bf16.mxu0 %v2751
        %3525 = vmatpush1.bf16.msra.mxu0 %v2750
        %3526 = vmatprep.subr.bf16.mxu0 %v2743
        %3527 = vmatpush1.bf16.msra.mxu0 %v2742
        %3528 = vmatprep.subr.bf16.mxu0 %v2735
        %3529 = vmatpush1.bf16.msra.mxu0 %v2734
        %3530 = vmatprep.subr.bf16.mxu0 %v2727
        %3531 = vmatpush1.bf16.msra.mxu0 %v2726
        %3532 = vmatprep.subr.bf16.mxu0 %v2719
        %3533 = vmatpush1.bf16.msra.mxu0 %v2718
        %3534 = vmatprep.subr.bf16.mxu0 %v2711
        %3535 = vmatpush1.bf16.msra.mxu0 %v2710
        %3536 = vmatprep.subr.bf16.mxu0 %v2703
        %3537 = vmatpush1.bf16.msra.mxu0 %v2702
        %3538 = vmatprep.subr.bf16.mxu0 %v2695
        %3539 = vmatpush1.bf16.msra.mxu0 %v2694
        %3540 = vmatprep.subr.bf16.mxu0 0
        %3541 = vmatpush2.bf16.msra.mxu0 0
        %3542 = vmatprep.subr.bf16.mxu0 0
        %3543 = vmatpush2.bf16.msra.mxu0 0
        %3544 = vmatprep.subr.bf16.mxu0 0
        %3545 = vmatpush2.bf16.msra.mxu0 0
        %3546 = vmatprep.subr.bf16.mxu0 0
        %3547 = vmatpush2.bf16.msra.mxu0 0
        %3548 = vmatprep.subr.bf16.mxu0 0
        %3549 = vmatpush2.bf16.msra.mxu0 0
        %3550 = vmatprep.subr.bf16.mxu0 0
        %3551 = vmatpush2.bf16.msra.mxu0 0
        %3552 = vmatprep.subr.bf16.mxu0 0
        %3553 = vmatpush2.bf16.msra.mxu0 0
        %3554 = vmatprep.subr.bf16.mxu0 0
        %3555 = vmatpush2.bf16.msra.mxu0 0
        %3556 = vmatprep.mubr.bf16.mxu0 0
        %3557 = vmatmul.mubr.bf16.gmra.mxu0 %v2360
        %v3558 = vpop.f32.mrf.mxu0
        %v3559 = vadd.f32 %v2477, %v3558
        %v3560 = vpop.f32.mrf.mxu0
        %v3561 = vadd.f32 %v2481, %v3560
        %v3562 = vpop.f32.mrf.mxu0
        %v3563 = vadd.f32 %v2477, %v3562
        %v3564 = vpop.f32.mrf.mxu0
        %v3565 = vadd.f32 %v2481, %v3564
        %3566 = vmatprep.mubr.bf16.mxu0 0
        %3567 = vmatmul.mubr.bf16.gmra.mxu0 %v2361
        %v3568 = vpop.f32.mrf.mxu0
        %v3569 = vadd.f32 %v2477, %v3568
        %v3570 = vpop.f32.mrf.mxu0
        %v3571 = vadd.f32 %v2481, %v3570
        %v3572 = vpop.f32.mrf.mxu0
        %v3573 = vadd.f32 %v2477, %v3572
        %v3574 = vpop.f32.mrf.mxu0
        %v3575 = vadd.f32 %v2481, %v3574
        %3576 = vmatprep.mubr.bf16.mxu0 0
        %3577 = vmatmul.mubr.bf16.gmra.mxu0 %v2362
        %v3578 = vpop.f32.mrf.mxu0
        %v3579 = vadd.f32 %v2477, %v3578
        %v3580 = vpop.f32.mrf.mxu0
        %v3581 = vadd.f32 %v2481, %v3580
        %v3582 = vpop.f32.mrf.mxu0
        %v3583 = vadd.f32 %v2477, %v3582
        %v3584 = vpop.f32.mrf.mxu0
        %v3585 = vadd.f32 %v2481, %v3584
        %3586 = vmatprep.mubr.bf16.mxu0 0
        %3587 = vmatmul.mubr.bf16.gmra.mxu0 %v2363
        %v3588 = vpop.f32.mrf.mxu0
        %v3589 = vadd.f32 %v2477, %v3588
        %v3590 = vpop.f32.mrf.mxu0
        %v3591 = vadd.f32 %v2481, %v3590
        %v3592 = vpop.f32.mrf.mxu0
        %v3593 = vadd.f32 %v2477, %v3592
        %v3594 = vpop.f32.mrf.mxu0
        %v3595 = vadd.f32 %v2481, %v3594
        %3596 = vmatprep.mubr.bf16.mxu0 0
        %3597 = vmatmul.mubr.bf16.gmra.mxu0 %v2364
        %v3598 = vpop.f32.mrf.mxu0
        %v3599 = vadd.f32 %v2477, %v3598
        %v3600 = vpop.f32.mrf.mxu0
        %v3601 = vadd.f32 %v2481, %v3600
        %v3602 = vpop.f32.mrf.mxu0
        %v3603 = vadd.f32 %v2477, %v3602
        %v3604 = vpop.f32.mrf.mxu0
        %v3605 = vadd.f32 %v2481, %v3604
        %3606 = vmatprep.mubr.bf16.mxu0 0
        %3607 = vmatmul.mubr.bf16.gmra.mxu0 %v2365
        %v3608 = vpop.f32.mrf.mxu0
        %v3609 = vadd.f32 %v2477, %v3608
        %v3610 = vpop.f32.mrf.mxu0
        %v3611 = vadd.f32 %v2481, %v3610
        %v3612 = vpop.f32.mrf.mxu0
        %v3613 = vadd.f32 %v2477, %v3612
        %v3614 = vpop.f32.mrf.mxu0
        %v3615 = vadd.f32 %v2481, %v3614
        %3616 = vmatprep.mubr.bf16.mxu0 0
        %3617 = vmatmul.mubr.bf16.gmra.mxu0 %v2366
        %v3618 = vpop.f32.mrf.mxu0
        %v3619 = vadd.f32 %v2477, %v3618
        %v3620 = vpop.f32.mrf.mxu0
        %v3621 = vadd.f32 %v2481, %v3620
        %v3622 = vpop.f32.mrf.mxu0
        %v3623 = vadd.f32 %v2477, %v3622
        %v3624 = vpop.f32.mrf.mxu0
        %v3625 = vadd.f32 %v2481, %v3624
        %3626 = vmatprep.mubr.bf16.mxu0 0
        %3627 = vmatmul.mubr.bf16.gmra.mxu0 %v2367
        %v3628 = vpop.f32.mrf.mxu0
        %v3629 = vadd.f32 %v2477, %v3628
        %v3630 = vpop.f32.mrf.mxu0
        %v3631 = vadd.f32 %v2481, %v3630
        %v3632 = vpop.f32.mrf.mxu0
        %v3633 = vadd.f32 %v2477, %v3632
        %v3634 = vpop.f32.mrf.mxu0
        %v3635 = vadd.f32 %v2481, %v3634
        %3636 = vmatprep.mubr.bf16.mxu0 0
        %3637 = vmatmul.mubr.bf16.gmra.mxu0 %v2368
        %v3638 = vpop.f32.mrf.mxu0
        %v3639 = vadd.f32 %v2477, %v3638
        %v3640 = vpop.f32.mrf.mxu0
        %v3641 = vadd.f32 %v2481, %v3640
        %v3642 = vpop.f32.mrf.mxu0
        %v3643 = vadd.f32 %v2477, %v3642
        %v3644 = vpop.f32.mrf.mxu0
        %v3645 = vadd.f32 %v2481, %v3644
        %3646 = vmatprep.mubr.bf16.mxu0 0
        %3647 = vmatmul.mubr.bf16.gmra.mxu0 %v2369
        %v3648 = vpop.f32.mrf.mxu0
        %v3649 = vadd.f32 %v2477, %v3648
        %v3650 = vpop.f32.mrf.mxu0
        %v3651 = vadd.f32 %v2481, %v3650
        %v3652 = vpop.f32.mrf.mxu0
        %v3653 = vadd.f32 %v2477, %v3652
        %v3654 = vpop.f32.mrf.mxu0
        %v3655 = vadd.f32 %v2481, %v3654
        %3656 = vmatprep.mubr.bf16.mxu0 0
        %3657 = vmatmul.mubr.bf16.gmra.mxu0 %v2370
        %v3658 = vpop.f32.mrf.mxu0
        %v3659 = vadd.f32 %v2477, %v3658
        %v3660 = vpop.f32.mrf.mxu0
        %v3661 = vadd.f32 %v2481, %v3660
        %v3662 = vpop.f32.mrf.mxu0
        %v3663 = vadd.f32 %v2477, %v3662
        %v3664 = vpop.f32.mrf.mxu0
        %v3665 = vadd.f32 %v2481, %v3664
        %3666 = vmatprep.mubr.bf16.mxu0 0
        %3667 = vmatmul.mubr.bf16.gmra.mxu0 %v2371
        %v3668 = vpop.f32.mrf.mxu0
        %v3669 = vadd.f32 %v2477, %v3668
        %v3670 = vpop.f32.mrf.mxu0
        %v3671 = vadd.f32 %v2481, %v3670
        %v3672 = vpop.f32.mrf.mxu0
        %v3673 = vadd.f32 %v2477, %v3672
        %v3674 = vpop.f32.mrf.mxu0
        %v3675 = vadd.f32 %v2481, %v3674
        %3676 = vmatprep.mubr.bf16.mxu0 0
        %3677 = vmatmul.mubr.bf16.gmra.mxu0 %v2372
        %v3678 = vpop.f32.mrf.mxu0
        %v3679 = vadd.f32 %v2477, %v3678
        %v3680 = vpop.f32.mrf.mxu0
        %v3681 = vadd.f32 %v2481, %v3680
        %v3682 = vpop.f32.mrf.mxu0
        %v3683 = vadd.f32 %v2477, %v3682
        %v3684 = vpop.f32.mrf.mxu0
        %v3685 = vadd.f32 %v2481, %v3684
        %3686 = vmatprep.mubr.bf16.mxu0 0
        %3687 = vmatmul.mubr.bf16.gmra.mxu0 %v2373
        %v3688 = vpop.f32.mrf.mxu0
        %v3689 = vadd.f32 %v2477, %v3688
        %v3690 = vpop.f32.mrf.mxu0
        %v3691 = vadd.f32 %v2481, %v3690
        %v3692 = vpop.f32.mrf.mxu0
        %v3693 = vadd.f32 %v2477, %v3692
        %v3694 = vpop.f32.mrf.mxu0
        %v3695 = vadd.f32 %v2481, %v3694
        %3696 = vmatprep.mubr.bf16.mxu0 0
        %3697 = vmatmul.mubr.bf16.gmra.mxu0 %v2374
        %v3698 = vpop.f32.mrf.mxu0
        %v3699 = vadd.f32 %v2477, %v3698
        %v3700 = vpop.f32.mrf.mxu0
        %v3701 = vadd.f32 %v2481, %v3700
        %v3702 = vpop.f32.mrf.mxu0
        %v3703 = vadd.f32 %v2477, %v3702
        %v3704 = vpop.f32.mrf.mxu0
        %v3705 = vadd.f32 %v2481, %v3704
        %3706 = vmatprep.mubr.bf16.mxu0 0
        %3707 = vmatmul.mubr.bf16.gmra.mxu0 %v2375
        %v3708 = vpop.f32.mrf.mxu0
        %v3709 = vadd.f32 %v2477, %v3708
        %v3710 = vpop.f32.mrf.mxu0
        %v3711 = vadd.f32 %v2481, %v3710
        %v3712 = vpop.f32.mrf.mxu0
        %v3713 = vadd.f32 %v2477, %v3712
        %v3714 = vpop.f32.mrf.mxu0
        %v3715 = vadd.f32 %v2481, %v3714
        %3716 = vmatprep.mubr.bf16.mxu0 0
        %3717 = vmatmul.mubr.bf16.gmra.mxu0 %v2376
        %v3718 = vpop.f32.mrf.mxu0
        %v3719 = vadd.f32 %v2477, %v3718
        %v3720 = vpop.f32.mrf.mxu0
        %v3721 = vadd.f32 %v2481, %v3720
        %v3722 = vpop.f32.mrf.mxu0
        %v3723 = vadd.f32 %v2477, %v3722
        %v3724 = vpop.f32.mrf.mxu0
        %v3725 = vadd.f32 %v2481, %v3724
        %3726 = vmatprep.mubr.bf16.mxu0 0
        %3727 = vmatmul.mubr.bf16.gmra.mxu0 %v2377
        %v3728 = vpop.f32.mrf.mxu0
        %v3729 = vadd.f32 %v2477, %v3728
        %v3730 = vpop.f32.mrf.mxu0
        %v3731 = vadd.f32 %v2481, %v3730
        %v3732 = vpop.f32.mrf.mxu0
        %v3733 = vadd.f32 %v2477, %v3732
        %v3734 = vpop.f32.mrf.mxu0
        %v3735 = vadd.f32 %v2481, %v3734
        %3736 = vmatprep.mubr.bf16.mxu0 0
        %3737 = vmatmul.mubr.bf16.gmra.mxu0 %v2378
        %v3738 = vpop.f32.mrf.mxu0
        %v3739 = vadd.f32 %v2477, %v3738
        %v3740 = vpop.f32.mrf.mxu0
        %v3741 = vadd.f32 %v2481, %v3740
        %v3742 = vpop.f32.mrf.mxu0
        %v3743 = vadd.f32 %v2477, %v3742
        %v3744 = vpop.f32.mrf.mxu0
        %v3745 = vadd.f32 %v2481, %v3744
        %3746 = vmatprep.mubr.bf16.mxu0 0
        %3747 = vmatmul.mubr.bf16.gmra.mxu0 %v2379
        %v3748 = vpop.f32.mrf.mxu0
        %v3749 = vadd.f32 %v2477, %v3748
        %v3750 = vpop.f32.mrf.mxu0
        %v3751 = vadd.f32 %v2481, %v3750
        %v3752 = vpop.f32.mrf.mxu0
        %v3753 = vadd.f32 %v2477, %v3752
        %v3754 = vpop.f32.mrf.mxu0
        %v3755 = vadd.f32 %v2481, %v3754
        %3756 = vmatprep.mubr.bf16.mxu0 0
        %3757 = vmatmul.mubr.bf16.gmra.mxu0 %v2380
        %v3758 = vpop.f32.mrf.mxu0
        %v3759 = vadd.f32 %v2477, %v3758
        %v3760 = vpop.f32.mrf.mxu0
        %v3761 = vadd.f32 %v2481, %v3760
        %v3762 = vpop.f32.mrf.mxu0
        %v3763 = vadd.f32 %v2477, %v3762
        %v3764 = vpop.f32.mrf.mxu0
        %v3765 = vadd.f32 %v2481, %v3764
        %3766 = vmatprep.mubr.bf16.mxu0 0
        %3767 = vmatmul.mubr.bf16.gmra.mxu0 %v2381
        %v3768 = vpop.f32.mrf.mxu0
        %v3769 = vadd.f32 %v2477, %v3768
        %v3770 = vpop.f32.mrf.mxu0
        %v3771 = vadd.f32 %v2481, %v3770
        %v3772 = vpop.f32.mrf.mxu0
        %v3773 = vadd.f32 %v2477, %v3772
        %v3774 = vpop.f32.mrf.mxu0
        %v3775 = vadd.f32 %v2481, %v3774
        %3776 = vmatprep.mubr.bf16.mxu0 0
        %3777 = vmatmul.mubr.bf16.gmra.mxu0 %v2382
        %v3778 = vpop.f32.mrf.mxu0
        %v3779 = vadd.f32 %v2477, %v3778
        %v3780 = vpop.f32.mrf.mxu0
        %v3781 = vadd.f32 %v2481, %v3780
        %v3782 = vpop.f32.mrf.mxu0
        %v3783 = vadd.f32 %v2477, %v3782
        %v3784 = vpop.f32.mrf.mxu0
        %v3785 = vadd.f32 %v2481, %v3784
        %3786 = vmatprep.mubr.bf16.mxu0 0
        %3787 = vmatmul.mubr.bf16.gmra.mxu0 %v2383
        %v3788 = vpop.f32.mrf.mxu0
        %v3789 = vadd.f32 %v2477, %v3788
        %v3790 = vpop.f32.mrf.mxu0
        %v3791 = vadd.f32 %v2481, %v3790
        %v3792 = vpop.f32.mrf.mxu0
        %v3793 = vadd.f32 %v2477, %v3792
        %v3794 = vpop.f32.mrf.mxu0
        %v3795 = vadd.f32 %v2481, %v3794
        %3796 = vmatprep.mubr.bf16.mxu0 0
        %3797 = vmatmul.mubr.bf16.gmra.mxu0 %v2384
        %v3798 = vpop.f32.mrf.mxu0
        %v3799 = vadd.f32 %v2477, %v3798
        %v3800 = vpop.f32.mrf.mxu0
        %v3801 = vadd.f32 %v2481, %v3800
        %v3802 = vpop.f32.mrf.mxu0
        %v3803 = vadd.f32 %v2477, %v3802
        %v3804 = vpop.f32.mrf.mxu0
        %v3805 = vadd.f32 %v2481, %v3804
        %3806 = vmatprep.mubr.bf16.mxu0 0
        %3807 = vmatmul.mubr.bf16.gmra.mxu0 %v2385
        %v3808 = vpop.f32.mrf.mxu0
        %v3809 = vadd.f32 %v2477, %v3808
        %v3810 = vpop.f32.mrf.mxu0
        %v3811 = vadd.f32 %v2481, %v3810
        %v3812 = vpop.f32.mrf.mxu0
        %v3813 = vadd.f32 %v2477, %v3812
        %v3814 = vpop.f32.mrf.mxu0
        %v3815 = vadd.f32 %v2481, %v3814
        %3816 = vmatprep.mubr.bf16.mxu0 0
        %3817 = vmatmul.mubr.bf16.gmra.mxu0 %v2386
        %v3818 = vpop.f32.mrf.mxu0
        %v3819 = vadd.f32 %v2477, %v3818
        %v3820 = vpop.f32.mrf.mxu0
        %v3821 = vadd.f32 %v2481, %v3820
        %v3822 = vpop.f32.mrf.mxu0
        %v3823 = vadd.f32 %v2477, %v3822
        %v3824 = vpop.f32.mrf.mxu0
        %v3825 = vadd.f32 %v2481, %v3824
        %3826 = vmatprep.mubr.bf16.mxu0 0
        %3827 = vmatmul.mubr.bf16.gmra.mxu0 %v2387
        %v3828 = vpop.f32.mrf.mxu0
        %v3829 = vadd.f32 %v2477, %v3828
        %v3830 = vpop.f32.mrf.mxu0
        %v3831 = vadd.f32 %v2481, %v3830
        %v3832 = vpop.f32.mrf.mxu0
        %v3833 = vadd.f32 %v2477, %v3832
        %v3834 = vpop.f32.mrf.mxu0
        %v3835 = vadd.f32 %v2481, %v3834
        %3836 = vmatprep.mubr.bf16.mxu0 0
        %3837 = vmatmul.mubr.bf16.gmra.mxu0 %v2388
        %v3838 = vpop.f32.mrf.mxu0
        %v3839 = vadd.f32 %v2477, %v3838
        %v3840 = vpop.f32.mrf.mxu0
        %v3841 = vadd.f32 %v2481, %v3840
        %v3842 = vpop.f32.mrf.mxu0
        %v3843 = vadd.f32 %v2477, %v3842
        %v3844 = vpop.f32.mrf.mxu0
        %v3845 = vadd.f32 %v2481, %v3844
        %3846 = vmatprep.mubr.bf16.mxu0 0
        %3847 = vmatmul.mubr.bf16.gmra.mxu0 %v2389
        %v3848 = vpop.f32.mrf.mxu0
        %v3849 = vadd.f32 %v2477, %v3848
        %v3850 = vpop.f32.mrf.mxu0
        %v3851 = vadd.f32 %v2481, %v3850
        %v3852 = vpop.f32.mrf.mxu0
        %v3853 = vadd.f32 %v2477, %v3852
        %v3854 = vpop.f32.mrf.mxu0
        %v3855 = vadd.f32 %v2481, %v3854
        %3856 = vmatprep.mubr.bf16.mxu0 0
        %3857 = vmatmul.mubr.bf16.gmra.mxu0 %v2390
        %v3858 = vpop.f32.mrf.mxu0
        %v3859 = vadd.f32 %v2477, %v3858
        %v3860 = vpop.f32.mrf.mxu0
        %v3861 = vadd.f32 %v2481, %v3860
        %v3862 = vpop.f32.mrf.mxu0
        %v3863 = vadd.f32 %v2477, %v3862
        %v3864 = vpop.f32.mrf.mxu0
        %v3865 = vadd.f32 %v2481, %v3864
        %3866 = vmatprep.mubr.bf16.mxu0 0
        %3867 = vmatmul.mubr.bf16.gmra.mxu0 %v2391
        %v3868 = vpop.f32.mrf.mxu0
        %v3869 = vadd.f32 %v2477, %v3868
        %v3870 = vpop.f32.mrf.mxu0
        %v3871 = vadd.f32 %v2481, %v3870
        %v3872 = vpop.f32.mrf.mxu0
        %v3873 = vadd.f32 %v2477, %v3872
        %v3874 = vpop.f32.mrf.mxu0
        %v3875 = vadd.f32 %v2481, %v3874
        %3876 = vdwg.mxu0
        %3877 = vmatprep.subr.bf16.mxu0 %v2753
        %3878 = vmatpush1.bf16.msra.mxu0 %v2752
        %3879 = vmatprep.subr.bf16.mxu0 %v2745
        %3880 = vmatpush1.bf16.msra.mxu0 %v2744
        %3881 = vmatprep.subr.bf16.mxu0 %v2737
        %3882 = vmatpush1.bf16.msra.mxu0 %v2736
        %3883 = vmatprep.subr.bf16.mxu0 %v2729
        %3884 = vmatpush1.bf16.msra.mxu0 %v2728
        %3885 = vmatprep.subr.bf16.mxu0 %v2721
        %3886 = vmatpush1.bf16.msra.mxu0 %v2720
        %3887 = vmatprep.subr.bf16.mxu0 %v2713
        %3888 = vmatpush1.bf16.msra.mxu0 %v2712
        %3889 = vmatprep.subr.bf16.mxu0 %v2705
        %3890 = vmatpush1.bf16.msra.mxu0 %v2704
        %3891 = vmatprep.subr.bf16.mxu0 %v2697
        %3892 = vmatpush1.bf16.msra.mxu0 %v2696
        %3893 = vmatprep.subr.bf16.mxu0 0
        %3894 = vmatpush2.bf16.msra.mxu0 0
        %3895 = vmatprep.subr.bf16.mxu0 0
        %3896 = vmatpush2.bf16.msra.mxu0 0
        %3897 = vmatprep.subr.bf16.mxu0 0
        %3898 = vmatpush2.bf16.msra.mxu0 0
        %3899 = vmatprep.subr.bf16.mxu0 0
        %3900 = vmatpush2.bf16.msra.mxu0 0
        %3901 = vmatprep.subr.bf16.mxu0 0
        %3902 = vmatpush2.bf16.msra.mxu0 0
        %3903 = vmatprep.subr.bf16.mxu0 0
        %3904 = vmatpush2.bf16.msra.mxu0 0
        %3905 = vmatprep.subr.bf16.mxu0 0
        %3906 = vmatpush2.bf16.msra.mxu0 0
        %3907 = vmatprep.subr.bf16.mxu0 0
        %3908 = vmatpush2.bf16.msra.mxu0 0
        %3909 = vmatprep.mubr.bf16.mxu0 0
        %3910 = vmatmul.mubr.bf16.gmra.mxu0 %v2360
        %v3911 = vpop.f32.mrf.mxu0
        %v3912 = vadd.f32 %v2485, %v3911
        %v3913 = vpop.f32.mrf.mxu0
        %v3914 = vadd.f32 %v2489, %v3913
        %v3915 = vpop.f32.mrf.mxu0
        %v3916 = vadd.f32 %v2485, %v3915
        %v3917 = vpop.f32.mrf.mxu0
        %v3918 = vadd.f32 %v2489, %v3917
        %3919 = vmatprep.mubr.bf16.mxu0 0
        %3920 = vmatmul.mubr.bf16.gmra.mxu0 %v2361
        %v3921 = vpop.f32.mrf.mxu0
        %v3922 = vadd.f32 %v2485, %v3921
        %v3923 = vpop.f32.mrf.mxu0
        %v3924 = vadd.f32 %v2489, %v3923
        %v3925 = vpop.f32.mrf.mxu0
        %v3926 = vadd.f32 %v2485, %v3925
        %v3927 = vpop.f32.mrf.mxu0
        %v3928 = vadd.f32 %v2489, %v3927
        %3929 = vmatprep.mubr.bf16.mxu0 0
        %3930 = vmatmul.mubr.bf16.gmra.mxu0 %v2362
        %v3931 = vpop.f32.mrf.mxu0
        %v3932 = vadd.f32 %v2485, %v3931
        %v3933 = vpop.f32.mrf.mxu0
        %v3934 = vadd.f32 %v2489, %v3933
        %v3935 = vpop.f32.mrf.mxu0
        %v3936 = vadd.f32 %v2485, %v3935
        %v3937 = vpop.f32.mrf.mxu0
        %v3938 = vadd.f32 %v2489, %v3937
        %3939 = vmatprep.mubr.bf16.mxu0 0
        %3940 = vmatmul.mubr.bf16.gmra.mxu0 %v2363
        %v3941 = vpop.f32.mrf.mxu0
        %v3942 = vadd.f32 %v2485, %v3941
        %v3943 = vpop.f32.mrf.mxu0
        %v3944 = vadd.f32 %v2489, %v3943
        %v3945 = vpop.f32.mrf.mxu0
        %v3946 = vadd.f32 %v2485, %v3945
        %v3947 = vpop.f32.mrf.mxu0
        %v3948 = vadd.f32 %v2489, %v3947
        %3949 = vmatprep.mubr.bf16.mxu0 0
        %3950 = vmatmul.mubr.bf16.gmra.mxu0 %v2364
        %v3951 = vpop.f32.mrf.mxu0
        %v3952 = vadd.f32 %v2485, %v3951
        %v3953 = vpop.f32.mrf.mxu0
        %v3954 = vadd.f32 %v2489, %v3953
        %v3955 = vpop.f32.mrf.mxu0
        %v3956 = vadd.f32 %v2485, %v3955
        %v3957 = vpop.f32.mrf.mxu0
        %v3958 = vadd.f32 %v2489, %v3957
        %3959 = vmatprep.mubr.bf16.mxu0 0
        %3960 = vmatmul.mubr.bf16.gmra.mxu0 %v2365
        %v3961 = vpop.f32.mrf.mxu0
        %v3962 = vadd.f32 %v2485, %v3961
        %v3963 = vpop.f32.mrf.mxu0
        %v3964 = vadd.f32 %v2489, %v3963
        %v3965 = vpop.f32.mrf.mxu0
        %v3966 = vadd.f32 %v2485, %v3965
        %v3967 = vpop.f32.mrf.mxu0
        %v3968 = vadd.f32 %v2489, %v3967
        %3969 = vmatprep.mubr.bf16.mxu0 0
        %3970 = vmatmul.mubr.bf16.gmra.mxu0 %v2366
        %v3971 = vpop.f32.mrf.mxu0
        %v3972 = vadd.f32 %v2485, %v3971
        %v3973 = vpop.f32.mrf.mxu0
        %v3974 = vadd.f32 %v2489, %v3973
        %v3975 = vpop.f32.mrf.mxu0
        %v3976 = vadd.f32 %v2485, %v3975
        %v3977 = vpop.f32.mrf.mxu0
        %v3978 = vadd.f32 %v2489, %v3977
        %3979 = vmatprep.mubr.bf16.mxu0 0
        %3980 = vmatmul.mubr.bf16.gmra.mxu0 %v2367
        %v3981 = vpop.f32.mrf.mxu0
        %v3982 = vadd.f32 %v2485, %v3981
        %v3983 = vpop.f32.mrf.mxu0
        %v3984 = vadd.f32 %v2489, %v3983
        %v3985 = vpop.f32.mrf.mxu0
        %v3986 = vadd.f32 %v2485, %v3985
        %v3987 = vpop.f32.mrf.mxu0
        %v3988 = vadd.f32 %v2489, %v3987
        %3989 = vmatprep.mubr.bf16.mxu0 0
        %3990 = vmatmul.mubr.bf16.gmra.mxu0 %v2368
        %v3991 = vpop.f32.mrf.mxu0
        %v3992 = vadd.f32 %v2485, %v3991
        %v3993 = vpop.f32.mrf.mxu0
        %v3994 = vadd.f32 %v2489, %v3993
        %v3995 = vpop.f32.mrf.mxu0
        %v3996 = vadd.f32 %v2485, %v3995
        %v3997 = vpop.f32.mrf.mxu0
        %v3998 = vadd.f32 %v2489, %v3997
        %3999 = vmatprep.mubr.bf16.mxu0 0
        %4000 = vmatmul.mubr.bf16.gmra.mxu0 %v2369
        %v4001 = vpop.f32.mrf.mxu0
        %v4002 = vadd.f32 %v2485, %v4001
        %v4003 = vpop.f32.mrf.mxu0
        %v4004 = vadd.f32 %v2489, %v4003
        %v4005 = vpop.f32.mrf.mxu0
        %v4006 = vadd.f32 %v2485, %v4005
        %v4007 = vpop.f32.mrf.mxu0
        %v4008 = vadd.f32 %v2489, %v4007
        %4009 = vmatprep.mubr.bf16.mxu0 0
        %4010 = vmatmul.mubr.bf16.gmra.mxu0 %v2370
        %v4011 = vpop.f32.mrf.mxu0
        %v4012 = vadd.f32 %v2485, %v4011
        %v4013 = vpop.f32.mrf.mxu0
        %v4014 = vadd.f32 %v2489, %v4013
        %v4015 = vpop.f32.mrf.mxu0
        %v4016 = vadd.f32 %v2485, %v4015
        %v4017 = vpop.f32.mrf.mxu0
        %v4018 = vadd.f32 %v2489, %v4017
        %4019 = vmatprep.mubr.bf16.mxu0 0
        %4020 = vmatmul.mubr.bf16.gmra.mxu0 %v2371
        %v4021 = vpop.f32.mrf.mxu0
        %v4022 = vadd.f32 %v2485, %v4021
        %v4023 = vpop.f32.mrf.mxu0
        %v4024 = vadd.f32 %v2489, %v4023
        %v4025 = vpop.f32.mrf.mxu0
        %v4026 = vadd.f32 %v2485, %v4025
        %v4027 = vpop.f32.mrf.mxu0
        %v4028 = vadd.f32 %v2489, %v4027
        %4029 = vmatprep.mubr.bf16.mxu0 0
        %4030 = vmatmul.mubr.bf16.gmra.mxu0 %v2372
        %v4031 = vpop.f32.mrf.mxu0
        %v4032 = vadd.f32 %v2485, %v4031
        %v4033 = vpop.f32.mrf.mxu0
        %v4034 = vadd.f32 %v2489, %v4033
        %v4035 = vpop.f32.mrf.mxu0
        %v4036 = vadd.f32 %v2485, %v4035
        %v4037 = vpop.f32.mrf.mxu0
        %v4038 = vadd.f32 %v2489, %v4037
        %4039 = vmatprep.mubr.bf16.mxu0 0
        %4040 = vmatmul.mubr.bf16.gmra.mxu0 %v2373
        %v4041 = vpop.f32.mrf.mxu0
        %v4042 = vadd.f32 %v2485, %v4041
        %v4043 = vpop.f32.mrf.mxu0
        %v4044 = vadd.f32 %v2489, %v4043
        %v4045 = vpop.f32.mrf.mxu0
        %v4046 = vadd.f32 %v2485, %v4045
        %v4047 = vpop.f32.mrf.mxu0
        %v4048 = vadd.f32 %v2489, %v4047
        %4049 = vmatprep.mubr.bf16.mxu0 0
        %4050 = vmatmul.mubr.bf16.gmra.mxu0 %v2374
        %v4051 = vpop.f32.mrf.mxu0
        %v4052 = vadd.f32 %v2485, %v4051
        %v4053 = vpop.f32.mrf.mxu0
        %v4054 = vadd.f32 %v2489, %v4053
        %v4055 = vpop.f32.mrf.mxu0
        %v4056 = vadd.f32 %v2485, %v4055
        %v4057 = vpop.f32.mrf.mxu0
        %v4058 = vadd.f32 %v2489, %v4057
        %4059 = vmatprep.mubr.bf16.mxu0 0
        %4060 = vmatmul.mubr.bf16.gmra.mxu0 %v2375
        %v4061 = vpop.f32.mrf.mxu0
        %v4062 = vadd.f32 %v2485, %v4061
        %v4063 = vpop.f32.mrf.mxu0
        %v4064 = vadd.f32 %v2489, %v4063
        %v4065 = vpop.f32.mrf.mxu0
        %v4066 = vadd.f32 %v2485, %v4065
        %v4067 = vpop.f32.mrf.mxu0
        %v4068 = vadd.f32 %v2489, %v4067
        %4069 = vmatprep.mubr.bf16.mxu0 0
        %4070 = vmatmul.mubr.bf16.gmra.mxu0 %v2376
        %v4071 = vpop.f32.mrf.mxu0
        %v4072 = vadd.f32 %v2485, %v4071
        %v4073 = vpop.f32.mrf.mxu0
        %v4074 = vadd.f32 %v2489, %v4073
        %v4075 = vpop.f32.mrf.mxu0
        %v4076 = vadd.f32 %v2485, %v4075
        %v4077 = vpop.f32.mrf.mxu0
        %v4078 = vadd.f32 %v2489, %v4077
        %4079 = vmatprep.mubr.bf16.mxu0 0
        %4080 = vmatmul.mubr.bf16.gmra.mxu0 %v2377
        %v4081 = vpop.f32.mrf.mxu0
        %v4082 = vadd.f32 %v2485, %v4081
        %v4083 = vpop.f32.mrf.mxu0
        %v4084 = vadd.f32 %v2489, %v4083
        %v4085 = vpop.f32.mrf.mxu0
        %v4086 = vadd.f32 %v2485, %v4085
        %v4087 = vpop.f32.mrf.mxu0
        %v4088 = vadd.f32 %v2489, %v4087
        %4089 = vmatprep.mubr.bf16.mxu0 0
        %4090 = vmatmul.mubr.bf16.gmra.mxu0 %v2378
        %v4091 = vpop.f32.mrf.mxu0
        %v4092 = vadd.f32 %v2485, %v4091
        %v4093 = vpop.f32.mrf.mxu0
        %v4094 = vadd.f32 %v2489, %v4093
        %v4095 = vpop.f32.mrf.mxu0
        %v4096 = vadd.f32 %v2485, %v4095
        %v4097 = vpop.f32.mrf.mxu0
        %v4098 = vadd.f32 %v2489, %v4097
        %4099 = vmatprep.mubr.bf16.mxu0 0
        %4100 = vmatmul.mubr.bf16.gmra.mxu0 %v2379
        %v4101 = vpop.f32.mrf.mxu0
        %v4102 = vadd.f32 %v2485, %v4101
        %v4103 = vpop.f32.mrf.mxu0
        %v4104 = vadd.f32 %v2489, %v4103
        %v4105 = vpop.f32.mrf.mxu0
        %v4106 = vadd.f32 %v2485, %v4105
        %v4107 = vpop.f32.mrf.mxu0
        %v4108 = vadd.f32 %v2489, %v4107
        %4109 = vmatprep.mubr.bf16.mxu0 0
        %4110 = vmatmul.mubr.bf16.gmra.mxu0 %v2380
        %v4111 = vpop.f32.mrf.mxu0
        %v4112 = vadd.f32 %v2485, %v4111
        %v4113 = vpop.f32.mrf.mxu0
        %v4114 = vadd.f32 %v2489, %v4113
        %v4115 = vpop.f32.mrf.mxu0
        %v4116 = vadd.f32 %v2485, %v4115
        %v4117 = vpop.f32.mrf.mxu0
        %v4118 = vadd.f32 %v2489, %v4117
        %4119 = vmatprep.mubr.bf16.mxu0 0
        %4120 = vmatmul.mubr.bf16.gmra.mxu0 %v2381
        %v4121 = vpop.f32.mrf.mxu0
        %v4122 = vadd.f32 %v2485, %v4121
        %v4123 = vpop.f32.mrf.mxu0
        %v4124 = vadd.f32 %v2489, %v4123
        %v4125 = vpop.f32.mrf.mxu0
        %v4126 = vadd.f32 %v2485, %v4125
        %v4127 = vpop.f32.mrf.mxu0
        %v4128 = vadd.f32 %v2489, %v4127
        %4129 = vmatprep.mubr.bf16.mxu0 0
        %4130 = vmatmul.mubr.bf16.gmra.mxu0 %v2382
        %v4131 = vpop.f32.mrf.mxu0
        %v4132 = vadd.f32 %v2485, %v4131
        %v4133 = vpop.f32.mrf.mxu0
        %v4134 = vadd.f32 %v2489, %v4133
        %v4135 = vpop.f32.mrf.mxu0
        %v4136 = vadd.f32 %v2485, %v4135
        %v4137 = vpop.f32.mrf.mxu0
        %v4138 = vadd.f32 %v2489, %v4137
        %4139 = vmatprep.mubr.bf16.mxu0 0
        %4140 = vmatmul.mubr.bf16.gmra.mxu0 %v2383
        %v4141 = vpop.f32.mrf.mxu0
        %v4142 = vadd.f32 %v2485, %v4141
        %v4143 = vpop.f32.mrf.mxu0
        %v4144 = vadd.f32 %v2489, %v4143
        %v4145 = vpop.f32.mrf.mxu0
        %v4146 = vadd.f32 %v2485, %v4145
        %v4147 = vpop.f32.mrf.mxu0
        %v4148 = vadd.f32 %v2489, %v4147
        %4149 = vmatprep.mubr.bf16.mxu0 0
        %4150 = vmatmul.mubr.bf16.gmra.mxu0 %v2384
        %v4151 = vpop.f32.mrf.mxu0
        %v4152 = vadd.f32 %v2485, %v4151
        %v4153 = vpop.f32.mrf.mxu0
        %v4154 = vadd.f32 %v2489, %v4153
        %v4155 = vpop.f32.mrf.mxu0
        %v4156 = vadd.f32 %v2485, %v4155
        %v4157 = vpop.f32.mrf.mxu0
        %v4158 = vadd.f32 %v2489, %v4157
        %4159 = vmatprep.mubr.bf16.mxu0 0
        %4160 = vmatmul.mubr.bf16.gmra.mxu0 %v2385
        %v4161 = vpop.f32.mrf.mxu0
        %v4162 = vadd.f32 %v2485, %v4161
        %v4163 = vpop.f32.mrf.mxu0
        %v4164 = vadd.f32 %v2489, %v4163
        %v4165 = vpop.f32.mrf.mxu0
        %v4166 = vadd.f32 %v2485, %v4165
        %v4167 = vpop.f32.mrf.mxu0
        %v4168 = vadd.f32 %v2489, %v4167
        %4169 = vmatprep.mubr.bf16.mxu0 0
        %4170 = vmatmul.mubr.bf16.gmra.mxu0 %v2386
        %v4171 = vpop.f32.mrf.mxu0
        %v4172 = vadd.f32 %v2485, %v4171
        %v4173 = vpop.f32.mrf.mxu0
        %v4174 = vadd.f32 %v2489, %v4173
        %v4175 = vpop.f32.mrf.mxu0
        %v4176 = vadd.f32 %v2485, %v4175
        %v4177 = vpop.f32.mrf.mxu0
        %v4178 = vadd.f32 %v2489, %v4177
        %4179 = vmatprep.mubr.bf16.mxu0 0
        %4180 = vmatmul.mubr.bf16.gmra.mxu0 %v2387
        %v4181 = vpop.f32.mrf.mxu0
        %v4182 = vadd.f32 %v2485, %v4181
        %v4183 = vpop.f32.mrf.mxu0
        %v4184 = vadd.f32 %v2489, %v4183
        %v4185 = vpop.f32.mrf.mxu0
        %v4186 = vadd.f32 %v2485, %v4185
        %v4187 = vpop.f32.mrf.mxu0
        %v4188 = vadd.f32 %v2489, %v4187
        %4189 = vmatprep.mubr.bf16.mxu0 0
        %4190 = vmatmul.mubr.bf16.gmra.mxu0 %v2388
        %v4191 = vpop.f32.mrf.mxu0
        %v4192 = vadd.f32 %v2485, %v4191
        %v4193 = vpop.f32.mrf.mxu0
        %v4194 = vadd.f32 %v2489, %v4193
        %v4195 = vpop.f32.mrf.mxu0
        %v4196 = vadd.f32 %v2485, %v4195
        %v4197 = vpop.f32.mrf.mxu0
        %v4198 = vadd.f32 %v2489, %v4197
        %4199 = vmatprep.mubr.bf16.mxu0 0
        %4200 = vmatmul.mubr.bf16.gmra.mxu0 %v2389
        %v4201 = vpop.f32.mrf.mxu0
        %v4202 = vadd.f32 %v2485, %v4201
        %v4203 = vpop.f32.mrf.mxu0
        %v4204 = vadd.f32 %v2489, %v4203
        %v4205 = vpop.f32.mrf.mxu0
        %v4206 = vadd.f32 %v2485, %v4205
        %v4207 = vpop.f32.mrf.mxu0
        %v4208 = vadd.f32 %v2489, %v4207
        %4209 = vmatprep.mubr.bf16.mxu0 0
        %4210 = vmatmul.mubr.bf16.gmra.mxu0 %v2390
        %v4211 = vpop.f32.mrf.mxu0
        %v4212 = vadd.f32 %v2485, %v4211
        %v4213 = vpop.f32.mrf.mxu0
        %v4214 = vadd.f32 %v2489, %v4213
        %v4215 = vpop.f32.mrf.mxu0
        %v4216 = vadd.f32 %v2485, %v4215
        %v4217 = vpop.f32.mrf.mxu0
        %v4218 = vadd.f32 %v2489, %v4217
        %4219 = vmatprep.mubr.bf16.mxu0 0
        %4220 = vmatmul.mubr.bf16.gmra.mxu0 %v2391
        %v4221 = vpop.f32.mrf.mxu0
        %v4222 = vadd.f32 %v2485, %v4221
        %v4223 = vpop.f32.mrf.mxu0
        %v4224 = vadd.f32 %v2489, %v4223
        %v4225 = vpop.f32.mrf.mxu0
        %v4226 = vadd.f32 %v2485, %v4225
        %v4227 = vpop.f32.mrf.mxu0
        %v4228 = vadd.f32 %v2489, %v4227
        %4229 = vdwg.mxu0
        %v4230 = vmax.f32 %v2853, 0.0
        %v4231 = vmax.f32 %v2855, 0.0
        %v4232 = vmax.f32 %v3206, 0.0
        %v4233 = vmax.f32 %v3208, 0.0
        %v4234 = vmax.f32 %v3559, 0.0
        %v4235 = vmax.f32 %v3561, 0.0
        %v4236 = vmax.f32 %v3912, 0.0
        %v4237 = vmax.f32 %v3914, 0.0
        %v4238 = vmax.f32 %v2857, 0.0
        %v4239 = vmax.f32 %v2859, 0.0
        %v4240 = vmax.f32 %v3210, 0.0
        %v4241 = vmax.f32 %v3212, 0.0
        %v4242 = vmax.f32 %v3563, 0.0
        %v4243 = vmax.f32 %v3565, 0.0
        %v4244 = vmax.f32 %v3916, 0.0
        %v4245 = vmax.f32 %v3918, 0.0
        %v4246 = vmax.f32 %v2863, 0.0
        %v4247 = vmax.f32 %v2865, 0.0
        %v4248 = vmax.f32 %v3216, 0.0
        %v4249 = vmax.f32 %v3218, 0.0
        %v4250 = vmax.f32 %v3569, 0.0
        %v4251 = vmax.f32 %v3571, 0.0
        %v4252 = vmax.f32 %v3922, 0.0
        %v4253 = vmax.f32 %v3924, 0.0
        %v4254 = vmax.f32 %v2867, 0.0
        %v4255 = vmax.f32 %v2869, 0.0
        %v4256 = vmax.f32 %v3220, 0.0
        %v4257 = vmax.f32 %v3222, 0.0
        %v4258 = vmax.f32 %v3573, 0.0
        %v4259 = vmax.f32 %v3575, 0.0
        %v4260 = vmax.f32 %v3926, 0.0
        %v4261 = vmax.f32 %v3928, 0.0
        %v4262 = vmax.f32 %v2873, 0.0
        %v4263 = vmax.f32 %v2875, 0.0
        %v4264 = vmax.f32 %v3226, 0.0
        %v4265 = vmax.f32 %v3228, 0.0
        %v4266 = vmax.f32 %v3579, 0.0
        %v4267 = vmax.f32 %v3581, 0.0
        %v4268 = vmax.f32 %v3932, 0.0
        %v4269 = vmax.f32 %v3934, 0.0
        %v4270 = vmax.f32 %v2877, 0.0
        %v4271 = vmax.f32 %v2879, 0.0
        %v4272 = vmax.f32 %v3230, 0.0
        %v4273 = vmax.f32 %v3232, 0.0
        %v4274 = vmax.f32 %v3583, 0.0
        %v4275 = vmax.f32 %v3585, 0.0
        %v4276 = vmax.f32 %v3936, 0.0
        %v4277 = vmax.f32 %v3938, 0.0
        %v4278 = vmax.f32 %v2883, 0.0
        %v4279 = vmax.f32 %v2885, 0.0
        %v4280 = vmax.f32 %v3236, 0.0
        %v4281 = vmax.f32 %v3238, 0.0
        %v4282 = vmax.f32 %v3589, 0.0
        %v4283 = vmax.f32 %v3591, 0.0
        %v4284 = vmax.f32 %v3942, 0.0
        %v4285 = vmax.f32 %v3944, 0.0
        %v4286 = vmax.f32 %v2887, 0.0
        %v4287 = vmax.f32 %v2889, 0.0
        %v4288 = vmax.f32 %v3240, 0.0
        %v4289 = vmax.f32 %v3242, 0.0
        %v4290 = vmax.f32 %v3593, 0.0
        %v4291 = vmax.f32 %v3595, 0.0
        %v4292 = vmax.f32 %v3946, 0.0
        %v4293 = vmax.f32 %v3948, 0.0
        %v4294 = vmax.f32 %v2893, 0.0
        %v4295 = vmax.f32 %v2895, 0.0
        %v4296 = vmax.f32 %v3246, 0.0
        %v4297 = vmax.f32 %v3248, 0.0
        %v4298 = vmax.f32 %v3599, 0.0
        %v4299 = vmax.f32 %v3601, 0.0
        %v4300 = vmax.f32 %v3952, 0.0
        %v4301 = vmax.f32 %v3954, 0.0
        %v4302 = vmax.f32 %v2897, 0.0
        %v4303 = vmax.f32 %v2899, 0.0
        %v4304 = vmax.f32 %v3250, 0.0
        %v4305 = vmax.f32 %v3252, 0.0
        %v4306 = vmax.f32 %v3603, 0.0
        %v4307 = vmax.f32 %v3605, 0.0
        %v4308 = vmax.f32 %v3956, 0.0
        %v4309 = vmax.f32 %v3958, 0.0
        %v4310 = vmax.f32 %v2903, 0.0
        %v4311 = vmax.f32 %v2905, 0.0
        %v4312 = vmax.f32 %v3256, 0.0
        %v4313 = vmax.f32 %v3258, 0.0
        %v4314 = vmax.f32 %v3609, 0.0
        %v4315 = vmax.f32 %v3611, 0.0
        %v4316 = vmax.f32 %v3962, 0.0
        %v4317 = vmax.f32 %v3964, 0.0
        %v4318 = vmax.f32 %v2907, 0.0
        %v4319 = vmax.f32 %v2909, 0.0
        %v4320 = vmax.f32 %v3260, 0.0
        %v4321 = vmax.f32 %v3262, 0.0
        %v4322 = vmax.f32 %v3613, 0.0
        %v4323 = vmax.f32 %v3615, 0.0
        %v4324 = vmax.f32 %v3966, 0.0
        %v4325 = vmax.f32 %v3968, 0.0
        %v4326 = vmax.f32 %v2913, 0.0
        %v4327 = vmax.f32 %v2915, 0.0
        %v4328 = vmax.f32 %v3266, 0.0
        %v4329 = vmax.f32 %v3268, 0.0
        %v4330 = vmax.f32 %v3619, 0.0
        %v4331 = vmax.f32 %v3621, 0.0
        %v4332 = vmax.f32 %v3972, 0.0
        %v4333 = vmax.f32 %v3974, 0.0
        %v4334 = vmax.f32 %v2917, 0.0
        %v4335 = vmax.f32 %v2919, 0.0
        %v4336 = vmax.f32 %v3270, 0.0
        %v4337 = vmax.f32 %v3272, 0.0
        %v4338 = vmax.f32 %v3623, 0.0
        %v4339 = vmax.f32 %v3625, 0.0
        %v4340 = vmax.f32 %v3976, 0.0
        %v4341 = vmax.f32 %v3978, 0.0
        %v4342 = vmax.f32 %v2923, 0.0
        %v4343 = vmax.f32 %v2925, 0.0
        %v4344 = vmax.f32 %v3276, 0.0
        %v4345 = vmax.f32 %v3278, 0.0
        %v4346 = vmax.f32 %v3629, 0.0
        %v4347 = vmax.f32 %v3631, 0.0
        %v4348 = vmax.f32 %v3982, 0.0
        %v4349 = vmax.f32 %v3984, 0.0
        %v4350 = vmax.f32 %v2927, 0.0
        %v4351 = vmax.f32 %v2929, 0.0
        %v4352 = vmax.f32 %v3280, 0.0
        %v4353 = vmax.f32 %v3282, 0.0
        %v4354 = vmax.f32 %v3633, 0.0
        %v4355 = vmax.f32 %v3635, 0.0
        %v4356 = vmax.f32 %v3986, 0.0
        %v4357 = vmax.f32 %v3988, 0.0
        %v4358 = vmax.f32 %v2933, 0.0
        %v4359 = vmax.f32 %v2935, 0.0
        %v4360 = vmax.f32 %v3286, 0.0
        %v4361 = vmax.f32 %v3288, 0.0
        %v4362 = vmax.f32 %v3639, 0.0
        %v4363 = vmax.f32 %v3641, 0.0
        %v4364 = vmax.f32 %v3992, 0.0
        %v4365 = vmax.f32 %v3994, 0.0
        %v4366 = vmax.f32 %v2937, 0.0
        %v4367 = vmax.f32 %v2939, 0.0
        %v4368 = vmax.f32 %v3290, 0.0
        %v4369 = vmax.f32 %v3292, 0.0
        %v4370 = vmax.f32 %v3643, 0.0
        %v4371 = vmax.f32 %v3645, 0.0
        %v4372 = vmax.f32 %v3996, 0.0
        %v4373 = vmax.f32 %v3998, 0.0
        %v4374 = vmax.f32 %v2943, 0.0
        %v4375 = vmax.f32 %v2945, 0.0
        %v4376 = vmax.f32 %v3296, 0.0
        %v4377 = vmax.f32 %v3298, 0.0
        %v4378 = vmax.f32 %v3649, 0.0
        %v4379 = vmax.f32 %v3651, 0.0
        %v4380 = vmax.f32 %v4002, 0.0
        %v4381 = vmax.f32 %v4004, 0.0
        %v4382 = vmax.f32 %v2947, 0.0
        %v4383 = vmax.f32 %v2949, 0.0
        %v4384 = vmax.f32 %v3300, 0.0
        %v4385 = vmax.f32 %v3302, 0.0
        %v4386 = vmax.f32 %v3653, 0.0
        %v4387 = vmax.f32 %v3655, 0.0
        %v4388 = vmax.f32 %v4006, 0.0
        %v4389 = vmax.f32 %v4008, 0.0
        %v4390 = vmax.f32 %v2953, 0.0
        %v4391 = vmax.f32 %v2955, 0.0
        %v4392 = vmax.f32 %v3306, 0.0
        %v4393 = vmax.f32 %v3308, 0.0
        %v4394 = vmax.f32 %v3659, 0.0
        %v4395 = vmax.f32 %v3661, 0.0
        %v4396 = vmax.f32 %v4012, 0.0
        %v4397 = vmax.f32 %v4014, 0.0
        %v4398 = vmax.f32 %v2957, 0.0
        %v4399 = vmax.f32 %v2959, 0.0
        %v4400 = vmax.f32 %v3310, 0.0
        %v4401 = vmax.f32 %v3312, 0.0
        %v4402 = vmax.f32 %v3663, 0.0
        %v4403 = vmax.f32 %v3665, 0.0
        %v4404 = vmax.f32 %v4016, 0.0
        %v4405 = vmax.f32 %v4018, 0.0
        %v4406 = vmax.f32 %v2963, 0.0
        %v4407 = vmax.f32 %v2965, 0.0
        %v4408 = vmax.f32 %v3316, 0.0
        %v4409 = vmax.f32 %v3318, 0.0
        %v4410 = vmax.f32 %v3669, 0.0
        %v4411 = vmax.f32 %v3671, 0.0
        %v4412 = vmax.f32 %v4022, 0.0
        %v4413 = vmax.f32 %v4024, 0.0
        %v4414 = vmax.f32 %v2967, 0.0
        %v4415 = vmax.f32 %v2969, 0.0
        %v4416 = vmax.f32 %v3320, 0.0
        %v4417 = vmax.f32 %v3322, 0.0
        %v4418 = vmax.f32 %v3673, 0.0
        %v4419 = vmax.f32 %v3675, 0.0
        %v4420 = vmax.f32 %v4026, 0.0
        %v4421 = vmax.f32 %v4028, 0.0
        %v4422 = vmax.f32 %v2973, 0.0
        %v4423 = vmax.f32 %v2975, 0.0
        %v4424 = vmax.f32 %v3326, 0.0
        %v4425 = vmax.f32 %v3328, 0.0
        %v4426 = vmax.f32 %v3679, 0.0
        %v4427 = vmax.f32 %v3681, 0.0
        %v4428 = vmax.f32 %v4032, 0.0
        %v4429 = vmax.f32 %v4034, 0.0
        %v4430 = vmax.f32 %v2977, 0.0
        %v4431 = vmax.f32 %v2979, 0.0
        %v4432 = vmax.f32 %v3330, 0.0
        %v4433 = vmax.f32 %v3332, 0.0
        %v4434 = vmax.f32 %v3683, 0.0
        %v4435 = vmax.f32 %v3685, 0.0
        %v4436 = vmax.f32 %v4036, 0.0
        %v4437 = vmax.f32 %v4038, 0.0
        %v4438 = vmax.f32 %v2983, 0.0
        %v4439 = vmax.f32 %v2985, 0.0
        %v4440 = vmax.f32 %v3336, 0.0
        %v4441 = vmax.f32 %v3338, 0.0
        %v4442 = vmax.f32 %v3689, 0.0
        %v4443 = vmax.f32 %v3691, 0.0
        %v4444 = vmax.f32 %v4042, 0.0
        %v4445 = vmax.f32 %v4044, 0.0
        %v4446 = vmax.f32 %v2987, 0.0
        %v4447 = vmax.f32 %v2989, 0.0
        %v4448 = vmax.f32 %v3340, 0.0
        %v4449 = vmax.f32 %v3342, 0.0
        %v4450 = vmax.f32 %v3693, 0.0
        %v4451 = vmax.f32 %v3695, 0.0
        %v4452 = vmax.f32 %v4046, 0.0
        %v4453 = vmax.f32 %v4048, 0.0
        %v4454 = vmax.f32 %v2993, 0.0
        %v4455 = vmax.f32 %v2995, 0.0
        %v4456 = vmax.f32 %v3346, 0.0
        %v4457 = vmax.f32 %v3348, 0.0
        %v4458 = vmax.f32 %v3699, 0.0
        %v4459 = vmax.f32 %v3701, 0.0
        %v4460 = vmax.f32 %v4052, 0.0
        %v4461 = vmax.f32 %v4054, 0.0
        %v4462 = vmax.f32 %v2997, 0.0
        %v4463 = vmax.f32 %v2999, 0.0
        %v4464 = vmax.f32 %v3350, 0.0
        %v4465 = vmax.f32 %v3352, 0.0
        %v4466 = vmax.f32 %v3703, 0.0
        %v4467 = vmax.f32 %v3705, 0.0
        %v4468 = vmax.f32 %v4056, 0.0
        %v4469 = vmax.f32 %v4058, 0.0
        %v4470 = vmax.f32 %v3003, 0.0
        %v4471 = vmax.f32 %v3005, 0.0
        %v4472 = vmax.f32 %v3356, 0.0
        %v4473 = vmax.f32 %v3358, 0.0
        %v4474 = vmax.f32 %v3709, 0.0
        %v4475 = vmax.f32 %v3711, 0.0
        %v4476 = vmax.f32 %v4062, 0.0
        %v4477 = vmax.f32 %v4064, 0.0
        %v4478 = vmax.f32 %v3007, 0.0
        %v4479 = vmax.f32 %v3009, 0.0
        %v4480 = vmax.f32 %v3360, 0.0
        %v4481 = vmax.f32 %v3362, 0.0
        %v4482 = vmax.f32 %v3713, 0.0
        %v4483 = vmax.f32 %v3715, 0.0
        %v4484 = vmax.f32 %v4066, 0.0
        %v4485 = vmax.f32 %v4068, 0.0
        %v4486 = vmax.f32 %v3013, 0.0
        %v4487 = vmax.f32 %v3015, 0.0
        %v4488 = vmax.f32 %v3366, 0.0
        %v4489 = vmax.f32 %v3368, 0.0
        %v4490 = vmax.f32 %v3719, 0.0
        %v4491 = vmax.f32 %v3721, 0.0
        %v4492 = vmax.f32 %v4072, 0.0
        %v4493 = vmax.f32 %v4074, 0.0
        %v4494 = vmax.f32 %v3017, 0.0
        %v4495 = vmax.f32 %v3019, 0.0
        %v4496 = vmax.f32 %v3370, 0.0
        %v4497 = vmax.f32 %v3372, 0.0
        %v4498 = vmax.f32 %v3723, 0.0
        %v4499 = vmax.f32 %v3725, 0.0
        %v4500 = vmax.f32 %v4076, 0.0
        %v4501 = vmax.f32 %v4078, 0.0
        %v4502 = vmax.f32 %v3023, 0.0
        %v4503 = vmax.f32 %v3025, 0.0
        %v4504 = vmax.f32 %v3376, 0.0
        %v4505 = vmax.f32 %v3378, 0.0
        %v4506 = vmax.f32 %v3729, 0.0
        %v4507 = vmax.f32 %v3731, 0.0
        %v4508 = vmax.f32 %v4082, 0.0
        %v4509 = vmax.f32 %v4084, 0.0
        %v4510 = vmax.f32 %v3027, 0.0
        %v4511 = vmax.f32 %v3029, 0.0
        %v4512 = vmax.f32 %v3380, 0.0
        %v4513 = vmax.f32 %v3382, 0.0
        %v4514 = vmax.f32 %v3733, 0.0
        %v4515 = vmax.f32 %v3735, 0.0
        %v4516 = vmax.f32 %v4086, 0.0
        %v4517 = vmax.f32 %v4088, 0.0
        %v4518 = vmax.f32 %v3033, 0.0
        %v4519 = vmax.f32 %v3035, 0.0
        %v4520 = vmax.f32 %v3386, 0.0
        %v4521 = vmax.f32 %v3388, 0.0
        %v4522 = vmax.f32 %v3739, 0.0
        %v4523 = vmax.f32 %v3741, 0.0
        %v4524 = vmax.f32 %v4092, 0.0
        %v4525 = vmax.f32 %v4094, 0.0
        %v4526 = vmax.f32 %v3037, 0.0
        %v4527 = vmax.f32 %v3039, 0.0
        %v4528 = vmax.f32 %v3390, 0.0
        %v4529 = vmax.f32 %v3392, 0.0
        %v4530 = vmax.f32 %v3743, 0.0
        %v4531 = vmax.f32 %v3745, 0.0
        %v4532 = vmax.f32 %v4096, 0.0
        %v4533 = vmax.f32 %v4098, 0.0
        %v4534 = vmax.f32 %v3043, 0.0
        %v4535 = vmax.f32 %v3045, 0.0
        %v4536 = vmax.f32 %v3396, 0.0
        %v4537 = vmax.f32 %v3398, 0.0
        %v4538 = vmax.f32 %v3749, 0.0
        %v4539 = vmax.f32 %v3751, 0.0
        %v4540 = vmax.f32 %v4102, 0.0
        %v4541 = vmax.f32 %v4104, 0.0
        %v4542 = vmax.f32 %v3047, 0.0
        %v4543 = vmax.f32 %v3049, 0.0
        %v4544 = vmax.f32 %v3400, 0.0
        %v4545 = vmax.f32 %v3402, 0.0
        %v4546 = vmax.f32 %v3753, 0.0
        %v4547 = vmax.f32 %v3755, 0.0
        %v4548 = vmax.f32 %v4106, 0.0
        %v4549 = vmax.f32 %v4108, 0.0
        %v4550 = vmax.f32 %v3053, 0.0
        %v4551 = vmax.f32 %v3055, 0.0
        %v4552 = vmax.f32 %v3406, 0.0
        %v4553 = vmax.f32 %v3408, 0.0
        %v4554 = vmax.f32 %v3759, 0.0
        %v4555 = vmax.f32 %v3761, 0.0
        %v4556 = vmax.f32 %v4112, 0.0
        %v4557 = vmax.f32 %v4114, 0.0
        %v4558 = vmax.f32 %v3057, 0.0
        %v4559 = vmax.f32 %v3059, 0.0
        %v4560 = vmax.f32 %v3410, 0.0
        %v4561 = vmax.f32 %v3412, 0.0
        %v4562 = vmax.f32 %v3763, 0.0
        %v4563 = vmax.f32 %v3765, 0.0
        %v4564 = vmax.f32 %v4116, 0.0
        %v4565 = vmax.f32 %v4118, 0.0
        %v4566 = vmax.f32 %v3063, 0.0
        %v4567 = vmax.f32 %v3065, 0.0
        %v4568 = vmax.f32 %v3416, 0.0
        %v4569 = vmax.f32 %v3418, 0.0
        %v4570 = vmax.f32 %v3769, 0.0
        %v4571 = vmax.f32 %v3771, 0.0
        %v4572 = vmax.f32 %v4122, 0.0
        %v4573 = vmax.f32 %v4124, 0.0
        %v4574 = vmax.f32 %v3067, 0.0
        %v4575 = vmax.f32 %v3069, 0.0
        %v4576 = vmax.f32 %v3420, 0.0
        %v4577 = vmax.f32 %v3422, 0.0
        %v4578 = vmax.f32 %v3773, 0.0
        %v4579 = vmax.f32 %v3775, 0.0
        %v4580 = vmax.f32 %v4126, 0.0
        %v4581 = vmax.f32 %v4128, 0.0
        %v4582 = vmax.f32 %v3073, 0.0
        %v4583 = vmax.f32 %v3075, 0.0
        %v4584 = vmax.f32 %v3426, 0.0
        %v4585 = vmax.f32 %v3428, 0.0
        %v4586 = vmax.f32 %v3779, 0.0
        %v4587 = vmax.f32 %v3781, 0.0
        %v4588 = vmax.f32 %v4132, 0.0
        %v4589 = vmax.f32 %v4134, 0.0
        %v4590 = vmax.f32 %v3077, 0.0
        %v4591 = vmax.f32 %v3079, 0.0
        %v4592 = vmax.f32 %v3430, 0.0
        %v4593 = vmax.f32 %v3432, 0.0
        %v4594 = vmax.f32 %v3783, 0.0
        %v4595 = vmax.f32 %v3785, 0.0
        %v4596 = vmax.f32 %v4136, 0.0
        %v4597 = vmax.f32 %v4138, 0.0
        %v4598 = vmax.f32 %v3083, 0.0
        %v4599 = vmax.f32 %v3085, 0.0
        %v4600 = vmax.f32 %v3436, 0.0
        %v4601 = vmax.f32 %v3438, 0.0
        %v4602 = vmax.f32 %v3789, 0.0
        %v4603 = vmax.f32 %v3791, 0.0
        %v4604 = vmax.f32 %v4142, 0.0
        %v4605 = vmax.f32 %v4144, 0.0
        %v4606 = vmax.f32 %v3087, 0.0
        %v4607 = vmax.f32 %v3089, 0.0
        %v4608 = vmax.f32 %v3440, 0.0
        %v4609 = vmax.f32 %v3442, 0.0
        %v4610 = vmax.f32 %v3793, 0.0
        %v4611 = vmax.f32 %v3795, 0.0
        %v4612 = vmax.f32 %v4146, 0.0
        %v4613 = vmax.f32 %v4148, 0.0
        %v4614 = vmax.f32 %v3093, 0.0
        %v4615 = vmax.f32 %v3095, 0.0
        %v4616 = vmax.f32 %v3446, 0.0
        %v4617 = vmax.f32 %v3448, 0.0
        %v4618 = vmax.f32 %v3799, 0.0
        %v4619 = vmax.f32 %v3801, 0.0
        %v4620 = vmax.f32 %v4152, 0.0
        %v4621 = vmax.f32 %v4154, 0.0
        %v4622 = vmax.f32 %v3097, 0.0
        %v4623 = vmax.f32 %v3099, 0.0
        %v4624 = vmax.f32 %v3450, 0.0
        %v4625 = vmax.f32 %v3452, 0.0
        %v4626 = vmax.f32 %v3803, 0.0
        %v4627 = vmax.f32 %v3805, 0.0
        %v4628 = vmax.f32 %v4156, 0.0
        %v4629 = vmax.f32 %v4158, 0.0
        %v4630 = vmax.f32 %v3103, 0.0
        %v4631 = vmax.f32 %v3105, 0.0
        %v4632 = vmax.f32 %v3456, 0.0
        %v4633 = vmax.f32 %v3458, 0.0
        %v4634 = vmax.f32 %v3809, 0.0
        %v4635 = vmax.f32 %v3811, 0.0
        %v4636 = vmax.f32 %v4162, 0.0
        %v4637 = vmax.f32 %v4164, 0.0
        %v4638 = vmax.f32 %v3107, 0.0
        %v4639 = vmax.f32 %v3109, 0.0
        %v4640 = vmax.f32 %v3460, 0.0
        %v4641 = vmax.f32 %v3462, 0.0
        %v4642 = vmax.f32 %v3813, 0.0
        %v4643 = vmax.f32 %v3815, 0.0
        %v4644 = vmax.f32 %v4166, 0.0
        %v4645 = vmax.f32 %v4168, 0.0
        %v4646 = vmax.f32 %v3113, 0.0
        %v4647 = vmax.f32 %v3115, 0.0
        %v4648 = vmax.f32 %v3466, 0.0
        %v4649 = vmax.f32 %v3468, 0.0
        %v4650 = vmax.f32 %v3819, 0.0
        %v4651 = vmax.f32 %v3821, 0.0
        %v4652 = vmax.f32 %v4172, 0.0
        %v4653 = vmax.f32 %v4174, 0.0
        %v4654 = vmax.f32 %v3117, 0.0
        %v4655 = vmax.f32 %v3119, 0.0
        %v4656 = vmax.f32 %v3470, 0.0
        %v4657 = vmax.f32 %v3472, 0.0
        %v4658 = vmax.f32 %v3823, 0.0
        %v4659 = vmax.f32 %v3825, 0.0
        %v4660 = vmax.f32 %v4176, 0.0
        %v4661 = vmax.f32 %v4178, 0.0
        %v4662 = vmax.f32 %v3123, 0.0
        %v4663 = vmax.f32 %v3125, 0.0
        %v4664 = vmax.f32 %v3476, 0.0
        %v4665 = vmax.f32 %v3478, 0.0
        %v4666 = vmax.f32 %v3829, 0.0
        %v4667 = vmax.f32 %v3831, 0.0
        %v4668 = vmax.f32 %v4182, 0.0
        %v4669 = vmax.f32 %v4184, 0.0
        %v4670 = vmax.f32 %v3127, 0.0
        %v4671 = vmax.f32 %v3129, 0.0
        %v4672 = vmax.f32 %v3480, 0.0
        %v4673 = vmax.f32 %v3482, 0.0
        %v4674 = vmax.f32 %v3833, 0.0
        %v4675 = vmax.f32 %v3835, 0.0
        %v4676 = vmax.f32 %v4186, 0.0
        %v4677 = vmax.f32 %v4188, 0.0
        %v4678 = vmax.f32 %v3133, 0.0
        %v4679 = vmax.f32 %v3135, 0.0
        %v4680 = vmax.f32 %v3486, 0.0
        %v4681 = vmax.f32 %v3488, 0.0
        %v4682 = vmax.f32 %v3839, 0.0
        %v4683 = vmax.f32 %v3841, 0.0
        %v4684 = vmax.f32 %v4192, 0.0
        %v4685 = vmax.f32 %v4194, 0.0
        %v4686 = vmax.f32 %v3137, 0.0
        %v4687 = vmax.f32 %v3139, 0.0
        %v4688 = vmax.f32 %v3490, 0.0
        %v4689 = vmax.f32 %v3492, 0.0
        %v4690 = vmax.f32 %v3843, 0.0
        %v4691 = vmax.f32 %v3845, 0.0
        %v4692 = vmax.f32 %v4196, 0.0
        %v4693 = vmax.f32 %v4198, 0.0
        %v4694 = vmax.f32 %v3143, 0.0
        %v4695 = vmax.f32 %v3145, 0.0
        %v4696 = vmax.f32 %v3496, 0.0
        %v4697 = vmax.f32 %v3498, 0.0
        %v4698 = vmax.f32 %v3849, 0.0
        %v4699 = vmax.f32 %v3851, 0.0
        %v4700 = vmax.f32 %v4202, 0.0
        %v4701 = vmax.f32 %v4204, 0.0
        %v4702 = vmax.f32 %v3147, 0.0
        %v4703 = vmax.f32 %v3149, 0.0
        %v4704 = vmax.f32 %v3500, 0.0
        %v4705 = vmax.f32 %v3502, 0.0
        %v4706 = vmax.f32 %v3853, 0.0
        %v4707 = vmax.f32 %v3855, 0.0
        %v4708 = vmax.f32 %v4206, 0.0
        %v4709 = vmax.f32 %v4208, 0.0
        %v4710 = vmax.f32 %v3153, 0.0
        %v4711 = vmax.f32 %v3155, 0.0
        %v4712 = vmax.f32 %v3506, 0.0
        %v4713 = vmax.f32 %v3508, 0.0
        %v4714 = vmax.f32 %v3859, 0.0
        %v4715 = vmax.f32 %v3861, 0.0
        %v4716 = vmax.f32 %v4212, 0.0
        %v4717 = vmax.f32 %v4214, 0.0
        %v4718 = vmax.f32 %v3157, 0.0
        %v4719 = vmax.f32 %v3159, 0.0
        %v4720 = vmax.f32 %v3510, 0.0
        %v4721 = vmax.f32 %v3512, 0.0
        %v4722 = vmax.f32 %v3863, 0.0
        %v4723 = vmax.f32 %v3865, 0.0
        %v4724 = vmax.f32 %v4216, 0.0
        %v4725 = vmax.f32 %v4218, 0.0
        %v4726 = vmax.f32 %v3163, 0.0
        %v4727 = vmax.f32 %v3165, 0.0
        %v4728 = vmax.f32 %v3516, 0.0
        %v4729 = vmax.f32 %v3518, 0.0
        %v4730 = vmax.f32 %v3869, 0.0
        %v4731 = vmax.f32 %v3871, 0.0
        %v4732 = vmax.f32 %v4222, 0.0
        %v4733 = vmax.f32 %v4224, 0.0
        %v4734 = vmax.f32 %v3167, 0.0
        %v4735 = vmax.f32 %v3169, 0.0
        %v4736 = vmax.f32 %v3520, 0.0
        %v4737 = vmax.f32 %v3522, 0.0
        %v4738 = vmax.f32 %v3873, 0.0
        %v4739 = vmax.f32 %v3875, 0.0
        %v4740 = vmax.f32 %v4226, 0.0
        %v4741 = vmax.f32 %v4228, 0.0
        %v4742 = vmax.f32 %v4230, %v4238
        %v4743 = vmax.f32 %v4742, %v4246
        %v4744 = vmax.f32 %v4743, %v4254
        %v4745 = vmax.f32 %v4744, %v4262
        %v4746 = vmax.f32 %v4745, %v4270
        %v4747 = vmax.f32 %v4746, %v4278
        %v4748 = vmax.f32 %v4747, %v4286
        %v4749 = vmax.f32 %v4748, %v4294
        %v4750 = vmax.f32 %v4749, %v4302
        %v4751 = vmax.f32 %v4750, %v4310
        %v4752 = vmax.f32 %v4751, %v4318
        %v4753 = vmax.f32 %v4752, %v4326
        %v4754 = vmax.f32 %v4753, %v4334
        %v4755 = vmax.f32 %v4754, %v4342
        %v4756 = vmax.f32 %v4755, %v4350
        %v4757 = vmax.f32 %v4756, %v4358
        %v4758 = vmax.f32 %v4757, %v4366
        %v4759 = vmax.f32 %v4758, %v4374
        %v4760 = vmax.f32 %v4759, %v4382
        %v4761 = vmax.f32 %v4760, %v4390
        %v4762 = vmax.f32 %v4761, %v4398
        %v4763 = vmax.f32 %v4762, %v4406
        %v4764 = vmax.f32 %v4763, %v4414
        %v4765 = vmax.f32 %v4764, %v4422
        %v4766 = vmax.f32 %v4765, %v4430
        %v4767 = vmax.f32 %v4766, %v4438
        %v4768 = vmax.f32 %v4767, %v4446
        %v4769 = vmax.f32 %v4768, %v4454
        %v4770 = vmax.f32 %v4769, %v4462
        %v4771 = vmax.f32 %v4770, %v4470
        %v4772 = vmax.f32 %v4771, %v4478
        %v4773 = vmax.f32 %v4772, %v4486
        %v4774 = vmax.f32 %v4773, %v4494
        %v4775 = vmax.f32 %v4774, %v4502
        %v4776 = vmax.f32 %v4775, %v4510
        %v4777 = vmax.f32 %v4776, %v4518
        %v4778 = vmax.f32 %v4777, %v4526
        %v4779 = vmax.f32 %v4778, %v4534
        %v4780 = vmax.f32 %v4779, %v4542
        %v4781 = vmax.f32 %v4780, %v4550
        %v4782 = vmax.f32 %v4781, %v4558
        %v4783 = vmax.f32 %v4782, %v4566
        %v4784 = vmax.f32 %v4783, %v4574
        %v4785 = vmax.f32 %v4784, %v4582
        %v4786 = vmax.f32 %v4785, %v4590
        %v4787 = vmax.f32 %v4786, %v4598
        %v4788 = vmax.f32 %v4787, %v4606
        %v4789 = vmax.f32 %v4788, %v4614
        %v4790 = vmax.f32 %v4789, %v4622
        %v4791 = vmax.f32 %v4790, %v4630
        %v4792 = vmax.f32 %v4791, %v4638
        %v4793 = vmax.f32 %v4792, %v4646
        %v4794 = vmax.f32 %v4793, %v4654
        %v4795 = vmax.f32 %v4794, %v4662
        %v4796 = vmax.f32 %v4795, %v4670
        %v4797 = vmax.f32 %v4796, %v4678
        %v4798 = vmax.f32 %v4797, %v4686
        %v4799 = vmax.f32 %v4798, %v4694
        %v4800 = vmax.f32 %v4799, %v4702
        %v4801 = vmax.f32 %v4800, %v4710
        %v4802 = vmax.f32 %v4801, %v4718
        %v4803 = vmax.f32 %v4802, %v4726
        %v4804 = vmax.f32 %v4803, %v4734
        %v4805 = vrot.slane %v4804, 4
        %v4806 = vmax.f32 %v4804, %v4805
        %v4807 = vrot.slane %v4806, 2
        %v4808 = vmax.f32 %v4806, %v4807
        %v4809 = vrot.slane %v4808, 1
        %v4810 = vmax.f32 %v4808, %v4809
        %v4811 = vmax.f32 %v4231, %v4239
        %v4812 = vmax.f32 %v4811, %v4247
        %v4813 = vmax.f32 %v4812, %v4255
        %v4814 = vmax.f32 %v4813, %v4263
        %v4815 = vmax.f32 %v4814, %v4271
        %v4816 = vmax.f32 %v4815, %v4279
        %v4817 = vmax.f32 %v4816, %v4287
        %v4818 = vmax.f32 %v4817, %v4295
        %v4819 = vmax.f32 %v4818, %v4303
        %v4820 = vmax.f32 %v4819, %v4311
        %v4821 = vmax.f32 %v4820, %v4319
        %v4822 = vmax.f32 %v4821, %v4327
        %v4823 = vmax.f32 %v4822, %v4335
        %v4824 = vmax.f32 %v4823, %v4343
        %v4825 = vmax.f32 %v4824, %v4351
        %v4826 = vmax.f32 %v4825, %v4359
        %v4827 = vmax.f32 %v4826, %v4367
        %v4828 = vmax.f32 %v4827, %v4375
        %v4829 = vmax.f32 %v4828, %v4383
        %v4830 = vmax.f32 %v4829, %v4391
        %v4831 = vmax.f32 %v4830, %v4399
        %v4832 = vmax.f32 %v4831, %v4407
        %v4833 = vmax.f32 %v4832, %v4415
        %v4834 = vmax.f32 %v4833, %v4423
        %v4835 = vmax.f32 %v4834, %v4431
        %v4836 = vmax.f32 %v4835, %v4439
        %v4837 = vmax.f32 %v4836, %v4447
        %v4838 = vmax.f32 %v4837, %v4455
        %v4839 = vmax.f32 %v4838, %v4463
        %v4840 = vmax.f32 %v4839, %v4471
        %v4841 = vmax.f32 %v4840, %v4479
        %v4842 = vmax.f32 %v4841, %v4487
        %v4843 = vmax.f32 %v4842, %v4495
        %v4844 = vmax.f32 %v4843, %v4503
        %v4845 = vmax.f32 %v4844, %v4511
        %v4846 = vmax.f32 %v4845, %v4519
        %v4847 = vmax.f32 %v4846, %v4527
        %v4848 = vmax.f32 %v4847, %v4535
        %v4849 = vmax.f32 %v4848, %v4543
        %v4850 = vmax.f32 %v4849, %v4551
        %v4851 = vmax.f32 %v4850, %v4559
        %v4852 = vmax.f32 %v4851, %v4567
        %v4853 = vmax.f32 %v4852, %v4575
        %v4854 = vmax.f32 %v4853, %v4583
        %v4855 = vmax.f32 %v4854, %v4591
        %v4856 = vmax.f32 %v4855, %v4599
        %v4857 = vmax.f32 %v4856, %v4607
        %v4858 = vmax.f32 %v4857, %v4615
        %v4859 = vmax.f32 %v4858, %v4623
        %v4860 = vmax.f32 %v4859, %v4631
        %v4861 = vmax.f32 %v4860, %v4639
        %v4862 = vmax.f32 %v4861, %v4647
        %v4863 = vmax.f32 %v4862, %v4655
        %v4864 = vmax.f32 %v4863, %v4663
        %v4865 = vmax.f32 %v4864, %v4671
        %v4866 = vmax.f32 %v4865, %v4679
        %v4867 = vmax.f32 %v4866, %v4687
        %v4868 = vmax.f32 %v4867, %v4695
        %v4869 = vmax.f32 %v4868, %v4703
        %v4870 = vmax.f32 %v4869, %v4711
        %v4871 = vmax.f32 %v4870, %v4719
        %v4872 = vmax.f32 %v4871, %v4727
        %v4873 = vmax.f32 %v4872, %v4735
        %v4874 = vrot.slane %v4873, 4
        %v4875 = vmax.f32 %v4873, %v4874
        %v4876 = vrot.slane %v4875, 2
        %v4877 = vmax.f32 %v4875, %v4876
        %v4878 = vrot.slane %v4877, 1
        %v4879 = vmax.f32 %v4877, %v4878
        %v4880 = vmax.f32 %v4232, %v4240
        %v4881 = vmax.f32 %v4880, %v4248
        %v4882 = vmax.f32 %v4881, %v4256
        %v4883 = vmax.f32 %v4882, %v4264
        %v4884 = vmax.f32 %v4883, %v4272
        %v4885 = vmax.f32 %v4884, %v4280
        %v4886 = vmax.f32 %v4885, %v4288
        %v4887 = vmax.f32 %v4886, %v4296
        %v4888 = vmax.f32 %v4887, %v4304
        %v4889 = vmax.f32 %v4888, %v4312
        %v4890 = vmax.f32 %v4889, %v4320
        %v4891 = vmax.f32 %v4890, %v4328
        %v4892 = vmax.f32 %v4891, %v4336
        %v4893 = vmax.f32 %v4892, %v4344
        %v4894 = vmax.f32 %v4893, %v4352
        %v4895 = vmax.f32 %v4894, %v4360
        %v4896 = vmax.f32 %v4895, %v4368
        %v4897 = vmax.f32 %v4896, %v4376
        %v4898 = vmax.f32 %v4897, %v4384
        %v4899 = vmax.f32 %v4898, %v4392
        %v4900 = vmax.f32 %v4899, %v4400
        %v4901 = vmax.f32 %v4900, %v4408
        %v4902 = vmax.f32 %v4901, %v4416
        %v4903 = vmax.f32 %v4902, %v4424
        %v4904 = vmax.f32 %v4903, %v4432
        %v4905 = vmax.f32 %v4904, %v4440
        %v4906 = vmax.f32 %v4905, %v4448
        %v4907 = vmax.f32 %v4906, %v4456
        %v4908 = vmax.f32 %v4907, %v4464
        %v4909 = vmax.f32 %v4908, %v4472
        %v4910 = vmax.f32 %v4909, %v4480
        %v4911 = vmax.f32 %v4910, %v4488
        %v4912 = vmax.f32 %v4911, %v4496
        %v4913 = vmax.f32 %v4912, %v4504
        %v4914 = vmax.f32 %v4913, %v4512
        %v4915 = vmax.f32 %v4914, %v4520
        %v4916 = vmax.f32 %v4915, %v4528
        %v4917 = vmax.f32 %v4916, %v4536
        %v4918 = vmax.f32 %v4917, %v4544
        %v4919 = vmax.f32 %v4918, %v4552
        %v4920 = vmax.f32 %v4919, %v4560
        %v4921 = vmax.f32 %v4920, %v4568
        %v4922 = vmax.f32 %v4921, %v4576
        %v4923 = vmax.f32 %v4922, %v4584
        %v4924 = vmax.f32 %v4923, %v4592
        %v4925 = vmax.f32 %v4924, %v4600
        %v4926 = vmax.f32 %v4925, %v4608
        %v4927 = vmax.f32 %v4926, %v4616
        %v4928 = vmax.f32 %v4927, %v4624
        %v4929 = vmax.f32 %v4928, %v4632
        %v4930 = vmax.f32 %v4929, %v4640
        %v4931 = vmax.f32 %v4930, %v4648
        %v4932 = vmax.f32 %v4931, %v4656
        %v4933 = vmax.f32 %v4932, %v4664
        %v4934 = vmax.f32 %v4933, %v4672
        %v4935 = vmax.f32 %v4934, %v4680
        %v4936 = vmax.f32 %v4935, %v4688
        %v4937 = vmax.f32 %v4936, %v4696
        %v4938 = vmax.f32 %v4937, %v4704
        %v4939 = vmax.f32 %v4938, %v4712
        %v4940 = vmax.f32 %v4939, %v4720
        %v4941 = vmax.f32 %v4940, %v4728
        %v4942 = vmax.f32 %v4941, %v4736
        %v4943 = vrot.slane %v4942, 4
        %v4944 = vmax.f32 %v4942, %v4943
        %v4945 = vrot.slane %v4944, 2
        %v4946 = vmax.f32 %v4944, %v4945
        %v4947 = vrot.slane %v4946, 1
        %v4948 = vmax.f32 %v4946, %v4947
        %v4949 = vmax.f32 %v4233, %v4241
        %v4950 = vmax.f32 %v4949, %v4249
        %v4951 = vmax.f32 %v4950, %v4257
        %v4952 = vmax.f32 %v4951, %v4265
        %v4953 = vmax.f32 %v4952, %v4273
        %v4954 = vmax.f32 %v4953, %v4281
        %v4955 = vmax.f32 %v4954, %v4289
        %v4956 = vmax.f32 %v4955, %v4297
        %v4957 = vmax.f32 %v4956, %v4305
        %v4958 = vmax.f32 %v4957, %v4313
        %v4959 = vmax.f32 %v4958, %v4321
        %v4960 = vmax.f32 %v4959, %v4329
        %v4961 = vmax.f32 %v4960, %v4337
        %v4962 = vmax.f32 %v4961, %v4345
        %v4963 = vmax.f32 %v4962, %v4353
        %v4964 = vmax.f32 %v4963, %v4361
        %v4965 = vmax.f32 %v4964, %v4369
        %v4966 = vmax.f32 %v4965, %v4377
        %v4967 = vmax.f32 %v4966, %v4385
        %v4968 = vmax.f32 %v4967, %v4393
        %v4969 = vmax.f32 %v4968, %v4401
        %v4970 = vmax.f32 %v4969, %v4409
        %v4971 = vmax.f32 %v4970, %v4417
        %v4972 = vmax.f32 %v4971, %v4425
        %v4973 = vmax.f32 %v4972, %v4433
        %v4974 = vmax.f32 %v4973, %v4441
        %v4975 = vmax.f32 %v4974, %v4449
        %v4976 = vmax.f32 %v4975, %v4457
        %v4977 = vmax.f32 %v4976, %v4465
        %v4978 = vmax.f32 %v4977, %v4473
        %v4979 = vmax.f32 %v4978, %v4481
        %v4980 = vmax.f32 %v4979, %v4489
        %v4981 = vmax.f32 %v4980, %v4497
        %v4982 = vmax.f32 %v4981, %v4505
        %v4983 = vmax.f32 %v4982, %v4513
        %v4984 = vmax.f32 %v4983, %v4521
        %v4985 = vmax.f32 %v4984, %v4529
        %v4986 = vmax.f32 %v4985, %v4537
        %v4987 = vmax.f32 %v4986, %v4545
        %v4988 = vmax.f32 %v4987, %v4553
        %v4989 = vmax.f32 %v4988, %v4561
        %v4990 = vmax.f32 %v4989, %v4569
        %v4991 = vmax.f32 %v4990, %v4577
        %v4992 = vmax.f32 %v4991, %v4585
        %v4993 = vmax.f32 %v4992, %v4593
        %v4994 = vmax.f32 %v4993, %v4601
        %v4995 = vmax.f32 %v4994, %v4609
        %v4996 = vmax.f32 %v4995, %v4617
        %v4997 = vmax.f32 %v4996, %v4625
        %v4998 = vmax.f32 %v4997, %v4633
        %v4999 = vmax.f32 %v4998, %v4641
        %v5000 = vmax.f32 %v4999, %v4649
        %v5001 = vmax.f32 %v5000, %v4657
        %v5002 = vmax.f32 %v5001, %v4665
        %v5003 = vmax.f32 %v5002, %v4673
        %v5004 = vmax.f32 %v5003, %v4681
        %v5005 = vmax.f32 %v5004, %v4689
        %v5006 = vmax.f32 %v5005, %v4697
        %v5007 = vmax.f32 %v5006, %v4705
        %v5008 = vmax.f32 %v5007, %v4713
        %v5009 = vmax.f32 %v5008, %v4721
        %v5010 = vmax.f32 %v5009, %v4729
        %v5011 = vmax.f32 %v5010, %v4737
        %v5012 = vrot.slane %v5011, 4
        %v5013 = vmax.f32 %v5011, %v5012
        %v5014 = vrot.slane %v5013, 2
        %v5015 = vmax.f32 %v5013, %v5014
        %v5016 = vrot.slane %v5015, 1
        %v5017 = vmax.f32 %v5015, %v5016
        %v5018 = vmax.f32 %v4234, %v4242
        %v5019 = vmax.f32 %v5018, %v4250
        %v5020 = vmax.f32 %v5019, %v4258
        %v5021 = vmax.f32 %v5020, %v4266
        %v5022 = vmax.f32 %v5021, %v4274
        %v5023 = vmax.f32 %v5022, %v4282
        %v5024 = vmax.f32 %v5023, %v4290
        %v5025 = vmax.f32 %v5024, %v4298
        %v5026 = vmax.f32 %v5025, %v4306
        %v5027 = vmax.f32 %v5026, %v4314
        %v5028 = vmax.f32 %v5027, %v4322
        %v5029 = vmax.f32 %v5028, %v4330
        %v5030 = vmax.f32 %v5029, %v4338
        %v5031 = vmax.f32 %v5030, %v4346
        %v5032 = vmax.f32 %v5031, %v4354
        %v5033 = vmax.f32 %v5032, %v4362
        %v5034 = vmax.f32 %v5033, %v4370
        %v5035 = vmax.f32 %v5034, %v4378
        %v5036 = vmax.f32 %v5035, %v4386
        %v5037 = vmax.f32 %v5036, %v4394
        %v5038 = vmax.f32 %v5037, %v4402
        %v5039 = vmax.f32 %v5038, %v4410
        %v5040 = vmax.f32 %v5039, %v4418
        %v5041 = vmax.f32 %v5040, %v4426
        %v5042 = vmax.f32 %v5041, %v4434
        %v5043 = vmax.f32 %v5042, %v4442
        %v5044 = vmax.f32 %v5043, %v4450
        %v5045 = vmax.f32 %v5044, %v4458
        %v5046 = vmax.f32 %v5045, %v4466
        %v5047 = vmax.f32 %v5046, %v4474
        %v5048 = vmax.f32 %v5047, %v4482
        %v5049 = vmax.f32 %v5048, %v4490
        %v5050 = vmax.f32 %v5049, %v4498
        %v5051 = vmax.f32 %v5050, %v4506
        %v5052 = vmax.f32 %v5051, %v4514
        %v5053 = vmax.f32 %v5052, %v4522
        %v5054 = vmax.f32 %v5053, %v4530
        %v5055 = vmax.f32 %v5054, %v4538
        %v5056 = vmax.f32 %v5055, %v4546
        %v5057 = vmax.f32 %v5056, %v4554
        %v5058 = vmax.f32 %v5057, %v4562
        %v5059 = vmax.f32 %v5058, %v4570
        %v5060 = vmax.f32 %v5059, %v4578
        %v5061 = vmax.f32 %v5060, %v4586
        %v5062 = vmax.f32 %v5061, %v4594
        %v5063 = vmax.f32 %v5062, %v4602
        %v5064 = vmax.f32 %v5063, %v4610
        %v5065 = vmax.f32 %v5064, %v4618
        %v5066 = vmax.f32 %v5065, %v4626
        %v5067 = vmax.f32 %v5066, %v4634
        %v5068 = vmax.f32 %v5067, %v4642
        %v5069 = vmax.f32 %v5068, %v4650
        %v5070 = vmax.f32 %v5069, %v4658
        %v5071 = vmax.f32 %v5070, %v4666
        %v5072 = vmax.f32 %v5071, %v4674
        %v5073 = vmax.f32 %v5072, %v4682
        %v5074 = vmax.f32 %v5073, %v4690
        %v5075 = vmax.f32 %v5074, %v4698
        %v5076 = vmax.f32 %v5075, %v4706
        %v5077 = vmax.f32 %v5076, %v4714
        %v5078 = vmax.f32 %v5077, %v4722
        %v5079 = vmax.f32 %v5078, %v4730
        %v5080 = vmax.f32 %v5079, %v4738
        %v5081 = vrot.slane %v5080, 4
        %v5082 = vmax.f32 %v5080, %v5081
        %v5083 = vrot.slane %v5082, 2
        %v5084 = vmax.f32 %v5082, %v5083
        %v5085 = vrot.slane %v5084, 1
        %v5086 = vmax.f32 %v5084, %v5085
        %v5087 = vmax.f32 %v4235, %v4243
        %v5088 = vmax.f32 %v5087, %v4251
        %v5089 = vmax.f32 %v5088, %v4259
        %v5090 = vmax.f32 %v5089, %v4267
        %v5091 = vmax.f32 %v5090, %v4275
        %v5092 = vmax.f32 %v5091, %v4283
        %v5093 = vmax.f32 %v5092, %v4291
        %v5094 = vmax.f32 %v5093, %v4299
        %v5095 = vmax.f32 %v5094, %v4307
        %v5096 = vmax.f32 %v5095, %v4315
        %v5097 = vmax.f32 %v5096, %v4323
        %v5098 = vmax.f32 %v5097, %v4331
        %v5099 = vmax.f32 %v5098, %v4339
        %v5100 = vmax.f32 %v5099, %v4347
        %v5101 = vmax.f32 %v5100, %v4355
        %v5102 = vmax.f32 %v5101, %v4363
        %v5103 = vmax.f32 %v5102, %v4371
        %v5104 = vmax.f32 %v5103, %v4379
        %v5105 = vmax.f32 %v5104, %v4387
        %v5106 = vmax.f32 %v5105, %v4395
        %v5107 = vmax.f32 %v5106, %v4403
        %v5108 = vmax.f32 %v5107, %v4411
        %v5109 = vmax.f32 %v5108, %v4419
        %v5110 = vmax.f32 %v5109, %v4427
        %v5111 = vmax.f32 %v5110, %v4435
        %v5112 = vmax.f32 %v5111, %v4443
        %v5113 = vmax.f32 %v5112, %v4451
        %v5114 = vmax.f32 %v5113, %v4459
        %v5115 = vmax.f32 %v5114, %v4467
        %v5116 = vmax.f32 %v5115, %v4475
        %v5117 = vmax.f32 %v5116, %v4483
        %v5118 = vmax.f32 %v5117, %v4491
        %v5119 = vmax.f32 %v5118, %v4499
        %v5120 = vmax.f32 %v5119, %v4507
        %v5121 = vmax.f32 %v5120, %v4515
        %v5122 = vmax.f32 %v5121, %v4523
        %v5123 = vmax.f32 %v5122, %v4531
        %v5124 = vmax.f32 %v5123, %v4539
        %v5125 = vmax.f32 %v5124, %v4547
        %v5126 = vmax.f32 %v5125, %v4555
        %v5127 = vmax.f32 %v5126, %v4563
        %v5128 = vmax.f32 %v5127, %v4571
        %v5129 = vmax.f32 %v5128, %v4579
        %v5130 = vmax.f32 %v5129, %v4587
        %v5131 = vmax.f32 %v5130, %v4595
        %v5132 = vmax.f32 %v5131, %v4603
        %v5133 = vmax.f32 %v5132, %v4611
        %v5134 = vmax.f32 %v5133, %v4619
        %v5135 = vmax.f32 %v5134, %v4627
        %v5136 = vmax.f32 %v5135, %v4635
        %v5137 = vmax.f32 %v5136, %v4643
        %v5138 = vmax.f32 %v5137, %v4651
        %v5139 = vmax.f32 %v5138, %v4659
        %v5140 = vmax.f32 %v5139, %v4667
        %v5141 = vmax.f32 %v5140, %v4675
        %v5142 = vmax.f32 %v5141, %v4683
        %v5143 = vmax.f32 %v5142, %v4691
        %v5144 = vmax.f32 %v5143, %v4699
        %v5145 = vmax.f32 %v5144, %v4707
        %v5146 = vmax.f32 %v5145, %v4715
        %v5147 = vmax.f32 %v5146, %v4723
        %v5148 = vmax.f32 %v5147, %v4731
        %v5149 = vmax.f32 %v5148, %v4739
        %v5150 = vrot.slane %v5149, 4
        %v5151 = vmax.f32 %v5149, %v5150
        %v5152 = vrot.slane %v5151, 2
        %v5153 = vmax.f32 %v5151, %v5152
        %v5154 = vrot.slane %v5153, 1
        %v5155 = vmax.f32 %v5153, %v5154
        %v5156 = vmax.f32 %v4236, %v4244
        %v5157 = vmax.f32 %v5156, %v4252
        %v5158 = vmax.f32 %v5157, %v4260
        %v5159 = vmax.f32 %v5158, %v4268
        %v5160 = vmax.f32 %v5159, %v4276
        %v5161 = vmax.f32 %v5160, %v4284
        %v5162 = vmax.f32 %v5161, %v4292
        %v5163 = vmax.f32 %v5162, %v4300
        %v5164 = vmax.f32 %v5163, %v4308
        %v5165 = vmax.f32 %v5164, %v4316
        %v5166 = vmax.f32 %v5165, %v4324
        %v5167 = vmax.f32 %v5166, %v4332
        %v5168 = vmax.f32 %v5167, %v4340
        %v5169 = vmax.f32 %v5168, %v4348
        %v5170 = vmax.f32 %v5169, %v4356
        %v5171 = vmax.f32 %v5170, %v4364
        %v5172 = vmax.f32 %v5171, %v4372
        %v5173 = vmax.f32 %v5172, %v4380
        %v5174 = vmax.f32 %v5173, %v4388
        %v5175 = vmax.f32 %v5174, %v4396
        %v5176 = vmax.f32 %v5175, %v4404
        %v5177 = vmax.f32 %v5176, %v4412
        %v5178 = vmax.f32 %v5177, %v4420
        %v5179 = vmax.f32 %v5178, %v4428
        %v5180 = vmax.f32 %v5179, %v4436
        %v5181 = vmax.f32 %v5180, %v4444
        %v5182 = vmax.f32 %v5181, %v4452
        %v5183 = vmax.f32 %v5182, %v4460
        %v5184 = vmax.f32 %v5183, %v4468
        %v5185 = vmax.f32 %v5184, %v4476
        %v5186 = vmax.f32 %v5185, %v4484
        %v5187 = vmax.f32 %v5186, %v4492
        %v5188 = vmax.f32 %v5187, %v4500
        %v5189 = vmax.f32 %v5188, %v4508
        %v5190 = vmax.f32 %v5189, %v4516
        %v5191 = vmax.f32 %v5190, %v4524
        %v5192 = vmax.f32 %v5191, %v4532
        %v5193 = vmax.f32 %v5192, %v4540
        %v5194 = vmax.f32 %v5193, %v4548
        %v5195 = vmax.f32 %v5194, %v4556
        %v5196 = vmax.f32 %v5195, %v4564
        %v5197 = vmax.f32 %v5196, %v4572
        %v5198 = vmax.f32 %v5197, %v4580
        %v5199 = vmax.f32 %v5198, %v4588
        %v5200 = vmax.f32 %v5199, %v4596
        %v5201 = vmax.f32 %v5200, %v4604
        %v5202 = vmax.f32 %v5201, %v4612
        %v5203 = vmax.f32 %v5202, %v4620
        %v5204 = vmax.f32 %v5203, %v4628
        %v5205 = vmax.f32 %v5204, %v4636
        %v5206 = vmax.f32 %v5205, %v4644
        %v5207 = vmax.f32 %v5206, %v4652
        %v5208 = vmax.f32 %v5207, %v4660
        %v5209 = vmax.f32 %v5208, %v4668
        %v5210 = vmax.f32 %v5209, %v4676
        %v5211 = vmax.f32 %v5210, %v4684
        %v5212 = vmax.f32 %v5211, %v4692
        %v5213 = vmax.f32 %v5212, %v4700
        %v5214 = vmax.f32 %v5213, %v4708
        %v5215 = vmax.f32 %v5214, %v4716
        %v5216 = vmax.f32 %v5215, %v4724
        %v5217 = vmax.f32 %v5216, %v4732
        %v5218 = vmax.f32 %v5217, %v4740
        %v5219 = vrot.slane %v5218, 4
        %v5220 = vmax.f32 %v5218, %v5219
        %v5221 = vrot.slane %v5220, 2
        %v5222 = vmax.f32 %v5220, %v5221
        %v5223 = vrot.slane %v5222, 1
        %v5224 = vmax.f32 %v5222, %v5223
        %v5225 = vmax.f32 %v4237, %v4245
        %v5226 = vmax.f32 %v5225, %v4253
        %v5227 = vmax.f32 %v5226, %v4261
        %v5228 = vmax.f32 %v5227, %v4269
        %v5229 = vmax.f32 %v5228, %v4277
        %v5230 = vmax.f32 %v5229, %v4285
        %v5231 = vmax.f32 %v5230, %v4293
        %v5232 = vmax.f32 %v5231, %v4301
        %v5233 = vmax.f32 %v5232, %v4309
        %v5234 = vmax.f32 %v5233, %v4317
        %v5235 = vmax.f32 %v5234, %v4325
        %v5236 = vmax.f32 %v5235, %v4333
        %v5237 = vmax.f32 %v5236, %v4341
        %v5238 = vmax.f32 %v5237, %v4349
        %v5239 = vmax.f32 %v5238, %v4357
        %v5240 = vmax.f32 %v5239, %v4365
        %v5241 = vmax.f32 %v5240, %v4373
        %v5242 = vmax.f32 %v5241, %v4381
        %v5243 = vmax.f32 %v5242, %v4389
        %v5244 = vmax.f32 %v5243, %v4397
        %v5245 = vmax.f32 %v5244, %v4405
        %v5246 = vmax.f32 %v5245, %v4413
        %v5247 = vmax.f32 %v5246, %v4421
        %v5248 = vmax.f32 %v5247, %v4429
        %v5249 = vmax.f32 %v5248, %v4437
        %v5250 = vmax.f32 %v5249, %v4445
        %v5251 = vmax.f32 %v5250, %v4453
        %v5252 = vmax.f32 %v5251, %v4461
        %v5253 = vmax.f32 %v5252, %v4469
        %v5254 = vmax.f32 %v5253, %v4477
        %v5255 = vmax.f32 %v5254, %v4485
        %v5256 = vmax.f32 %v5255, %v4493
        %v5257 = vmax.f32 %v5256, %v4501
        %v5258 = vmax.f32 %v5257, %v4509
        %v5259 = vmax.f32 %v5258, %v4517
        %v5260 = vmax.f32 %v5259, %v4525
        %v5261 = vmax.f32 %v5260, %v4533
        %v5262 = vmax.f32 %v5261, %v4541
        %v5263 = vmax.f32 %v5262, %v4549
        %v5264 = vmax.f32 %v5263, %v4557
        %v5265 = vmax.f32 %v5264, %v4565
        %v5266 = vmax.f32 %v5265, %v4573
        %v5267 = vmax.f32 %v5266, %v4581
        %v5268 = vmax.f32 %v5267, %v4589
        %v5269 = vmax.f32 %v5268, %v4597
        %v5270 = vmax.f32 %v5269, %v4605
        %v5271 = vmax.f32 %v5270, %v4613
        %v5272 = vmax.f32 %v5271, %v4621
        %v5273 = vmax.f32 %v5272, %v4629
        %v5274 = vmax.f32 %v5273, %v4637
        %v5275 = vmax.f32 %v5274, %v4645
        %v5276 = vmax.f32 %v5275, %v4653
        %v5277 = vmax.f32 %v5276, %v4661
        %v5278 = vmax.f32 %v5277, %v4669
        %v5279 = vmax.f32 %v5278, %v4677
        %v5280 = vmax.f32 %v5279, %v4685
        %v5281 = vmax.f32 %v5280, %v4693
        %v5282 = vmax.f32 %v5281, %v4701
        %v5283 = vmax.f32 %v5282, %v4709
        %v5284 = vmax.f32 %v5283, %v4717
        %v5285 = vmax.f32 %v5284, %v4725
        %v5286 = vmax.f32 %v5285, %v4733
        %v5287 = vmax.f32 %v5286, %v4741
        %v5288 = vrot.slane %v5287, 4
        %v5289 = vmax.f32 %v5287, %v5288
        %v5290 = vrot.slane %v5289, 2
        %v5291 = vmax.f32 %v5289, %v5290
        %v5292 = vrot.slane %v5291, 1
        %v5293 = vmax.f32 %v5291, %v5292
        %v5302 = vcombine.low %v4810, %v4879
        %v5303 = vcombine.low %v4948, %v5017
        %v5304 = vcombine.low %v5086, %v5155
        %v5305 = vcombine.low %v5224, %v5293
        %v5307 = vunpack.c.l.s4 1966171168
        %v5308 = vunpack.c.0.s8 %v5307
        %v5309 = vlaneseq
        %v5310 = vshrl.u32 %v5309, 7
        %v5311 = vsub.s32 %v5308, %v5310
        %v5312 = vrot.slane %v5302, %v5311
        %v5314 = vunpack.c.l.s4 1966171168
        %v5315 = vunpack.c.0.s8 %v5314
        %v5316 = vlaneseq
        %v5317 = vshrl.u32 %v5316, 7
        %v5318 = vsub.s32 %v5315, %v5317
        %v5319 = vrot.slane %v5303, %v5318
        %v5321 = vunpack.c.l.s4 1966171168
        %v5322 = vunpack.c.0.s8 %v5321
        %v5323 = vlaneseq
        %v5324 = vshrl.u32 %v5323, 7
        %v5325 = vsub.s32 %v5322, %v5324
        %v5326 = vrot.slane %v5304, %v5325
        %v5328 = vunpack.c.l.s4 1966171168
        %v5329 = vunpack.c.0.s8 %v5328
        %v5330 = vlaneseq
        %v5331 = vshrl.u32 %v5330, 7
        %v5332 = vsub.s32 %v5329, %v5331
        %v5333 = vrot.slane %v5305, %v5332
        %v5334 = vcombine.low %v5312, %v5319
        %v5335 = vcombine.low %v5326, %v5333
        %v5337 = vunpack.c.l.s4 1966171168
        %v5338 = vunpack.c.0.s8 %v5337
        %v5339 = vlaneseq
        %v5340 = vshrl.u32 %v5339, 7
        %v5341 = vsub.s32 %v5338, %v5340
        %v5342 = vrot.slane %v5334, %v5341
        %v5344 = vunpack.c.l.s4 1966171168
        %v5345 = vunpack.c.0.s8 %v5344
        %v5346 = vlaneseq
        %v5347 = vshrl.u32 %v5346, 7
        %v5348 = vsub.s32 %v5345, %v5347
        %v5349 = vrot.slane %v5335, %v5348
        %v5350 = vcombine.low %v5342, %v5349
        %5352 = vst [vmem:[%s408] sm:$0xff] %v5350
        %p5353 = scmp.lt.s32.totalorder %s27, 0
        %s5354 = scalar_select %p5353, %s27, 0
        %p5355 = scmp.lt.s32.totalorder %s28, 1
        %s5356 = scalar_select %p5355, %s28, 1
        %s5357 = smul.addr %s5356, 8
        %s5358 = smul.addr %s5354, 16
        %s5359 = sadd.s32 %s5357, %s5358
        %s5360 = scalar_lea.vmem %s7, %s5359
        // Predicated region
        $region73: #{pointnetfeat_forward.2} parent=47 // pred_check
          %p5361 = pneg %p217
        $region74: #{pointnetfeat_forward.2} parent=47 // pred_check_branch
          %5363 = sbr.rel (%p5361) target = $region76
        $region75: #{pointnetfeat_forward.2} parent=47 // pred_region
          _
        $region76: #{pointnetfeat_forward.2} parent=47 // pred_fallthru
          _
      $region48: #{pointnetfeat_forward.2} parent=5 // pred_fallthru
        _
      %p5364 = scmp.le.s32.totalorder 2, %s17
      // Predicated region
      $region77: #{pointnetfeat_forward.2} parent=5 // pred_check
        %p5365 = pneg %p5364
      $region78: #{pointnetfeat_forward.2} parent=5 // pred_check_branch
        %5367 = sbr.rel (%p5365) target = $region80
      $region79: #{pointnetfeat_forward.2} parent=5 // pred_region
        %s5368 = ssub.s32 %s17, 2
        // Predicated region
        $region81: #{pointnetfeat_forward.2} parent=79 // pred_check
          %p5369 = pneg %p223
        $region82: #{pointnetfeat_forward.2} parent=79 // pred_check_branch
          %5371 = sbr.rel (%p5369) target = $region84
        $region83: #{pointnetfeat_forward.2} parent=79 // pred_region
          %p5372 = scmp.lt.s32.totalorder %s30, 0
          %s5373 = scalar_select %p5372, %s30, 0
          %p5374 = scmp.lt.s32.totalorder %s31, 1
          %s5375 = scalar_select %p5374, %s31, 1
          %s5376 = smul.addr %s5375, 8
          %s5377 = smul.addr %s5373, 16
          %s5378 = sadd.s32 %s5376, %s5377
          %s5379 = scalar_lea.vmem %s7, %s5378
        $region84: #{pointnetfeat_forward.2} parent=79 // pred_fallthru
          _
      $region80: #{pointnetfeat_forward.2} parent=5 // pred_fallthru
        _
    $region6: #{pointnetfeat_forward.2} parent=1 // loop_footer
      %s21 = sadd.s32 1, %s17
    $region7: #{pointnetfeat_forward.2} parent=1 // loop_footer_branch
      %16 = sbr.rel target = $region3
    $region8: #{pointnetfeat_forward.2} parent=1 // loop_exit
      _
    %5380 = vsyncpa [#allocation3], 1
    %s5381 = scalar_lea.sflag [#allocation3], 1
    %5382 = vsyncpa %s5381, 1
    %5383 = vsyncpa [#allocation5], 1
    %5384 = vsyncpa [#allocation8], 1
    %5385 = vsyncpa [#allocation11], 1

</llo_original>
